<compile_context>
chip_gen: v7x
topology: tpu7x:2x2x1
jax: 0.10.0
libtpu: 0.0.40
codegen_flags: <defaults>
</compile_context>

<pallas_src>
import functools

import jax
import jax.numpy as jnp
from jax.experimental import pallas as pl
from jax.experimental.pallas import tpu as pltpu

_KH, _KW = 5, 3   # conv kernel size (5, 3)
_PH, _PW = 2, 1   # "same" padding (2, 1)


# -----------------------------------------------------------------------------
# Single fused kernel: features + classifier
# -----------------------------------------------------------------------------
def _stock_cnn_kernel(x_ref, w1_ref, b1_ref, w2_ref, b2_ref,
                      wf1_ref, bf1_ref, wf2_ref, bf2_ref, o_ref,
                      *, compute_dtype):
    def pad_same(x):
        # Zero-pad H by _PH and W by _PW entirely in-kernel (no HBM round trip).
        n, h, w, c = x.shape
        zh = jnp.zeros((n, _PH, w, c), x.dtype)
        x = jnp.concatenate([zh, x, zh], axis=1)            # leading-dim concat
        zw = jnp.zeros((n, h + 2 * _PH, _PW, c), x.dtype)
        return jnp.concatenate([zw, x, zw], axis=2)         # sublane concat

    def conv_relu_hpool(x, w_ref, b_ref):
        # Conv2d(k=(5,3), pad=(2,1)) -> ReLU -> MaxPool2d((2,1)), NHWC layout.
        n, h, w, cin = x.shape
        cout = w_ref.shape[1]
        xp = pad_same(x)
        # im2col: build one lane-dense (n*h*w, KH*KW*cin) operand -> ONE matmul.
        taps = [xp[:, kh:kh + h, kw:kw + w, :]
                for kh in range(_KH) for kw in range(_KW)]
        cols = jnp.concatenate(taps, axis=-1)               # (n, h, w, KH*KW*cin)
        cols = cols.reshape(n * h * w, _KH * _KW * cin)
        y = jnp.dot(cols.astype(compute_dtype), w_ref[...].astype(compute_dtype),
                    preferred_element_type=jnp.float32)
        y = jnp.maximum(y + b_ref[...], 0.0)                # bias + ReLU
        y = y.reshape(n, h, w, cout)
        # MaxPool2d((2,1)): pool H by 2, W untouched.
        return jnp.max(y.reshape(n, h // 2, 2, w, cout), axis=2)

    x = x_ref[...].astype(jnp.float32)
    h1 = conv_relu_hpool(x, w1_ref, b1_ref)                 # (nb, H/2, W, 16)
    h2 = conv_relu_hpool(h1, w2_ref, b2_ref)                # (nb, H/4, W, 32)

    # AdaptiveAvgPool2d((4, 4)) -- divisible case == uniform average pooling.
    n, h4, w, c = h2.shape
    rh, rw = h4 // 4, w // 4
    h2 = jnp.mean(h2.reshape(n, 4, rh, w, c), axis=2)       # (nb, 4, W, 32)
    h2 = jnp.mean(h2.reshape(n, 4, 4, rw, c), axis=3)       # (nb, 4, 4, 32)

    # Flatten in (h, w, c) order; fc1 weight columns were pre-permuted to match,
    # so no runtime transpose is needed anywhere.
    flat = jnp.concatenate(
        [h2[:, hh, ww, :] for hh in range(4) for ww in range(4)], axis=-1)  # (nb, 512)

    # TODO(synk): Dropout(p=0.5) is identity in eval mode; training-mode RNG
    # masking (pltpu.prng_*) is not implemented here.
    z = jnp.dot(flat.astype(compute_dtype), wf1_ref[...].astype(compute_dtype),
                preferred_element_type=jnp.float32) + bf1_ref[...]
    z = jnp.maximum(z, 0.0)                                  # (nb, 128)

    # fc2 (128 -> 1): VPU multiply + row-sum instead of a 1-lane-wide MXU matmul.
    y = jnp.sum(z * wf2_ref[...], axis=-1, keepdims=True) + bf2_ref[...]
    o_ref[...] = jnp.tanh(y) * 10.0


# -----------------------------------------------------------------------------
# Wrapper: layout/param prep (tiny trace-time ops) + the single pallas_call
# -----------------------------------------------------------------------------
def _batch_tile(n):
    # Whole batch if small; otherwise 8-image tiles (multiple of 8 keeps the
    # (nb, 1) output block sublane-legal and bounds per-step VMEM on v7x).
    if n <= 8 or n % 8 != 0:
        return n
    return 8


@functools.partial(jax.jit, static_argnames=("compute_dtype",))
def stock_cnn_forward(x_nchw, params, compute_dtype=jnp.float32):
    # PyTorch NCHW -> NHWC (channels sit on the 128-lane axis inside the kernel).
    x = jnp.transpose(x_nchw, (0, 2, 3, 1)).astype(jnp.float32)
    N, H, W, C = x.shape
    assert H % 4 == 0 and (H // 4) % 4 == 0 and W % 4 == 0, (
        "kernel assumes the divisible AdaptiveAvgPool((4,4)) case")

    c1 = params["conv1_w"].shape[0]       # 16
    c2 = params["conv2_w"].shape[0]       # 32

    # Conv weights -> im2col matrices with K ordered (kh, kw, cin).
    w1 = jnp.transpose(params["conv1_w"], (2, 3, 1, 0)).reshape(_KH * _KW * C, c1)
    b1 = params["conv1_b"].reshape(1, c1)
    w2 = jnp.transpose(params["conv2_w"], (2, 3, 1, 0)).reshape(_KH * _KW * c1, c2)
    b2 = params["conv2_b"].reshape(1, c2)
    # Fold PyTorch's (c, h, w) flatten order into fc1's columns: the kernel then
    # consumes the natural NHWC (h, w, c) flatten directly.
    wf1 = params["fc1_w"].reshape(128, c2, 4, 4)                 # (k, c, h, w)
    wf1 = jnp.transpose(wf1, (2, 3, 1, 0)).reshape(4 * 4 * c2, 128)
    bf1 = params["fc1_b"].reshape(1, 128)
    wf2 = params["fc2_w"].reshape(1, 128)
    bf2 = params["fc2_b"].reshape(1, 1)

    nb = _batch_tile(N)
    grid = (N // nb,)

    def full(arr):
        # Weights/biases: whole array resident in VMEM, same block every step.
        return pl.BlockSpec(arr.shape, lambda b, _nd=arr.ndim: (0,) * _nd)

    kernel = functools.partial(_stock_cnn_kernel, compute_dtype=compute_dtype)
    return pl.pallas_call(
        kernel,
        out_shape=jax.ShapeDtypeStruct((N, 1), jnp.float32),
        grid=grid,
        in_specs=[
            pl.BlockSpec((nb, H, W, C), lambda b: (b, 0, 0, 0)),
            full(w1), full(b1), full(w2), full(b2),
            full(wf1), full(bf1), full(wf2), full(bf2),
        ],
        out_specs=pl.BlockSpec((nb, 1), lambda b: (b, 0)),
        compiler_params=pltpu.CompilerParams(
            dimension_semantics=("parallel",)),   # batch tiles shard across TCs (v7x)
    )(x, w1, b1, w2, b2, wf1, bf1, wf2, bf2)


def init_params(key):
    ks = jax.random.split(key, 8)

    def n(k, shape, scale=0.05):
        return scale * jax.random.normal(k, shape, jnp.float32)

    return {
        # PyTorch conv weight layout: (Cout, Cin, KH, KW)
        "conv1_w": n(ks[0], (16, 3, 5, 3)),
        "conv1_b": n(ks[1], (16,)),
        "conv2_w": n(ks[2], (32, 16, 5, 3)),
        "conv2_b": n(ks[3], (32,)),
        # PyTorch linear weight layout: (out_features, in_features)
        "fc1_w": n(ks[4], (128, 32 * 4 * 4)),
        "fc1_b": n(ks[5], (128,)),
        "fc2_w": n(ks[6], (1, 128)),
        "fc2_b": n(ks[7], (1,)),
    }


if __name__ == "__main__":
    key = jax.random.PRNGKey(0)
    pkey, xkey = jax.random.split(key)
    params = init_params(pkey)

    # Small deterministic NCHW input: batch=2, channels=3, H=16, W=16.
    x = jax.random.normal(xkey, (2, 3, 16, 16), jnp.float32)

    y = stock_cnn_forward(x, params)
    y = jax.block_until_ready(y)
    assert y.shape == (2, 1), y.shape
    assert bool(jnp.all(jnp.isfinite(y)))
    print("KERNEL_OK")
</pallas_src>

<mosaic_0001>
module attributes {stable_mosaic.version = 11 : i64} {
  func.func @_stock_cnn_kernel(%arg0: i32, %arg1: memref<2x16x16x3xf32, #tpu.memory_space<vmem>>, %arg2: memref<45x16xf32, #tpu.memory_space<vmem>>, %arg3: memref<1x16xf32, #tpu.memory_space<vmem>>, %arg4: memref<240x32xf32, #tpu.memory_space<vmem>>, %arg5: memref<1x32xf32, #tpu.memory_space<vmem>>, %arg6: memref<512x128xf32, #tpu.memory_space<vmem>>, %arg7: memref<1x128xf32, #tpu.memory_space<vmem>>, %arg8: memref<1x128xf32, #tpu.memory_space<vmem>>, %arg9: memref<1x1xf32, #tpu.memory_space<vmem>>, %arg10: memref<2x1xf32, #tpu.memory_space<vmem>>) attributes {dimension_semantics = [#tpu.dimension_semantics<parallel>], iteration_bounds = array<i64: 1>, scalar_prefetch = 0 : i64, scratch_operands = 0 : i64, tpu.core_type = #tpu.core_type<tc>, window_params = [{transform_indices = @transform_0, window_bounds = array<i64: 2, 16, 16, 3>}, {pipeline_mode = #tpu.pipeline_mode<synchronous>, transform_indices = @transform_1, window_bounds = array<i64: 45, 16>}, {pipeline_mode = #tpu.pipeline_mode<synchronous>, transform_indices = @transform_2, window_bounds = array<i64: 1, 16>}, {pipeline_mode = #tpu.pipeline_mode<synchronous>, transform_indices = @transform_3, window_bounds = array<i64: 240, 32>}, {pipeline_mode = #tpu.pipeline_mode<synchronous>, transform_indices = @transform_4, window_bounds = array<i64: 1, 32>}, {pipeline_mode = #tpu.pipeline_mode<synchronous>, transform_indices = @transform_5, window_bounds = array<i64: 512, 128>}, {pipeline_mode = #tpu.pipeline_mode<synchronous>, transform_indices = @transform_6, window_bounds = array<i64: 1, 128>}, {pipeline_mode = #tpu.pipeline_mode<synchronous>, transform_indices = @transform_7, window_bounds = array<i64: 1, 128>}, {pipeline_mode = #tpu.pipeline_mode<synchronous>, transform_indices = @transform_8, window_bounds = array<i64: 1, 1>}, {transform_indices = @transform_9, window_bounds = array<i64: 2, 1>}]} {
    %c0 = arith.constant 0 : index
    %c0_0 = arith.constant 0 : index
    %c0_1 = arith.constant 0 : index
    %c0_2 = arith.constant 0 : index
    %0 = vector.load %arg1[%c0, %c0_0, %c0_1, %c0_2] : memref<2x16x16x3xf32, #tpu.memory_space<vmem>>, vector<2x16x16x3xf32>
    %cst = arith.constant 0.000000e+00 : f32
    %1 = vector.broadcast %cst : f32 to vector<2x2x16x3xf32>
    %2 = tpu.concatenate %1, %0, %1 in 1 : vector<2x2x16x3xf32>, vector<2x16x16x3xf32>, vector<2x2x16x3xf32> -> vector<2x20x16x3xf32>
    %cst_3 = arith.constant 0.000000e+00 : f32
    %3 = vector.broadcast %cst_3 : f32 to vector<2x20x1x3xf32>
    %4 = tpu.concatenate %3, %2, %3 in 2 : vector<2x20x1x3xf32>, vector<2x20x16x3xf32>, vector<2x20x1x3xf32> -> vector<2x20x18x3xf32>
    %5 = vector.extract_strided_slice %4 {offsets = [0, 0, 0, 0], sizes = [2, 16, 16, 3], strides = [1, 1, 1, 1]} : vector<2x20x18x3xf32> to vector<2x16x16x3xf32>
    %6 = vector.extract_strided_slice %4 {offsets = [0, 0, 1, 0], sizes = [2, 16, 16, 3], strides = [1, 1, 1, 1]} : vector<2x20x18x3xf32> to vector<2x16x16x3xf32>
    %7 = vector.extract_strided_slice %4 {offsets = [0, 0, 2, 0], sizes = [2, 16, 16, 3], strides = [1, 1, 1, 1]} : vector<2x20x18x3xf32> to vector<2x16x16x3xf32>
    %8 = vector.extract_strided_slice %4 {offsets = [0, 1, 0, 0], sizes = [2, 16, 16, 3], strides = [1, 1, 1, 1]} : vector<2x20x18x3xf32> to vector<2x16x16x3xf32>
    %9 = vector.extract_strided_slice %4 {offsets = [0, 1, 1, 0], sizes = [2, 16, 16, 3], strides = [1, 1, 1, 1]} : vector<2x20x18x3xf32> to vector<2x16x16x3xf32>
    %10 = vector.extract_strided_slice %4 {offsets = [0, 1, 2, 0], sizes = [2, 16, 16, 3], strides = [1, 1, 1, 1]} : vector<2x20x18x3xf32> to vector<2x16x16x3xf32>
    %11 = vector.extract_strided_slice %4 {offsets = [0, 2, 0, 0], sizes = [2, 16, 16, 3], strides = [1, 1, 1, 1]} : vector<2x20x18x3xf32> to vector<2x16x16x3xf32>
    %12 = vector.extract_strided_slice %4 {offsets = [0, 2, 1, 0], sizes = [2, 16, 16, 3], strides = [1, 1, 1, 1]} : vector<2x20x18x3xf32> to vector<2x16x16x3xf32>
    %13 = vector.extract_strided_slice %4 {offsets = [0, 2, 2, 0], sizes = [2, 16, 16, 3], strides = [1, 1, 1, 1]} : vector<2x20x18x3xf32> to vector<2x16x16x3xf32>
    %14 = vector.extract_strided_slice %4 {offsets = [0, 3, 0, 0], sizes = [2, 16, 16, 3], strides = [1, 1, 1, 1]} : vector<2x20x18x3xf32> to vector<2x16x16x3xf32>
    %15 = vector.extract_strided_slice %4 {offsets = [0, 3, 1, 0], sizes = [2, 16, 16, 3], strides = [1, 1, 1, 1]} : vector<2x20x18x3xf32> to vector<2x16x16x3xf32>
    %16 = vector.extract_strided_slice %4 {offsets = [0, 3, 2, 0], sizes = [2, 16, 16, 3], strides = [1, 1, 1, 1]} : vector<2x20x18x3xf32> to vector<2x16x16x3xf32>
    %17 = vector.extract_strided_slice %4 {offsets = [0, 4, 0, 0], sizes = [2, 16, 16, 3], strides = [1, 1, 1, 1]} : vector<2x20x18x3xf32> to vector<2x16x16x3xf32>
    %18 = vector.extract_strided_slice %4 {offsets = [0, 4, 1, 0], sizes = [2, 16, 16, 3], strides = [1, 1, 1, 1]} : vector<2x20x18x3xf32> to vector<2x16x16x3xf32>
    %19 = vector.extract_strided_slice %4 {offsets = [0, 4, 2, 0], sizes = [2, 16, 16, 3], strides = [1, 1, 1, 1]} : vector<2x20x18x3xf32> to vector<2x16x16x3xf32>
    %20 = tpu.concatenate %5, %6, %7, %8, %9, %10, %11, %12, %13, %14, %15, %16, %17, %18, %19 in 3 : vector<2x16x16x3xf32>, vector<2x16x16x3xf32>, vector<2x16x16x3xf32>, vector<2x16x16x3xf32>, vector<2x16x16x3xf32>, vector<2x16x16x3xf32>, vector<2x16x16x3xf32>, vector<2x16x16x3xf32>, vector<2x16x16x3xf32>, vector<2x16x16x3xf32>, vector<2x16x16x3xf32>, vector<2x16x16x3xf32>, vector<2x16x16x3xf32>, vector<2x16x16x3xf32>, vector<2x16x16x3xf32> -> vector<2x16x16x45xf32>
    %21 = vector.shape_cast %20 : vector<2x16x16x45xf32> to vector<512x45xf32>
    %c0_4 = arith.constant 0 : index
    %c0_5 = arith.constant 0 : index
    %22 = vector.load %arg2[%c0_4, %c0_5] : memref<45x16xf32, #tpu.memory_space<vmem>>, vector<45x16xf32>
    %cst_6 = arith.constant dense<0.000000e+00> : vector<512x16xf32>
    %23 = tpu.matmul %21, %22, %cst_6 {dimension_numbers = #tpu.dot_dimension_numbers<[1], [0], [0], [1], [0, 0, 1, 1], [], []>} : vector<512x45xf32>, vector<45x16xf32>, vector<512x16xf32> -> vector<512x16xf32>
    %c0_7 = arith.constant 0 : index
    %c0_8 = arith.constant 0 : index
    %24 = vector.load %arg3[%c0_7, %c0_8] : memref<1x16xf32, #tpu.memory_space<vmem>>, vector<1x16xf32>
    %25 = vector.broadcast %24 : vector<1x16xf32> to vector<512x16xf32>
    %26 = arith.addf %23, %25 : vector<512x16xf32>
    %cst_9 = arith.constant 0.000000e+00 : f32
    %27 = vector.broadcast %cst_9 : f32 to vector<512x16xf32>
    %28 = arith.maximumf %26, %27 : vector<512x16xf32>
    %29 = vector.shape_cast %28 : vector<512x16xf32> to vector<2x16x16x16xf32>
    %30 = vector.shape_cast %29 : vector<2x16x16x16xf32> to vector<2x8x2x16x16xf32>
    %cst_10 = arith.constant dense<0xFF800000> : vector<2x8x16x16xf32>
    %31 = vector.multi_reduction <maximumf>, %30, %cst_10 [2] : vector<2x8x2x16x16xf32> to vector<2x8x16x16xf32>
    %cst_11 = arith.constant 0.000000e+00 : f32
    %32 = vector.broadcast %cst_11 : f32 to vector<2x2x16x16xf32>
    %33 = tpu.concatenate %32, %31, %32 in 1 : vector<2x2x16x16xf32>, vector<2x8x16x16xf32>, vector<2x2x16x16xf32> -> vector<2x12x16x16xf32>
    %cst_12 = arith.constant 0.000000e+00 : f32
    %34 = vector.broadcast %cst_12 : f32 to vector<2x12x1x16xf32>
    %35 = tpu.concatenate %34, %33, %34 in 2 : vector<2x12x1x16xf32>, vector<2x12x16x16xf32>, vector<2x12x1x16xf32> -> vector<2x12x18x16xf32>
    %36 = vector.extract_strided_slice %35 {offsets = [0, 0, 0, 0], sizes = [2, 8, 16, 16], strides = [1, 1, 1, 1]} : vector<2x12x18x16xf32> to vector<2x8x16x16xf32>
    %37 = vector.extract_strided_slice %35 {offsets = [0, 0, 1, 0], sizes = [2, 8, 16, 16], strides = [1, 1, 1, 1]} : vector<2x12x18x16xf32> to vector<2x8x16x16xf32>
    %38 = vector.extract_strided_slice %35 {offsets = [0, 0, 2, 0], sizes = [2, 8, 16, 16], strides = [1, 1, 1, 1]} : vector<2x12x18x16xf32> to vector<2x8x16x16xf32>
    %39 = vector.extract_strided_slice %35 {offsets = [0, 1, 0, 0], sizes = [2, 8, 16, 16], strides = [1, 1, 1, 1]} : vector<2x12x18x16xf32> to vector<2x8x16x16xf32>
    %40 = vector.extract_strided_slice %35 {offsets = [0, 1, 1, 0], sizes = [2, 8, 16, 16], strides = [1, 1, 1, 1]} : vector<2x12x18x16xf32> to vector<2x8x16x16xf32>
    %41 = vector.extract_strided_slice %35 {offsets = [0, 1, 2, 0], sizes = [2, 8, 16, 16], strides = [1, 1, 1, 1]} : vector<2x12x18x16xf32> to vector<2x8x16x16xf32>
    %42 = vector.extract_strided_slice %35 {offsets = [0, 2, 0, 0], sizes = [2, 8, 16, 16], strides = [1, 1, 1, 1]} : vector<2x12x18x16xf32> to vector<2x8x16x16xf32>
    %43 = vector.extract_strided_slice %35 {offsets = [0, 2, 1, 0], sizes = [2, 8, 16, 16], strides = [1, 1, 1, 1]} : vector<2x12x18x16xf32> to vector<2x8x16x16xf32>
    %44 = vector.extract_strided_slice %35 {offsets = [0, 2, 2, 0], sizes = [2, 8, 16, 16], strides = [1, 1, 1, 1]} : vector<2x12x18x16xf32> to vector<2x8x16x16xf32>
    %45 = vector.extract_strided_slice %35 {offsets = [0, 3, 0, 0], sizes = [2, 8, 16, 16], strides = [1, 1, 1, 1]} : vector<2x12x18x16xf32> to vector<2x8x16x16xf32>
    %46 = vector.extract_strided_slice %35 {offsets = [0, 3, 1, 0], sizes = [2, 8, 16, 16], strides = [1, 1, 1, 1]} : vector<2x12x18x16xf32> to vector<2x8x16x16xf32>
    %47 = vector.extract_strided_slice %35 {offsets = [0, 3, 2, 0], sizes = [2, 8, 16, 16], strides = [1, 1, 1, 1]} : vector<2x12x18x16xf32> to vector<2x8x16x16xf32>
    %48 = vector.extract_strided_slice %35 {offsets = [0, 4, 0, 0], sizes = [2, 8, 16, 16], strides = [1, 1, 1, 1]} : vector<2x12x18x16xf32> to vector<2x8x16x16xf32>
    %49 = vector.extract_strided_slice %35 {offsets = [0, 4, 1, 0], sizes = [2, 8, 16, 16], strides = [1, 1, 1, 1]} : vector<2x12x18x16xf32> to vector<2x8x16x16xf32>
    %50 = vector.extract_strided_slice %35 {offsets = [0, 4, 2, 0], sizes = [2, 8, 16, 16], strides = [1, 1, 1, 1]} : vector<2x12x18x16xf32> to vector<2x8x16x16xf32>
    %51 = tpu.concatenate %36, %37, %38, %39, %40, %41, %42, %43, %44, %45, %46, %47, %48, %49, %50 in 3 : vector<2x8x16x16xf32>, vector<2x8x16x16xf32>, vector<2x8x16x16xf32>, vector<2x8x16x16xf32>, vector<2x8x16x16xf32>, vector<2x8x16x16xf32>, vector<2x8x16x16xf32>, vector<2x8x16x16xf32>, vector<2x8x16x16xf32>, vector<2x8x16x16xf32>, vector<2x8x16x16xf32>, vector<2x8x16x16xf32>, vector<2x8x16x16xf32>, vector<2x8x16x16xf32>, vector<2x8x16x16xf32> -> vector<2x8x16x240xf32>
    %52 = vector.shape_cast %51 : vector<2x8x16x240xf32> to vector<256x240xf32>
    %c0_13 = arith.constant 0 : index
    %c0_14 = arith.constant 0 : index
    %53 = vector.load %arg4[%c0_13, %c0_14] : memref<240x32xf32, #tpu.memory_space<vmem>>, vector<240x32xf32>
    %cst_15 = arith.constant dense<0.000000e+00> : vector<256x32xf32>
    %54 = tpu.matmul %52, %53, %cst_15 {dimension_numbers = #tpu.dot_dimension_numbers<[1], [0], [0], [1], [0, 0, 1, 1], [], []>} : vector<256x240xf32>, vector<240x32xf32>, vector<256x32xf32> -> vector<256x32xf32>
    %c0_16 = arith.constant 0 : index
    %c0_17 = arith.constant 0 : index
    %55 = vector.load %arg5[%c0_16, %c0_17] : memref<1x32xf32, #tpu.memory_space<vmem>>, vector<1x32xf32>
    %56 = vector.broadcast %55 : vector<1x32xf32> to vector<256x32xf32>
    %57 = arith.addf %54, %56 : vector<256x32xf32>
    %cst_18 = arith.constant 0.000000e+00 : f32
    %58 = vector.broadcast %cst_18 : f32 to vector<256x32xf32>
    %59 = arith.maximumf %57, %58 : vector<256x32xf32>
    %60 = vector.shape_cast %59 : vector<256x32xf32> to vector<2x8x16x32xf32>
    %61 = vector.shape_cast %60 : vector<2x8x16x32xf32> to vector<2x4x2x16x32xf32>
    %cst_19 = arith.constant dense<0xFF800000> : vector<2x4x16x32xf32>
    %62 = vector.multi_reduction <maximumf>, %61, %cst_19 [2] : vector<2x4x2x16x32xf32> to vector<2x4x16x32xf32>
    %63 = vector.shape_cast %62 : vector<2x4x16x32xf32> to vector<2x4x1x16x32xf32>
    %cst_20 = arith.constant dense<0.000000e+00> : vector<2x4x16x32xf32>
    %64 = vector.multi_reduction <add>, %63, %cst_20 [2] : vector<2x4x1x16x32xf32> to vector<2x4x16x32xf32>
    %cst_21 = arith.constant 1.000000e+00 : f32
    %65 = vector.broadcast %cst_21 : f32 to vector<2x4x16x32xf32>
    %66 = arith.divf %64, %65 : vector<2x4x16x32xf32>
    %67 = vector.shape_cast %66 : vector<2x4x16x32xf32> to vector<2x4x4x4x32xf32>
    %cst_22 = arith.constant dense<0.000000e+00> : vector<2x4x4x32xf32>
    %68 = vector.multi_reduction <add>, %67, %cst_22 [3] : vector<2x4x4x4x32xf32> to vector<2x4x4x32xf32>
    %cst_23 = arith.constant 4.000000e+00 : f32
    %69 = vector.broadcast %cst_23 : f32 to vector<2x4x4x32xf32>
    %70 = arith.divf %68, %69 : vector<2x4x4x32xf32>
    %71 = vector.extract_strided_slice %70 {offsets = [0, 0, 0, 0], sizes = [2, 1, 1, 32], strides = [1, 1, 1, 1]} : vector<2x4x4x32xf32> to vector<2x1x1x32xf32>
    %72 = vector.shape_cast %71 : vector<2x1x1x32xf32> to vector<2x32xf32>
    %73 = vector.extract_strided_slice %70 {offsets = [0, 0, 1, 0], sizes = [2, 1, 1, 32], strides = [1, 1, 1, 1]} : vector<2x4x4x32xf32> to vector<2x1x1x32xf32>
    %74 = vector.shape_cast %73 : vector<2x1x1x32xf32> to vector<2x32xf32>
    %75 = vector.extract_strided_slice %70 {offsets = [0, 0, 2, 0], sizes = [2, 1, 1, 32], strides = [1, 1, 1, 1]} : vector<2x4x4x32xf32> to vector<2x1x1x32xf32>
    %76 = vector.shape_cast %75 : vector<2x1x1x32xf32> to vector<2x32xf32>
    %77 = vector.extract_strided_slice %70 {offsets = [0, 0, 3, 0], sizes = [2, 1, 1, 32], strides = [1, 1, 1, 1]} : vector<2x4x4x32xf32> to vector<2x1x1x32xf32>
    %78 = vector.shape_cast %77 : vector<2x1x1x32xf32> to vector<2x32xf32>
    %79 = vector.extract_strided_slice %70 {offsets = [0, 1, 0, 0], sizes = [2, 1, 1, 32], strides = [1, 1, 1, 1]} : vector<2x4x4x32xf32> to vector<2x1x1x32xf32>
    %80 = vector.shape_cast %79 : vector<2x1x1x32xf32> to vector<2x32xf32>
    %81 = vector.extract_strided_slice %70 {offsets = [0, 1, 1, 0], sizes = [2, 1, 1, 32], strides = [1, 1, 1, 1]} : vector<2x4x4x32xf32> to vector<2x1x1x32xf32>
    %82 = vector.shape_cast %81 : vector<2x1x1x32xf32> to vector<2x32xf32>
    %83 = vector.extract_strided_slice %70 {offsets = [0, 1, 2, 0], sizes = [2, 1, 1, 32], strides = [1, 1, 1, 1]} : vector<2x4x4x32xf32> to vector<2x1x1x32xf32>
    %84 = vector.shape_cast %83 : vector<2x1x1x32xf32> to vector<2x32xf32>
    %85 = vector.extract_strided_slice %70 {offsets = [0, 1, 3, 0], sizes = [2, 1, 1, 32], strides = [1, 1, 1, 1]} : vector<2x4x4x32xf32> to vector<2x1x1x32xf32>
    %86 = vector.shape_cast %85 : vector<2x1x1x32xf32> to vector<2x32xf32>
    %87 = vector.extract_strided_slice %70 {offsets = [0, 2, 0, 0], sizes = [2, 1, 1, 32], strides = [1, 1, 1, 1]} : vector<2x4x4x32xf32> to vector<2x1x1x32xf32>
    %88 = vector.shape_cast %87 : vector<2x1x1x32xf32> to vector<2x32xf32>
    %89 = vector.extract_strided_slice %70 {offsets = [0, 2, 1, 0], sizes = [2, 1, 1, 32], strides = [1, 1, 1, 1]} : vector<2x4x4x32xf32> to vector<2x1x1x32xf32>
    %90 = vector.shape_cast %89 : vector<2x1x1x32xf32> to vector<2x32xf32>
    %91 = vector.extract_strided_slice %70 {offsets = [0, 2, 2, 0], sizes = [2, 1, 1, 32], strides = [1, 1, 1, 1]} : vector<2x4x4x32xf32> to vector<2x1x1x32xf32>
    %92 = vector.shape_cast %91 : vector<2x1x1x32xf32> to vector<2x32xf32>
    %93 = vector.extract_strided_slice %70 {offsets = [0, 2, 3, 0], sizes = [2, 1, 1, 32], strides = [1, 1, 1, 1]} : vector<2x4x4x32xf32> to vector<2x1x1x32xf32>
    %94 = vector.shape_cast %93 : vector<2x1x1x32xf32> to vector<2x32xf32>
    %95 = vector.extract_strided_slice %70 {offsets = [0, 3, 0, 0], sizes = [2, 1, 1, 32], strides = [1, 1, 1, 1]} : vector<2x4x4x32xf32> to vector<2x1x1x32xf32>
    %96 = vector.shape_cast %95 : vector<2x1x1x32xf32> to vector<2x32xf32>
    %97 = vector.extract_strided_slice %70 {offsets = [0, 3, 1, 0], sizes = [2, 1, 1, 32], strides = [1, 1, 1, 1]} : vector<2x4x4x32xf32> to vector<2x1x1x32xf32>
    %98 = vector.shape_cast %97 : vector<2x1x1x32xf32> to vector<2x32xf32>
    %99 = vector.extract_strided_slice %70 {offsets = [0, 3, 2, 0], sizes = [2, 1, 1, 32], strides = [1, 1, 1, 1]} : vector<2x4x4x32xf32> to vector<2x1x1x32xf32>
    %100 = vector.shape_cast %99 : vector<2x1x1x32xf32> to vector<2x32xf32>
    %101 = vector.extract_strided_slice %70 {offsets = [0, 3, 3, 0], sizes = [2, 1, 1, 32], strides = [1, 1, 1, 1]} : vector<2x4x4x32xf32> to vector<2x1x1x32xf32>
    %102 = vector.shape_cast %101 : vector<2x1x1x32xf32> to vector<2x32xf32>
    %103 = tpu.concatenate %72, %74, %76, %78, %80, %82, %84, %86, %88, %90, %92, %94, %96, %98, %100, %102 in 1 : vector<2x32xf32>, vector<2x32xf32>, vector<2x32xf32>, vector<2x32xf32>, vector<2x32xf32>, vector<2x32xf32>, vector<2x32xf32>, vector<2x32xf32>, vector<2x32xf32>, vector<2x32xf32>, vector<2x32xf32>, vector<2x32xf32>, vector<2x32xf32>, vector<2x32xf32>, vector<2x32xf32>, vector<2x32xf32> -> vector<2x512xf32>
    %c0_24 = arith.constant 0 : index
    %c0_25 = arith.constant 0 : index
    %104 = vector.load %arg6[%c0_24, %c0_25] : memref<512x128xf32, #tpu.memory_space<vmem>>, vector<512x128xf32>
    %cst_26 = arith.constant dense<0.000000e+00> : vector<2x128xf32>
    %105 = tpu.matmul %103, %104, %cst_26 {dimension_numbers = #tpu.dot_dimension_numbers<[1], [0], [0], [1], [0, 0, 1, 1], [], []>} : vector<2x512xf32>, vector<512x128xf32>, vector<2x128xf32> -> vector<2x128xf32>
    %c0_27 = arith.constant 0 : index
    %c0_28 = arith.constant 0 : index
    %106 = vector.load %arg7[%c0_27, %c0_28] : memref<1x128xf32, #tpu.memory_space<vmem>>, vector<1x128xf32>
    %107 = vector.broadcast %106 : vector<1x128xf32> to vector<2x128xf32>
    %108 = arith.addf %105, %107 : vector<2x128xf32>
    %cst_29 = arith.constant 0.000000e+00 : f32
    %109 = vector.broadcast %cst_29 : f32 to vector<2x128xf32>
    %110 = arith.maximumf %108, %109 : vector<2x128xf32>
    %c0_30 = arith.constant 0 : index
    %c0_31 = arith.constant 0 : index
    %111 = vector.load %arg8[%c0_30, %c0_31] : memref<1x128xf32, #tpu.memory_space<vmem>>, vector<1x128xf32>
    %112 = vector.broadcast %111 : vector<1x128xf32> to vector<2x128xf32>
    %113 = arith.mulf %110, %112 : vector<2x128xf32>
    %cst_32 = arith.constant dense<0.000000e+00> : vector<2xf32>
    %114 = vector.multi_reduction <add>, %113, %cst_32 [1] : vector<2x128xf32> to vector<2xf32>
    %115 = vector.shape_cast %114 : vector<2xf32> to vector<2x1xf32>
    %c0_33 = arith.constant 0 : index
    %c0_34 = arith.constant 0 : index
    %116 = vector.load %arg9[%c0_33, %c0_34] : memref<1x1xf32, #tpu.memory_space<vmem>>, vector<1x1xf32>
    %117 = vector.broadcast %116 : vector<1x1xf32> to vector<2x1xf32>
    %118 = arith.addf %115, %117 : vector<2x1xf32>
    %119 = math.tanh %118 : vector<2x1xf32>
    %cst_35 = arith.constant 1.000000e+01 : f32
    %120 = vector.broadcast %cst_35 : f32 to vector<2x1xf32>
    %121 = arith.mulf %119, %120 : vector<2x1xf32>
    %c0_36 = arith.constant 0 : index
    %c0_37 = arith.constant 0 : index
    %122 = vector.load %arg10[%c0_36, %c0_37] : memref<2x1xf32, #tpu.memory_space<vmem>>, vector<2x1xf32>
    tpu.vector_store %arg10[%c0_36, %c0_37], %121 {strides = array<i32>} : memref<2x1xf32, #tpu.memory_space<vmem>>, vector<2x1xf32>,
    return
  }
  func.func @transform_0(%arg0: i32) -> (i32, i32, i32, i32) {
    %c0_i32 = arith.constant 0 : i32
    %c0_i32_0 = arith.constant 0 : i32
    %c0_i32_1 = arith.constant 0 : i32
    %c0_i32_2 = arith.constant 0 : i32
    return %arg0, %c0_i32, %c0_i32_0, %c0_i32_1 : i32, i32, i32, i32
  }
  func.func @transform_1(%arg0: i32) -> (i32, i32) {
    %c0_i32 = arith.constant 0 : i32
    %c0_i32_0 = arith.constant 0 : i32
    %c0_i32_1 = arith.constant 0 : i32
    return %c0_i32, %c0_i32_0 : i32, i32
  }
  func.func @transform_2(%arg0: i32) -> (i32, i32) {
    %c0_i32 = arith.constant 0 : i32
    %c0_i32_0 = arith.constant 0 : i32
    %c0_i32_1 = arith.constant 0 : i32
    return %c0_i32, %c0_i32_0 : i32, i32
  }
  func.func @transform_3(%arg0: i32) -> (i32, i32) {
    %c0_i32 = arith.constant 0 : i32
    %c0_i32_0 = arith.constant 0 : i32
    %c0_i32_1 = arith.constant 0 : i32
    return %c0_i32, %c0_i32_0 : i32, i32
  }
  func.func @transform_4(%arg0: i32) -> (i32, i32) {
    %c0_i32 = arith.constant 0 : i32
    %c0_i32_0 = arith.constant 0 : i32
    %c0_i32_1 = arith.constant 0 : i32
    return %c0_i32, %c0_i32_0 : i32, i32
  }
  func.func @transform_5(%arg0: i32) -> (i32, i32) {
    %c0_i32 = arith.constant 0 : i32
    %c0_i32_0 = arith.constant 0 : i32
    %c0_i32_1 = arith.constant 0 : i32
    return %c0_i32, %c0_i32_0 : i32, i32
  }
  func.func @transform_6(%arg0: i32) -> (i32, i32) {
    %c0_i32 = arith.constant 0 : i32
    %c0_i32_0 = arith.constant 0 : i32
    %c0_i32_1 = arith.constant 0 : i32
    return %c0_i32, %c0_i32_0 : i32, i32
  }
  func.func @transform_7(%arg0: i32) -> (i32, i32) {
    %c0_i32 = arith.constant 0 : i32
    %c0_i32_0 = arith.constant 0 : i32
    %c0_i32_1 = arith.constant 0 : i32
    return %c0_i32, %c0_i32_0 : i32, i32
  }
  func.func @transform_8(%arg0: i32) -> (i32, i32) {
    %c0_i32 = arith.constant 0 : i32
    %c0_i32_0 = arith.constant 0 : i32
    %c0_i32_1 = arith.constant 0 : i32
    return %c0_i32, %c0_i32_0 : i32, i32
  }
  func.func @transform_9(%arg0: i32) -> (i32, i32) {
    %c0_i32 = arith.constant 0 : i32
    %c0_i32_0 = arith.constant 0 : i32
    return %arg0, %c0_i32 : i32, i32
  }
}

</mosaic_0001>

<llo_original>
// kernel: stock_cnn_forward.1
$region0: #{stock_cnn_forward.1}
  #allocation0 [shape = 'u32[]', space=smem, size = 0x4, offset = 0x4, fixed_abs, tag = 'smem constant byte address 0x4 - core index']
  #allocation1 [shape = 'u32[144,128]{1,0:T(1,128)}', space=vmem, size = 0x12000, scoped, tag = 'internal scratch']
  #allocation2 [shape = 'f32[1,1]{1,0:T(1,128)S(1)}', space=vmem, size = 0x200, scoped, tag = 'scoped memory for stock_cnn_forward.1']
  %s0 = inlined_call_operand.vmem [shape: f32[2,16,16,3], index: 0, kind: input, shape index: {}]
  %s1 = inlined_call_operand.vmem [shape: f32[45,16], index: 1, kind: input, shape index: {}]
  %s2 = inlined_call_operand.vmem [shape: f32[1,16], index: 2, kind: input, shape index: {}]
  %s3 = inlined_call_operand.vmem [shape: f32[240,32], index: 3, kind: input, shape index: {}]
  %s4 = inlined_call_operand.vmem [shape: f32[1,32], index: 4, kind: input, shape index: {}]
  %s5 = inlined_call_operand.vmem [shape: f32[512,128], index: 5, kind: input, shape index: {}]
  %s6 = inlined_call_operand.vmem [shape: f32[1,128], index: 6, kind: input, shape index: {}]
  %s7 = inlined_call_operand.vmem [shape: f32[1,128], index: 7, kind: input, shape index: {}]
  %s8 = inlined_call_operand.<no memory space> [shape: f32[1,1], index: 8, kind: input, shape index: {}]
  %s9 = inlined_call_operand.vmem [shape: f32[2,1], index: 9, kind: output, shape index: {}]
  %s10 = sld [smem:[#allocation0]]
  $region46: #{stock_cnn_forward.1} parent=0
    _
  %s12 = ssub.s32 1, %s10
  %s13 = scalar_select 0, %s12, %s10
  %v14 = vstv %s8
  %15 = vst [vmem:[#allocation2] sm:$0x1] %v14
  // Predicated region
  $region2: #{stock_cnn_forward.1} parent=0 // pred_check
    _
  $region3: #{stock_cnn_forward.1} parent=0 // pred_check_branch
    %17 = sbr.rel (0) target = $region5
  $region4: #{stock_cnn_forward.1} parent=0 // pred_region
    _
  $region5: #{stock_cnn_forward.1} parent=0 // pred_fallthru
    _
  // Predicated region
  $region6: #{stock_cnn_forward.1} parent=0 // pred_check
    _
  $region7: #{stock_cnn_forward.1} parent=0 // pred_check_branch
    %19 = sbr.rel (0) target = $region9
  $region8: #{stock_cnn_forward.1} parent=0 // pred_region
    _
  $region9: #{stock_cnn_forward.1} parent=0 // pred_fallthru
    _
  // Predicated region
  $region10: #{stock_cnn_forward.1} parent=0 // pred_check
    _
  $region11: #{stock_cnn_forward.1} parent=0 // pred_check_branch
    %21 = sbr.rel (0) target = $region13
  $region12: #{stock_cnn_forward.1} parent=0 // pred_region
    _
  $region13: #{stock_cnn_forward.1} parent=0 // pred_fallthru
    _
  // Predicated region
  $region14: #{stock_cnn_forward.1} parent=0 // pred_check
    _
  $region15: #{stock_cnn_forward.1} parent=0 // pred_check_branch
    %23 = sbr.rel (0) target = $region17
  $region16: #{stock_cnn_forward.1} parent=0 // pred_region
    _
  $region17: #{stock_cnn_forward.1} parent=0 // pred_fallthru
    _
  // Predicated region
  $region18: #{stock_cnn_forward.1} parent=0 // pred_check
    _
  $region19: #{stock_cnn_forward.1} parent=0 // pred_check_branch
    %25 = sbr.rel (0) target = $region21
  $region20: #{stock_cnn_forward.1} parent=0 // pred_region
    _
  $region21: #{stock_cnn_forward.1} parent=0 // pred_fallthru
    _
  // Predicated region
  $region22: #{stock_cnn_forward.1} parent=0 // pred_check
    _
  $region23: #{stock_cnn_forward.1} parent=0 // pred_check_branch
    %27 = sbr.rel (0) target = $region25
  $region24: #{stock_cnn_forward.1} parent=0 // pred_region
    _
  $region25: #{stock_cnn_forward.1} parent=0 // pred_fallthru
    _
  // Predicated region
  $region26: #{stock_cnn_forward.1} parent=0 // pred_check
    _
  $region27: #{stock_cnn_forward.1} parent=0 // pred_check_branch
    %29 = sbr.rel (0) target = $region29
  $region28: #{stock_cnn_forward.1} parent=0 // pred_region
    _
  $region29: #{stock_cnn_forward.1} parent=0 // pred_fallthru
    _
  // Predicated region
  $region30: #{stock_cnn_forward.1} parent=0 // pred_check
    _
  $region31: #{stock_cnn_forward.1} parent=0 // pred_check_branch
    %31 = sbr.rel (0) target = $region33
  $region32: #{stock_cnn_forward.1} parent=0 // pred_region
    _
  $region33: #{stock_cnn_forward.1} parent=0 // pred_fallthru
    _
  // Predicated region
  $region34: #{stock_cnn_forward.1} parent=0 // pred_check
    _
  $region35: #{stock_cnn_forward.1} parent=0 // pred_check_branch
    %33 = sbr.rel (0) target = $region37
  $region36: #{stock_cnn_forward.1} parent=0 // pred_region
    _
  $region37: #{stock_cnn_forward.1} parent=0 // pred_fallthru
    _
  %v34 = vld [vmem:[%s0] sm:$0xff]
  %v35 = vld [vmem:[%s0 + $0x8] sm:$0xff]
  %v36 = vld [vmem:[%s0 + $0x10] sm:$0xff]
  %v37 = vld [vmem:[%s0 + $0x18] sm:$0xff]
  %v38 = vld [vmem:[%s0 + $0x20] sm:$0xff]
  %v39 = vld [vmem:[%s0 + $0x28] sm:$0xff]
  %v40 = vld [vmem:[%s0 + $0x30] sm:$0xff]
  %v41 = vld [vmem:[%s0 + $0x38] sm:$0xff]
  %v42 = vld [vmem:[%s0 + $0x40] sm:$0xff]
  %v43 = vld [vmem:[%s0 + $0x48] sm:$0xff]
  %v44 = vld [vmem:[%s0 + $0x50] sm:$0xff]
  %v45 = vld [vmem:[%s0 + $0x58] sm:$0xff]
  %v46 = vld [vmem:[%s0 + $0x60] sm:$0xff]
  %v47 = vld [vmem:[%s0 + $0x68] sm:$0xff]
  %v48 = vld [vmem:[%s0 + $0x70] sm:$0xff]
  %v49 = vld [vmem:[%s0 + $0x78] sm:$0xff]
  %v50 = vld [vmem:[%s0 + $0x80] sm:$0xff]
  %v51 = vld [vmem:[%s0 + $0x88] sm:$0xff]
  %v52 = vld [vmem:[%s0 + $0x90] sm:$0xff]
  %v53 = vld [vmem:[%s0 + $0x98] sm:$0xff]
  %v54 = vld [vmem:[%s0 + $0xa0] sm:$0xff]
  %v55 = vld [vmem:[%s0 + $0xa8] sm:$0xff]
  %v56 = vld [vmem:[%s0 + $0xb0] sm:$0xff]
  %v57 = vld [vmem:[%s0 + $0xb8] sm:$0xff]
  %v58 = vld [vmem:[%s0 + $0xc0] sm:$0xff]
  %v59 = vld [vmem:[%s0 + $0xc8] sm:$0xff]
  %v60 = vld [vmem:[%s0 + $0xd0] sm:$0xff]
  %v61 = vld [vmem:[%s0 + $0xd8] sm:$0xff]
  %v62 = vld [vmem:[%s0 + $0xe0] sm:$0xff]
  %v63 = vld [vmem:[%s0 + $0xe8] sm:$0xff]
  %v64 = vld [vmem:[%s0 + $0xf0] sm:$0xff]
  %v65 = vld [vmem:[%s0 + $0xf8] sm:$0xff]
  %v66 = vld [vmem:[%s0 + $0x100] sm:$0xff]
  %v67 = vld [vmem:[%s0 + $0x108] sm:$0xff]
  %v68 = vld [vmem:[%s0 + $0x110] sm:$0xff]
  %v69 = vld [vmem:[%s0 + $0x118] sm:$0xff]
  %v70 = vld [vmem:[%s0 + $0x120] sm:$0xff]
  %v71 = vld [vmem:[%s0 + $0x128] sm:$0xff]
  %v72 = vld [vmem:[%s0 + $0x130] sm:$0xff]
  %v73 = vld [vmem:[%s0 + $0x138] sm:$0xff]
  %v74 = vld [vmem:[%s0 + $0x140] sm:$0xff]
  %v75 = vld [vmem:[%s0 + $0x148] sm:$0xff]
  %v76 = vld [vmem:[%s0 + $0x150] sm:$0xff]
  %v77 = vld [vmem:[%s0 + $0x158] sm:$0xff]
  %v78 = vld [vmem:[%s0 + $0x160] sm:$0xff]
  %v79 = vld [vmem:[%s0 + $0x168] sm:$0xff]
  %v80 = vld [vmem:[%s0 + $0x170] sm:$0xff]
  %v81 = vld [vmem:[%s0 + $0x178] sm:$0xff]
  %v82 = vld [vmem:[%s0 + $0x180] sm:$0xff]
  %v83 = vld [vmem:[%s0 + $0x188] sm:$0xff]
  %v84 = vld [vmem:[%s0 + $0x190] sm:$0xff]
  %v85 = vld [vmem:[%s0 + $0x198] sm:$0xff]
  %v86 = vld [vmem:[%s0 + $0x1a0] sm:$0xff]
  %v87 = vld [vmem:[%s0 + $0x1a8] sm:$0xff]
  %v88 = vld [vmem:[%s0 + $0x1b0] sm:$0xff]
  %v89 = vld [vmem:[%s0 + $0x1b8] sm:$0xff]
  %v90 = vld [vmem:[%s0 + $0x1c0] sm:$0xff]
  %v91 = vld [vmem:[%s0 + $0x1c8] sm:$0xff]
  %v92 = vld [vmem:[%s0 + $0x1d0] sm:$0xff]
  %v93 = vld [vmem:[%s0 + $0x1d8] sm:$0xff]
  %v94 = vld [vmem:[%s0 + $0x1e0] sm:$0xff]
  %v95 = vld [vmem:[%s0 + $0x1e8] sm:$0xff]
  %v96 = vld [vmem:[%s0 + $0x1f0] sm:$0xff]
  %v97 = vld [vmem:[%s0 + $0x1f8] sm:$0xff]
  %vm163 = vcmask 1040384
  %v164 = vrot.slane 0.0, 7
  %v165 = vsel %vm163, %v164, %v164
  %v166 = vrot.slane %v34, 7
  %v167 = vrot.slane %v35, 7
  %v168 = vsel %vm163, %v166, %v167
  %v169 = vrot.slane %v36, 7
  %v170 = vrot.slane %v37, 7
  %v171 = vsel %vm163, %v169, %v170
  %v172 = vrot.slane %v38, 7
  %v173 = vrot.slane %v39, 7
  %v174 = vsel %vm163, %v172, %v173
  %v175 = vrot.slane %v40, 7
  %v176 = vrot.slane %v41, 7
  %v177 = vsel %vm163, %v175, %v176
  %v178 = vrot.slane %v42, 7
  %v179 = vrot.slane %v43, 7
  %v180 = vsel %vm163, %v178, %v179
  %v181 = vrot.slane %v44, 7
  %v182 = vrot.slane %v45, 7
  %v183 = vsel %vm163, %v181, %v182
  %v184 = vrot.slane %v46, 7
  %v185 = vrot.slane %v47, 7
  %v186 = vsel %vm163, %v184, %v185
  %v187 = vrot.slane %v48, 7
  %v188 = vrot.slane %v49, 7
  %v189 = vsel %vm163, %v187, %v188
  %v190 = vrot.slane %v50, 7
  %v191 = vrot.slane %v51, 7
  %v192 = vsel %vm163, %v190, %v191
  %v193 = vrot.slane %v52, 7
  %v194 = vrot.slane %v53, 7
  %v195 = vsel %vm163, %v193, %v194
  %v196 = vrot.slane %v54, 7
  %v197 = vrot.slane %v55, 7
  %v198 = vsel %vm163, %v196, %v197
  %v199 = vrot.slane %v56, 7
  %v200 = vrot.slane %v57, 7
  %v201 = vsel %vm163, %v199, %v200
  %v202 = vrot.slane %v58, 7
  %v203 = vrot.slane %v59, 7
  %v204 = vsel %vm163, %v202, %v203
  %v205 = vrot.slane %v60, 7
  %v206 = vrot.slane %v61, 7
  %v207 = vsel %vm163, %v205, %v206
  %v208 = vrot.slane %v62, 7
  %v209 = vrot.slane %v63, 7
  %v210 = vsel %vm163, %v208, %v209
  %v211 = vrot.slane %v64, 7
  %v212 = vrot.slane %v65, 7
  %v213 = vsel %vm163, %v211, %v212
  %v214 = vrot.slane %v66, 7
  %v215 = vrot.slane %v67, 7
  %v216 = vsel %vm163, %v214, %v215
  %v217 = vrot.slane %v68, 7
  %v218 = vrot.slane %v69, 7
  %v219 = vsel %vm163, %v217, %v218
  %v220 = vrot.slane %v70, 7
  %v221 = vrot.slane %v71, 7
  %v222 = vsel %vm163, %v220, %v221
  %v223 = vrot.slane %v72, 7
  %v224 = vrot.slane %v73, 7
  %v225 = vsel %vm163, %v223, %v224
  %v226 = vrot.slane %v74, 7
  %v227 = vrot.slane %v75, 7
  %v228 = vsel %vm163, %v226, %v227
  %v229 = vrot.slane %v76, 7
  %v230 = vrot.slane %v77, 7
  %v231 = vsel %vm163, %v229, %v230
  %v232 = vrot.slane %v78, 7
  %v233 = vrot.slane %v79, 7
  %v234 = vsel %vm163, %v232, %v233
  %v235 = vrot.slane %v80, 7
  %v236 = vrot.slane %v81, 7
  %v237 = vsel %vm163, %v235, %v236
  %v238 = vrot.slane %v82, 7
  %v239 = vrot.slane %v83, 7
  %v240 = vsel %vm163, %v238, %v239
  %v241 = vrot.slane %v84, 7
  %v242 = vrot.slane %v85, 7
  %v243 = vsel %vm163, %v241, %v242
  %v244 = vrot.slane %v86, 7
  %v245 = vrot.slane %v87, 7
  %v246 = vsel %vm163, %v244, %v245
  %v247 = vrot.slane %v88, 7
  %v248 = vrot.slane %v89, 7
  %v249 = vsel %vm163, %v247, %v248
  %v250 = vrot.slane %v90, 7
  %v251 = vrot.slane %v91, 7
  %v252 = vsel %vm163, %v250, %v251
  %v253 = vrot.slane %v92, 7
  %v254 = vrot.slane %v93, 7
  %v255 = vsel %vm163, %v253, %v254
  %v256 = vrot.slane %v94, 7
  %v257 = vrot.slane %v95, 7
  %v258 = vsel %vm163, %v256, %v257
  %v259 = vrot.slane %v96, 7
  %v260 = vrot.slane %v97, 7
  %v261 = vsel %vm163, %v259, %v260
  %v356 = vsel %vm163, 0.0, %v164
  %v357 = vsel %vm163, 0.0, %v166
  %v358 = vsel %vm163, 0.0, %v169
  %v359 = vsel %vm163, 0.0, %v172
  %v360 = vsel %vm163, 0.0, %v175
  %v361 = vsel %vm163, 0.0, %v178
  %v362 = vsel %vm163, 0.0, %v181
  %v363 = vsel %vm163, 0.0, %v184
  %v364 = vsel %vm163, 0.0, %v187
  %v365 = vsel %vm163, 0.0, %v190
  %v366 = vsel %vm163, 0.0, %v193
  %v367 = vsel %vm163, 0.0, %v196
  %v368 = vsel %vm163, 0.0, %v199
  %v369 = vsel %vm163, 0.0, %v202
  %v370 = vsel %vm163, 0.0, %v205
  %v371 = vsel %vm163, 0.0, %v208
  %v372 = vsel %vm163, 0.0, %v211
  %v373 = vsel %vm163, 0.0, %v214
  %v374 = vsel %vm163, 0.0, %v217
  %v375 = vsel %vm163, 0.0, %v220
  %v376 = vsel %vm163, 0.0, %v223
  %v377 = vsel %vm163, 0.0, %v226
  %v378 = vsel %vm163, 0.0, %v229
  %v379 = vsel %vm163, 0.0, %v232
  %v380 = vsel %vm163, 0.0, %v235
  %v381 = vsel %vm163, 0.0, %v238
  %v382 = vsel %vm163, 0.0, %v241
  %v383 = vsel %vm163, 0.0, %v244
  %v384 = vsel %vm163, 0.0, %v247
  %v385 = vsel %vm163, 0.0, %v250
  %v386 = vsel %vm163, 0.0, %v253
  %v387 = vsel %vm163, 0.0, %v256
  %v388 = vsel %vm163, 0.0, %v259
  %v389 = vsel %vm163, %v164, 0.0
  %v390 = vsel %vm163, %v167, 0.0
  %v391 = vsel %vm163, %v170, 0.0
  %v392 = vsel %vm163, %v173, 0.0
  %v393 = vsel %vm163, %v176, 0.0
  %v394 = vsel %vm163, %v179, 0.0
  %v395 = vsel %vm163, %v182, 0.0
  %v396 = vsel %vm163, %v185, 0.0
  %v397 = vsel %vm163, %v188, 0.0
  %v398 = vsel %vm163, %v191, 0.0
  %v399 = vsel %vm163, %v194, 0.0
  %v400 = vsel %vm163, %v197, 0.0
  %v401 = vsel %vm163, %v200, 0.0
  %v402 = vsel %vm163, %v203, 0.0
  %v403 = vsel %vm163, %v206, 0.0
  %v404 = vsel %vm163, %v209, 0.0
  %v405 = vsel %vm163, %v212, 0.0
  %v406 = vsel %vm163, %v215, 0.0
  %v407 = vsel %vm163, %v218, 0.0
  %v408 = vsel %vm163, %v221, 0.0
  %v409 = vsel %vm163, %v224, 0.0
  %v410 = vsel %vm163, %v227, 0.0
  %v411 = vsel %vm163, %v230, 0.0
  %v412 = vsel %vm163, %v233, 0.0
  %v413 = vsel %vm163, %v236, 0.0
  %v414 = vsel %vm163, %v239, 0.0
  %v415 = vsel %vm163, %v242, 0.0
  %v416 = vsel %vm163, %v245, 0.0
  %v417 = vsel %vm163, %v248, 0.0
  %v418 = vsel %vm163, %v251, 0.0
  %v419 = vsel %vm163, %v254, 0.0
  %v420 = vsel %vm163, %v257, 0.0
  %v421 = vsel %vm163, %v260, 0.0
  %vm480 = vcmask 1046528
  %v481 = vrot.slane %v356, 1
  %v482 = vrot.slane %v165, 1
  %v483 = vsel %vm480, %v481, %v482
  %v484 = vrot.slane %v389, 1
  %v485 = vsel %vm480, %v482, %v484
  %v486 = vrot.slane %v357, 1
  %v487 = vrot.slane %v168, 1
  %v488 = vsel %vm480, %v486, %v487
  %v489 = vrot.slane %v390, 1
  %v490 = vsel %vm480, %v487, %v489
  %v491 = vrot.slane %v358, 1
  %v492 = vrot.slane %v171, 1
  %v493 = vsel %vm480, %v491, %v492
  %v494 = vrot.slane %v391, 1
  %v495 = vsel %vm480, %v492, %v494
  %v496 = vrot.slane %v359, 1
  %v497 = vrot.slane %v174, 1
  %v498 = vsel %vm480, %v496, %v497
  %v499 = vrot.slane %v392, 1
  %v500 = vsel %vm480, %v497, %v499
  %v501 = vrot.slane %v360, 1
  %v502 = vrot.slane %v177, 1
  %v503 = vsel %vm480, %v501, %v502
  %v504 = vrot.slane %v393, 1
  %v505 = vsel %vm480, %v502, %v504
  %v506 = vrot.slane %v361, 1
  %v507 = vrot.slane %v180, 1
  %v508 = vsel %vm480, %v506, %v507
  %v509 = vrot.slane %v394, 1
  %v510 = vsel %vm480, %v507, %v509
  %v511 = vrot.slane %v362, 1
  %v512 = vrot.slane %v183, 1
  %v513 = vsel %vm480, %v511, %v512
  %v514 = vrot.slane %v395, 1
  %v515 = vsel %vm480, %v512, %v514
  %v516 = vrot.slane %v363, 1
  %v517 = vrot.slane %v186, 1
  %v518 = vsel %vm480, %v516, %v517
  %v519 = vrot.slane %v396, 1
  %v520 = vsel %vm480, %v517, %v519
  %v521 = vrot.slane %v364, 1
  %v522 = vrot.slane %v189, 1
  %v523 = vsel %vm480, %v521, %v522
  %v524 = vrot.slane %v397, 1
  %v525 = vsel %vm480, %v522, %v524
  %v526 = vrot.slane %v365, 1
  %v527 = vrot.slane %v192, 1
  %v528 = vsel %vm480, %v526, %v527
  %v529 = vrot.slane %v398, 1
  %v530 = vsel %vm480, %v527, %v529
  %v531 = vrot.slane %v366, 1
  %v532 = vrot.slane %v195, 1
  %v533 = vsel %vm480, %v531, %v532
  %v534 = vrot.slane %v399, 1
  %v535 = vsel %vm480, %v532, %v534
  %v536 = vrot.slane %v367, 1
  %v537 = vrot.slane %v198, 1
  %v538 = vsel %vm480, %v536, %v537
  %v539 = vrot.slane %v400, 1
  %v540 = vsel %vm480, %v537, %v539
  %v541 = vrot.slane %v368, 1
  %v542 = vrot.slane %v201, 1
  %v543 = vsel %vm480, %v541, %v542
  %v544 = vrot.slane %v401, 1
  %v545 = vsel %vm480, %v542, %v544
  %v546 = vrot.slane %v369, 1
  %v547 = vrot.slane %v204, 1
  %v548 = vsel %vm480, %v546, %v547
  %v549 = vrot.slane %v402, 1
  %v550 = vsel %vm480, %v547, %v549
  %v551 = vrot.slane %v370, 1
  %v552 = vrot.slane %v207, 1
  %v553 = vsel %vm480, %v551, %v552
  %v554 = vrot.slane %v403, 1
  %v555 = vsel %vm480, %v552, %v554
  %v556 = vrot.slane %v373, 1
  %v557 = vrot.slane %v216, 1
  %v558 = vsel %vm480, %v556, %v557
  %v559 = vrot.slane %v406, 1
  %v560 = vsel %vm480, %v557, %v559
  %v561 = vrot.slane %v374, 1
  %v562 = vrot.slane %v219, 1
  %v563 = vsel %vm480, %v561, %v562
  %v564 = vrot.slane %v407, 1
  %v565 = vsel %vm480, %v562, %v564
  %v566 = vrot.slane %v375, 1
  %v567 = vrot.slane %v222, 1
  %v568 = vsel %vm480, %v566, %v567
  %v569 = vrot.slane %v408, 1
  %v570 = vsel %vm480, %v567, %v569
  %v571 = vrot.slane %v376, 1
  %v572 = vrot.slane %v225, 1
  %v573 = vsel %vm480, %v571, %v572
  %v574 = vrot.slane %v409, 1
  %v575 = vsel %vm480, %v572, %v574
  %v576 = vrot.slane %v377, 1
  %v577 = vrot.slane %v228, 1
  %v578 = vsel %vm480, %v576, %v577
  %v579 = vrot.slane %v410, 1
  %v580 = vsel %vm480, %v577, %v579
  %v581 = vrot.slane %v378, 1
  %v582 = vrot.slane %v231, 1
  %v583 = vsel %vm480, %v581, %v582
  %v584 = vrot.slane %v411, 1
  %v585 = vsel %vm480, %v582, %v584
  %v586 = vrot.slane %v379, 1
  %v587 = vrot.slane %v234, 1
  %v588 = vsel %vm480, %v586, %v587
  %v589 = vrot.slane %v412, 1
  %v590 = vsel %vm480, %v587, %v589
  %v591 = vrot.slane %v380, 1
  %v592 = vrot.slane %v237, 1
  %v593 = vsel %vm480, %v591, %v592
  %v594 = vrot.slane %v413, 1
  %v595 = vsel %vm480, %v592, %v594
  %v596 = vrot.slane %v381, 1
  %v597 = vrot.slane %v240, 1
  %v598 = vsel %vm480, %v596, %v597
  %v599 = vrot.slane %v414, 1
  %v600 = vsel %vm480, %v597, %v599
  %v601 = vrot.slane %v382, 1
  %v602 = vrot.slane %v243, 1
  %v603 = vsel %vm480, %v601, %v602
  %v604 = vrot.slane %v415, 1
  %v605 = vsel %vm480, %v602, %v604
  %v606 = vrot.slane %v383, 1
  %v607 = vrot.slane %v246, 1
  %v608 = vsel %vm480, %v606, %v607
  %v609 = vrot.slane %v416, 1
  %v610 = vsel %vm480, %v607, %v609
  %v611 = vrot.slane %v384, 1
  %v612 = vrot.slane %v249, 1
  %v613 = vsel %vm480, %v611, %v612
  %v614 = vrot.slane %v417, 1
  %v615 = vsel %vm480, %v612, %v614
  %v616 = vrot.slane %v385, 1
  %v617 = vrot.slane %v252, 1
  %v618 = vsel %vm480, %v616, %v617
  %v619 = vrot.slane %v418, 1
  %v620 = vsel %vm480, %v617, %v619
  %v621 = vrot.slane %v386, 1
  %v622 = vrot.slane %v255, 1
  %v623 = vsel %vm480, %v621, %v622
  %v624 = vrot.slane %v419, 1
  %v625 = vsel %vm480, %v622, %v624
  %626 = vrot.lane.b32.xlu0 %v483, 3
  %v627 = vpop.permute.xlu0 %626
  %628 = vrot.lane.b32.xlu0 %v485, 3
  %v629 = vpop.permute.xlu0 %628
  %630 = vrot.lane.b32.xlu0 %v488, 3
  %v631 = vpop.permute.xlu0 %630
  %632 = vrot.lane.b32.xlu0 %v490, 3
  %v633 = vpop.permute.xlu0 %632
  %634 = vrot.lane.b32.xlu0 %v493, 3
  %v635 = vpop.permute.xlu0 %634
  %636 = vrot.lane.b32.xlu0 %v495, 3
  %v637 = vpop.permute.xlu0 %636
  %638 = vrot.lane.b32.xlu0 %v498, 3
  %v639 = vpop.permute.xlu0 %638
  %640 = vrot.lane.b32.xlu0 %v500, 3
  %v641 = vpop.permute.xlu0 %640
  %642 = vrot.lane.b32.xlu0 %v503, 3
  %v643 = vpop.permute.xlu0 %642
  %644 = vrot.lane.b32.xlu0 %v505, 3
  %v645 = vpop.permute.xlu0 %644
  %646 = vrot.lane.b32.xlu0 %v508, 3
  %v647 = vpop.permute.xlu0 %646
  %648 = vrot.lane.b32.xlu0 %v510, 3
  %v649 = vpop.permute.xlu0 %648
  %650 = vrot.lane.b32.xlu0 %v513, 3
  %v651 = vpop.permute.xlu0 %650
  %652 = vrot.lane.b32.xlu0 %v515, 3
  %v653 = vpop.permute.xlu0 %652
  %654 = vrot.lane.b32.xlu0 %v518, 3
  %v655 = vpop.permute.xlu0 %654
  %656 = vrot.lane.b32.xlu0 %v520, 3
  %v657 = vpop.permute.xlu0 %656
  %658 = vrot.lane.b32.xlu0 %v523, 3
  %v659 = vpop.permute.xlu0 %658
  %660 = vrot.lane.b32.xlu0 %v525, 3
  %v661 = vpop.permute.xlu0 %660
  %662 = vrot.lane.b32.xlu0 %v528, 3
  %v663 = vpop.permute.xlu0 %662
  %664 = vrot.lane.b32.xlu0 %v530, 3
  %v665 = vpop.permute.xlu0 %664
  %666 = vrot.lane.b32.xlu0 %v533, 3
  %v667 = vpop.permute.xlu0 %666
  %668 = vrot.lane.b32.xlu0 %v535, 3
  %v669 = vpop.permute.xlu0 %668
  %670 = vrot.lane.b32.xlu0 %v538, 3
  %v671 = vpop.permute.xlu0 %670
  %672 = vrot.lane.b32.xlu0 %v540, 3
  %v673 = vpop.permute.xlu0 %672
  %674 = vrot.lane.b32.xlu0 %v543, 3
  %v675 = vpop.permute.xlu0 %674
  %676 = vrot.lane.b32.xlu0 %v545, 3
  %v677 = vpop.permute.xlu0 %676
  %678 = vrot.lane.b32.xlu0 %v548, 3
  %v679 = vpop.permute.xlu0 %678
  %680 = vrot.lane.b32.xlu0 %v550, 3
  %v681 = vpop.permute.xlu0 %680
  %682 = vrot.lane.b32.xlu0 %v553, 3
  %v683 = vpop.permute.xlu0 %682
  %684 = vrot.lane.b32.xlu0 %v555, 3
  %v685 = vpop.permute.xlu0 %684
  %686 = vrot.lane.b32.xlu0 %v558, 3
  %v687 = vpop.permute.xlu0 %686
  %688 = vrot.lane.b32.xlu0 %v560, 3
  %v689 = vpop.permute.xlu0 %688
  %690 = vrot.lane.b32.xlu0 %v563, 3
  %v691 = vpop.permute.xlu0 %690
  %692 = vrot.lane.b32.xlu0 %v565, 3
  %v693 = vpop.permute.xlu0 %692
  %694 = vrot.lane.b32.xlu0 %v568, 3
  %v695 = vpop.permute.xlu0 %694
  %696 = vrot.lane.b32.xlu0 %v570, 3
  %v697 = vpop.permute.xlu0 %696
  %698 = vrot.lane.b32.xlu0 %v573, 3
  %v699 = vpop.permute.xlu0 %698
  %700 = vrot.lane.b32.xlu0 %v575, 3
  %v701 = vpop.permute.xlu0 %700
  %702 = vrot.lane.b32.xlu0 %v578, 3
  %v703 = vpop.permute.xlu0 %702
  %704 = vrot.lane.b32.xlu0 %v580, 3
  %v705 = vpop.permute.xlu0 %704
  %706 = vrot.lane.b32.xlu0 %v583, 3
  %v707 = vpop.permute.xlu0 %706
  %708 = vrot.lane.b32.xlu0 %v585, 3
  %v709 = vpop.permute.xlu0 %708
  %710 = vrot.lane.b32.xlu0 %v588, 3
  %v711 = vpop.permute.xlu0 %710
  %712 = vrot.lane.b32.xlu0 %v590, 3
  %v713 = vpop.permute.xlu0 %712
  %714 = vrot.lane.b32.xlu0 %v593, 3
  %v715 = vpop.permute.xlu0 %714
  %716 = vrot.lane.b32.xlu0 %v595, 3
  %v717 = vpop.permute.xlu0 %716
  %718 = vrot.lane.b32.xlu0 %v598, 3
  %v719 = vpop.permute.xlu0 %718
  %720 = vrot.lane.b32.xlu0 %v600, 3
  %v721 = vpop.permute.xlu0 %720
  %722 = vrot.lane.b32.xlu0 %v603, 3
  %v723 = vpop.permute.xlu0 %722
  %724 = vrot.lane.b32.xlu0 %v605, 3
  %v725 = vpop.permute.xlu0 %724
  %726 = vrot.lane.b32.xlu0 %v608, 3
  %v727 = vpop.permute.xlu0 %726
  %728 = vrot.lane.b32.xlu0 %v610, 3
  %v729 = vpop.permute.xlu0 %728
  %730 = vrot.lane.b32.xlu0 %v613, 3
  %v731 = vpop.permute.xlu0 %730
  %732 = vrot.lane.b32.xlu0 %v615, 3
  %v733 = vpop.permute.xlu0 %732
  %734 = vrot.lane.b32.xlu0 %v618, 3
  %v735 = vpop.permute.xlu0 %734
  %736 = vrot.lane.b32.xlu0 %v620, 3
  %v737 = vpop.permute.xlu0 %736
  %738 = vrot.lane.b32.xlu0 %v623, 3
  %v739 = vpop.permute.xlu0 %738
  %740 = vrot.lane.b32.xlu0 %v625, 3
  %v741 = vpop.permute.xlu0 %740
  %vm800 = vcmask 1045504
  %v801 = vrot.slane %v356, 2
  %v802 = vrot.slane %v165, 2
  %v803 = vsel %vm800, %v801, %v802
  %v804 = vrot.slane %v389, 2
  %v805 = vsel %vm800, %v802, %v804
  %v806 = vrot.slane %v357, 2
  %v807 = vrot.slane %v168, 2
  %v808 = vsel %vm800, %v806, %v807
  %v809 = vrot.slane %v390, 2
  %v810 = vsel %vm800, %v807, %v809
  %v811 = vrot.slane %v358, 2
  %v812 = vrot.slane %v171, 2
  %v813 = vsel %vm800, %v811, %v812
  %v814 = vrot.slane %v391, 2
  %v815 = vsel %vm800, %v812, %v814
  %v816 = vrot.slane %v359, 2
  %v817 = vrot.slane %v174, 2
  %v818 = vsel %vm800, %v816, %v817
  %v819 = vrot.slane %v392, 2
  %v820 = vsel %vm800, %v817, %v819
  %v821 = vrot.slane %v360, 2
  %v822 = vrot.slane %v177, 2
  %v823 = vsel %vm800, %v821, %v822
  %v824 = vrot.slane %v393, 2
  %v825 = vsel %vm800, %v822, %v824
  %v826 = vrot.slane %v361, 2
  %v827 = vrot.slane %v180, 2
  %v828 = vsel %vm800, %v826, %v827
  %v829 = vrot.slane %v394, 2
  %v830 = vsel %vm800, %v827, %v829
  %v831 = vrot.slane %v362, 2
  %v832 = vrot.slane %v183, 2
  %v833 = vsel %vm800, %v831, %v832
  %v834 = vrot.slane %v395, 2
  %v835 = vsel %vm800, %v832, %v834
  %v836 = vrot.slane %v363, 2
  %v837 = vrot.slane %v186, 2
  %v838 = vsel %vm800, %v836, %v837
  %v839 = vrot.slane %v396, 2
  %v840 = vsel %vm800, %v837, %v839
  %v841 = vrot.slane %v364, 2
  %v842 = vrot.slane %v189, 2
  %v843 = vsel %vm800, %v841, %v842
  %v844 = vrot.slane %v397, 2
  %v845 = vsel %vm800, %v842, %v844
  %v846 = vrot.slane %v365, 2
  %v847 = vrot.slane %v192, 2
  %v848 = vsel %vm800, %v846, %v847
  %v849 = vrot.slane %v398, 2
  %v850 = vsel %vm800, %v847, %v849
  %v851 = vrot.slane %v366, 2
  %v852 = vrot.slane %v195, 2
  %v853 = vsel %vm800, %v851, %v852
  %v854 = vrot.slane %v399, 2
  %v855 = vsel %vm800, %v852, %v854
  %v856 = vrot.slane %v367, 2
  %v857 = vrot.slane %v198, 2
  %v858 = vsel %vm800, %v856, %v857
  %v859 = vrot.slane %v400, 2
  %v860 = vsel %vm800, %v857, %v859
  %v861 = vrot.slane %v368, 2
  %v862 = vrot.slane %v201, 2
  %v863 = vsel %vm800, %v861, %v862
  %v864 = vrot.slane %v401, 2
  %v865 = vsel %vm800, %v862, %v864
  %v866 = vrot.slane %v369, 2
  %v867 = vrot.slane %v204, 2
  %v868 = vsel %vm800, %v866, %v867
  %v869 = vrot.slane %v402, 2
  %v870 = vsel %vm800, %v867, %v869
  %v871 = vrot.slane %v370, 2
  %v872 = vrot.slane %v207, 2
  %v873 = vsel %vm800, %v871, %v872
  %v874 = vrot.slane %v403, 2
  %v875 = vsel %vm800, %v872, %v874
  %v876 = vrot.slane %v373, 2
  %v877 = vrot.slane %v216, 2
  %v878 = vsel %vm800, %v876, %v877
  %v879 = vrot.slane %v406, 2
  %v880 = vsel %vm800, %v877, %v879
  %v881 = vrot.slane %v374, 2
  %v882 = vrot.slane %v219, 2
  %v883 = vsel %vm800, %v881, %v882
  %v884 = vrot.slane %v407, 2
  %v885 = vsel %vm800, %v882, %v884
  %v886 = vrot.slane %v375, 2
  %v887 = vrot.slane %v222, 2
  %v888 = vsel %vm800, %v886, %v887
  %v889 = vrot.slane %v408, 2
  %v890 = vsel %vm800, %v887, %v889
  %v891 = vrot.slane %v376, 2
  %v892 = vrot.slane %v225, 2
  %v893 = vsel %vm800, %v891, %v892
  %v894 = vrot.slane %v409, 2
  %v895 = vsel %vm800, %v892, %v894
  %v896 = vrot.slane %v377, 2
  %v897 = vrot.slane %v228, 2
  %v898 = vsel %vm800, %v896, %v897
  %v899 = vrot.slane %v410, 2
  %v900 = vsel %vm800, %v897, %v899
  %v901 = vrot.slane %v378, 2
  %v902 = vrot.slane %v231, 2
  %v903 = vsel %vm800, %v901, %v902
  %v904 = vrot.slane %v411, 2
  %v905 = vsel %vm800, %v902, %v904
  %v906 = vrot.slane %v379, 2
  %v907 = vrot.slane %v234, 2
  %v908 = vsel %vm800, %v906, %v907
  %v909 = vrot.slane %v412, 2
  %v910 = vsel %vm800, %v907, %v909
  %v911 = vrot.slane %v380, 2
  %v912 = vrot.slane %v237, 2
  %v913 = vsel %vm800, %v911, %v912
  %v914 = vrot.slane %v413, 2
  %v915 = vsel %vm800, %v912, %v914
  %v916 = vrot.slane %v381, 2
  %v917 = vrot.slane %v240, 2
  %v918 = vsel %vm800, %v916, %v917
  %v919 = vrot.slane %v414, 2
  %v920 = vsel %vm800, %v917, %v919
  %v921 = vrot.slane %v382, 2
  %v922 = vrot.slane %v243, 2
  %v923 = vsel %vm800, %v921, %v922
  %v924 = vrot.slane %v415, 2
  %v925 = vsel %vm800, %v922, %v924
  %v926 = vrot.slane %v383, 2
  %v927 = vrot.slane %v246, 2
  %v928 = vsel %vm800, %v926, %v927
  %v929 = vrot.slane %v416, 2
  %v930 = vsel %vm800, %v927, %v929
  %v931 = vrot.slane %v384, 2
  %v932 = vrot.slane %v249, 2
  %v933 = vsel %vm800, %v931, %v932
  %v934 = vrot.slane %v417, 2
  %v935 = vsel %vm800, %v932, %v934
  %v936 = vrot.slane %v385, 2
  %v937 = vrot.slane %v252, 2
  %v938 = vsel %vm800, %v936, %v937
  %v939 = vrot.slane %v418, 2
  %v940 = vsel %vm800, %v937, %v939
  %v941 = vrot.slane %v386, 2
  %v942 = vrot.slane %v255, 2
  %v943 = vsel %vm800, %v941, %v942
  %v944 = vrot.slane %v419, 2
  %v945 = vsel %vm800, %v942, %v944
  %946 = vrot.lane.b32.xlu0 %v803, 6
  %v947 = vpop.permute.xlu0 %946
  %948 = vrot.lane.b32.xlu0 %v805, 6
  %v949 = vpop.permute.xlu0 %948
  %950 = vrot.lane.b32.xlu0 %v808, 6
  %v951 = vpop.permute.xlu0 %950
  %952 = vrot.lane.b32.xlu0 %v810, 6
  %v953 = vpop.permute.xlu0 %952
  %954 = vrot.lane.b32.xlu0 %v813, 6
  %v955 = vpop.permute.xlu0 %954
  %956 = vrot.lane.b32.xlu0 %v815, 6
  %v957 = vpop.permute.xlu0 %956
  %958 = vrot.lane.b32.xlu0 %v818, 6
  %v959 = vpop.permute.xlu0 %958
  %960 = vrot.lane.b32.xlu0 %v820, 6
  %v961 = vpop.permute.xlu0 %960
  %962 = vrot.lane.b32.xlu0 %v823, 6
  %v963 = vpop.permute.xlu0 %962
  %964 = vrot.lane.b32.xlu0 %v825, 6
  %v965 = vpop.permute.xlu0 %964
  %966 = vrot.lane.b32.xlu0 %v828, 6
  %v967 = vpop.permute.xlu0 %966
  %968 = vrot.lane.b32.xlu0 %v830, 6
  %v969 = vpop.permute.xlu0 %968
  %970 = vrot.lane.b32.xlu0 %v833, 6
  %v971 = vpop.permute.xlu0 %970
  %972 = vrot.lane.b32.xlu0 %v835, 6
  %v973 = vpop.permute.xlu0 %972
  %974 = vrot.lane.b32.xlu0 %v838, 6
  %v975 = vpop.permute.xlu0 %974
  %976 = vrot.lane.b32.xlu0 %v840, 6
  %v977 = vpop.permute.xlu0 %976
  %978 = vrot.lane.b32.xlu0 %v843, 6
  %v979 = vpop.permute.xlu0 %978
  %980 = vrot.lane.b32.xlu0 %v845, 6
  %v981 = vpop.permute.xlu0 %980
  %982 = vrot.lane.b32.xlu0 %v848, 6
  %v983 = vpop.permute.xlu0 %982
  %984 = vrot.lane.b32.xlu0 %v850, 6
  %v985 = vpop.permute.xlu0 %984
  %986 = vrot.lane.b32.xlu0 %v853, 6
  %v987 = vpop.permute.xlu0 %986
  %988 = vrot.lane.b32.xlu0 %v855, 6
  %v989 = vpop.permute.xlu0 %988
  %990 = vrot.lane.b32.xlu0 %v858, 6
  %v991 = vpop.permute.xlu0 %990
  %992 = vrot.lane.b32.xlu0 %v860, 6
  %v993 = vpop.permute.xlu0 %992
  %994 = vrot.lane.b32.xlu0 %v863, 6
  %v995 = vpop.permute.xlu0 %994
  %996 = vrot.lane.b32.xlu0 %v865, 6
  %v997 = vpop.permute.xlu0 %996
  %998 = vrot.lane.b32.xlu0 %v868, 6
  %v999 = vpop.permute.xlu0 %998
  %1000 = vrot.lane.b32.xlu0 %v870, 6
  %v1001 = vpop.permute.xlu0 %1000
  %1002 = vrot.lane.b32.xlu0 %v873, 6
  %v1003 = vpop.permute.xlu0 %1002
  %1004 = vrot.lane.b32.xlu0 %v875, 6
  %v1005 = vpop.permute.xlu0 %1004
  %1006 = vrot.lane.b32.xlu0 %v878, 6
  %v1007 = vpop.permute.xlu0 %1006
  %1008 = vrot.lane.b32.xlu0 %v880, 6
  %v1009 = vpop.permute.xlu0 %1008
  %1010 = vrot.lane.b32.xlu0 %v883, 6
  %v1011 = vpop.permute.xlu0 %1010
  %1012 = vrot.lane.b32.xlu0 %v885, 6
  %v1013 = vpop.permute.xlu0 %1012
  %1014 = vrot.lane.b32.xlu0 %v888, 6
  %v1015 = vpop.permute.xlu0 %1014
  %1016 = vrot.lane.b32.xlu0 %v890, 6
  %v1017 = vpop.permute.xlu0 %1016
  %1018 = vrot.lane.b32.xlu0 %v893, 6
  %v1019 = vpop.permute.xlu0 %1018
  %1020 = vrot.lane.b32.xlu0 %v895, 6
  %v1021 = vpop.permute.xlu0 %1020
  %1022 = vrot.lane.b32.xlu0 %v898, 6
  %v1023 = vpop.permute.xlu0 %1022
  %1024 = vrot.lane.b32.xlu0 %v900, 6
  %v1025 = vpop.permute.xlu0 %1024
  %1026 = vrot.lane.b32.xlu0 %v903, 6
  %v1027 = vpop.permute.xlu0 %1026
  %1028 = vrot.lane.b32.xlu0 %v905, 6
  %v1029 = vpop.permute.xlu0 %1028
  %1030 = vrot.lane.b32.xlu0 %v908, 6
  %v1031 = vpop.permute.xlu0 %1030
  %1032 = vrot.lane.b32.xlu0 %v910, 6
  %v1033 = vpop.permute.xlu0 %1032
  %1034 = vrot.lane.b32.xlu0 %v913, 6
  %v1035 = vpop.permute.xlu0 %1034
  %1036 = vrot.lane.b32.xlu0 %v915, 6
  %v1037 = vpop.permute.xlu0 %1036
  %1038 = vrot.lane.b32.xlu0 %v918, 6
  %v1039 = vpop.permute.xlu0 %1038
  %1040 = vrot.lane.b32.xlu0 %v920, 6
  %v1041 = vpop.permute.xlu0 %1040
  %1042 = vrot.lane.b32.xlu0 %v923, 6
  %v1043 = vpop.permute.xlu0 %1042
  %1044 = vrot.lane.b32.xlu0 %v925, 6
  %v1045 = vpop.permute.xlu0 %1044
  %1046 = vrot.lane.b32.xlu0 %v928, 6
  %v1047 = vpop.permute.xlu0 %1046
  %1048 = vrot.lane.b32.xlu0 %v930, 6
  %v1049 = vpop.permute.xlu0 %1048
  %1050 = vrot.lane.b32.xlu0 %v933, 6
  %v1051 = vpop.permute.xlu0 %1050
  %1052 = vrot.lane.b32.xlu0 %v935, 6
  %v1053 = vpop.permute.xlu0 %1052
  %1054 = vrot.lane.b32.xlu0 %v938, 6
  %v1055 = vpop.permute.xlu0 %1054
  %1056 = vrot.lane.b32.xlu0 %v940, 6
  %v1057 = vpop.permute.xlu0 %1056
  %1058 = vrot.lane.b32.xlu0 %v943, 6
  %v1059 = vpop.permute.xlu0 %1058
  %1060 = vrot.lane.b32.xlu0 %v945, 6
  %v1061 = vpop.permute.xlu0 %1060
  %1122 = vrot.lane.b32.xlu0 %v356, 9
  %v1123 = vpop.permute.xlu0 %1122
  %1124 = vrot.lane.b32.xlu0 %v165, 9
  %v1125 = vpop.permute.xlu0 %1124
  %1126 = vrot.lane.b32.xlu0 %v357, 9
  %v1127 = vpop.permute.xlu0 %1126
  %1128 = vrot.lane.b32.xlu0 %v168, 9
  %v1129 = vpop.permute.xlu0 %1128
  %1130 = vrot.lane.b32.xlu0 %v358, 9
  %v1131 = vpop.permute.xlu0 %1130
  %1132 = vrot.lane.b32.xlu0 %v171, 9
  %v1133 = vpop.permute.xlu0 %1132
  %1134 = vrot.lane.b32.xlu0 %v359, 9
  %v1135 = vpop.permute.xlu0 %1134
  %1136 = vrot.lane.b32.xlu0 %v174, 9
  %v1137 = vpop.permute.xlu0 %1136
  %1138 = vrot.lane.b32.xlu0 %v360, 9
  %v1139 = vpop.permute.xlu0 %1138
  %1140 = vrot.lane.b32.xlu0 %v177, 9
  %v1141 = vpop.permute.xlu0 %1140
  %1142 = vrot.lane.b32.xlu0 %v361, 9
  %v1143 = vpop.permute.xlu0 %1142
  %1144 = vrot.lane.b32.xlu0 %v180, 9
  %v1145 = vpop.permute.xlu0 %1144
  %1146 = vrot.lane.b32.xlu0 %v362, 9
  %v1147 = vpop.permute.xlu0 %1146
  %1148 = vrot.lane.b32.xlu0 %v183, 9
  %v1149 = vpop.permute.xlu0 %1148
  %1150 = vrot.lane.b32.xlu0 %v363, 9
  %v1151 = vpop.permute.xlu0 %1150
  %1152 = vrot.lane.b32.xlu0 %v186, 9
  %v1153 = vpop.permute.xlu0 %1152
  %1154 = vrot.lane.b32.xlu0 %v364, 9
  %v1155 = vpop.permute.xlu0 %1154
  %1156 = vrot.lane.b32.xlu0 %v189, 9
  %v1157 = vpop.permute.xlu0 %1156
  %1158 = vrot.lane.b32.xlu0 %v365, 9
  %v1159 = vpop.permute.xlu0 %1158
  %1160 = vrot.lane.b32.xlu0 %v192, 9
  %v1161 = vpop.permute.xlu0 %1160
  %1162 = vrot.lane.b32.xlu0 %v366, 9
  %v1163 = vpop.permute.xlu0 %1162
  %1164 = vrot.lane.b32.xlu0 %v195, 9
  %v1165 = vpop.permute.xlu0 %1164
  %1166 = vrot.lane.b32.xlu0 %v367, 9
  %v1167 = vpop.permute.xlu0 %1166
  %1168 = vrot.lane.b32.xlu0 %v198, 9
  %v1169 = vpop.permute.xlu0 %1168
  %1170 = vrot.lane.b32.xlu0 %v368, 9
  %v1171 = vpop.permute.xlu0 %1170
  %1172 = vrot.lane.b32.xlu0 %v201, 9
  %v1173 = vpop.permute.xlu0 %1172
  %1174 = vrot.lane.b32.xlu0 %v369, 9
  %v1175 = vpop.permute.xlu0 %1174
  %1176 = vrot.lane.b32.xlu0 %v204, 9
  %v1177 = vpop.permute.xlu0 %1176
  %1178 = vrot.lane.b32.xlu0 %v370, 9
  %v1179 = vpop.permute.xlu0 %1178
  %1180 = vrot.lane.b32.xlu0 %v207, 9
  %v1181 = vpop.permute.xlu0 %1180
  %1182 = vrot.lane.b32.xlu0 %v371, 9
  %v1183 = vpop.permute.xlu0 %1182
  %1184 = vrot.lane.b32.xlu0 %v210, 9
  %v1185 = vpop.permute.xlu0 %1184
  %1186 = vrot.lane.b32.xlu0 %v373, 9
  %v1187 = vpop.permute.xlu0 %1186
  %1188 = vrot.lane.b32.xlu0 %v216, 9
  %v1189 = vpop.permute.xlu0 %1188
  %1190 = vrot.lane.b32.xlu0 %v374, 9
  %v1191 = vpop.permute.xlu0 %1190
  %1192 = vrot.lane.b32.xlu0 %v219, 9
  %v1193 = vpop.permute.xlu0 %1192
  %1194 = vrot.lane.b32.xlu0 %v375, 9
  %v1195 = vpop.permute.xlu0 %1194
  %1196 = vrot.lane.b32.xlu0 %v222, 9
  %v1197 = vpop.permute.xlu0 %1196
  %1198 = vrot.lane.b32.xlu0 %v376, 9
  %v1199 = vpop.permute.xlu0 %1198
  %1200 = vrot.lane.b32.xlu0 %v225, 9
  %v1201 = vpop.permute.xlu0 %1200
  %1202 = vrot.lane.b32.xlu0 %v377, 9
  %v1203 = vpop.permute.xlu0 %1202
  %1204 = vrot.lane.b32.xlu0 %v228, 9
  %v1205 = vpop.permute.xlu0 %1204
  %1206 = vrot.lane.b32.xlu0 %v378, 9
  %v1207 = vpop.permute.xlu0 %1206
  %1208 = vrot.lane.b32.xlu0 %v231, 9
  %v1209 = vpop.permute.xlu0 %1208
  %1210 = vrot.lane.b32.xlu0 %v379, 9
  %v1211 = vpop.permute.xlu0 %1210
  %1212 = vrot.lane.b32.xlu0 %v234, 9
  %v1213 = vpop.permute.xlu0 %1212
  %1214 = vrot.lane.b32.xlu0 %v380, 9
  %v1215 = vpop.permute.xlu0 %1214
  %1216 = vrot.lane.b32.xlu0 %v237, 9
  %v1217 = vpop.permute.xlu0 %1216
  %1218 = vrot.lane.b32.xlu0 %v381, 9
  %v1219 = vpop.permute.xlu0 %1218
  %1220 = vrot.lane.b32.xlu0 %v240, 9
  %v1221 = vpop.permute.xlu0 %1220
  %1222 = vrot.lane.b32.xlu0 %v382, 9
  %v1223 = vpop.permute.xlu0 %1222
  %1224 = vrot.lane.b32.xlu0 %v243, 9
  %v1225 = vpop.permute.xlu0 %1224
  %1226 = vrot.lane.b32.xlu0 %v383, 9
  %v1227 = vpop.permute.xlu0 %1226
  %1228 = vrot.lane.b32.xlu0 %v246, 9
  %v1229 = vpop.permute.xlu0 %1228
  %1230 = vrot.lane.b32.xlu0 %v384, 9
  %v1231 = vpop.permute.xlu0 %1230
  %1232 = vrot.lane.b32.xlu0 %v249, 9
  %v1233 = vpop.permute.xlu0 %1232
  %1234 = vrot.lane.b32.xlu0 %v385, 9
  %v1235 = vpop.permute.xlu0 %1234
  %1236 = vrot.lane.b32.xlu0 %v252, 9
  %v1237 = vpop.permute.xlu0 %1236
  %1238 = vrot.lane.b32.xlu0 %v386, 9
  %v1239 = vpop.permute.xlu0 %1238
  %1240 = vrot.lane.b32.xlu0 %v255, 9
  %v1241 = vpop.permute.xlu0 %1240
  %1242 = vrot.lane.b32.xlu0 %v387, 9
  %v1243 = vpop.permute.xlu0 %1242
  %1244 = vrot.lane.b32.xlu0 %v258, 9
  %v1245 = vpop.permute.xlu0 %1244
  %v1310 = vrot.slane %v371, 1
  %v1311 = vrot.slane %v210, 1
  %v1312 = vsel %vm480, %v1310, %v1311
  %v1313 = vrot.slane %v404, 1
  %v1314 = vsel %vm480, %v1311, %v1313
  %v1315 = vrot.slane %v387, 1
  %v1316 = vrot.slane %v258, 1
  %v1317 = vsel %vm480, %v1315, %v1316
  %v1318 = vrot.slane %v420, 1
  %v1319 = vsel %vm480, %v1316, %v1318
  %1320 = vrot.lane.b32.xlu0 %v483, 12
  %v1321 = vpop.permute.xlu0 %1320
  %1322 = vrot.lane.b32.xlu0 %v485, 12
  %v1323 = vpop.permute.xlu0 %1322
  %1324 = vrot.lane.b32.xlu0 %v488, 12
  %v1325 = vpop.permute.xlu0 %1324
  %1326 = vrot.lane.b32.xlu0 %v490, 12
  %v1327 = vpop.permute.xlu0 %1326
  %1328 = vrot.lane.b32.xlu0 %v493, 12
  %v1329 = vpop.permute.xlu0 %1328
  %1330 = vrot.lane.b32.xlu0 %v495, 12
  %v1331 = vpop.permute.xlu0 %1330
  %1332 = vrot.lane.b32.xlu0 %v498, 12
  %v1333 = vpop.permute.xlu0 %1332
  %1334 = vrot.lane.b32.xlu0 %v500, 12
  %v1335 = vpop.permute.xlu0 %1334
  %1336 = vrot.lane.b32.xlu0 %v503, 12
  %v1337 = vpop.permute.xlu0 %1336
  %1338 = vrot.lane.b32.xlu0 %v505, 12
  %v1339 = vpop.permute.xlu0 %1338
  %1340 = vrot.lane.b32.xlu0 %v508, 12
  %v1341 = vpop.permute.xlu0 %1340
  %1342 = vrot.lane.b32.xlu0 %v510, 12
  %v1343 = vpop.permute.xlu0 %1342
  %1344 = vrot.lane.b32.xlu0 %v513, 12
  %v1345 = vpop.permute.xlu0 %1344
  %1346 = vrot.lane.b32.xlu0 %v515, 12
  %v1347 = vpop.permute.xlu0 %1346
  %1348 = vrot.lane.b32.xlu0 %v518, 12
  %v1349 = vpop.permute.xlu0 %1348
  %1350 = vrot.lane.b32.xlu0 %v520, 12
  %v1351 = vpop.permute.xlu0 %1350
  %1352 = vrot.lane.b32.xlu0 %v523, 12
  %v1353 = vpop.permute.xlu0 %1352
  %1354 = vrot.lane.b32.xlu0 %v525, 12
  %v1355 = vpop.permute.xlu0 %1354
  %1356 = vrot.lane.b32.xlu0 %v528, 12
  %v1357 = vpop.permute.xlu0 %1356
  %1358 = vrot.lane.b32.xlu0 %v530, 12
  %v1359 = vpop.permute.xlu0 %1358
  %1360 = vrot.lane.b32.xlu0 %v533, 12
  %v1361 = vpop.permute.xlu0 %1360
  %1362 = vrot.lane.b32.xlu0 %v535, 12
  %v1363 = vpop.permute.xlu0 %1362
  %1364 = vrot.lane.b32.xlu0 %v538, 12
  %v1365 = vpop.permute.xlu0 %1364
  %1366 = vrot.lane.b32.xlu0 %v540, 12
  %v1367 = vpop.permute.xlu0 %1366
  %1368 = vrot.lane.b32.xlu0 %v543, 12
  %v1369 = vpop.permute.xlu0 %1368
  %1370 = vrot.lane.b32.xlu0 %v545, 12
  %v1371 = vpop.permute.xlu0 %1370
  %1372 = vrot.lane.b32.xlu0 %v548, 12
  %v1373 = vpop.permute.xlu0 %1372
  %1374 = vrot.lane.b32.xlu0 %v550, 12
  %v1375 = vpop.permute.xlu0 %1374
  %1376 = vrot.lane.b32.xlu0 %v553, 12
  %v1377 = vpop.permute.xlu0 %1376
  %1378 = vrot.lane.b32.xlu0 %v555, 12
  %v1379 = vpop.permute.xlu0 %1378
  %1380 = vrot.lane.b32.xlu0 %v1312, 12
  %v1381 = vpop.permute.xlu0 %1380
  %1382 = vrot.lane.b32.xlu0 %v1314, 12
  %v1383 = vpop.permute.xlu0 %1382
  %1384 = vrot.lane.b32.xlu0 %v558, 12
  %v1385 = vpop.permute.xlu0 %1384
  %1386 = vrot.lane.b32.xlu0 %v560, 12
  %v1387 = vpop.permute.xlu0 %1386
  %1388 = vrot.lane.b32.xlu0 %v563, 12
  %v1389 = vpop.permute.xlu0 %1388
  %1390 = vrot.lane.b32.xlu0 %v565, 12
  %v1391 = vpop.permute.xlu0 %1390
  %1392 = vrot.lane.b32.xlu0 %v568, 12
  %v1393 = vpop.permute.xlu0 %1392
  %1394 = vrot.lane.b32.xlu0 %v570, 12
  %v1395 = vpop.permute.xlu0 %1394
  %1396 = vrot.lane.b32.xlu0 %v573, 12
  %v1397 = vpop.permute.xlu0 %1396
  %1398 = vrot.lane.b32.xlu0 %v575, 12
  %v1399 = vpop.permute.xlu0 %1398
  %1400 = vrot.lane.b32.xlu0 %v578, 12
  %v1401 = vpop.permute.xlu0 %1400
  %1402 = vrot.lane.b32.xlu0 %v580, 12
  %v1403 = vpop.permute.xlu0 %1402
  %1404 = vrot.lane.b32.xlu0 %v583, 12
  %v1405 = vpop.permute.xlu0 %1404
  %1406 = vrot.lane.b32.xlu0 %v585, 12
  %v1407 = vpop.permute.xlu0 %1406
  %1408 = vrot.lane.b32.xlu0 %v588, 12
  %v1409 = vpop.permute.xlu0 %1408
  %1410 = vrot.lane.b32.xlu0 %v590, 12
  %v1411 = vpop.permute.xlu0 %1410
  %1412 = vrot.lane.b32.xlu0 %v593, 12
  %v1413 = vpop.permute.xlu0 %1412
  %1414 = vrot.lane.b32.xlu0 %v595, 12
  %v1415 = vpop.permute.xlu0 %1414
  %1416 = vrot.lane.b32.xlu0 %v598, 12
  %v1417 = vpop.permute.xlu0 %1416
  %1418 = vrot.lane.b32.xlu0 %v600, 12
  %v1419 = vpop.permute.xlu0 %1418
  %1420 = vrot.lane.b32.xlu0 %v603, 12
  %v1421 = vpop.permute.xlu0 %1420
  %1422 = vrot.lane.b32.xlu0 %v605, 12
  %v1423 = vpop.permute.xlu0 %1422
  %1424 = vrot.lane.b32.xlu0 %v608, 12
  %v1425 = vpop.permute.xlu0 %1424
  %1426 = vrot.lane.b32.xlu0 %v610, 12
  %v1427 = vpop.permute.xlu0 %1426
  %1428 = vrot.lane.b32.xlu0 %v613, 12
  %v1429 = vpop.permute.xlu0 %1428
  %1430 = vrot.lane.b32.xlu0 %v615, 12
  %v1431 = vpop.permute.xlu0 %1430
  %1432 = vrot.lane.b32.xlu0 %v618, 12
  %v1433 = vpop.permute.xlu0 %1432
  %1434 = vrot.lane.b32.xlu0 %v620, 12
  %v1435 = vpop.permute.xlu0 %1434
  %1436 = vrot.lane.b32.xlu0 %v623, 12
  %v1437 = vpop.permute.xlu0 %1436
  %1438 = vrot.lane.b32.xlu0 %v625, 12
  %v1439 = vpop.permute.xlu0 %1438
  %1440 = vrot.lane.b32.xlu0 %v1317, 12
  %v1441 = vpop.permute.xlu0 %1440
  %1442 = vrot.lane.b32.xlu0 %v1319, 12
  %v1443 = vpop.permute.xlu0 %1442
  %v1506 = vrot.slane %v371, 2
  %v1507 = vrot.slane %v210, 2
  %v1508 = vsel %vm800, %v1506, %v1507
  %v1509 = vrot.slane %v404, 2
  %v1510 = vsel %vm800, %v1507, %v1509
  %v1511 = vrot.slane %v387, 2
  %v1512 = vrot.slane %v258, 2
  %v1513 = vsel %vm800, %v1511, %v1512
  %v1514 = vrot.slane %v420, 2
  %v1515 = vsel %vm800, %v1512, %v1514
  %1516 = vrot.lane.b32.xlu0 %v803, 15
  %v1517 = vpop.permute.xlu0 %1516
  %1518 = vrot.lane.b32.xlu0 %v805, 15
  %v1519 = vpop.permute.xlu0 %1518
  %1520 = vrot.lane.b32.xlu0 %v808, 15
  %v1521 = vpop.permute.xlu0 %1520
  %1522 = vrot.lane.b32.xlu0 %v810, 15
  %v1523 = vpop.permute.xlu0 %1522
  %1524 = vrot.lane.b32.xlu0 %v813, 15
  %v1525 = vpop.permute.xlu0 %1524
  %1526 = vrot.lane.b32.xlu0 %v815, 15
  %v1527 = vpop.permute.xlu0 %1526
  %1528 = vrot.lane.b32.xlu0 %v818, 15
  %v1529 = vpop.permute.xlu0 %1528
  %1530 = vrot.lane.b32.xlu0 %v820, 15
  %v1531 = vpop.permute.xlu0 %1530
  %1532 = vrot.lane.b32.xlu0 %v823, 15
  %v1533 = vpop.permute.xlu0 %1532
  %1534 = vrot.lane.b32.xlu0 %v825, 15
  %v1535 = vpop.permute.xlu0 %1534
  %1536 = vrot.lane.b32.xlu0 %v828, 15
  %v1537 = vpop.permute.xlu0 %1536
  %1538 = vrot.lane.b32.xlu0 %v830, 15
  %v1539 = vpop.permute.xlu0 %1538
  %1540 = vrot.lane.b32.xlu0 %v833, 15
  %v1541 = vpop.permute.xlu0 %1540
  %1542 = vrot.lane.b32.xlu0 %v835, 15
  %v1543 = vpop.permute.xlu0 %1542
  %1544 = vrot.lane.b32.xlu0 %v838, 15
  %v1545 = vpop.permute.xlu0 %1544
  %1546 = vrot.lane.b32.xlu0 %v840, 15
  %v1547 = vpop.permute.xlu0 %1546
  %1548 = vrot.lane.b32.xlu0 %v843, 15
  %v1549 = vpop.permute.xlu0 %1548
  %1550 = vrot.lane.b32.xlu0 %v845, 15
  %v1551 = vpop.permute.xlu0 %1550
  %1552 = vrot.lane.b32.xlu0 %v848, 15
  %v1553 = vpop.permute.xlu0 %1552
  %1554 = vrot.lane.b32.xlu0 %v850, 15
  %v1555 = vpop.permute.xlu0 %1554
  %1556 = vrot.lane.b32.xlu0 %v853, 15
  %v1557 = vpop.permute.xlu0 %1556
  %1558 = vrot.lane.b32.xlu0 %v855, 15
  %v1559 = vpop.permute.xlu0 %1558
  %1560 = vrot.lane.b32.xlu0 %v858, 15
  %v1561 = vpop.permute.xlu0 %1560
  %1562 = vrot.lane.b32.xlu0 %v860, 15
  %v1563 = vpop.permute.xlu0 %1562
  %1564 = vrot.lane.b32.xlu0 %v863, 15
  %v1565 = vpop.permute.xlu0 %1564
  %1566 = vrot.lane.b32.xlu0 %v865, 15
  %v1567 = vpop.permute.xlu0 %1566
  %1568 = vrot.lane.b32.xlu0 %v868, 15
  %v1569 = vpop.permute.xlu0 %1568
  %1570 = vrot.lane.b32.xlu0 %v870, 15
  %v1571 = vpop.permute.xlu0 %1570
  %1572 = vrot.lane.b32.xlu0 %v873, 15
  %v1573 = vpop.permute.xlu0 %1572
  %1574 = vrot.lane.b32.xlu0 %v875, 15
  %v1575 = vpop.permute.xlu0 %1574
  %1576 = vrot.lane.b32.xlu0 %v1508, 15
  %v1577 = vpop.permute.xlu0 %1576
  %1578 = vrot.lane.b32.xlu0 %v1510, 15
  %v1579 = vpop.permute.xlu0 %1578
  %1580 = vrot.lane.b32.xlu0 %v878, 15
  %v1581 = vpop.permute.xlu0 %1580
  %1582 = vrot.lane.b32.xlu0 %v880, 15
  %v1583 = vpop.permute.xlu0 %1582
  %1584 = vrot.lane.b32.xlu0 %v883, 15
  %v1585 = vpop.permute.xlu0 %1584
  %1586 = vrot.lane.b32.xlu0 %v885, 15
  %v1587 = vpop.permute.xlu0 %1586
  %1588 = vrot.lane.b32.xlu0 %v888, 15
  %v1589 = vpop.permute.xlu0 %1588
  %1590 = vrot.lane.b32.xlu0 %v890, 15
  %v1591 = vpop.permute.xlu0 %1590
  %1592 = vrot.lane.b32.xlu0 %v893, 15
  %v1593 = vpop.permute.xlu0 %1592
  %1594 = vrot.lane.b32.xlu0 %v895, 15
  %v1595 = vpop.permute.xlu0 %1594
  %1596 = vrot.lane.b32.xlu0 %v898, 15
  %v1597 = vpop.permute.xlu0 %1596
  %1598 = vrot.lane.b32.xlu0 %v900, 15
  %v1599 = vpop.permute.xlu0 %1598
  %1600 = vrot.lane.b32.xlu0 %v903, 15
  %v1601 = vpop.permute.xlu0 %1600
  %1602 = vrot.lane.b32.xlu0 %v905, 15
  %v1603 = vpop.permute.xlu0 %1602
  %1604 = vrot.lane.b32.xlu0 %v908, 15
  %v1605 = vpop.permute.xlu0 %1604
  %1606 = vrot.lane.b32.xlu0 %v910, 15
  %v1607 = vpop.permute.xlu0 %1606
  %1608 = vrot.lane.b32.xlu0 %v913, 15
  %v1609 = vpop.permute.xlu0 %1608
  %1610 = vrot.lane.b32.xlu0 %v915, 15
  %v1611 = vpop.permute.xlu0 %1610
  %1612 = vrot.lane.b32.xlu0 %v918, 15
  %v1613 = vpop.permute.xlu0 %1612
  %1614 = vrot.lane.b32.xlu0 %v920, 15
  %v1615 = vpop.permute.xlu0 %1614
  %1616 = vrot.lane.b32.xlu0 %v923, 15
  %v1617 = vpop.permute.xlu0 %1616
  %1618 = vrot.lane.b32.xlu0 %v925, 15
  %v1619 = vpop.permute.xlu0 %1618
  %1620 = vrot.lane.b32.xlu0 %v928, 15
  %v1621 = vpop.permute.xlu0 %1620
  %1622 = vrot.lane.b32.xlu0 %v930, 15
  %v1623 = vpop.permute.xlu0 %1622
  %1624 = vrot.lane.b32.xlu0 %v933, 15
  %v1625 = vpop.permute.xlu0 %1624
  %1626 = vrot.lane.b32.xlu0 %v935, 15
  %v1627 = vpop.permute.xlu0 %1626
  %1628 = vrot.lane.b32.xlu0 %v938, 15
  %v1629 = vpop.permute.xlu0 %1628
  %1630 = vrot.lane.b32.xlu0 %v940, 15
  %v1631 = vpop.permute.xlu0 %1630
  %1632 = vrot.lane.b32.xlu0 %v943, 15
  %v1633 = vpop.permute.xlu0 %1632
  %1634 = vrot.lane.b32.xlu0 %v945, 15
  %v1635 = vpop.permute.xlu0 %1634
  %1636 = vrot.lane.b32.xlu0 %v1513, 15
  %v1637 = vpop.permute.xlu0 %1636
  %1638 = vrot.lane.b32.xlu0 %v1515, 15
  %v1639 = vpop.permute.xlu0 %1638
  %1704 = vrot.lane.b32.xlu0 %v357, 18
  %v1705 = vpop.permute.xlu0 %1704
  %1706 = vrot.lane.b32.xlu0 %v168, 18
  %v1707 = vpop.permute.xlu0 %1706
  %1708 = vrot.lane.b32.xlu0 %v358, 18
  %v1709 = vpop.permute.xlu0 %1708
  %1710 = vrot.lane.b32.xlu0 %v171, 18
  %v1711 = vpop.permute.xlu0 %1710
  %1712 = vrot.lane.b32.xlu0 %v359, 18
  %v1713 = vpop.permute.xlu0 %1712
  %1714 = vrot.lane.b32.xlu0 %v174, 18
  %v1715 = vpop.permute.xlu0 %1714
  %1716 = vrot.lane.b32.xlu0 %v360, 18
  %v1717 = vpop.permute.xlu0 %1716
  %1718 = vrot.lane.b32.xlu0 %v177, 18
  %v1719 = vpop.permute.xlu0 %1718
  %1720 = vrot.lane.b32.xlu0 %v361, 18
  %v1721 = vpop.permute.xlu0 %1720
  %1722 = vrot.lane.b32.xlu0 %v180, 18
  %v1723 = vpop.permute.xlu0 %1722
  %1724 = vrot.lane.b32.xlu0 %v362, 18
  %v1725 = vpop.permute.xlu0 %1724
  %1726 = vrot.lane.b32.xlu0 %v183, 18
  %v1727 = vpop.permute.xlu0 %1726
  %1728 = vrot.lane.b32.xlu0 %v363, 18
  %v1729 = vpop.permute.xlu0 %1728
  %1730 = vrot.lane.b32.xlu0 %v186, 18
  %v1731 = vpop.permute.xlu0 %1730
  %1732 = vrot.lane.b32.xlu0 %v364, 18
  %v1733 = vpop.permute.xlu0 %1732
  %1734 = vrot.lane.b32.xlu0 %v189, 18
  %v1735 = vpop.permute.xlu0 %1734
  %1736 = vrot.lane.b32.xlu0 %v365, 18
  %v1737 = vpop.permute.xlu0 %1736
  %1738 = vrot.lane.b32.xlu0 %v192, 18
  %v1739 = vpop.permute.xlu0 %1738
  %1740 = vrot.lane.b32.xlu0 %v366, 18
  %v1741 = vpop.permute.xlu0 %1740
  %1742 = vrot.lane.b32.xlu0 %v195, 18
  %v1743 = vpop.permute.xlu0 %1742
  %1744 = vrot.lane.b32.xlu0 %v367, 18
  %v1745 = vpop.permute.xlu0 %1744
  %1746 = vrot.lane.b32.xlu0 %v198, 18
  %v1747 = vpop.permute.xlu0 %1746
  %1748 = vrot.lane.b32.xlu0 %v368, 18
  %v1749 = vpop.permute.xlu0 %1748
  %1750 = vrot.lane.b32.xlu0 %v201, 18
  %v1751 = vpop.permute.xlu0 %1750
  %1752 = vrot.lane.b32.xlu0 %v369, 18
  %v1753 = vpop.permute.xlu0 %1752
  %1754 = vrot.lane.b32.xlu0 %v204, 18
  %v1755 = vpop.permute.xlu0 %1754
  %1756 = vrot.lane.b32.xlu0 %v370, 18
  %v1757 = vpop.permute.xlu0 %1756
  %1758 = vrot.lane.b32.xlu0 %v207, 18
  %v1759 = vpop.permute.xlu0 %1758
  %1760 = vrot.lane.b32.xlu0 %v371, 18
  %v1761 = vpop.permute.xlu0 %1760
  %1762 = vrot.lane.b32.xlu0 %v210, 18
  %v1763 = vpop.permute.xlu0 %1762
  %1764 = vrot.lane.b32.xlu0 %v372, 18
  %v1765 = vpop.permute.xlu0 %1764
  %1766 = vrot.lane.b32.xlu0 %v213, 18
  %v1767 = vpop.permute.xlu0 %1766
  %1768 = vrot.lane.b32.xlu0 %v373, 18
  %v1769 = vpop.permute.xlu0 %1768
  %1770 = vrot.lane.b32.xlu0 %v216, 18
  %v1771 = vpop.permute.xlu0 %1770
  %1772 = vrot.lane.b32.xlu0 %v374, 18
  %v1773 = vpop.permute.xlu0 %1772
  %1774 = vrot.lane.b32.xlu0 %v219, 18
  %v1775 = vpop.permute.xlu0 %1774
  %1776 = vrot.lane.b32.xlu0 %v375, 18
  %v1777 = vpop.permute.xlu0 %1776
  %1778 = vrot.lane.b32.xlu0 %v222, 18
  %v1779 = vpop.permute.xlu0 %1778
  %1780 = vrot.lane.b32.xlu0 %v376, 18
  %v1781 = vpop.permute.xlu0 %1780
  %1782 = vrot.lane.b32.xlu0 %v225, 18
  %v1783 = vpop.permute.xlu0 %1782
  %1784 = vrot.lane.b32.xlu0 %v377, 18
  %v1785 = vpop.permute.xlu0 %1784
  %1786 = vrot.lane.b32.xlu0 %v228, 18
  %v1787 = vpop.permute.xlu0 %1786
  %1788 = vrot.lane.b32.xlu0 %v378, 18
  %v1789 = vpop.permute.xlu0 %1788
  %1790 = vrot.lane.b32.xlu0 %v231, 18
  %v1791 = vpop.permute.xlu0 %1790
  %1792 = vrot.lane.b32.xlu0 %v379, 18
  %v1793 = vpop.permute.xlu0 %1792
  %1794 = vrot.lane.b32.xlu0 %v234, 18
  %v1795 = vpop.permute.xlu0 %1794
  %1796 = vrot.lane.b32.xlu0 %v380, 18
  %v1797 = vpop.permute.xlu0 %1796
  %1798 = vrot.lane.b32.xlu0 %v237, 18
  %v1799 = vpop.permute.xlu0 %1798
  %1800 = vrot.lane.b32.xlu0 %v381, 18
  %v1801 = vpop.permute.xlu0 %1800
  %1802 = vrot.lane.b32.xlu0 %v240, 18
  %v1803 = vpop.permute.xlu0 %1802
  %1804 = vrot.lane.b32.xlu0 %v382, 18
  %v1805 = vpop.permute.xlu0 %1804
  %1806 = vrot.lane.b32.xlu0 %v243, 18
  %v1807 = vpop.permute.xlu0 %1806
  %1808 = vrot.lane.b32.xlu0 %v383, 18
  %v1809 = vpop.permute.xlu0 %1808
  %1810 = vrot.lane.b32.xlu0 %v246, 18
  %v1811 = vpop.permute.xlu0 %1810
  %1812 = vrot.lane.b32.xlu0 %v384, 18
  %v1813 = vpop.permute.xlu0 %1812
  %1814 = vrot.lane.b32.xlu0 %v249, 18
  %v1815 = vpop.permute.xlu0 %1814
  %1816 = vrot.lane.b32.xlu0 %v385, 18
  %v1817 = vpop.permute.xlu0 %1816
  %1818 = vrot.lane.b32.xlu0 %v252, 18
  %v1819 = vpop.permute.xlu0 %1818
  %1820 = vrot.lane.b32.xlu0 %v386, 18
  %v1821 = vpop.permute.xlu0 %1820
  %1822 = vrot.lane.b32.xlu0 %v255, 18
  %v1823 = vpop.permute.xlu0 %1822
  %1824 = vrot.lane.b32.xlu0 %v387, 18
  %v1825 = vpop.permute.xlu0 %1824
  %1826 = vrot.lane.b32.xlu0 %v258, 18
  %v1827 = vpop.permute.xlu0 %1826
  %1828 = vrot.lane.b32.xlu0 %v388, 18
  %v1829 = vpop.permute.xlu0 %1828
  %1830 = vrot.lane.b32.xlu0 %v261, 18
  %v1831 = vpop.permute.xlu0 %1830
  %v1898 = vrot.slane %v372, 1
  %v1899 = vrot.slane %v213, 1
  %v1900 = vsel %vm480, %v1898, %v1899
  %v1901 = vrot.slane %v405, 1
  %v1902 = vsel %vm480, %v1899, %v1901
  %v1903 = vrot.slane %v388, 1
  %v1904 = vrot.slane %v261, 1
  %v1905 = vsel %vm480, %v1903, %v1904
  %v1906 = vrot.slane %v421, 1
  %v1907 = vsel %vm480, %v1904, %v1906
  %1908 = vrot.lane.b32.xlu0 %v488, 21
  %v1909 = vpop.permute.xlu0 %1908
  %1910 = vrot.lane.b32.xlu0 %v490, 21
  %v1911 = vpop.permute.xlu0 %1910
  %1912 = vrot.lane.b32.xlu0 %v493, 21
  %v1913 = vpop.permute.xlu0 %1912
  %1914 = vrot.lane.b32.xlu0 %v495, 21
  %v1915 = vpop.permute.xlu0 %1914
  %1916 = vrot.lane.b32.xlu0 %v498, 21
  %v1917 = vpop.permute.xlu0 %1916
  %1918 = vrot.lane.b32.xlu0 %v500, 21
  %v1919 = vpop.permute.xlu0 %1918
  %1920 = vrot.lane.b32.xlu0 %v503, 21
  %v1921 = vpop.permute.xlu0 %1920
  %1922 = vrot.lane.b32.xlu0 %v505, 21
  %v1923 = vpop.permute.xlu0 %1922
  %1924 = vrot.lane.b32.xlu0 %v508, 21
  %v1925 = vpop.permute.xlu0 %1924
  %1926 = vrot.lane.b32.xlu0 %v510, 21
  %v1927 = vpop.permute.xlu0 %1926
  %1928 = vrot.lane.b32.xlu0 %v513, 21
  %v1929 = vpop.permute.xlu0 %1928
  %1930 = vrot.lane.b32.xlu0 %v515, 21
  %v1931 = vpop.permute.xlu0 %1930
  %1932 = vrot.lane.b32.xlu0 %v518, 21
  %v1933 = vpop.permute.xlu0 %1932
  %1934 = vrot.lane.b32.xlu0 %v520, 21
  %v1935 = vpop.permute.xlu0 %1934
  %1936 = vrot.lane.b32.xlu0 %v523, 21
  %v1937 = vpop.permute.xlu0 %1936
  %1938 = vrot.lane.b32.xlu0 %v525, 21
  %v1939 = vpop.permute.xlu0 %1938
  %1940 = vrot.lane.b32.xlu0 %v528, 21
  %v1941 = vpop.permute.xlu0 %1940
  %1942 = vrot.lane.b32.xlu0 %v530, 21
  %v1943 = vpop.permute.xlu0 %1942
  %1944 = vrot.lane.b32.xlu0 %v533, 21
  %v1945 = vpop.permute.xlu0 %1944
  %1946 = vrot.lane.b32.xlu0 %v535, 21
  %v1947 = vpop.permute.xlu0 %1946
  %1948 = vrot.lane.b32.xlu0 %v538, 21
  %v1949 = vpop.permute.xlu0 %1948
  %1950 = vrot.lane.b32.xlu0 %v540, 21
  %v1951 = vpop.permute.xlu0 %1950
  %1952 = vrot.lane.b32.xlu0 %v543, 21
  %v1953 = vpop.permute.xlu0 %1952
  %1954 = vrot.lane.b32.xlu0 %v545, 21
  %v1955 = vpop.permute.xlu0 %1954
  %1956 = vrot.lane.b32.xlu0 %v548, 21
  %v1957 = vpop.permute.xlu0 %1956
  %1958 = vrot.lane.b32.xlu0 %v550, 21
  %v1959 = vpop.permute.xlu0 %1958
  %1960 = vrot.lane.b32.xlu0 %v553, 21
  %v1961 = vpop.permute.xlu0 %1960
  %1962 = vrot.lane.b32.xlu0 %v555, 21
  %v1963 = vpop.permute.xlu0 %1962
  %1964 = vrot.lane.b32.xlu0 %v1312, 21
  %v1965 = vpop.permute.xlu0 %1964
  %1966 = vrot.lane.b32.xlu0 %v1314, 21
  %v1967 = vpop.permute.xlu0 %1966
  %1968 = vrot.lane.b32.xlu0 %v1900, 21
  %v1969 = vpop.permute.xlu0 %1968
  %1970 = vrot.lane.b32.xlu0 %v1902, 21
  %v1971 = vpop.permute.xlu0 %1970
  %1972 = vrot.lane.b32.xlu0 %v558, 21
  %v1973 = vpop.permute.xlu0 %1972
  %1974 = vrot.lane.b32.xlu0 %v560, 21
  %v1975 = vpop.permute.xlu0 %1974
  %1976 = vrot.lane.b32.xlu0 %v563, 21
  %v1977 = vpop.permute.xlu0 %1976
  %1978 = vrot.lane.b32.xlu0 %v565, 21
  %v1979 = vpop.permute.xlu0 %1978
  %1980 = vrot.lane.b32.xlu0 %v568, 21
  %v1981 = vpop.permute.xlu0 %1980
  %1982 = vrot.lane.b32.xlu0 %v570, 21
  %v1983 = vpop.permute.xlu0 %1982
  %1984 = vrot.lane.b32.xlu0 %v573, 21
  %v1985 = vpop.permute.xlu0 %1984
  %1986 = vrot.lane.b32.xlu0 %v575, 21
  %v1987 = vpop.permute.xlu0 %1986
  %1988 = vrot.lane.b32.xlu0 %v578, 21
  %v1989 = vpop.permute.xlu0 %1988
  %1990 = vrot.lane.b32.xlu0 %v580, 21
  %v1991 = vpop.permute.xlu0 %1990
  %1992 = vrot.lane.b32.xlu0 %v583, 21
  %v1993 = vpop.permute.xlu0 %1992
  %1994 = vrot.lane.b32.xlu0 %v585, 21
  %v1995 = vpop.permute.xlu0 %1994
  %1996 = vrot.lane.b32.xlu0 %v588, 21
  %v1997 = vpop.permute.xlu0 %1996
  %1998 = vrot.lane.b32.xlu0 %v590, 21
  %v1999 = vpop.permute.xlu0 %1998
  %2000 = vrot.lane.b32.xlu0 %v593, 21
  %v2001 = vpop.permute.xlu0 %2000
  %2002 = vrot.lane.b32.xlu0 %v595, 21
  %v2003 = vpop.permute.xlu0 %2002
  %2004 = vrot.lane.b32.xlu0 %v598, 21
  %v2005 = vpop.permute.xlu0 %2004
  %2006 = vrot.lane.b32.xlu0 %v600, 21
  %v2007 = vpop.permute.xlu0 %2006
  %2008 = vrot.lane.b32.xlu0 %v603, 21
  %v2009 = vpop.permute.xlu0 %2008
  %2010 = vrot.lane.b32.xlu0 %v605, 21
  %v2011 = vpop.permute.xlu0 %2010
  %2012 = vrot.lane.b32.xlu0 %v608, 21
  %v2013 = vpop.permute.xlu0 %2012
  %2014 = vrot.lane.b32.xlu0 %v610, 21
  %v2015 = vpop.permute.xlu0 %2014
  %2016 = vrot.lane.b32.xlu0 %v613, 21
  %v2017 = vpop.permute.xlu0 %2016
  %2018 = vrot.lane.b32.xlu0 %v615, 21
  %v2019 = vpop.permute.xlu0 %2018
  %2020 = vrot.lane.b32.xlu0 %v618, 21
  %v2021 = vpop.permute.xlu0 %2020
  %2022 = vrot.lane.b32.xlu0 %v620, 21
  %v2023 = vpop.permute.xlu0 %2022
  %2024 = vrot.lane.b32.xlu0 %v623, 21
  %v2025 = vpop.permute.xlu0 %2024
  %2026 = vrot.lane.b32.xlu0 %v625, 21
  %v2027 = vpop.permute.xlu0 %2026
  %2028 = vrot.lane.b32.xlu0 %v1317, 21
  %v2029 = vpop.permute.xlu0 %2028
  %2030 = vrot.lane.b32.xlu0 %v1319, 21
  %v2031 = vpop.permute.xlu0 %2030
  %2032 = vrot.lane.b32.xlu0 %v1905, 21
  %v2033 = vpop.permute.xlu0 %2032
  %2034 = vrot.lane.b32.xlu0 %v1907, 21
  %v2035 = vpop.permute.xlu0 %2034
  %v2100 = vrot.slane %v372, 2
  %v2101 = vrot.slane %v213, 2
  %v2102 = vsel %vm800, %v2100, %v2101
  %v2103 = vrot.slane %v405, 2
  %v2104 = vsel %vm800, %v2101, %v2103
  %v2105 = vrot.slane %v388, 2
  %v2106 = vrot.slane %v261, 2
  %v2107 = vsel %vm800, %v2105, %v2106
  %v2108 = vrot.slane %v421, 2
  %v2109 = vsel %vm800, %v2106, %v2108
  %2110 = vrot.lane.b32.xlu0 %v808, 24
  %v2111 = vpop.permute.xlu0 %2110
  %2112 = vrot.lane.b32.xlu0 %v810, 24
  %v2113 = vpop.permute.xlu0 %2112
  %2114 = vrot.lane.b32.xlu0 %v813, 24
  %v2115 = vpop.permute.xlu0 %2114
  %2116 = vrot.lane.b32.xlu0 %v815, 24
  %v2117 = vpop.permute.xlu0 %2116
  %2118 = vrot.lane.b32.xlu0 %v818, 24
  %v2119 = vpop.permute.xlu0 %2118
  %2120 = vrot.lane.b32.xlu0 %v820, 24
  %v2121 = vpop.permute.xlu0 %2120
  %2122 = vrot.lane.b32.xlu0 %v823, 24
  %v2123 = vpop.permute.xlu0 %2122
  %2124 = vrot.lane.b32.xlu0 %v825, 24
  %v2125 = vpop.permute.xlu0 %2124
  %2126 = vrot.lane.b32.xlu0 %v828, 24
  %v2127 = vpop.permute.xlu0 %2126
  %2128 = vrot.lane.b32.xlu0 %v830, 24
  %v2129 = vpop.permute.xlu0 %2128
  %2130 = vrot.lane.b32.xlu0 %v833, 24
  %v2131 = vpop.permute.xlu0 %2130
  %2132 = vrot.lane.b32.xlu0 %v835, 24
  %v2133 = vpop.permute.xlu0 %2132
  %2134 = vrot.lane.b32.xlu0 %v838, 24
  %v2135 = vpop.permute.xlu0 %2134
  %2136 = vrot.lane.b32.xlu0 %v840, 24
  %v2137 = vpop.permute.xlu0 %2136
  %2138 = vrot.lane.b32.xlu0 %v843, 24
  %v2139 = vpop.permute.xlu0 %2138
  %2140 = vrot.lane.b32.xlu0 %v845, 24
  %v2141 = vpop.permute.xlu0 %2140
  %2142 = vrot.lane.b32.xlu0 %v848, 24
  %v2143 = vpop.permute.xlu0 %2142
  %2144 = vrot.lane.b32.xlu0 %v850, 24
  %v2145 = vpop.permute.xlu0 %2144
  %2146 = vrot.lane.b32.xlu0 %v853, 24
  %v2147 = vpop.permute.xlu0 %2146
  %2148 = vrot.lane.b32.xlu0 %v855, 24
  %v2149 = vpop.permute.xlu0 %2148
  %2150 = vrot.lane.b32.xlu0 %v858, 24
  %v2151 = vpop.permute.xlu0 %2150
  %2152 = vrot.lane.b32.xlu0 %v860, 24
  %v2153 = vpop.permute.xlu0 %2152
  %2154 = vrot.lane.b32.xlu0 %v863, 24
  %v2155 = vpop.permute.xlu0 %2154
  %2156 = vrot.lane.b32.xlu0 %v865, 24
  %v2157 = vpop.permute.xlu0 %2156
  %2158 = vrot.lane.b32.xlu0 %v868, 24
  %v2159 = vpop.permute.xlu0 %2158
  %2160 = vrot.lane.b32.xlu0 %v870, 24
  %v2161 = vpop.permute.xlu0 %2160
  %2162 = vrot.lane.b32.xlu0 %v873, 24
  %v2163 = vpop.permute.xlu0 %2162
  %2164 = vrot.lane.b32.xlu0 %v875, 24
  %v2165 = vpop.permute.xlu0 %2164
  %2166 = vrot.lane.b32.xlu0 %v1508, 24
  %v2167 = vpop.permute.xlu0 %2166
  %2168 = vrot.lane.b32.xlu0 %v1510, 24
  %v2169 = vpop.permute.xlu0 %2168
  %2170 = vrot.lane.b32.xlu0 %v2102, 24
  %v2171 = vpop.permute.xlu0 %2170
  %2172 = vrot.lane.b32.xlu0 %v2104, 24
  %v2173 = vpop.permute.xlu0 %2172
  %2174 = vrot.lane.b32.xlu0 %v878, 24
  %v2175 = vpop.permute.xlu0 %2174
  %2176 = vrot.lane.b32.xlu0 %v880, 24
  %v2177 = vpop.permute.xlu0 %2176
  %2178 = vrot.lane.b32.xlu0 %v883, 24
  %v2179 = vpop.permute.xlu0 %2178
  %2180 = vrot.lane.b32.xlu0 %v885, 24
  %v2181 = vpop.permute.xlu0 %2180
  %2182 = vrot.lane.b32.xlu0 %v888, 24
  %v2183 = vpop.permute.xlu0 %2182
  %2184 = vrot.lane.b32.xlu0 %v890, 24
  %v2185 = vpop.permute.xlu0 %2184
  %2186 = vrot.lane.b32.xlu0 %v893, 24
  %v2187 = vpop.permute.xlu0 %2186
  %2188 = vrot.lane.b32.xlu0 %v895, 24
  %v2189 = vpop.permute.xlu0 %2188
  %2190 = vrot.lane.b32.xlu0 %v898, 24
  %v2191 = vpop.permute.xlu0 %2190
  %2192 = vrot.lane.b32.xlu0 %v900, 24
  %v2193 = vpop.permute.xlu0 %2192
  %2194 = vrot.lane.b32.xlu0 %v903, 24
  %v2195 = vpop.permute.xlu0 %2194
  %2196 = vrot.lane.b32.xlu0 %v905, 24
  %v2197 = vpop.permute.xlu0 %2196
  %2198 = vrot.lane.b32.xlu0 %v908, 24
  %v2199 = vpop.permute.xlu0 %2198
  %2200 = vrot.lane.b32.xlu0 %v910, 24
  %v2201 = vpop.permute.xlu0 %2200
  %2202 = vrot.lane.b32.xlu0 %v913, 24
  %v2203 = vpop.permute.xlu0 %2202
  %2204 = vrot.lane.b32.xlu0 %v915, 24
  %v2205 = vpop.permute.xlu0 %2204
  %2206 = vrot.lane.b32.xlu0 %v918, 24
  %v2207 = vpop.permute.xlu0 %2206
  %2208 = vrot.lane.b32.xlu0 %v920, 24
  %v2209 = vpop.permute.xlu0 %2208
  %2210 = vrot.lane.b32.xlu0 %v923, 24
  %v2211 = vpop.permute.xlu0 %2210
  %2212 = vrot.lane.b32.xlu0 %v925, 24
  %v2213 = vpop.permute.xlu0 %2212
  %2214 = vrot.lane.b32.xlu0 %v928, 24
  %v2215 = vpop.permute.xlu0 %2214
  %2216 = vrot.lane.b32.xlu0 %v930, 24
  %v2217 = vpop.permute.xlu0 %2216
  %2218 = vrot.lane.b32.xlu0 %v933, 24
  %v2219 = vpop.permute.xlu0 %2218
  %2220 = vrot.lane.b32.xlu0 %v935, 24
  %v2221 = vpop.permute.xlu0 %2220
  %2222 = vrot.lane.b32.xlu0 %v938, 24
  %v2223 = vpop.permute.xlu0 %2222
  %2224 = vrot.lane.b32.xlu0 %v940, 24
  %v2225 = vpop.permute.xlu0 %2224
  %2226 = vrot.lane.b32.xlu0 %v943, 24
  %v2227 = vpop.permute.xlu0 %2226
  %2228 = vrot.lane.b32.xlu0 %v945, 24
  %v2229 = vpop.permute.xlu0 %2228
  %2230 = vrot.lane.b32.xlu0 %v1513, 24
  %v2231 = vpop.permute.xlu0 %2230
  %2232 = vrot.lane.b32.xlu0 %v1515, 24
  %v2233 = vpop.permute.xlu0 %2232
  %2234 = vrot.lane.b32.xlu0 %v2107, 24
  %v2235 = vpop.permute.xlu0 %2234
  %2236 = vrot.lane.b32.xlu0 %v2109, 24
  %v2237 = vpop.permute.xlu0 %2236
  %2302 = vrot.lane.b32.xlu0 %v358, 27
  %v2303 = vpop.permute.xlu0 %2302
  %2304 = vrot.lane.b32.xlu0 %v171, 27
  %v2305 = vpop.permute.xlu0 %2304
  %2306 = vrot.lane.b32.xlu0 %v359, 27
  %v2307 = vpop.permute.xlu0 %2306
  %2308 = vrot.lane.b32.xlu0 %v174, 27
  %v2309 = vpop.permute.xlu0 %2308
  %2310 = vrot.lane.b32.xlu0 %v360, 27
  %v2311 = vpop.permute.xlu0 %2310
  %2312 = vrot.lane.b32.xlu0 %v177, 27
  %v2313 = vpop.permute.xlu0 %2312
  %2314 = vrot.lane.b32.xlu0 %v361, 27
  %v2315 = vpop.permute.xlu0 %2314
  %2316 = vrot.lane.b32.xlu0 %v180, 27
  %v2317 = vpop.permute.xlu0 %2316
  %2318 = vrot.lane.b32.xlu0 %v362, 27
  %v2319 = vpop.permute.xlu0 %2318
  %2320 = vrot.lane.b32.xlu0 %v183, 27
  %v2321 = vpop.permute.xlu0 %2320
  %2322 = vrot.lane.b32.xlu0 %v363, 27
  %v2323 = vpop.permute.xlu0 %2322
  %2324 = vrot.lane.b32.xlu0 %v186, 27
  %v2325 = vpop.permute.xlu0 %2324
  %2326 = vrot.lane.b32.xlu0 %v364, 27
  %v2327 = vpop.permute.xlu0 %2326
  %2328 = vrot.lane.b32.xlu0 %v189, 27
  %v2329 = vpop.permute.xlu0 %2328
  %2330 = vrot.lane.b32.xlu0 %v365, 27
  %v2331 = vpop.permute.xlu0 %2330
  %2332 = vrot.lane.b32.xlu0 %v192, 27
  %v2333 = vpop.permute.xlu0 %2332
  %2334 = vrot.lane.b32.xlu0 %v366, 27
  %v2335 = vpop.permute.xlu0 %2334
  %2336 = vrot.lane.b32.xlu0 %v195, 27
  %v2337 = vpop.permute.xlu0 %2336
  %2338 = vrot.lane.b32.xlu0 %v367, 27
  %v2339 = vpop.permute.xlu0 %2338
  %2340 = vrot.lane.b32.xlu0 %v198, 27
  %v2341 = vpop.permute.xlu0 %2340
  %2342 = vrot.lane.b32.xlu0 %v368, 27
  %v2343 = vpop.permute.xlu0 %2342
  %2344 = vrot.lane.b32.xlu0 %v201, 27
  %v2345 = vpop.permute.xlu0 %2344
  %2346 = vrot.lane.b32.xlu0 %v369, 27
  %v2347 = vpop.permute.xlu0 %2346
  %2348 = vrot.lane.b32.xlu0 %v204, 27
  %v2349 = vpop.permute.xlu0 %2348
  %2350 = vrot.lane.b32.xlu0 %v370, 27
  %v2351 = vpop.permute.xlu0 %2350
  %2352 = vrot.lane.b32.xlu0 %v207, 27
  %v2353 = vpop.permute.xlu0 %2352
  %2354 = vrot.lane.b32.xlu0 %v371, 27
  %v2355 = vpop.permute.xlu0 %2354
  %2356 = vrot.lane.b32.xlu0 %v210, 27
  %v2357 = vpop.permute.xlu0 %2356
  %2358 = vrot.lane.b32.xlu0 %v372, 27
  %v2359 = vpop.permute.xlu0 %2358
  %2360 = vrot.lane.b32.xlu0 %v213, 27
  %v2361 = vpop.permute.xlu0 %2360
  %2362 = vrot.lane.b32.xlu0 %v356, 27
  %v2363 = vpop.permute.xlu0 %2362
  %2364 = vrot.lane.b32.xlu0 %v165, 27
  %v2365 = vpop.permute.xlu0 %2364
  %2366 = vrot.lane.b32.xlu0 %v374, 27
  %v2367 = vpop.permute.xlu0 %2366
  %2368 = vrot.lane.b32.xlu0 %v219, 27
  %v2369 = vpop.permute.xlu0 %2368
  %2370 = vrot.lane.b32.xlu0 %v375, 27
  %v2371 = vpop.permute.xlu0 %2370
  %2372 = vrot.lane.b32.xlu0 %v222, 27
  %v2373 = vpop.permute.xlu0 %2372
  %2374 = vrot.lane.b32.xlu0 %v376, 27
  %v2375 = vpop.permute.xlu0 %2374
  %2376 = vrot.lane.b32.xlu0 %v225, 27
  %v2377 = vpop.permute.xlu0 %2376
  %2378 = vrot.lane.b32.xlu0 %v377, 27
  %v2379 = vpop.permute.xlu0 %2378
  %2380 = vrot.lane.b32.xlu0 %v228, 27
  %v2381 = vpop.permute.xlu0 %2380
  %2382 = vrot.lane.b32.xlu0 %v378, 27
  %v2383 = vpop.permute.xlu0 %2382
  %2384 = vrot.lane.b32.xlu0 %v231, 27
  %v2385 = vpop.permute.xlu0 %2384
  %2386 = vrot.lane.b32.xlu0 %v379, 27
  %v2387 = vpop.permute.xlu0 %2386
  %2388 = vrot.lane.b32.xlu0 %v234, 27
  %v2389 = vpop.permute.xlu0 %2388
  %2390 = vrot.lane.b32.xlu0 %v380, 27
  %v2391 = vpop.permute.xlu0 %2390
  %2392 = vrot.lane.b32.xlu0 %v237, 27
  %v2393 = vpop.permute.xlu0 %2392
  %2394 = vrot.lane.b32.xlu0 %v381, 27
  %v2395 = vpop.permute.xlu0 %2394
  %2396 = vrot.lane.b32.xlu0 %v240, 27
  %v2397 = vpop.permute.xlu0 %2396
  %2398 = vrot.lane.b32.xlu0 %v382, 27
  %v2399 = vpop.permute.xlu0 %2398
  %2400 = vrot.lane.b32.xlu0 %v243, 27
  %v2401 = vpop.permute.xlu0 %2400
  %2402 = vrot.lane.b32.xlu0 %v383, 27
  %v2403 = vpop.permute.xlu0 %2402
  %2404 = vrot.lane.b32.xlu0 %v246, 27
  %v2405 = vpop.permute.xlu0 %2404
  %2406 = vrot.lane.b32.xlu0 %v384, 27
  %v2407 = vpop.permute.xlu0 %2406
  %2408 = vrot.lane.b32.xlu0 %v249, 27
  %v2409 = vpop.permute.xlu0 %2408
  %2410 = vrot.lane.b32.xlu0 %v385, 27
  %v2411 = vpop.permute.xlu0 %2410
  %2412 = vrot.lane.b32.xlu0 %v252, 27
  %v2413 = vpop.permute.xlu0 %2412
  %2414 = vrot.lane.b32.xlu0 %v386, 27
  %v2415 = vpop.permute.xlu0 %2414
  %2416 = vrot.lane.b32.xlu0 %v255, 27
  %v2417 = vpop.permute.xlu0 %2416
  %2418 = vrot.lane.b32.xlu0 %v387, 27
  %v2419 = vpop.permute.xlu0 %2418
  %2420 = vrot.lane.b32.xlu0 %v258, 27
  %v2421 = vpop.permute.xlu0 %2420
  %2422 = vrot.lane.b32.xlu0 %v388, 27
  %v2423 = vpop.permute.xlu0 %2422
  %2424 = vrot.lane.b32.xlu0 %v261, 27
  %v2425 = vpop.permute.xlu0 %2424
  %2488 = vrot.lane.b32.xlu0 %v493, 30
  %v2489 = vpop.permute.xlu0 %2488
  %2490 = vrot.lane.b32.xlu0 %v495, 30
  %v2491 = vpop.permute.xlu0 %2490
  %2492 = vrot.lane.b32.xlu0 %v498, 30
  %v2493 = vpop.permute.xlu0 %2492
  %2494 = vrot.lane.b32.xlu0 %v500, 30
  %v2495 = vpop.permute.xlu0 %2494
  %2496 = vrot.lane.b32.xlu0 %v503, 30
  %v2497 = vpop.permute.xlu0 %2496
  %2498 = vrot.lane.b32.xlu0 %v505, 30
  %v2499 = vpop.permute.xlu0 %2498
  %2500 = vrot.lane.b32.xlu0 %v508, 30
  %v2501 = vpop.permute.xlu0 %2500
  %2502 = vrot.lane.b32.xlu0 %v510, 30
  %v2503 = vpop.permute.xlu0 %2502
  %2504 = vrot.lane.b32.xlu0 %v513, 30
  %v2505 = vpop.permute.xlu0 %2504
  %2506 = vrot.lane.b32.xlu0 %v515, 30
  %v2507 = vpop.permute.xlu0 %2506
  %2508 = vrot.lane.b32.xlu0 %v518, 30
  %v2509 = vpop.permute.xlu0 %2508
  %2510 = vrot.lane.b32.xlu0 %v520, 30
  %v2511 = vpop.permute.xlu0 %2510
  %2512 = vrot.lane.b32.xlu0 %v523, 30
  %v2513 = vpop.permute.xlu0 %2512
  %2514 = vrot.lane.b32.xlu0 %v525, 30
  %v2515 = vpop.permute.xlu0 %2514
  %2516 = vrot.lane.b32.xlu0 %v528, 30
  %v2517 = vpop.permute.xlu0 %2516
  %2518 = vrot.lane.b32.xlu0 %v530, 30
  %v2519 = vpop.permute.xlu0 %2518
  %2520 = vrot.lane.b32.xlu0 %v533, 30
  %v2521 = vpop.permute.xlu0 %2520
  %2522 = vrot.lane.b32.xlu0 %v535, 30
  %v2523 = vpop.permute.xlu0 %2522
  %2524 = vrot.lane.b32.xlu0 %v538, 30
  %v2525 = vpop.permute.xlu0 %2524
  %2526 = vrot.lane.b32.xlu0 %v540, 30
  %v2527 = vpop.permute.xlu0 %2526
  %2528 = vrot.lane.b32.xlu0 %v543, 30
  %v2529 = vpop.permute.xlu0 %2528
  %2530 = vrot.lane.b32.xlu0 %v545, 30
  %v2531 = vpop.permute.xlu0 %2530
  %2532 = vrot.lane.b32.xlu0 %v548, 30
  %v2533 = vpop.permute.xlu0 %2532
  %2534 = vrot.lane.b32.xlu0 %v550, 30
  %v2535 = vpop.permute.xlu0 %2534
  %2536 = vrot.lane.b32.xlu0 %v553, 30
  %v2537 = vpop.permute.xlu0 %2536
  %2538 = vrot.lane.b32.xlu0 %v555, 30
  %v2539 = vpop.permute.xlu0 %2538
  %2540 = vrot.lane.b32.xlu0 %v1312, 30
  %v2541 = vpop.permute.xlu0 %2540
  %2542 = vrot.lane.b32.xlu0 %v1314, 30
  %v2543 = vpop.permute.xlu0 %2542
  %2544 = vrot.lane.b32.xlu0 %v1900, 30
  %v2545 = vpop.permute.xlu0 %2544
  %2546 = vrot.lane.b32.xlu0 %v1902, 30
  %v2547 = vpop.permute.xlu0 %2546
  %2548 = vrot.lane.b32.xlu0 %v483, 30
  %v2549 = vpop.permute.xlu0 %2548
  %2550 = vrot.lane.b32.xlu0 %v485, 30
  %v2551 = vpop.permute.xlu0 %2550
  %2552 = vrot.lane.b32.xlu0 %v563, 30
  %v2553 = vpop.permute.xlu0 %2552
  %2554 = vrot.lane.b32.xlu0 %v565, 30
  %v2555 = vpop.permute.xlu0 %2554
  %2556 = vrot.lane.b32.xlu0 %v568, 30
  %v2557 = vpop.permute.xlu0 %2556
  %2558 = vrot.lane.b32.xlu0 %v570, 30
  %v2559 = vpop.permute.xlu0 %2558
  %2560 = vrot.lane.b32.xlu0 %v573, 30
  %v2561 = vpop.permute.xlu0 %2560
  %2562 = vrot.lane.b32.xlu0 %v575, 30
  %v2563 = vpop.permute.xlu0 %2562
  %2564 = vrot.lane.b32.xlu0 %v578, 30
  %v2565 = vpop.permute.xlu0 %2564
  %2566 = vrot.lane.b32.xlu0 %v580, 30
  %v2567 = vpop.permute.xlu0 %2566
  %2568 = vrot.lane.b32.xlu0 %v583, 30
  %v2569 = vpop.permute.xlu0 %2568
  %2570 = vrot.lane.b32.xlu0 %v585, 30
  %v2571 = vpop.permute.xlu0 %2570
  %2572 = vrot.lane.b32.xlu0 %v588, 30
  %v2573 = vpop.permute.xlu0 %2572
  %2574 = vrot.lane.b32.xlu0 %v590, 30
  %v2575 = vpop.permute.xlu0 %2574
  %2576 = vrot.lane.b32.xlu0 %v593, 30
  %v2577 = vpop.permute.xlu0 %2576
  %2578 = vrot.lane.b32.xlu0 %v595, 30
  %v2579 = vpop.permute.xlu0 %2578
  %2580 = vrot.lane.b32.xlu0 %v598, 30
  %v2581 = vpop.permute.xlu0 %2580
  %2582 = vrot.lane.b32.xlu0 %v600, 30
  %v2583 = vpop.permute.xlu0 %2582
  %2584 = vrot.lane.b32.xlu0 %v603, 30
  %v2585 = vpop.permute.xlu0 %2584
  %2586 = vrot.lane.b32.xlu0 %v605, 30
  %v2587 = vpop.permute.xlu0 %2586
  %2588 = vrot.lane.b32.xlu0 %v608, 30
  %v2589 = vpop.permute.xlu0 %2588
  %2590 = vrot.lane.b32.xlu0 %v610, 30
  %v2591 = vpop.permute.xlu0 %2590
  %2592 = vrot.lane.b32.xlu0 %v613, 30
  %v2593 = vpop.permute.xlu0 %2592
  %2594 = vrot.lane.b32.xlu0 %v615, 30
  %v2595 = vpop.permute.xlu0 %2594
  %2596 = vrot.lane.b32.xlu0 %v618, 30
  %v2597 = vpop.permute.xlu0 %2596
  %2598 = vrot.lane.b32.xlu0 %v620, 30
  %v2599 = vpop.permute.xlu0 %2598
  %2600 = vrot.lane.b32.xlu0 %v623, 30
  %v2601 = vpop.permute.xlu0 %2600
  %2602 = vrot.lane.b32.xlu0 %v625, 30
  %v2603 = vpop.permute.xlu0 %2602
  %2604 = vrot.lane.b32.xlu0 %v1317, 30
  %v2605 = vpop.permute.xlu0 %2604
  %2606 = vrot.lane.b32.xlu0 %v1319, 30
  %v2607 = vpop.permute.xlu0 %2606
  %2608 = vrot.lane.b32.xlu0 %v1905, 30
  %v2609 = vpop.permute.xlu0 %2608
  %2610 = vrot.lane.b32.xlu0 %v1907, 30
  %v2611 = vpop.permute.xlu0 %2610
  %2674 = vrot.lane.b32.xlu0 %v813, 33
  %v2675 = vpop.permute.xlu0 %2674
  %2676 = vrot.lane.b32.xlu0 %v815, 33
  %v2677 = vpop.permute.xlu0 %2676
  %2678 = vrot.lane.b32.xlu0 %v818, 33
  %v2679 = vpop.permute.xlu0 %2678
  %2680 = vrot.lane.b32.xlu0 %v820, 33
  %v2681 = vpop.permute.xlu0 %2680
  %2682 = vrot.lane.b32.xlu0 %v823, 33
  %v2683 = vpop.permute.xlu0 %2682
  %2684 = vrot.lane.b32.xlu0 %v825, 33
  %v2685 = vpop.permute.xlu0 %2684
  %2686 = vrot.lane.b32.xlu0 %v828, 33
  %v2687 = vpop.permute.xlu0 %2686
  %2688 = vrot.lane.b32.xlu0 %v830, 33
  %v2689 = vpop.permute.xlu0 %2688
  %2690 = vrot.lane.b32.xlu0 %v833, 33
  %v2691 = vpop.permute.xlu0 %2690
  %2692 = vrot.lane.b32.xlu0 %v835, 33
  %v2693 = vpop.permute.xlu0 %2692
  %2694 = vrot.lane.b32.xlu0 %v838, 33
  %v2695 = vpop.permute.xlu0 %2694
  %2696 = vrot.lane.b32.xlu0 %v840, 33
  %v2697 = vpop.permute.xlu0 %2696
  %2698 = vrot.lane.b32.xlu0 %v843, 33
  %v2699 = vpop.permute.xlu0 %2698
  %2700 = vrot.lane.b32.xlu0 %v845, 33
  %v2701 = vpop.permute.xlu0 %2700
  %2702 = vrot.lane.b32.xlu0 %v848, 33
  %v2703 = vpop.permute.xlu0 %2702
  %2704 = vrot.lane.b32.xlu0 %v850, 33
  %v2705 = vpop.permute.xlu0 %2704
  %2706 = vrot.lane.b32.xlu0 %v853, 33
  %v2707 = vpop.permute.xlu0 %2706
  %2708 = vrot.lane.b32.xlu0 %v855, 33
  %v2709 = vpop.permute.xlu0 %2708
  %2710 = vrot.lane.b32.xlu0 %v858, 33
  %v2711 = vpop.permute.xlu0 %2710
  %2712 = vrot.lane.b32.xlu0 %v860, 33
  %v2713 = vpop.permute.xlu0 %2712
  %2714 = vrot.lane.b32.xlu0 %v863, 33
  %v2715 = vpop.permute.xlu0 %2714
  %2716 = vrot.lane.b32.xlu0 %v865, 33
  %v2717 = vpop.permute.xlu0 %2716
  %2718 = vrot.lane.b32.xlu0 %v868, 33
  %v2719 = vpop.permute.xlu0 %2718
  %2720 = vrot.lane.b32.xlu0 %v870, 33
  %v2721 = vpop.permute.xlu0 %2720
  %2722 = vrot.lane.b32.xlu0 %v873, 33
  %v2723 = vpop.permute.xlu0 %2722
  %2724 = vrot.lane.b32.xlu0 %v875, 33
  %v2725 = vpop.permute.xlu0 %2724
  %2726 = vrot.lane.b32.xlu0 %v1508, 33
  %v2727 = vpop.permute.xlu0 %2726
  %2728 = vrot.lane.b32.xlu0 %v1510, 33
  %v2729 = vpop.permute.xlu0 %2728
  %2730 = vrot.lane.b32.xlu0 %v2102, 33
  %v2731 = vpop.permute.xlu0 %2730
  %2732 = vrot.lane.b32.xlu0 %v2104, 33
  %v2733 = vpop.permute.xlu0 %2732
  %2734 = vrot.lane.b32.xlu0 %v803, 33
  %v2735 = vpop.permute.xlu0 %2734
  %2736 = vrot.lane.b32.xlu0 %v805, 33
  %v2737 = vpop.permute.xlu0 %2736
  %2738 = vrot.lane.b32.xlu0 %v883, 33
  %v2739 = vpop.permute.xlu0 %2738
  %2740 = vrot.lane.b32.xlu0 %v885, 33
  %v2741 = vpop.permute.xlu0 %2740
  %2742 = vrot.lane.b32.xlu0 %v888, 33
  %v2743 = vpop.permute.xlu0 %2742
  %2744 = vrot.lane.b32.xlu0 %v890, 33
  %v2745 = vpop.permute.xlu0 %2744
  %2746 = vrot.lane.b32.xlu0 %v893, 33
  %v2747 = vpop.permute.xlu0 %2746
  %2748 = vrot.lane.b32.xlu0 %v895, 33
  %v2749 = vpop.permute.xlu0 %2748
  %2750 = vrot.lane.b32.xlu0 %v898, 33
  %v2751 = vpop.permute.xlu0 %2750
  %2752 = vrot.lane.b32.xlu0 %v900, 33
  %v2753 = vpop.permute.xlu0 %2752
  %2754 = vrot.lane.b32.xlu0 %v903, 33
  %v2755 = vpop.permute.xlu0 %2754
  %2756 = vrot.lane.b32.xlu0 %v905, 33
  %v2757 = vpop.permute.xlu0 %2756
  %2758 = vrot.lane.b32.xlu0 %v908, 33
  %v2759 = vpop.permute.xlu0 %2758
  %2760 = vrot.lane.b32.xlu0 %v910, 33
  %v2761 = vpop.permute.xlu0 %2760
  %2762 = vrot.lane.b32.xlu0 %v913, 33
  %v2763 = vpop.permute.xlu0 %2762
  %2764 = vrot.lane.b32.xlu0 %v915, 33
  %v2765 = vpop.permute.xlu0 %2764
  %2766 = vrot.lane.b32.xlu0 %v918, 33
  %v2767 = vpop.permute.xlu0 %2766
  %2768 = vrot.lane.b32.xlu0 %v920, 33
  %v2769 = vpop.permute.xlu0 %2768
  %2770 = vrot.lane.b32.xlu0 %v923, 33
  %v2771 = vpop.permute.xlu0 %2770
  %2772 = vrot.lane.b32.xlu0 %v925, 33
  %v2773 = vpop.permute.xlu0 %2772
  %2774 = vrot.lane.b32.xlu0 %v928, 33
  %v2775 = vpop.permute.xlu0 %2774
  %2776 = vrot.lane.b32.xlu0 %v930, 33
  %v2777 = vpop.permute.xlu0 %2776
  %2778 = vrot.lane.b32.xlu0 %v933, 33
  %v2779 = vpop.permute.xlu0 %2778
  %2780 = vrot.lane.b32.xlu0 %v935, 33
  %v2781 = vpop.permute.xlu0 %2780
  %2782 = vrot.lane.b32.xlu0 %v938, 33
  %v2783 = vpop.permute.xlu0 %2782
  %2784 = vrot.lane.b32.xlu0 %v940, 33
  %v2785 = vpop.permute.xlu0 %2784
  %2786 = vrot.lane.b32.xlu0 %v943, 33
  %v2787 = vpop.permute.xlu0 %2786
  %2788 = vrot.lane.b32.xlu0 %v945, 33
  %v2789 = vpop.permute.xlu0 %2788
  %2790 = vrot.lane.b32.xlu0 %v1513, 33
  %v2791 = vpop.permute.xlu0 %2790
  %2792 = vrot.lane.b32.xlu0 %v1515, 33
  %v2793 = vpop.permute.xlu0 %2792
  %2794 = vrot.lane.b32.xlu0 %v2107, 33
  %v2795 = vpop.permute.xlu0 %2794
  %2796 = vrot.lane.b32.xlu0 %v2109, 33
  %v2797 = vpop.permute.xlu0 %2796
  %2860 = vrot.lane.b32.xlu0 %v359, 36
  %v2861 = vpop.permute.xlu0 %2860
  %2862 = vrot.lane.b32.xlu0 %v174, 36
  %v2863 = vpop.permute.xlu0 %2862
  %2864 = vrot.lane.b32.xlu0 %v360, 36
  %v2865 = vpop.permute.xlu0 %2864
  %2866 = vrot.lane.b32.xlu0 %v177, 36
  %v2867 = vpop.permute.xlu0 %2866
  %2868 = vrot.lane.b32.xlu0 %v361, 36
  %v2869 = vpop.permute.xlu0 %2868
  %2870 = vrot.lane.b32.xlu0 %v180, 36
  %v2871 = vpop.permute.xlu0 %2870
  %2872 = vrot.lane.b32.xlu0 %v362, 36
  %v2873 = vpop.permute.xlu0 %2872
  %2874 = vrot.lane.b32.xlu0 %v183, 36
  %v2875 = vpop.permute.xlu0 %2874
  %2876 = vrot.lane.b32.xlu0 %v363, 36
  %v2877 = vpop.permute.xlu0 %2876
  %2878 = vrot.lane.b32.xlu0 %v186, 36
  %v2879 = vpop.permute.xlu0 %2878
  %2880 = vrot.lane.b32.xlu0 %v364, 36
  %v2881 = vpop.permute.xlu0 %2880
  %2882 = vrot.lane.b32.xlu0 %v189, 36
  %v2883 = vpop.permute.xlu0 %2882
  %2884 = vrot.lane.b32.xlu0 %v365, 36
  %v2885 = vpop.permute.xlu0 %2884
  %2886 = vrot.lane.b32.xlu0 %v192, 36
  %v2887 = vpop.permute.xlu0 %2886
  %2888 = vrot.lane.b32.xlu0 %v366, 36
  %v2889 = vpop.permute.xlu0 %2888
  %2890 = vrot.lane.b32.xlu0 %v195, 36
  %v2891 = vpop.permute.xlu0 %2890
  %2892 = vrot.lane.b32.xlu0 %v367, 36
  %v2893 = vpop.permute.xlu0 %2892
  %2894 = vrot.lane.b32.xlu0 %v198, 36
  %v2895 = vpop.permute.xlu0 %2894
  %2896 = vrot.lane.b32.xlu0 %v368, 36
  %v2897 = vpop.permute.xlu0 %2896
  %2898 = vrot.lane.b32.xlu0 %v201, 36
  %v2899 = vpop.permute.xlu0 %2898
  %2900 = vrot.lane.b32.xlu0 %v369, 36
  %v2901 = vpop.permute.xlu0 %2900
  %2902 = vrot.lane.b32.xlu0 %v204, 36
  %v2903 = vpop.permute.xlu0 %2902
  %2904 = vrot.lane.b32.xlu0 %v370, 36
  %v2905 = vpop.permute.xlu0 %2904
  %2906 = vrot.lane.b32.xlu0 %v207, 36
  %v2907 = vpop.permute.xlu0 %2906
  %2908 = vrot.lane.b32.xlu0 %v371, 36
  %v2909 = vpop.permute.xlu0 %2908
  %2910 = vrot.lane.b32.xlu0 %v210, 36
  %v2911 = vpop.permute.xlu0 %2910
  %2912 = vrot.lane.b32.xlu0 %v372, 36
  %v2913 = vpop.permute.xlu0 %2912
  %2914 = vrot.lane.b32.xlu0 %v213, 36
  %v2915 = vpop.permute.xlu0 %2914
  %2916 = vrot.lane.b32.xlu0 %v356, 36
  %v2917 = vpop.permute.xlu0 %2916
  %2918 = vrot.lane.b32.xlu0 %v165, 36
  %v2919 = vpop.permute.xlu0 %2918
  %2920 = vrot.lane.b32.xlu0 %v375, 36
  %v2921 = vpop.permute.xlu0 %2920
  %2922 = vrot.lane.b32.xlu0 %v222, 36
  %v2923 = vpop.permute.xlu0 %2922
  %2924 = vrot.lane.b32.xlu0 %v376, 36
  %v2925 = vpop.permute.xlu0 %2924
  %2926 = vrot.lane.b32.xlu0 %v225, 36
  %v2927 = vpop.permute.xlu0 %2926
  %2928 = vrot.lane.b32.xlu0 %v377, 36
  %v2929 = vpop.permute.xlu0 %2928
  %2930 = vrot.lane.b32.xlu0 %v228, 36
  %v2931 = vpop.permute.xlu0 %2930
  %2932 = vrot.lane.b32.xlu0 %v378, 36
  %v2933 = vpop.permute.xlu0 %2932
  %2934 = vrot.lane.b32.xlu0 %v231, 36
  %v2935 = vpop.permute.xlu0 %2934
  %2936 = vrot.lane.b32.xlu0 %v379, 36
  %v2937 = vpop.permute.xlu0 %2936
  %2938 = vrot.lane.b32.xlu0 %v234, 36
  %v2939 = vpop.permute.xlu0 %2938
  %2940 = vrot.lane.b32.xlu0 %v380, 36
  %v2941 = vpop.permute.xlu0 %2940
  %2942 = vrot.lane.b32.xlu0 %v237, 36
  %v2943 = vpop.permute.xlu0 %2942
  %2944 = vrot.lane.b32.xlu0 %v381, 36
  %v2945 = vpop.permute.xlu0 %2944
  %2946 = vrot.lane.b32.xlu0 %v240, 36
  %v2947 = vpop.permute.xlu0 %2946
  %2948 = vrot.lane.b32.xlu0 %v382, 36
  %v2949 = vpop.permute.xlu0 %2948
  %2950 = vrot.lane.b32.xlu0 %v243, 36
  %v2951 = vpop.permute.xlu0 %2950
  %2952 = vrot.lane.b32.xlu0 %v383, 36
  %v2953 = vpop.permute.xlu0 %2952
  %2954 = vrot.lane.b32.xlu0 %v246, 36
  %v2955 = vpop.permute.xlu0 %2954
  %2956 = vrot.lane.b32.xlu0 %v384, 36
  %v2957 = vpop.permute.xlu0 %2956
  %2958 = vrot.lane.b32.xlu0 %v249, 36
  %v2959 = vpop.permute.xlu0 %2958
  %2960 = vrot.lane.b32.xlu0 %v385, 36
  %v2961 = vpop.permute.xlu0 %2960
  %2962 = vrot.lane.b32.xlu0 %v252, 36
  %v2963 = vpop.permute.xlu0 %2962
  %2964 = vrot.lane.b32.xlu0 %v386, 36
  %v2965 = vpop.permute.xlu0 %2964
  %2966 = vrot.lane.b32.xlu0 %v255, 36
  %v2967 = vpop.permute.xlu0 %2966
  %2968 = vrot.lane.b32.xlu0 %v387, 36
  %v2969 = vpop.permute.xlu0 %2968
  %2970 = vrot.lane.b32.xlu0 %v258, 36
  %v2971 = vpop.permute.xlu0 %2970
  %2972 = vrot.lane.b32.xlu0 %v388, 36
  %v2973 = vpop.permute.xlu0 %2972
  %2974 = vrot.lane.b32.xlu0 %v261, 36
  %v2975 = vpop.permute.xlu0 %2974
  %3034 = vrot.lane.b32.xlu0 %v498, 39
  %v3035 = vpop.permute.xlu0 %3034
  %3036 = vrot.lane.b32.xlu0 %v500, 39
  %v3037 = vpop.permute.xlu0 %3036
  %3038 = vrot.lane.b32.xlu0 %v503, 39
  %v3039 = vpop.permute.xlu0 %3038
  %3040 = vrot.lane.b32.xlu0 %v505, 39
  %v3041 = vpop.permute.xlu0 %3040
  %3042 = vrot.lane.b32.xlu0 %v508, 39
  %v3043 = vpop.permute.xlu0 %3042
  %3044 = vrot.lane.b32.xlu0 %v510, 39
  %v3045 = vpop.permute.xlu0 %3044
  %3046 = vrot.lane.b32.xlu0 %v513, 39
  %v3047 = vpop.permute.xlu0 %3046
  %3048 = vrot.lane.b32.xlu0 %v515, 39
  %v3049 = vpop.permute.xlu0 %3048
  %3050 = vrot.lane.b32.xlu0 %v518, 39
  %v3051 = vpop.permute.xlu0 %3050
  %3052 = vrot.lane.b32.xlu0 %v520, 39
  %v3053 = vpop.permute.xlu0 %3052
  %3054 = vrot.lane.b32.xlu0 %v523, 39
  %v3055 = vpop.permute.xlu0 %3054
  %3056 = vrot.lane.b32.xlu0 %v525, 39
  %v3057 = vpop.permute.xlu0 %3056
  %3058 = vrot.lane.b32.xlu0 %v528, 39
  %v3059 = vpop.permute.xlu0 %3058
  %3060 = vrot.lane.b32.xlu0 %v530, 39
  %v3061 = vpop.permute.xlu0 %3060
  %3062 = vrot.lane.b32.xlu0 %v533, 39
  %v3063 = vpop.permute.xlu0 %3062
  %3064 = vrot.lane.b32.xlu0 %v535, 39
  %v3065 = vpop.permute.xlu0 %3064
  %3066 = vrot.lane.b32.xlu0 %v538, 39
  %v3067 = vpop.permute.xlu0 %3066
  %3068 = vrot.lane.b32.xlu0 %v540, 39
  %v3069 = vpop.permute.xlu0 %3068
  %3070 = vrot.lane.b32.xlu0 %v543, 39
  %v3071 = vpop.permute.xlu0 %3070
  %3072 = vrot.lane.b32.xlu0 %v545, 39
  %v3073 = vpop.permute.xlu0 %3072
  %3074 = vrot.lane.b32.xlu0 %v548, 39
  %v3075 = vpop.permute.xlu0 %3074
  %3076 = vrot.lane.b32.xlu0 %v550, 39
  %v3077 = vpop.permute.xlu0 %3076
  %3078 = vrot.lane.b32.xlu0 %v553, 39
  %v3079 = vpop.permute.xlu0 %3078
  %3080 = vrot.lane.b32.xlu0 %v555, 39
  %v3081 = vpop.permute.xlu0 %3080
  %3082 = vrot.lane.b32.xlu0 %v1312, 39
  %v3083 = vpop.permute.xlu0 %3082
  %3084 = vrot.lane.b32.xlu0 %v1314, 39
  %v3085 = vpop.permute.xlu0 %3084
  %3086 = vrot.lane.b32.xlu0 %v1900, 39
  %v3087 = vpop.permute.xlu0 %3086
  %3088 = vrot.lane.b32.xlu0 %v1902, 39
  %v3089 = vpop.permute.xlu0 %3088
  %3090 = vrot.lane.b32.xlu0 %v483, 39
  %v3091 = vpop.permute.xlu0 %3090
  %3092 = vrot.lane.b32.xlu0 %v485, 39
  %v3093 = vpop.permute.xlu0 %3092
  %3094 = vrot.lane.b32.xlu0 %v568, 39
  %v3095 = vpop.permute.xlu0 %3094
  %3096 = vrot.lane.b32.xlu0 %v570, 39
  %v3097 = vpop.permute.xlu0 %3096
  %3098 = vrot.lane.b32.xlu0 %v573, 39
  %v3099 = vpop.permute.xlu0 %3098
  %3100 = vrot.lane.b32.xlu0 %v575, 39
  %v3101 = vpop.permute.xlu0 %3100
  %3102 = vrot.lane.b32.xlu0 %v578, 39
  %v3103 = vpop.permute.xlu0 %3102
  %3104 = vrot.lane.b32.xlu0 %v580, 39
  %v3105 = vpop.permute.xlu0 %3104
  %3106 = vrot.lane.b32.xlu0 %v583, 39
  %v3107 = vpop.permute.xlu0 %3106
  %3108 = vrot.lane.b32.xlu0 %v585, 39
  %v3109 = vpop.permute.xlu0 %3108
  %3110 = vrot.lane.b32.xlu0 %v588, 39
  %v3111 = vpop.permute.xlu0 %3110
  %3112 = vrot.lane.b32.xlu0 %v590, 39
  %v3113 = vpop.permute.xlu0 %3112
  %3114 = vrot.lane.b32.xlu0 %v593, 39
  %v3115 = vpop.permute.xlu0 %3114
  %3116 = vrot.lane.b32.xlu0 %v595, 39
  %v3117 = vpop.permute.xlu0 %3116
  %3118 = vrot.lane.b32.xlu0 %v598, 39
  %v3119 = vpop.permute.xlu0 %3118
  %3120 = vrot.lane.b32.xlu0 %v600, 39
  %v3121 = vpop.permute.xlu0 %3120
  %3122 = vrot.lane.b32.xlu0 %v603, 39
  %v3123 = vpop.permute.xlu0 %3122
  %3124 = vrot.lane.b32.xlu0 %v605, 39
  %v3125 = vpop.permute.xlu0 %3124
  %3126 = vrot.lane.b32.xlu0 %v608, 39
  %v3127 = vpop.permute.xlu0 %3126
  %3128 = vrot.lane.b32.xlu0 %v610, 39
  %v3129 = vpop.permute.xlu0 %3128
  %3130 = vrot.lane.b32.xlu0 %v613, 39
  %v3131 = vpop.permute.xlu0 %3130
  %3132 = vrot.lane.b32.xlu0 %v615, 39
  %v3133 = vpop.permute.xlu0 %3132
  %3134 = vrot.lane.b32.xlu0 %v618, 39
  %v3135 = vpop.permute.xlu0 %3134
  %3136 = vrot.lane.b32.xlu0 %v620, 39
  %v3137 = vpop.permute.xlu0 %3136
  %3138 = vrot.lane.b32.xlu0 %v623, 39
  %v3139 = vpop.permute.xlu0 %3138
  %3140 = vrot.lane.b32.xlu0 %v625, 39
  %v3141 = vpop.permute.xlu0 %3140
  %3142 = vrot.lane.b32.xlu0 %v1317, 39
  %v3143 = vpop.permute.xlu0 %3142
  %3144 = vrot.lane.b32.xlu0 %v1319, 39
  %v3145 = vpop.permute.xlu0 %3144
  %3146 = vrot.lane.b32.xlu0 %v1905, 39
  %v3147 = vpop.permute.xlu0 %3146
  %3148 = vrot.lane.b32.xlu0 %v1907, 39
  %v3149 = vpop.permute.xlu0 %3148
  %3208 = vrot.lane.b32.xlu0 %v818, 42
  %v3209 = vpop.permute.xlu0 %3208
  %3210 = vrot.lane.b32.xlu0 %v820, 42
  %v3211 = vpop.permute.xlu0 %3210
  %3212 = vrot.lane.b32.xlu0 %v823, 42
  %v3213 = vpop.permute.xlu0 %3212
  %3214 = vrot.lane.b32.xlu0 %v825, 42
  %v3215 = vpop.permute.xlu0 %3214
  %3216 = vrot.lane.b32.xlu0 %v828, 42
  %v3217 = vpop.permute.xlu0 %3216
  %3218 = vrot.lane.b32.xlu0 %v830, 42
  %v3219 = vpop.permute.xlu0 %3218
  %3220 = vrot.lane.b32.xlu0 %v833, 42
  %v3221 = vpop.permute.xlu0 %3220
  %3222 = vrot.lane.b32.xlu0 %v835, 42
  %v3223 = vpop.permute.xlu0 %3222
  %3224 = vrot.lane.b32.xlu0 %v838, 42
  %v3225 = vpop.permute.xlu0 %3224
  %3226 = vrot.lane.b32.xlu0 %v840, 42
  %v3227 = vpop.permute.xlu0 %3226
  %3228 = vrot.lane.b32.xlu0 %v843, 42
  %v3229 = vpop.permute.xlu0 %3228
  %3230 = vrot.lane.b32.xlu0 %v845, 42
  %v3231 = vpop.permute.xlu0 %3230
  %3232 = vrot.lane.b32.xlu0 %v848, 42
  %v3233 = vpop.permute.xlu0 %3232
  %3234 = vrot.lane.b32.xlu0 %v850, 42
  %v3235 = vpop.permute.xlu0 %3234
  %3236 = vrot.lane.b32.xlu0 %v853, 42
  %v3237 = vpop.permute.xlu0 %3236
  %3238 = vrot.lane.b32.xlu0 %v855, 42
  %v3239 = vpop.permute.xlu0 %3238
  %3240 = vrot.lane.b32.xlu0 %v858, 42
  %v3241 = vpop.permute.xlu0 %3240
  %3242 = vrot.lane.b32.xlu0 %v860, 42
  %v3243 = vpop.permute.xlu0 %3242
  %3244 = vrot.lane.b32.xlu0 %v863, 42
  %v3245 = vpop.permute.xlu0 %3244
  %3246 = vrot.lane.b32.xlu0 %v865, 42
  %v3247 = vpop.permute.xlu0 %3246
  %3248 = vrot.lane.b32.xlu0 %v868, 42
  %v3249 = vpop.permute.xlu0 %3248
  %3250 = vrot.lane.b32.xlu0 %v870, 42
  %v3251 = vpop.permute.xlu0 %3250
  %3252 = vrot.lane.b32.xlu0 %v873, 42
  %v3253 = vpop.permute.xlu0 %3252
  %3254 = vrot.lane.b32.xlu0 %v875, 42
  %v3255 = vpop.permute.xlu0 %3254
  %3256 = vrot.lane.b32.xlu0 %v1508, 42
  %v3257 = vpop.permute.xlu0 %3256
  %3258 = vrot.lane.b32.xlu0 %v1510, 42
  %v3259 = vpop.permute.xlu0 %3258
  %3260 = vrot.lane.b32.xlu0 %v2102, 42
  %v3261 = vpop.permute.xlu0 %3260
  %3262 = vrot.lane.b32.xlu0 %v2104, 42
  %v3263 = vpop.permute.xlu0 %3262
  %3264 = vrot.lane.b32.xlu0 %v803, 42
  %v3265 = vpop.permute.xlu0 %3264
  %3266 = vrot.lane.b32.xlu0 %v805, 42
  %v3267 = vpop.permute.xlu0 %3266
  %3268 = vrot.lane.b32.xlu0 %v888, 42
  %v3269 = vpop.permute.xlu0 %3268
  %3270 = vrot.lane.b32.xlu0 %v890, 42
  %v3271 = vpop.permute.xlu0 %3270
  %3272 = vrot.lane.b32.xlu0 %v893, 42
  %v3273 = vpop.permute.xlu0 %3272
  %3274 = vrot.lane.b32.xlu0 %v895, 42
  %v3275 = vpop.permute.xlu0 %3274
  %3276 = vrot.lane.b32.xlu0 %v898, 42
  %v3277 = vpop.permute.xlu0 %3276
  %3278 = vrot.lane.b32.xlu0 %v900, 42
  %v3279 = vpop.permute.xlu0 %3278
  %3280 = vrot.lane.b32.xlu0 %v903, 42
  %v3281 = vpop.permute.xlu0 %3280
  %3282 = vrot.lane.b32.xlu0 %v905, 42
  %v3283 = vpop.permute.xlu0 %3282
  %3284 = vrot.lane.b32.xlu0 %v908, 42
  %v3285 = vpop.permute.xlu0 %3284
  %3286 = vrot.lane.b32.xlu0 %v910, 42
  %v3287 = vpop.permute.xlu0 %3286
  %3288 = vrot.lane.b32.xlu0 %v913, 42
  %v3289 = vpop.permute.xlu0 %3288
  %3290 = vrot.lane.b32.xlu0 %v915, 42
  %v3291 = vpop.permute.xlu0 %3290
  %3292 = vrot.lane.b32.xlu0 %v918, 42
  %v3293 = vpop.permute.xlu0 %3292
  %3294 = vrot.lane.b32.xlu0 %v920, 42
  %v3295 = vpop.permute.xlu0 %3294
  %3296 = vrot.lane.b32.xlu0 %v923, 42
  %v3297 = vpop.permute.xlu0 %3296
  %3298 = vrot.lane.b32.xlu0 %v925, 42
  %v3299 = vpop.permute.xlu0 %3298
  %3300 = vrot.lane.b32.xlu0 %v928, 42
  %v3301 = vpop.permute.xlu0 %3300
  %3302 = vrot.lane.b32.xlu0 %v930, 42
  %v3303 = vpop.permute.xlu0 %3302
  %3304 = vrot.lane.b32.xlu0 %v933, 42
  %v3305 = vpop.permute.xlu0 %3304
  %3306 = vrot.lane.b32.xlu0 %v935, 42
  %v3307 = vpop.permute.xlu0 %3306
  %3308 = vrot.lane.b32.xlu0 %v938, 42
  %v3309 = vpop.permute.xlu0 %3308
  %3310 = vrot.lane.b32.xlu0 %v940, 42
  %v3311 = vpop.permute.xlu0 %3310
  %3312 = vrot.lane.b32.xlu0 %v943, 42
  %v3313 = vpop.permute.xlu0 %3312
  %3314 = vrot.lane.b32.xlu0 %v945, 42
  %v3315 = vpop.permute.xlu0 %3314
  %3316 = vrot.lane.b32.xlu0 %v1513, 42
  %v3317 = vpop.permute.xlu0 %3316
  %3318 = vrot.lane.b32.xlu0 %v1515, 42
  %v3319 = vpop.permute.xlu0 %3318
  %3320 = vrot.lane.b32.xlu0 %v2107, 42
  %v3321 = vpop.permute.xlu0 %3320
  %3322 = vrot.lane.b32.xlu0 %v2109, 42
  %v3323 = vpop.permute.xlu0 %3322
  %vm3382 = vcmask 23552
  %v3383 = vsel %vm3382, %v356, %v627
  %v3384 = vsel %vm3382, %v165, %v629
  %v3385 = vsel %vm3382, %v357, %v631
  %v3386 = vsel %vm3382, %v168, %v633
  %v3387 = vsel %vm3382, %v358, %v635
  %v3388 = vsel %vm3382, %v171, %v637
  %v3389 = vsel %vm3382, %v359, %v639
  %v3390 = vsel %vm3382, %v174, %v641
  %v3391 = vsel %vm3382, %v360, %v643
  %v3392 = vsel %vm3382, %v177, %v645
  %v3393 = vsel %vm3382, %v361, %v647
  %v3394 = vsel %vm3382, %v180, %v649
  %v3395 = vsel %vm3382, %v362, %v651
  %v3396 = vsel %vm3382, %v183, %v653
  %v3397 = vsel %vm3382, %v363, %v655
  %v3398 = vsel %vm3382, %v186, %v657
  %v3399 = vsel %vm3382, %v364, %v659
  %v3400 = vsel %vm3382, %v189, %v661
  %v3401 = vsel %vm3382, %v365, %v663
  %v3402 = vsel %vm3382, %v192, %v665
  %v3403 = vsel %vm3382, %v366, %v667
  %v3404 = vsel %vm3382, %v195, %v669
  %v3405 = vsel %vm3382, %v367, %v671
  %v3406 = vsel %vm3382, %v198, %v673
  %v3407 = vsel %vm3382, %v368, %v675
  %v3408 = vsel %vm3382, %v201, %v677
  %v3409 = vsel %vm3382, %v369, %v679
  %v3410 = vsel %vm3382, %v204, %v681
  %v3411 = vsel %vm3382, %v370, %v683
  %v3412 = vsel %vm3382, %v207, %v685
  %v3413 = vsel %vm3382, %v373, %v687
  %v3414 = vsel %vm3382, %v216, %v689
  %v3415 = vsel %vm3382, %v374, %v691
  %v3416 = vsel %vm3382, %v219, %v693
  %v3417 = vsel %vm3382, %v375, %v695
  %v3418 = vsel %vm3382, %v222, %v697
  %v3419 = vsel %vm3382, %v376, %v699
  %v3420 = vsel %vm3382, %v225, %v701
  %v3421 = vsel %vm3382, %v377, %v703
  %v3422 = vsel %vm3382, %v228, %v705
  %v3423 = vsel %vm3382, %v378, %v707
  %v3424 = vsel %vm3382, %v231, %v709
  %v3425 = vsel %vm3382, %v379, %v711
  %v3426 = vsel %vm3382, %v234, %v713
  %v3427 = vsel %vm3382, %v380, %v715
  %v3428 = vsel %vm3382, %v237, %v717
  %v3429 = vsel %vm3382, %v381, %v719
  %v3430 = vsel %vm3382, %v240, %v721
  %v3431 = vsel %vm3382, %v382, %v723
  %v3432 = vsel %vm3382, %v243, %v725
  %v3433 = vsel %vm3382, %v383, %v727
  %v3434 = vsel %vm3382, %v246, %v729
  %v3435 = vsel %vm3382, %v384, %v731
  %v3436 = vsel %vm3382, %v249, %v733
  %v3437 = vsel %vm3382, %v385, %v735
  %v3438 = vsel %vm3382, %v252, %v737
  %v3439 = vsel %vm3382, %v386, %v739
  %v3440 = vsel %vm3382, %v255, %v741
  %vm3441 = vcmask 48128
  %v3442 = vsel %vm3441, %v3383, %v947
  %v3443 = vsel %vm3441, %v3384, %v949
  %v3444 = vsel %vm3441, %v3385, %v951
  %v3445 = vsel %vm3441, %v3386, %v953
  %v3446 = vsel %vm3441, %v3387, %v955
  %v3447 = vsel %vm3441, %v3388, %v957
  %v3448 = vsel %vm3441, %v3389, %v959
  %v3449 = vsel %vm3441, %v3390, %v961
  %v3450 = vsel %vm3441, %v3391, %v963
  %v3451 = vsel %vm3441, %v3392, %v965
  %v3452 = vsel %vm3441, %v3393, %v967
  %v3453 = vsel %vm3441, %v3394, %v969
  %v3454 = vsel %vm3441, %v3395, %v971
  %v3455 = vsel %vm3441, %v3396, %v973
  %v3456 = vsel %vm3441, %v3397, %v975
  %v3457 = vsel %vm3441, %v3398, %v977
  %v3458 = vsel %vm3441, %v3399, %v979
  %v3459 = vsel %vm3441, %v3400, %v981
  %v3460 = vsel %vm3441, %v3401, %v983
  %v3461 = vsel %vm3441, %v3402, %v985
  %v3462 = vsel %vm3441, %v3403, %v987
  %v3463 = vsel %vm3441, %v3404, %v989
  %v3464 = vsel %vm3441, %v3405, %v991
  %v3465 = vsel %vm3441, %v3406, %v993
  %v3466 = vsel %vm3441, %v3407, %v995
  %v3467 = vsel %vm3441, %v3408, %v997
  %v3468 = vsel %vm3441, %v3409, %v999
  %v3469 = vsel %vm3441, %v3410, %v1001
  %v3470 = vsel %vm3441, %v3411, %v1003
  %v3471 = vsel %vm3441, %v3412, %v1005
  %v3472 = vsel %vm3441, %v3413, %v1007
  %v3473 = vsel %vm3441, %v3414, %v1009
  %v3474 = vsel %vm3441, %v3415, %v1011
  %v3475 = vsel %vm3441, %v3416, %v1013
  %v3476 = vsel %vm3441, %v3417, %v1015
  %v3477 = vsel %vm3441, %v3418, %v1017
  %v3478 = vsel %vm3441, %v3419, %v1019
  %v3479 = vsel %vm3441, %v3420, %v1021
  %v3480 = vsel %vm3441, %v3421, %v1023
  %v3481 = vsel %vm3441, %v3422, %v1025
  %v3482 = vsel %vm3441, %v3423, %v1027
  %v3483 = vsel %vm3441, %v3424, %v1029
  %v3484 = vsel %vm3441, %v3425, %v1031
  %v3485 = vsel %vm3441, %v3426, %v1033
  %v3486 = vsel %vm3441, %v3427, %v1035
  %v3487 = vsel %vm3441, %v3428, %v1037
  %v3488 = vsel %vm3441, %v3429, %v1039
  %v3489 = vsel %vm3441, %v3430, %v1041
  %v3490 = vsel %vm3441, %v3431, %v1043
  %v3491 = vsel %vm3441, %v3432, %v1045
  %v3492 = vsel %vm3441, %v3433, %v1047
  %v3493 = vsel %vm3441, %v3434, %v1049
  %v3494 = vsel %vm3441, %v3435, %v1051
  %v3495 = vsel %vm3441, %v3436, %v1053
  %v3496 = vsel %vm3441, %v3437, %v1055
  %v3497 = vsel %vm3441, %v3438, %v1057
  %v3498 = vsel %vm3441, %v3439, %v1059
  %v3499 = vsel %vm3441, %v3440, %v1061
  %vm3500 = vcmask 72704
  %v3501 = vsel %vm3500, %v3442, %v1123
  %v3502 = vsel %vm3500, %v3443, %v1125
  %v3503 = vsel %vm3500, %v3442, %v1127
  %v3504 = vsel %vm3500, %v3443, %v1129
  %v3505 = vsel %vm3500, %v3444, %v1131
  %v3506 = vsel %vm3500, %v3445, %v1133
  %v3507 = vsel %vm3500, %v3446, %v1135
  %v3508 = vsel %vm3500, %v3447, %v1137
  %v3509 = vsel %vm3500, %v3448, %v1139
  %v3510 = vsel %vm3500, %v3449, %v1141
  %v3511 = vsel %vm3500, %v3450, %v1143
  %v3512 = vsel %vm3500, %v3451, %v1145
  %v3513 = vsel %vm3500, %v3452, %v1147
  %v3514 = vsel %vm3500, %v3453, %v1149
  %v3515 = vsel %vm3500, %v3454, %v1151
  %v3516 = vsel %vm3500, %v3455, %v1153
  %v3517 = vsel %vm3500, %v3456, %v1155
  %v3518 = vsel %vm3500, %v3457, %v1157
  %v3519 = vsel %vm3500, %v3458, %v1159
  %v3520 = vsel %vm3500, %v3459, %v1161
  %v3521 = vsel %vm3500, %v3460, %v1163
  %v3522 = vsel %vm3500, %v3461, %v1165
  %v3523 = vsel %vm3500, %v3462, %v1167
  %v3524 = vsel %vm3500, %v3463, %v1169
  %v3525 = vsel %vm3500, %v3464, %v1171
  %v3526 = vsel %vm3500, %v3465, %v1173
  %v3527 = vsel %vm3500, %v3466, %v1175
  %v3528 = vsel %vm3500, %v3467, %v1177
  %v3529 = vsel %vm3500, %v3468, %v1179
  %v3530 = vsel %vm3500, %v3469, %v1181
  %v3531 = vsel %vm3500, %v3470, %v1183
  %v3532 = vsel %vm3500, %v3471, %v1185
  %v3533 = vsel %vm3500, %v3442, %v1187
  %v3534 = vsel %vm3500, %v3443, %v1189
  %v3535 = vsel %vm3500, %v3472, %v1191
  %v3536 = vsel %vm3500, %v3473, %v1193
  %v3537 = vsel %vm3500, %v3474, %v1195
  %v3538 = vsel %vm3500, %v3475, %v1197
  %v3539 = vsel %vm3500, %v3476, %v1199
  %v3540 = vsel %vm3500, %v3477, %v1201
  %v3541 = vsel %vm3500, %v3478, %v1203
  %v3542 = vsel %vm3500, %v3479, %v1205
  %v3543 = vsel %vm3500, %v3480, %v1207
  %v3544 = vsel %vm3500, %v3481, %v1209
  %v3545 = vsel %vm3500, %v3482, %v1211
  %v3546 = vsel %vm3500, %v3483, %v1213
  %v3547 = vsel %vm3500, %v3484, %v1215
  %v3548 = vsel %vm3500, %v3485, %v1217
  %v3549 = vsel %vm3500, %v3486, %v1219
  %v3550 = vsel %vm3500, %v3487, %v1221
  %v3551 = vsel %vm3500, %v3488, %v1223
  %v3552 = vsel %vm3500, %v3489, %v1225
  %v3553 = vsel %vm3500, %v3490, %v1227
  %v3554 = vsel %vm3500, %v3491, %v1229
  %v3555 = vsel %vm3500, %v3492, %v1231
  %v3556 = vsel %vm3500, %v3493, %v1233
  %v3557 = vsel %vm3500, %v3494, %v1235
  %v3558 = vsel %vm3500, %v3495, %v1237
  %v3559 = vsel %vm3500, %v3496, %v1239
  %v3560 = vsel %vm3500, %v3497, %v1241
  %v3561 = vsel %vm3500, %v3498, %v1243
  %v3562 = vsel %vm3500, %v3499, %v1245
  %vm3563 = vcmask 97280
  %v3564 = vsel %vm3563, %v3501, %v1321
  %v3565 = vsel %vm3563, %v3502, %v1323
  %v3566 = vsel %vm3563, %v3503, %v1325
  %v3567 = vsel %vm3563, %v3504, %v1327
  %v3568 = vsel %vm3563, %v3505, %v1329
  %v3569 = vsel %vm3563, %v3506, %v1331
  %v3570 = vsel %vm3563, %v3507, %v1333
  %v3571 = vsel %vm3563, %v3508, %v1335
  %v3572 = vsel %vm3563, %v3509, %v1337
  %v3573 = vsel %vm3563, %v3510, %v1339
  %v3574 = vsel %vm3563, %v3511, %v1341
  %v3575 = vsel %vm3563, %v3512, %v1343
  %v3576 = vsel %vm3563, %v3513, %v1345
  %v3577 = vsel %vm3563, %v3514, %v1347
  %v3578 = vsel %vm3563, %v3515, %v1349
  %v3579 = vsel %vm3563, %v3516, %v1351
  %v3580 = vsel %vm3563, %v3517, %v1353
  %v3581 = vsel %vm3563, %v3518, %v1355
  %v3582 = vsel %vm3563, %v3519, %v1357
  %v3583 = vsel %vm3563, %v3520, %v1359
  %v3584 = vsel %vm3563, %v3521, %v1361
  %v3585 = vsel %vm3563, %v3522, %v1363
  %v3586 = vsel %vm3563, %v3523, %v1365
  %v3587 = vsel %vm3563, %v3524, %v1367
  %v3588 = vsel %vm3563, %v3525, %v1369
  %v3589 = vsel %vm3563, %v3526, %v1371
  %v3590 = vsel %vm3563, %v3527, %v1373
  %v3591 = vsel %vm3563, %v3528, %v1375
  %v3592 = vsel %vm3563, %v3529, %v1377
  %v3593 = vsel %vm3563, %v3530, %v1379
  %v3594 = vsel %vm3563, %v3531, %v1381
  %v3595 = vsel %vm3563, %v3532, %v1383
  %v3596 = vsel %vm3563, %v3533, %v1385
  %v3597 = vsel %vm3563, %v3534, %v1387
  %v3598 = vsel %vm3563, %v3535, %v1389
  %v3599 = vsel %vm3563, %v3536, %v1391
  %v3600 = vsel %vm3563, %v3537, %v1393
  %v3601 = vsel %vm3563, %v3538, %v1395
  %v3602 = vsel %vm3563, %v3539, %v1397
  %v3603 = vsel %vm3563, %v3540, %v1399
  %v3604 = vsel %vm3563, %v3541, %v1401
  %v3605 = vsel %vm3563, %v3542, %v1403
  %v3606 = vsel %vm3563, %v3543, %v1405
  %v3607 = vsel %vm3563, %v3544, %v1407
  %v3608 = vsel %vm3563, %v3545, %v1409
  %v3609 = vsel %vm3563, %v3546, %v1411
  %v3610 = vsel %vm3563, %v3547, %v1413
  %v3611 = vsel %vm3563, %v3548, %v1415
  %v3612 = vsel %vm3563, %v3549, %v1417
  %v3613 = vsel %vm3563, %v3550, %v1419
  %v3614 = vsel %vm3563, %v3551, %v1421
  %v3615 = vsel %vm3563, %v3552, %v1423
  %v3616 = vsel %vm3563, %v3553, %v1425
  %v3617 = vsel %vm3563, %v3554, %v1427
  %v3618 = vsel %vm3563, %v3555, %v1429
  %v3619 = vsel %vm3563, %v3556, %v1431
  %v3620 = vsel %vm3563, %v3557, %v1433
  %v3621 = vsel %vm3563, %v3558, %v1435
  %v3622 = vsel %vm3563, %v3559, %v1437
  %v3623 = vsel %vm3563, %v3560, %v1439
  %v3624 = vsel %vm3563, %v3561, %v1441
  %v3625 = vsel %vm3563, %v3562, %v1443
  %vm3626 = vcmask 121856
  %v3627 = vsel %vm3626, %v3564, %v1517
  %v3628 = vsel %vm3626, %v3565, %v1519
  %v3629 = vsel %vm3626, %v3566, %v1521
  %v3630 = vsel %vm3626, %v3567, %v1523
  %v3631 = vsel %vm3626, %v3568, %v1525
  %v3632 = vsel %vm3626, %v3569, %v1527
  %v3633 = vsel %vm3626, %v3570, %v1529
  %v3634 = vsel %vm3626, %v3571, %v1531
  %v3635 = vsel %vm3626, %v3572, %v1533
  %v3636 = vsel %vm3626, %v3573, %v1535
  %v3637 = vsel %vm3626, %v3574, %v1537
  %v3638 = vsel %vm3626, %v3575, %v1539
  %v3639 = vsel %vm3626, %v3576, %v1541
  %v3640 = vsel %vm3626, %v3577, %v1543
  %v3641 = vsel %vm3626, %v3578, %v1545
  %v3642 = vsel %vm3626, %v3579, %v1547
  %v3643 = vsel %vm3626, %v3580, %v1549
  %v3644 = vsel %vm3626, %v3581, %v1551
  %v3645 = vsel %vm3626, %v3582, %v1553
  %v3646 = vsel %vm3626, %v3583, %v1555
  %v3647 = vsel %vm3626, %v3584, %v1557
  %v3648 = vsel %vm3626, %v3585, %v1559
  %v3649 = vsel %vm3626, %v3586, %v1561
  %v3650 = vsel %vm3626, %v3587, %v1563
  %v3651 = vsel %vm3626, %v3588, %v1565
  %v3652 = vsel %vm3626, %v3589, %v1567
  %v3653 = vsel %vm3626, %v3590, %v1569
  %v3654 = vsel %vm3626, %v3591, %v1571
  %v3655 = vsel %vm3626, %v3592, %v1573
  %v3656 = vsel %vm3626, %v3593, %v1575
  %v3657 = vsel %vm3626, %v3594, %v1577
  %v3658 = vsel %vm3626, %v3595, %v1579
  %v3659 = vsel %vm3626, %v3596, %v1581
  %v3660 = vsel %vm3626, %v3597, %v1583
  %v3661 = vsel %vm3626, %v3598, %v1585
  %v3662 = vsel %vm3626, %v3599, %v1587
  %v3663 = vsel %vm3626, %v3600, %v1589
  %v3664 = vsel %vm3626, %v3601, %v1591
  %v3665 = vsel %vm3626, %v3602, %v1593
  %v3666 = vsel %vm3626, %v3603, %v1595
  %v3667 = vsel %vm3626, %v3604, %v1597
  %v3668 = vsel %vm3626, %v3605, %v1599
  %v3669 = vsel %vm3626, %v3606, %v1601
  %v3670 = vsel %vm3626, %v3607, %v1603
  %v3671 = vsel %vm3626, %v3608, %v1605
  %v3672 = vsel %vm3626, %v3609, %v1607
  %v3673 = vsel %vm3626, %v3610, %v1609
  %v3674 = vsel %vm3626, %v3611, %v1611
  %v3675 = vsel %vm3626, %v3612, %v1613
  %v3676 = vsel %vm3626, %v3613, %v1615
  %v3677 = vsel %vm3626, %v3614, %v1617
  %v3678 = vsel %vm3626, %v3615, %v1619
  %v3679 = vsel %vm3626, %v3616, %v1621
  %v3680 = vsel %vm3626, %v3617, %v1623
  %v3681 = vsel %vm3626, %v3618, %v1625
  %v3682 = vsel %vm3626, %v3619, %v1627
  %v3683 = vsel %vm3626, %v3620, %v1629
  %v3684 = vsel %vm3626, %v3621, %v1631
  %v3685 = vsel %vm3626, %v3622, %v1633
  %v3686 = vsel %vm3626, %v3623, %v1635
  %v3687 = vsel %vm3626, %v3624, %v1637
  %v3688 = vsel %vm3626, %v3625, %v1639
  %vm3689 = vcmask 146432
  %v3690 = vsel %vm3689, %v3627, %v1705
  %v3691 = vsel %vm3689, %v3628, %v1707
  %v3692 = vsel %vm3689, %v3629, %v1709
  %v3693 = vsel %vm3689, %v3630, %v1711
  %v3694 = vsel %vm3689, %v3631, %v1713
  %v3695 = vsel %vm3689, %v3632, %v1715
  %v3696 = vsel %vm3689, %v3633, %v1717
  %v3697 = vsel %vm3689, %v3634, %v1719
  %v3698 = vsel %vm3689, %v3635, %v1721
  %v3699 = vsel %vm3689, %v3636, %v1723
  %v3700 = vsel %vm3689, %v3637, %v1725
  %v3701 = vsel %vm3689, %v3638, %v1727
  %v3702 = vsel %vm3689, %v3639, %v1729
  %v3703 = vsel %vm3689, %v3640, %v1731
  %v3704 = vsel %vm3689, %v3641, %v1733
  %v3705 = vsel %vm3689, %v3642, %v1735
  %v3706 = vsel %vm3689, %v3643, %v1737
  %v3707 = vsel %vm3689, %v3644, %v1739
  %v3708 = vsel %vm3689, %v3645, %v1741
  %v3709 = vsel %vm3689, %v3646, %v1743
  %v3710 = vsel %vm3689, %v3647, %v1745
  %v3711 = vsel %vm3689, %v3648, %v1747
  %v3712 = vsel %vm3689, %v3649, %v1749
  %v3713 = vsel %vm3689, %v3650, %v1751
  %v3714 = vsel %vm3689, %v3651, %v1753
  %v3715 = vsel %vm3689, %v3652, %v1755
  %v3716 = vsel %vm3689, %v3653, %v1757
  %v3717 = vsel %vm3689, %v3654, %v1759
  %v3718 = vsel %vm3689, %v3655, %v1761
  %v3719 = vsel %vm3689, %v3656, %v1763
  %v3720 = vsel %vm3689, %v3657, %v1765
  %v3721 = vsel %vm3689, %v3658, %v1767
  %v3722 = vsel %vm3689, %v3627, %v1769
  %v3723 = vsel %vm3689, %v3628, %v1771
  %v3724 = vsel %vm3689, %v3659, %v1773
  %v3725 = vsel %vm3689, %v3660, %v1775
  %v3726 = vsel %vm3689, %v3661, %v1777
  %v3727 = vsel %vm3689, %v3662, %v1779
  %v3728 = vsel %vm3689, %v3663, %v1781
  %v3729 = vsel %vm3689, %v3664, %v1783
  %v3730 = vsel %vm3689, %v3665, %v1785
  %v3731 = vsel %vm3689, %v3666, %v1787
  %v3732 = vsel %vm3689, %v3667, %v1789
  %v3733 = vsel %vm3689, %v3668, %v1791
  %v3734 = vsel %vm3689, %v3669, %v1793
  %v3735 = vsel %vm3689, %v3670, %v1795
  %v3736 = vsel %vm3689, %v3671, %v1797
  %v3737 = vsel %vm3689, %v3672, %v1799
  %v3738 = vsel %vm3689, %v3673, %v1801
  %v3739 = vsel %vm3689, %v3674, %v1803
  %v3740 = vsel %vm3689, %v3675, %v1805
  %v3741 = vsel %vm3689, %v3676, %v1807
  %v3742 = vsel %vm3689, %v3677, %v1809
  %v3743 = vsel %vm3689, %v3678, %v1811
  %v3744 = vsel %vm3689, %v3679, %v1813
  %v3745 = vsel %vm3689, %v3680, %v1815
  %v3746 = vsel %vm3689, %v3681, %v1817
  %v3747 = vsel %vm3689, %v3682, %v1819
  %v3748 = vsel %vm3689, %v3683, %v1821
  %v3749 = vsel %vm3689, %v3684, %v1823
  %v3750 = vsel %vm3689, %v3685, %v1825
  %v3751 = vsel %vm3689, %v3686, %v1827
  %v3752 = vsel %vm3689, %v3687, %v1829
  %v3753 = vsel %vm3689, %v3688, %v1831
  %vm3754 = vcmask 171008
  %v3755 = vsel %vm3754, %v3690, %v1909
  %v3756 = vsel %vm3754, %v3691, %v1911
  %v3757 = vsel %vm3754, %v3692, %v1913
  %v3758 = vsel %vm3754, %v3693, %v1915
  %v3759 = vsel %vm3754, %v3694, %v1917
  %v3760 = vsel %vm3754, %v3695, %v1919
  %v3761 = vsel %vm3754, %v3696, %v1921
  %v3762 = vsel %vm3754, %v3697, %v1923
  %v3763 = vsel %vm3754, %v3698, %v1925
  %v3764 = vsel %vm3754, %v3699, %v1927
  %v3765 = vsel %vm3754, %v3700, %v1929
  %v3766 = vsel %vm3754, %v3701, %v1931
  %v3767 = vsel %vm3754, %v3702, %v1933
  %v3768 = vsel %vm3754, %v3703, %v1935
  %v3769 = vsel %vm3754, %v3704, %v1937
  %v3770 = vsel %vm3754, %v3705, %v1939
  %v3771 = vsel %vm3754, %v3706, %v1941
  %v3772 = vsel %vm3754, %v3707, %v1943
  %v3773 = vsel %vm3754, %v3708, %v1945
  %v3774 = vsel %vm3754, %v3709, %v1947
  %v3775 = vsel %vm3754, %v3710, %v1949
  %v3776 = vsel %vm3754, %v3711, %v1951
  %v3777 = vsel %vm3754, %v3712, %v1953
  %v3778 = vsel %vm3754, %v3713, %v1955
  %v3779 = vsel %vm3754, %v3714, %v1957
  %v3780 = vsel %vm3754, %v3715, %v1959
  %v3781 = vsel %vm3754, %v3716, %v1961
  %v3782 = vsel %vm3754, %v3717, %v1963
  %v3783 = vsel %vm3754, %v3718, %v1965
  %v3784 = vsel %vm3754, %v3719, %v1967
  %v3785 = vsel %vm3754, %v3720, %v1969
  %v3786 = vsel %vm3754, %v3721, %v1971
  %v3787 = vsel %vm3754, %v3722, %v1973
  %v3788 = vsel %vm3754, %v3723, %v1975
  %v3789 = vsel %vm3754, %v3724, %v1977
  %v3790 = vsel %vm3754, %v3725, %v1979
  %v3791 = vsel %vm3754, %v3726, %v1981
  %v3792 = vsel %vm3754, %v3727, %v1983
  %v3793 = vsel %vm3754, %v3728, %v1985
  %v3794 = vsel %vm3754, %v3729, %v1987
  %v3795 = vsel %vm3754, %v3730, %v1989
  %v3796 = vsel %vm3754, %v3731, %v1991
  %v3797 = vsel %vm3754, %v3732, %v1993
  %v3798 = vsel %vm3754, %v3733, %v1995
  %v3799 = vsel %vm3754, %v3734, %v1997
  %v3800 = vsel %vm3754, %v3735, %v1999
  %v3801 = vsel %vm3754, %v3736, %v2001
  %v3802 = vsel %vm3754, %v3737, %v2003
  %v3803 = vsel %vm3754, %v3738, %v2005
  %v3804 = vsel %vm3754, %v3739, %v2007
  %v3805 = vsel %vm3754, %v3740, %v2009
  %v3806 = vsel %vm3754, %v3741, %v2011
  %v3807 = vsel %vm3754, %v3742, %v2013
  %v3808 = vsel %vm3754, %v3743, %v2015
  %v3809 = vsel %vm3754, %v3744, %v2017
  %v3810 = vsel %vm3754, %v3745, %v2019
  %v3811 = vsel %vm3754, %v3746, %v2021
  %v3812 = vsel %vm3754, %v3747, %v2023
  %v3813 = vsel %vm3754, %v3748, %v2025
  %v3814 = vsel %vm3754, %v3749, %v2027
  %v3815 = vsel %vm3754, %v3750, %v2029
  %v3816 = vsel %vm3754, %v3751, %v2031
  %v3817 = vsel %vm3754, %v3752, %v2033
  %v3818 = vsel %vm3754, %v3753, %v2035
  %vm3819 = vcmask 195584
  %v3820 = vsel %vm3819, %v3755, %v2111
  %v3821 = vsel %vm3819, %v3756, %v2113
  %v3822 = vsel %vm3819, %v3757, %v2115
  %v3823 = vsel %vm3819, %v3758, %v2117
  %v3824 = vsel %vm3819, %v3759, %v2119
  %v3825 = vsel %vm3819, %v3760, %v2121
  %v3826 = vsel %vm3819, %v3761, %v2123
  %v3827 = vsel %vm3819, %v3762, %v2125
  %v3828 = vsel %vm3819, %v3763, %v2127
  %v3829 = vsel %vm3819, %v3764, %v2129
  %v3830 = vsel %vm3819, %v3765, %v2131
  %v3831 = vsel %vm3819, %v3766, %v2133
  %v3832 = vsel %vm3819, %v3767, %v2135
  %v3833 = vsel %vm3819, %v3768, %v2137
  %v3834 = vsel %vm3819, %v3769, %v2139
  %v3835 = vsel %vm3819, %v3770, %v2141
  %v3836 = vsel %vm3819, %v3771, %v2143
  %v3837 = vsel %vm3819, %v3772, %v2145
  %v3838 = vsel %vm3819, %v3773, %v2147
  %v3839 = vsel %vm3819, %v3774, %v2149
  %v3840 = vsel %vm3819, %v3775, %v2151
  %v3841 = vsel %vm3819, %v3776, %v2153
  %v3842 = vsel %vm3819, %v3777, %v2155
  %v3843 = vsel %vm3819, %v3778, %v2157
  %v3844 = vsel %vm3819, %v3779, %v2159
  %v3845 = vsel %vm3819, %v3780, %v2161
  %v3846 = vsel %vm3819, %v3781, %v2163
  %v3847 = vsel %vm3819, %v3782, %v2165
  %v3848 = vsel %vm3819, %v3783, %v2167
  %v3849 = vsel %vm3819, %v3784, %v2169
  %v3850 = vsel %vm3819, %v3785, %v2171
  %v3851 = vsel %vm3819, %v3786, %v2173
  %v3852 = vsel %vm3819, %v3787, %v2175
  %v3853 = vsel %vm3819, %v3788, %v2177
  %v3854 = vsel %vm3819, %v3789, %v2179
  %v3855 = vsel %vm3819, %v3790, %v2181
  %v3856 = vsel %vm3819, %v3791, %v2183
  %v3857 = vsel %vm3819, %v3792, %v2185
  %v3858 = vsel %vm3819, %v3793, %v2187
  %v3859 = vsel %vm3819, %v3794, %v2189
  %v3860 = vsel %vm3819, %v3795, %v2191
  %v3861 = vsel %vm3819, %v3796, %v2193
  %v3862 = vsel %vm3819, %v3797, %v2195
  %v3863 = vsel %vm3819, %v3798, %v2197
  %v3864 = vsel %vm3819, %v3799, %v2199
  %v3865 = vsel %vm3819, %v3800, %v2201
  %v3866 = vsel %vm3819, %v3801, %v2203
  %v3867 = vsel %vm3819, %v3802, %v2205
  %v3868 = vsel %vm3819, %v3803, %v2207
  %v3869 = vsel %vm3819, %v3804, %v2209
  %v3870 = vsel %vm3819, %v3805, %v2211
  %v3871 = vsel %vm3819, %v3806, %v2213
  %v3872 = vsel %vm3819, %v3807, %v2215
  %v3873 = vsel %vm3819, %v3808, %v2217
  %v3874 = vsel %vm3819, %v3809, %v2219
  %v3875 = vsel %vm3819, %v3810, %v2221
  %v3876 = vsel %vm3819, %v3811, %v2223
  %v3877 = vsel %vm3819, %v3812, %v2225
  %v3878 = vsel %vm3819, %v3813, %v2227
  %v3879 = vsel %vm3819, %v3814, %v2229
  %v3880 = vsel %vm3819, %v3815, %v2231
  %v3881 = vsel %vm3819, %v3816, %v2233
  %v3882 = vsel %vm3819, %v3817, %v2235
  %v3883 = vsel %vm3819, %v3818, %v2237
  %vm3884 = vcmask 220160
  %v3885 = vsel %vm3884, %v3820, %v2303
  %v3886 = vsel %vm3884, %v3821, %v2305
  %v3887 = vsel %vm3884, %v3822, %v2307
  %v3888 = vsel %vm3884, %v3823, %v2309
  %v3889 = vsel %vm3884, %v3824, %v2311
  %v3890 = vsel %vm3884, %v3825, %v2313
  %v3891 = vsel %vm3884, %v3826, %v2315
  %v3892 = vsel %vm3884, %v3827, %v2317
  %v3893 = vsel %vm3884, %v3828, %v2319
  %v3894 = vsel %vm3884, %v3829, %v2321
  %v3895 = vsel %vm3884, %v3830, %v2323
  %v3896 = vsel %vm3884, %v3831, %v2325
  %v3897 = vsel %vm3884, %v3832, %v2327
  %v3898 = vsel %vm3884, %v3833, %v2329
  %v3899 = vsel %vm3884, %v3834, %v2331
  %v3900 = vsel %vm3884, %v3835, %v2333
  %v3901 = vsel %vm3884, %v3836, %v2335
  %v3902 = vsel %vm3884, %v3837, %v2337
  %v3903 = vsel %vm3884, %v3838, %v2339
  %v3904 = vsel %vm3884, %v3839, %v2341
  %v3905 = vsel %vm3884, %v3840, %v2343
  %v3906 = vsel %vm3884, %v3841, %v2345
  %v3907 = vsel %vm3884, %v3842, %v2347
  %v3908 = vsel %vm3884, %v3843, %v2349
  %v3909 = vsel %vm3884, %v3844, %v2351
  %v3910 = vsel %vm3884, %v3845, %v2353
  %v3911 = vsel %vm3884, %v3846, %v2355
  %v3912 = vsel %vm3884, %v3847, %v2357
  %v3913 = vsel %vm3884, %v3848, %v2359
  %v3914 = vsel %vm3884, %v3849, %v2361
  %v3915 = vsel %vm3884, %v3850, %v2363
  %v3916 = vsel %vm3884, %v3851, %v2365
  %v3917 = vsel %vm3884, %v3852, %v2367
  %v3918 = vsel %vm3884, %v3853, %v2369
  %v3919 = vsel %vm3884, %v3854, %v2371
  %v3920 = vsel %vm3884, %v3855, %v2373
  %v3921 = vsel %vm3884, %v3856, %v2375
  %v3922 = vsel %vm3884, %v3857, %v2377
  %v3923 = vsel %vm3884, %v3858, %v2379
  %v3924 = vsel %vm3884, %v3859, %v2381
  %v3925 = vsel %vm3884, %v3860, %v2383
  %v3926 = vsel %vm3884, %v3861, %v2385
  %v3927 = vsel %vm3884, %v3862, %v2387
  %v3928 = vsel %vm3884, %v3863, %v2389
  %v3929 = vsel %vm3884, %v3864, %v2391
  %v3930 = vsel %vm3884, %v3865, %v2393
  %v3931 = vsel %vm3884, %v3866, %v2395
  %v3932 = vsel %vm3884, %v3867, %v2397
  %v3933 = vsel %vm3884, %v3868, %v2399
  %v3934 = vsel %vm3884, %v3869, %v2401
  %v3935 = vsel %vm3884, %v3870, %v2403
  %v3936 = vsel %vm3884, %v3871, %v2405
  %v3937 = vsel %vm3884, %v3872, %v2407
  %v3938 = vsel %vm3884, %v3873, %v2409
  %v3939 = vsel %vm3884, %v3874, %v2411
  %v3940 = vsel %vm3884, %v3875, %v2413
  %v3941 = vsel %vm3884, %v3876, %v2415
  %v3942 = vsel %vm3884, %v3877, %v2417
  %v3943 = vsel %vm3884, %v3878, %v2419
  %v3944 = vsel %vm3884, %v3879, %v2421
  %v3945 = vsel %vm3884, %v3880, %v2423
  %v3946 = vsel %vm3884, %v3881, %v2425
  %v3947 = vsel %vm3884, %v3882, %v2363
  %v3948 = vsel %vm3884, %v3883, %v2365
  %vm3949 = vcmask 244736
  %v3950 = vsel %vm3949, %v3885, %v2489
  %v3951 = vsel %vm3949, %v3886, %v2491
  %v3952 = vsel %vm3949, %v3887, %v2493
  %v3953 = vsel %vm3949, %v3888, %v2495
  %v3954 = vsel %vm3949, %v3889, %v2497
  %v3955 = vsel %vm3949, %v3890, %v2499
  %v3956 = vsel %vm3949, %v3891, %v2501
  %v3957 = vsel %vm3949, %v3892, %v2503
  %v3958 = vsel %vm3949, %v3893, %v2505
  %v3959 = vsel %vm3949, %v3894, %v2507
  %v3960 = vsel %vm3949, %v3895, %v2509
  %v3961 = vsel %vm3949, %v3896, %v2511
  %v3962 = vsel %vm3949, %v3897, %v2513
  %v3963 = vsel %vm3949, %v3898, %v2515
  %v3964 = vsel %vm3949, %v3899, %v2517
  %v3965 = vsel %vm3949, %v3900, %v2519
  %v3966 = vsel %vm3949, %v3901, %v2521
  %v3967 = vsel %vm3949, %v3902, %v2523
  %v3968 = vsel %vm3949, %v3903, %v2525
  %v3969 = vsel %vm3949, %v3904, %v2527
  %v3970 = vsel %vm3949, %v3905, %v2529
  %v3971 = vsel %vm3949, %v3906, %v2531
  %v3972 = vsel %vm3949, %v3907, %v2533
  %v3973 = vsel %vm3949, %v3908, %v2535
  %v3974 = vsel %vm3949, %v3909, %v2537
  %v3975 = vsel %vm3949, %v3910, %v2539
  %v3976 = vsel %vm3949, %v3911, %v2541
  %v3977 = vsel %vm3949, %v3912, %v2543
  %v3978 = vsel %vm3949, %v3913, %v2545
  %v3979 = vsel %vm3949, %v3914, %v2547
  %v3980 = vsel %vm3949, %v3915, %v2549
  %v3981 = vsel %vm3949, %v3916, %v2551
  %v3982 = vsel %vm3949, %v3917, %v2553
  %v3983 = vsel %vm3949, %v3918, %v2555
  %v3984 = vsel %vm3949, %v3919, %v2557
  %v3985 = vsel %vm3949, %v3920, %v2559
  %v3986 = vsel %vm3949, %v3921, %v2561
  %v3987 = vsel %vm3949, %v3922, %v2563
  %v3988 = vsel %vm3949, %v3923, %v2565
  %v3989 = vsel %vm3949, %v3924, %v2567
  %v3990 = vsel %vm3949, %v3925, %v2569
  %v3991 = vsel %vm3949, %v3926, %v2571
  %v3992 = vsel %vm3949, %v3927, %v2573
  %v3993 = vsel %vm3949, %v3928, %v2575
  %v3994 = vsel %vm3949, %v3929, %v2577
  %v3995 = vsel %vm3949, %v3930, %v2579
  %v3996 = vsel %vm3949, %v3931, %v2581
  %v3997 = vsel %vm3949, %v3932, %v2583
  %v3998 = vsel %vm3949, %v3933, %v2585
  %v3999 = vsel %vm3949, %v3934, %v2587
  %v4000 = vsel %vm3949, %v3935, %v2589
  %v4001 = vsel %vm3949, %v3936, %v2591
  %v4002 = vsel %vm3949, %v3937, %v2593
  %v4003 = vsel %vm3949, %v3938, %v2595
  %v4004 = vsel %vm3949, %v3939, %v2597
  %v4005 = vsel %vm3949, %v3940, %v2599
  %v4006 = vsel %vm3949, %v3941, %v2601
  %v4007 = vsel %vm3949, %v3942, %v2603
  %v4008 = vsel %vm3949, %v3943, %v2605
  %v4009 = vsel %vm3949, %v3944, %v2607
  %v4010 = vsel %vm3949, %v3945, %v2609
  %v4011 = vsel %vm3949, %v3946, %v2611
  %v4012 = vsel %vm3949, %v3947, %v2549
  %v4013 = vsel %vm3949, %v3948, %v2551
  %vm4014 = vcmask 269312
  %v4015 = vsel %vm4014, %v3950, %v2675
  %v4016 = vsel %vm4014, %v3951, %v2677
  %v4017 = vsel %vm4014, %v3952, %v2679
  %v4018 = vsel %vm4014, %v3953, %v2681
  %v4019 = vsel %vm4014, %v3954, %v2683
  %v4020 = vsel %vm4014, %v3955, %v2685
  %v4021 = vsel %vm4014, %v3956, %v2687
  %v4022 = vsel %vm4014, %v3957, %v2689
  %v4023 = vsel %vm4014, %v3958, %v2691
  %v4024 = vsel %vm4014, %v3959, %v2693
  %v4025 = vsel %vm4014, %v3960, %v2695
  %v4026 = vsel %vm4014, %v3961, %v2697
  %v4027 = vsel %vm4014, %v3962, %v2699
  %v4028 = vsel %vm4014, %v3963, %v2701
  %v4029 = vsel %vm4014, %v3964, %v2703
  %v4030 = vsel %vm4014, %v3965, %v2705
  %v4031 = vsel %vm4014, %v3966, %v2707
  %v4032 = vsel %vm4014, %v3967, %v2709
  %v4033 = vsel %vm4014, %v3968, %v2711
  %v4034 = vsel %vm4014, %v3969, %v2713
  %v4035 = vsel %vm4014, %v3970, %v2715
  %v4036 = vsel %vm4014, %v3971, %v2717
  %v4037 = vsel %vm4014, %v3972, %v2719
  %v4038 = vsel %vm4014, %v3973, %v2721
  %v4039 = vsel %vm4014, %v3974, %v2723
  %v4040 = vsel %vm4014, %v3975, %v2725
  %v4041 = vsel %vm4014, %v3976, %v2727
  %v4042 = vsel %vm4014, %v3977, %v2729
  %v4043 = vsel %vm4014, %v3978, %v2731
  %v4044 = vsel %vm4014, %v3979, %v2733
  %v4045 = vsel %vm4014, %v3980, %v2735
  %v4046 = vsel %vm4014, %v3981, %v2737
  %v4047 = vsel %vm4014, %v3982, %v2739
  %v4048 = vsel %vm4014, %v3983, %v2741
  %v4049 = vsel %vm4014, %v3984, %v2743
  %v4050 = vsel %vm4014, %v3985, %v2745
  %v4051 = vsel %vm4014, %v3986, %v2747
  %v4052 = vsel %vm4014, %v3987, %v2749
  %v4053 = vsel %vm4014, %v3988, %v2751
  %v4054 = vsel %vm4014, %v3989, %v2753
  %v4055 = vsel %vm4014, %v3990, %v2755
  %v4056 = vsel %vm4014, %v3991, %v2757
  %v4057 = vsel %vm4014, %v3992, %v2759
  %v4058 = vsel %vm4014, %v3993, %v2761
  %v4059 = vsel %vm4014, %v3994, %v2763
  %v4060 = vsel %vm4014, %v3995, %v2765
  %v4061 = vsel %vm4014, %v3996, %v2767
  %v4062 = vsel %vm4014, %v3997, %v2769
  %v4063 = vsel %vm4014, %v3998, %v2771
  %v4064 = vsel %vm4014, %v3999, %v2773
  %v4065 = vsel %vm4014, %v4000, %v2775
  %v4066 = vsel %vm4014, %v4001, %v2777
  %v4067 = vsel %vm4014, %v4002, %v2779
  %v4068 = vsel %vm4014, %v4003, %v2781
  %v4069 = vsel %vm4014, %v4004, %v2783
  %v4070 = vsel %vm4014, %v4005, %v2785
  %v4071 = vsel %vm4014, %v4006, %v2787
  %v4072 = vsel %vm4014, %v4007, %v2789
  %v4073 = vsel %vm4014, %v4008, %v2791
  %v4074 = vsel %vm4014, %v4009, %v2793
  %v4075 = vsel %vm4014, %v4010, %v2795
  %v4076 = vsel %vm4014, %v4011, %v2797
  %v4077 = vsel %vm4014, %v4012, %v2735
  %v4078 = vsel %vm4014, %v4013, %v2737
  %vm4079 = vcmask 293888
  %v4080 = vsel %vm4079, %v4015, %v2861
  %v4081 = vsel %vm4079, %v4016, %v2863
  %v4082 = vsel %vm4079, %v4017, %v2865
  %v4083 = vsel %vm4079, %v4018, %v2867
  %v4084 = vsel %vm4079, %v4019, %v2869
  %v4085 = vsel %vm4079, %v4020, %v2871
  %v4086 = vsel %vm4079, %v4021, %v2873
  %v4087 = vsel %vm4079, %v4022, %v2875
  %v4088 = vsel %vm4079, %v4023, %v2877
  %v4089 = vsel %vm4079, %v4024, %v2879
  %v4090 = vsel %vm4079, %v4025, %v2881
  %v4091 = vsel %vm4079, %v4026, %v2883
  %v4092 = vsel %vm4079, %v4027, %v2885
  %v4093 = vsel %vm4079, %v4028, %v2887
  %v4094 = vsel %vm4079, %v4029, %v2889
  %v4095 = vsel %vm4079, %v4030, %v2891
  %v4096 = vsel %vm4079, %v4031, %v2893
  %v4097 = vsel %vm4079, %v4032, %v2895
  %v4098 = vsel %vm4079, %v4033, %v2897
  %v4099 = vsel %vm4079, %v4034, %v2899
  %v4100 = vsel %vm4079, %v4035, %v2901
  %v4101 = vsel %vm4079, %v4036, %v2903
  %v4102 = vsel %vm4079, %v4037, %v2905
  %v4103 = vsel %vm4079, %v4038, %v2907
  %v4104 = vsel %vm4079, %v4039, %v2909
  %v4105 = vsel %vm4079, %v4040, %v2911
  %v4106 = vsel %vm4079, %v4041, %v2913
  %v4107 = vsel %vm4079, %v4042, %v2915
  %v4108 = vsel %vm4079, %v4043, %v2917
  %v4109 = vsel %vm4079, %v4044, %v2919
  %v4110 = vsel %vm4079, %v4045, %v2917
  %v4111 = vsel %vm4079, %v4046, %v2919
  %v4112 = vsel %vm4079, %v4047, %v2921
  %v4113 = vsel %vm4079, %v4048, %v2923
  %v4114 = vsel %vm4079, %v4049, %v2925
  %v4115 = vsel %vm4079, %v4050, %v2927
  %v4116 = vsel %vm4079, %v4051, %v2929
  %v4117 = vsel %vm4079, %v4052, %v2931
  %v4118 = vsel %vm4079, %v4053, %v2933
  %v4119 = vsel %vm4079, %v4054, %v2935
  %v4120 = vsel %vm4079, %v4055, %v2937
  %v4121 = vsel %vm4079, %v4056, %v2939
  %v4122 = vsel %vm4079, %v4057, %v2941
  %v4123 = vsel %vm4079, %v4058, %v2943
  %v4124 = vsel %vm4079, %v4059, %v2945
  %v4125 = vsel %vm4079, %v4060, %v2947
  %v4126 = vsel %vm4079, %v4061, %v2949
  %v4127 = vsel %vm4079, %v4062, %v2951
  %v4128 = vsel %vm4079, %v4063, %v2953
  %v4129 = vsel %vm4079, %v4064, %v2955
  %v4130 = vsel %vm4079, %v4065, %v2957
  %v4131 = vsel %vm4079, %v4066, %v2959
  %v4132 = vsel %vm4079, %v4067, %v2961
  %v4133 = vsel %vm4079, %v4068, %v2963
  %v4134 = vsel %vm4079, %v4069, %v2965
  %v4135 = vsel %vm4079, %v4070, %v2967
  %v4136 = vsel %vm4079, %v4071, %v2969
  %v4137 = vsel %vm4079, %v4072, %v2971
  %v4138 = vsel %vm4079, %v4073, %v2973
  %v4139 = vsel %vm4079, %v4074, %v2975
  %v4140 = vsel %vm4079, %v4075, %v2917
  %v4141 = vsel %vm4079, %v4076, %v2919
  %v4142 = vsel %vm4079, %v4077, %v2917
  %v4143 = vsel %vm4079, %v4078, %v2919
  %vm4144 = vcmask 318464
  %v4145 = vsel %vm4144, %v4080, %v3035
  %v4146 = vsel %vm4144, %v4081, %v3037
  %v4147 = vsel %vm4144, %v4082, %v3039
  %v4148 = vsel %vm4144, %v4083, %v3041
  %v4149 = vsel %vm4144, %v4084, %v3043
  %v4150 = vsel %vm4144, %v4085, %v3045
  %v4151 = vsel %vm4144, %v4086, %v3047
  %v4152 = vsel %vm4144, %v4087, %v3049
  %v4153 = vsel %vm4144, %v4088, %v3051
  %v4154 = vsel %vm4144, %v4089, %v3053
  %v4155 = vsel %vm4144, %v4090, %v3055
  %v4156 = vsel %vm4144, %v4091, %v3057
  %v4157 = vsel %vm4144, %v4092, %v3059
  %v4158 = vsel %vm4144, %v4093, %v3061
  %v4159 = vsel %vm4144, %v4094, %v3063
  %v4160 = vsel %vm4144, %v4095, %v3065
  %v4161 = vsel %vm4144, %v4096, %v3067
  %v4162 = vsel %vm4144, %v4097, %v3069
  %v4163 = vsel %vm4144, %v4098, %v3071
  %v4164 = vsel %vm4144, %v4099, %v3073
  %v4165 = vsel %vm4144, %v4100, %v3075
  %v4166 = vsel %vm4144, %v4101, %v3077
  %v4167 = vsel %vm4144, %v4102, %v3079
  %v4168 = vsel %vm4144, %v4103, %v3081
  %v4169 = vsel %vm4144, %v4104, %v3083
  %v4170 = vsel %vm4144, %v4105, %v3085
  %v4171 = vsel %vm4144, %v4106, %v3087
  %v4172 = vsel %vm4144, %v4107, %v3089
  %v4173 = vsel %vm4144, %v4108, %v3091
  %v4174 = vsel %vm4144, %v4109, %v3093
  %v4175 = vsel %vm4144, %v4110, %v3091
  %v4176 = vsel %vm4144, %v4111, %v3093
  %v4177 = vsel %vm4144, %v4112, %v3095
  %v4178 = vsel %vm4144, %v4113, %v3097
  %v4179 = vsel %vm4144, %v4114, %v3099
  %v4180 = vsel %vm4144, %v4115, %v3101
  %v4181 = vsel %vm4144, %v4116, %v3103
  %v4182 = vsel %vm4144, %v4117, %v3105
  %v4183 = vsel %vm4144, %v4118, %v3107
  %v4184 = vsel %vm4144, %v4119, %v3109
  %v4185 = vsel %vm4144, %v4120, %v3111
  %v4186 = vsel %vm4144, %v4121, %v3113
  %v4187 = vsel %vm4144, %v4122, %v3115
  %v4188 = vsel %vm4144, %v4123, %v3117
  %v4189 = vsel %vm4144, %v4124, %v3119
  %v4190 = vsel %vm4144, %v4125, %v3121
  %v4191 = vsel %vm4144, %v4126, %v3123
  %v4192 = vsel %vm4144, %v4127, %v3125
  %v4193 = vsel %vm4144, %v4128, %v3127
  %v4194 = vsel %vm4144, %v4129, %v3129
  %v4195 = vsel %vm4144, %v4130, %v3131
  %v4196 = vsel %vm4144, %v4131, %v3133
  %v4197 = vsel %vm4144, %v4132, %v3135
  %v4198 = vsel %vm4144, %v4133, %v3137
  %v4199 = vsel %vm4144, %v4134, %v3139
  %v4200 = vsel %vm4144, %v4135, %v3141
  %v4201 = vsel %vm4144, %v4136, %v3143
  %v4202 = vsel %vm4144, %v4137, %v3145
  %v4203 = vsel %vm4144, %v4138, %v3147
  %v4204 = vsel %vm4144, %v4139, %v3149
  %v4205 = vsel %vm4144, %v4140, %v3091
  %v4206 = vsel %vm4144, %v4141, %v3093
  %v4207 = vsel %vm4144, %v4142, %v3091
  %v4208 = vsel %vm4144, %v4143, %v3093
  %vm4209 = vcmask 343040
  %v4210 = vsel %vm4209, %v4145, %v3209
  %v4211 = vsel %vm4209, %v4146, %v3211
  %v4212 = vsel %vm4209, %v4147, %v3213
  %v4213 = vsel %vm4209, %v4148, %v3215
  %v4214 = vsel %vm4209, %v4149, %v3217
  %v4215 = vsel %vm4209, %v4150, %v3219
  %v4216 = vsel %vm4209, %v4151, %v3221
  %v4217 = vsel %vm4209, %v4152, %v3223
  %v4218 = vsel %vm4209, %v4153, %v3225
  %v4219 = vsel %vm4209, %v4154, %v3227
  %v4220 = vsel %vm4209, %v4155, %v3229
  %v4221 = vsel %vm4209, %v4156, %v3231
  %v4222 = vsel %vm4209, %v4157, %v3233
  %v4223 = vsel %vm4209, %v4158, %v3235
  %v4224 = vsel %vm4209, %v4159, %v3237
  %v4225 = vsel %vm4209, %v4160, %v3239
  %v4226 = vsel %vm4209, %v4161, %v3241
  %v4227 = vsel %vm4209, %v4162, %v3243
  %v4228 = vsel %vm4209, %v4163, %v3245
  %v4229 = vsel %vm4209, %v4164, %v3247
  %v4230 = vsel %vm4209, %v4165, %v3249
  %v4231 = vsel %vm4209, %v4166, %v3251
  %v4232 = vsel %vm4209, %v4167, %v3253
  %v4233 = vsel %vm4209, %v4168, %v3255
  %v4234 = vsel %vm4209, %v4169, %v3257
  %v4235 = vsel %vm4209, %v4170, %v3259
  %v4236 = vsel %vm4209, %v4171, %v3261
  %v4237 = vsel %vm4209, %v4172, %v3263
  %v4238 = vsel %vm4209, %v4173, %v3265
  %v4239 = vsel %vm4209, %v4174, %v3267
  %v4240 = vsel %vm4209, %v4175, %v3265
  %v4241 = vsel %vm4209, %v4176, %v3267
  %v4242 = vsel %vm4209, %v4177, %v3269
  %v4243 = vsel %vm4209, %v4178, %v3271
  %v4244 = vsel %vm4209, %v4179, %v3273
  %v4245 = vsel %vm4209, %v4180, %v3275
  %v4246 = vsel %vm4209, %v4181, %v3277
  %v4247 = vsel %vm4209, %v4182, %v3279
  %v4248 = vsel %vm4209, %v4183, %v3281
  %v4249 = vsel %vm4209, %v4184, %v3283
  %v4250 = vsel %vm4209, %v4185, %v3285
  %v4251 = vsel %vm4209, %v4186, %v3287
  %v4252 = vsel %vm4209, %v4187, %v3289
  %v4253 = vsel %vm4209, %v4188, %v3291
  %v4254 = vsel %vm4209, %v4189, %v3293
  %v4255 = vsel %vm4209, %v4190, %v3295
  %v4256 = vsel %vm4209, %v4191, %v3297
  %v4257 = vsel %vm4209, %v4192, %v3299
  %v4258 = vsel %vm4209, %v4193, %v3301
  %v4259 = vsel %vm4209, %v4194, %v3303
  %v4260 = vsel %vm4209, %v4195, %v3305
  %v4261 = vsel %vm4209, %v4196, %v3307
  %v4262 = vsel %vm4209, %v4197, %v3309
  %v4263 = vsel %vm4209, %v4198, %v3311
  %v4264 = vsel %vm4209, %v4199, %v3313
  %v4265 = vsel %vm4209, %v4200, %v3315
  %v4266 = vsel %vm4209, %v4201, %v3317
  %v4267 = vsel %vm4209, %v4202, %v3319
  %v4268 = vsel %vm4209, %v4203, %v3321
  %v4269 = vsel %vm4209, %v4204, %v3323
  %v4270 = vsel %vm4209, %v4205, %v3265
  %v4271 = vsel %vm4209, %v4206, %v3267
  %v4272 = vsel %vm4209, %v4207, %v3265
  %v4273 = vsel %vm4209, %v4208, %v3267
  %v4274 = vld [vmem:[%s1] sm:$0xff]
  %v4275 = vld [vmem:[%s1 + $0x8] sm:$0xff]
  %v4276 = vld [vmem:[%s1 + $0x10] sm:$0xff]
  %v4277 = vld [vmem:[%s1 + $0x18] sm:$0xff]
  %v4278 = vld [vmem:[%s1 + $0x20] sm:$0xff]
  %v4279 = vld [vmem:[%s1 + $0x28] sm:$0x1f]
  %v4280 = vld [vmem:[%s2] sm:$0x1]
  %v4282 = vlaneseq
  %v4283 = vshrl.u32 %v4282, 7
  %v4284 = vsub.s32 0, %v4283
  %v4285 = vrot.slane %v4280, %v4284
  %vm4287 = vcmask 367616
  %v4289 = vsel %vm4287, %v4210, 0
  %v4292 = vsel %vm4287, %v4211, 0
  %v4295 = vsel %vm4287, %v4212, 0
  %v4298 = vsel %vm4287, %v4213, 0
  %v4301 = vsel %vm4287, %v4214, 0
  %v4304 = vsel %vm4287, %v4215, 0
  %v4307 = vsel %vm4287, %v4216, 0
  %v4310 = vsel %vm4287, %v4217, 0
  %v4313 = vsel %vm4287, %v4218, 0
  %v4316 = vsel %vm4287, %v4219, 0
  %v4319 = vsel %vm4287, %v4220, 0
  %v4322 = vsel %vm4287, %v4221, 0
  %v4325 = vsel %vm4287, %v4222, 0
  %v4328 = vsel %vm4287, %v4223, 0
  %v4331 = vsel %vm4287, %v4224, 0
  %v4334 = vsel %vm4287, %v4225, 0
  %v4337 = vsel %vm4287, %v4226, 0
  %v4340 = vsel %vm4287, %v4227, 0
  %v4343 = vsel %vm4287, %v4228, 0
  %v4346 = vsel %vm4287, %v4229, 0
  %v4349 = vsel %vm4287, %v4230, 0
  %v4352 = vsel %vm4287, %v4231, 0
  %v4355 = vsel %vm4287, %v4232, 0
  %v4358 = vsel %vm4287, %v4233, 0
  %v4361 = vsel %vm4287, %v4234, 0
  %v4364 = vsel %vm4287, %v4235, 0
  %v4367 = vsel %vm4287, %v4236, 0
  %v4370 = vsel %vm4287, %v4237, 0
  %v4373 = vsel %vm4287, %v4238, 0
  %v4376 = vsel %vm4287, %v4239, 0
  %v4379 = vsel %vm4287, %v4240, 0
  %v4382 = vsel %vm4287, %v4241, 0
  %v4385 = vsel %vm4287, %v4242, 0
  %v4388 = vsel %vm4287, %v4243, 0
  %v4391 = vsel %vm4287, %v4244, 0
  %v4394 = vsel %vm4287, %v4245, 0
  %v4397 = vsel %vm4287, %v4246, 0
  %v4400 = vsel %vm4287, %v4247, 0
  %v4403 = vsel %vm4287, %v4248, 0
  %v4406 = vsel %vm4287, %v4249, 0
  %v4409 = vsel %vm4287, %v4250, 0
  %v4412 = vsel %vm4287, %v4251, 0
  %v4415 = vsel %vm4287, %v4252, 0
  %v4418 = vsel %vm4287, %v4253, 0
  %v4421 = vsel %vm4287, %v4254, 0
  %v4424 = vsel %vm4287, %v4255, 0
  %v4427 = vsel %vm4287, %v4256, 0
  %v4430 = vsel %vm4287, %v4257, 0
  %v4433 = vsel %vm4287, %v4258, 0
  %v4436 = vsel %vm4287, %v4259, 0
  %v4439 = vsel %vm4287, %v4260, 0
  %v4442 = vsel %vm4287, %v4261, 0
  %v4445 = vsel %vm4287, %v4262, 0
  %v4448 = vsel %vm4287, %v4263, 0
  %v4451 = vsel %vm4287, %v4264, 0
  %v4454 = vsel %vm4287, %v4265, 0
  %v4457 = vsel %vm4287, %v4266, 0
  %v4460 = vsel %vm4287, %v4267, 0
  %v4463 = vsel %vm4287, %v4268, 0
  %v4466 = vsel %vm4287, %v4269, 0
  %v4469 = vsel %vm4287, %v4270, 0
  %v4472 = vsel %vm4287, %v4271, 0
  %v4475 = vsel %vm4287, %v4272, 0
  %v4478 = vsel %vm4287, %v4273, 0
  %vm4480 = vcmask 1044480
  %v4482 = vsel %vm4480, %v4279, 0
  %4484 = vmatprep.subr.mxu0 0.0
  %4485 = vmatpush1.msra.mxu0 %v4274
  %4486 = vmatprep.subr.mxu0 0.0
  %4487 = vmatpush1.msra.mxu0 %v4275
  %4488 = vmatprep.subr.mxu0 0.0
  %4489 = vmatpush1.msra.mxu0 %v4276
  %4490 = vmatprep.subr.mxu0 0.0
  %4491 = vmatpush1.msra.mxu0 %v4277
  %4492 = vmatprep.subr.mxu0 0.0
  %4493 = vmatpush1.msra.mxu0 %v4278
  %4494 = vmatprep.subr.mxu0 0.0
  %4495 = vmatpush1.msra.mxu0 %v4482
  %4496 = vmatprep.subr.mxu0 0.0
  %4497 = vmatpush1.msra.mxu0 0.0
  %4498 = vmatprep.subr.mxu0 0.0
  %4499 = vmatpush1.msra.mxu0 0.0
  %4500 = vmatprep.subr.mxu0 0.0
  %4501 = vmatpush1.msra.mxu0 0.0
  %4502 = vmatprep.subr.mxu0 0.0
  %4503 = vmatpush1.msra.mxu0 0.0
  %4504 = vmatprep.subr.mxu0 0.0
  %4505 = vmatpush1.msra.mxu0 0.0
  %4506 = vmatprep.subr.mxu0 0.0
  %4507 = vmatpush1.msra.mxu0 0.0
  %4508 = vmatprep.subr.mxu0 0.0
  %4509 = vmatpush1.msra.mxu0 0.0
  %4510 = vmatprep.subr.mxu0 0.0
  %4511 = vmatpush1.msra.mxu0 0.0
  %4512 = vmatprep.subr.mxu0 0.0
  %4513 = vmatpush1.msra.mxu0 0.0
  %4514 = vmatprep.subr.mxu0 0.0
  %4515 = vmatpush1.msra.mxu0 0.0
  %4516 = vmatprep.subr.mxu0 0.0
  %4517 = vmatpush1.msra.mxu0 0.0
  %4518 = vmatprep.subr.mxu0 0.0
  %4519 = vmatpush1.msra.mxu0 0.0
  %4520 = vmatprep.subr.mxu0 0.0
  %4521 = vmatpush1.msra.mxu0 0.0
  %4522 = vmatprep.subr.mxu0 0.0
  %4523 = vmatpush1.msra.mxu0 0.0
  %4524 = vmatprep.subr.mxu0 0.0
  %4525 = vmatpush1.msra.mxu0 0.0
  %4526 = vmatprep.subr.mxu0 0.0
  %4527 = vmatpush1.msra.mxu0 0.0
  %4528 = vmatprep.subr.mxu0 0.0
  %4529 = vmatpush1.msra.mxu0 0.0
  %4530 = vmatprep.subr.mxu0 0.0
  %4531 = vmatpush1.msra.mxu0 0.0
  %4532 = vmatprep.subr.mxu0 0.0
  %4533 = vmatpush1.msra.mxu0 0.0
  %4534 = vmatprep.subr.mxu0 0.0
  %4535 = vmatpush1.msra.mxu0 0.0
  %4536 = vmatprep.subr.mxu0 0.0
  %4537 = vmatpush1.msra.mxu0 0.0
  %4538 = vmatprep.subr.mxu0 0.0
  %4539 = vmatpush1.msra.mxu0 0.0
  %4540 = vmatprep.subr.mxu0 0.0
  %4541 = vmatpush1.msra.mxu0 0.0
  %4542 = vmatprep.subr.mxu0 0.0
  %4543 = vmatpush1.msra.mxu0 0.0
  %4544 = vmatprep.subr.mxu0 0.0
  %4545 = vmatpush1.msra.mxu0 0.0
  %4546 = vmatprep.subr.mxu0 0.0
  %4547 = vmatpush1.msra.mxu0 0.0
  %4548 = vmatprep.mubr.f32.mxu0 0.0
  %4549 = vmatmul.mubr.f32.gmra.mrb[0].mxu0 %v4289
  %v4550 = vpop.f32.mrb[0].mxu0
  %v4551 = vadd.f32 %v4285, %v4550
  %v4552 = vpop.f32.mrb[0].mxu0
  %4553 = vmatprep.mubr.f32.mxu0 0.0
  %4554 = vmatmul.mubr.f32.gmra.mrb[0].mxu0 %v4292
  %v4555 = vpop.f32.mrb[0].mxu0
  %v4556 = vadd.f32 %v4285, %v4555
  %v4557 = vpop.f32.mrb[0].mxu0
  %4558 = vmatprep.mubr.f32.mxu0 0.0
  %4559 = vmatmul.mubr.f32.gmra.mrb[0].mxu0 %v4295
  %v4560 = vpop.f32.mrb[0].mxu0
  %v4561 = vadd.f32 %v4285, %v4560
  %v4562 = vpop.f32.mrb[0].mxu0
  %4563 = vmatprep.mubr.f32.mxu0 0.0
  %4564 = vmatmul.mubr.f32.gmra.mrb[0].mxu0 %v4298
  %v4565 = vpop.f32.mrb[0].mxu0
  %v4566 = vadd.f32 %v4285, %v4565
  %v4567 = vpop.f32.mrb[0].mxu0
  %4568 = vmatprep.mubr.f32.mxu0 0.0
  %4569 = vmatmul.mubr.f32.gmra.mrb[0].mxu0 %v4301
  %v4570 = vpop.f32.mrb[0].mxu0
  %v4571 = vadd.f32 %v4285, %v4570
  %v4572 = vpop.f32.mrb[0].mxu0
  %4573 = vmatprep.mubr.f32.mxu0 0.0
  %4574 = vmatmul.mubr.f32.gmra.mrb[0].mxu0 %v4304
  %v4575 = vpop.f32.mrb[0].mxu0
  %v4576 = vadd.f32 %v4285, %v4575
  %v4577 = vpop.f32.mrb[0].mxu0
  %4578 = vmatprep.mubr.f32.mxu0 0.0
  %4579 = vmatmul.mubr.f32.gmra.mrb[0].mxu0 %v4307
  %v4580 = vpop.f32.mrb[0].mxu0
  %v4581 = vadd.f32 %v4285, %v4580
  %v4582 = vpop.f32.mrb[0].mxu0
  %4583 = vmatprep.mubr.f32.mxu0 0.0
  %4584 = vmatmul.mubr.f32.gmra.mrb[0].mxu0 %v4310
  %v4585 = vpop.f32.mrb[0].mxu0
  %v4586 = vadd.f32 %v4285, %v4585
  %v4587 = vpop.f32.mrb[0].mxu0
  %4588 = vmatprep.mubr.f32.mxu0 0.0
  %4589 = vmatmul.mubr.f32.gmra.mrb[0].mxu0 %v4313
  %v4590 = vpop.f32.mrb[0].mxu0
  %v4591 = vadd.f32 %v4285, %v4590
  %v4592 = vpop.f32.mrb[0].mxu0
  %4593 = vmatprep.mubr.f32.mxu0 0.0
  %4594 = vmatmul.mubr.f32.gmra.mrb[0].mxu0 %v4316
  %v4595 = vpop.f32.mrb[0].mxu0
  %v4596 = vadd.f32 %v4285, %v4595
  %v4597 = vpop.f32.mrb[0].mxu0
  %4598 = vmatprep.mubr.f32.mxu0 0.0
  %4599 = vmatmul.mubr.f32.gmra.mrb[0].mxu0 %v4319
  %v4600 = vpop.f32.mrb[0].mxu0
  %v4601 = vadd.f32 %v4285, %v4600
  %v4602 = vpop.f32.mrb[0].mxu0
  %4603 = vmatprep.mubr.f32.mxu0 0.0
  %4604 = vmatmul.mubr.f32.gmra.mrb[0].mxu0 %v4322
  %v4605 = vpop.f32.mrb[0].mxu0
  %v4606 = vadd.f32 %v4285, %v4605
  %v4607 = vpop.f32.mrb[0].mxu0
  %4608 = vmatprep.mubr.f32.mxu0 0.0
  %4609 = vmatmul.mubr.f32.gmra.mrb[0].mxu0 %v4325
  %v4610 = vpop.f32.mrb[0].mxu0
  %v4611 = vadd.f32 %v4285, %v4610
  %v4612 = vpop.f32.mrb[0].mxu0
  %4613 = vmatprep.mubr.f32.mxu0 0.0
  %4614 = vmatmul.mubr.f32.gmra.mrb[0].mxu0 %v4328
  %v4615 = vpop.f32.mrb[0].mxu0
  %v4616 = vadd.f32 %v4285, %v4615
  %v4617 = vpop.f32.mrb[0].mxu0
  %4618 = vmatprep.mubr.f32.mxu0 0.0
  %4619 = vmatmul.mubr.f32.gmra.mrb[0].mxu0 %v4331
  %v4620 = vpop.f32.mrb[0].mxu0
  %v4621 = vadd.f32 %v4285, %v4620
  %v4622 = vpop.f32.mrb[0].mxu0
  %4623 = vmatprep.mubr.f32.mxu0 0.0
  %4624 = vmatmul.mubr.f32.gmra.mrb[0].mxu0 %v4334
  %v4625 = vpop.f32.mrb[0].mxu0
  %v4626 = vadd.f32 %v4285, %v4625
  %v4627 = vpop.f32.mrb[0].mxu0
  %4628 = vmatprep.mubr.f32.mxu0 0.0
  %4629 = vmatmul.mubr.f32.gmra.mrb[0].mxu0 %v4337
  %v4630 = vpop.f32.mrb[0].mxu0
  %v4631 = vadd.f32 %v4285, %v4630
  %v4632 = vpop.f32.mrb[0].mxu0
  %4633 = vmatprep.mubr.f32.mxu0 0.0
  %4634 = vmatmul.mubr.f32.gmra.mrb[0].mxu0 %v4340
  %v4635 = vpop.f32.mrb[0].mxu0
  %v4636 = vadd.f32 %v4285, %v4635
  %v4637 = vpop.f32.mrb[0].mxu0
  %4638 = vmatprep.mubr.f32.mxu0 0.0
  %4639 = vmatmul.mubr.f32.gmra.mrb[0].mxu0 %v4343
  %v4640 = vpop.f32.mrb[0].mxu0
  %v4641 = vadd.f32 %v4285, %v4640
  %v4642 = vpop.f32.mrb[0].mxu0
  %4643 = vmatprep.mubr.f32.mxu0 0.0
  %4644 = vmatmul.mubr.f32.gmra.mrb[0].mxu0 %v4346
  %v4645 = vpop.f32.mrb[0].mxu0
  %v4646 = vadd.f32 %v4285, %v4645
  %v4647 = vpop.f32.mrb[0].mxu0
  %4648 = vmatprep.mubr.f32.mxu0 0.0
  %4649 = vmatmul.mubr.f32.gmra.mrb[0].mxu0 %v4349
  %v4650 = vpop.f32.mrb[0].mxu0
  %v4651 = vadd.f32 %v4285, %v4650
  %v4652 = vpop.f32.mrb[0].mxu0
  %4653 = vmatprep.mubr.f32.mxu0 0.0
  %4654 = vmatmul.mubr.f32.gmra.mrb[0].mxu0 %v4352
  %v4655 = vpop.f32.mrb[0].mxu0
  %v4656 = vadd.f32 %v4285, %v4655
  %v4657 = vpop.f32.mrb[0].mxu0
  %4658 = vmatprep.mubr.f32.mxu0 0.0
  %4659 = vmatmul.mubr.f32.gmra.mrb[0].mxu0 %v4355
  %v4660 = vpop.f32.mrb[0].mxu0
  %v4661 = vadd.f32 %v4285, %v4660
  %v4662 = vpop.f32.mrb[0].mxu0
  %4663 = vmatprep.mubr.f32.mxu0 0.0
  %4664 = vmatmul.mubr.f32.gmra.mrb[0].mxu0 %v4358
  %v4665 = vpop.f32.mrb[0].mxu0
  %v4666 = vadd.f32 %v4285, %v4665
  %v4667 = vpop.f32.mrb[0].mxu0
  %4668 = vmatprep.mubr.f32.mxu0 0.0
  %4669 = vmatmul.mubr.f32.gmra.mrb[0].mxu0 %v4361
  %v4670 = vpop.f32.mrb[0].mxu0
  %v4671 = vadd.f32 %v4285, %v4670
  %v4672 = vpop.f32.mrb[0].mxu0
  %4673 = vmatprep.mubr.f32.mxu0 0.0
  %4674 = vmatmul.mubr.f32.gmra.mrb[0].mxu0 %v4364
  %v4675 = vpop.f32.mrb[0].mxu0
  %v4676 = vadd.f32 %v4285, %v4675
  %v4677 = vpop.f32.mrb[0].mxu0
  %4678 = vmatprep.mubr.f32.mxu0 0.0
  %4679 = vmatmul.mubr.f32.gmra.mrb[0].mxu0 %v4367
  %v4680 = vpop.f32.mrb[0].mxu0
  %v4681 = vadd.f32 %v4285, %v4680
  %v4682 = vpop.f32.mrb[0].mxu0
  %4683 = vmatprep.mubr.f32.mxu0 0.0
  %4684 = vmatmul.mubr.f32.gmra.mrb[0].mxu0 %v4370
  %v4685 = vpop.f32.mrb[0].mxu0
  %v4686 = vadd.f32 %v4285, %v4685
  %v4687 = vpop.f32.mrb[0].mxu0
  %4688 = vmatprep.mubr.f32.mxu0 0.0
  %4689 = vmatmul.mubr.f32.gmra.mrb[0].mxu0 %v4373
  %v4690 = vpop.f32.mrb[0].mxu0
  %v4691 = vadd.f32 %v4285, %v4690
  %v4692 = vpop.f32.mrb[0].mxu0
  %4693 = vmatprep.mubr.f32.mxu0 0.0
  %4694 = vmatmul.mubr.f32.gmra.mrb[0].mxu0 %v4376
  %v4695 = vpop.f32.mrb[0].mxu0
  %v4696 = vadd.f32 %v4285, %v4695
  %v4697 = vpop.f32.mrb[0].mxu0
  %4698 = vmatprep.mubr.f32.mxu0 0.0
  %4699 = vmatmul.mubr.f32.gmra.mrb[0].mxu0 %v4379
  %v4700 = vpop.f32.mrb[0].mxu0
  %v4701 = vadd.f32 %v4285, %v4700
  %v4702 = vpop.f32.mrb[0].mxu0
  %4703 = vmatprep.mubr.f32.mxu0 0.0
  %4704 = vmatmul.mubr.f32.gmra.mrb[0].mxu0 %v4382
  %v4705 = vpop.f32.mrb[0].mxu0
  %v4706 = vadd.f32 %v4285, %v4705
  %v4707 = vpop.f32.mrb[0].mxu0
  %4708 = vmatprep.mubr.f32.mxu0 0.0
  %4709 = vmatmul.mubr.f32.gmra.mrb[0].mxu0 %v4385
  %v4710 = vpop.f32.mrb[0].mxu0
  %v4711 = vadd.f32 %v4285, %v4710
  %v4712 = vpop.f32.mrb[0].mxu0
  %4713 = vmatprep.mubr.f32.mxu0 0.0
  %4714 = vmatmul.mubr.f32.gmra.mrb[0].mxu0 %v4388
  %v4715 = vpop.f32.mrb[0].mxu0
  %v4716 = vadd.f32 %v4285, %v4715
  %v4717 = vpop.f32.mrb[0].mxu0
  %4718 = vmatprep.mubr.f32.mxu0 0.0
  %4719 = vmatmul.mubr.f32.gmra.mrb[0].mxu0 %v4391
  %v4720 = vpop.f32.mrb[0].mxu0
  %v4721 = vadd.f32 %v4285, %v4720
  %v4722 = vpop.f32.mrb[0].mxu0
  %4723 = vmatprep.mubr.f32.mxu0 0.0
  %4724 = vmatmul.mubr.f32.gmra.mrb[0].mxu0 %v4394
  %v4725 = vpop.f32.mrb[0].mxu0
  %v4726 = vadd.f32 %v4285, %v4725
  %v4727 = vpop.f32.mrb[0].mxu0
  %4728 = vmatprep.mubr.f32.mxu0 0.0
  %4729 = vmatmul.mubr.f32.gmra.mrb[0].mxu0 %v4397
  %v4730 = vpop.f32.mrb[0].mxu0
  %v4731 = vadd.f32 %v4285, %v4730
  %v4732 = vpop.f32.mrb[0].mxu0
  %4733 = vmatprep.mubr.f32.mxu0 0.0
  %4734 = vmatmul.mubr.f32.gmra.mrb[0].mxu0 %v4400
  %v4735 = vpop.f32.mrb[0].mxu0
  %v4736 = vadd.f32 %v4285, %v4735
  %v4737 = vpop.f32.mrb[0].mxu0
  %4738 = vmatprep.mubr.f32.mxu0 0.0
  %4739 = vmatmul.mubr.f32.gmra.mrb[0].mxu0 %v4403
  %v4740 = vpop.f32.mrb[0].mxu0
  %v4741 = vadd.f32 %v4285, %v4740
  %v4742 = vpop.f32.mrb[0].mxu0
  %4743 = vmatprep.mubr.f32.mxu0 0.0
  %4744 = vmatmul.mubr.f32.gmra.mrb[0].mxu0 %v4406
  %v4745 = vpop.f32.mrb[0].mxu0
  %v4746 = vadd.f32 %v4285, %v4745
  %v4747 = vpop.f32.mrb[0].mxu0
  %4748 = vmatprep.mubr.f32.mxu0 0.0
  %4749 = vmatmul.mubr.f32.gmra.mrb[0].mxu0 %v4409
  %v4750 = vpop.f32.mrb[0].mxu0
  %v4751 = vadd.f32 %v4285, %v4750
  %v4752 = vpop.f32.mrb[0].mxu0
  %4753 = vmatprep.mubr.f32.mxu0 0.0
  %4754 = vmatmul.mubr.f32.gmra.mrb[0].mxu0 %v4412
  %v4755 = vpop.f32.mrb[0].mxu0
  %v4756 = vadd.f32 %v4285, %v4755
  %v4757 = vpop.f32.mrb[0].mxu0
  %4758 = vmatprep.mubr.f32.mxu0 0.0
  %4759 = vmatmul.mubr.f32.gmra.mrb[0].mxu0 %v4415
  %v4760 = vpop.f32.mrb[0].mxu0
  %v4761 = vadd.f32 %v4285, %v4760
  %v4762 = vpop.f32.mrb[0].mxu0
  %4763 = vmatprep.mubr.f32.mxu0 0.0
  %4764 = vmatmul.mubr.f32.gmra.mrb[0].mxu0 %v4418
  %v4765 = vpop.f32.mrb[0].mxu0
  %v4766 = vadd.f32 %v4285, %v4765
  %v4767 = vpop.f32.mrb[0].mxu0
  %4768 = vmatprep.mubr.f32.mxu0 0.0
  %4769 = vmatmul.mubr.f32.gmra.mrb[0].mxu0 %v4421
  %v4770 = vpop.f32.mrb[0].mxu0
  %v4771 = vadd.f32 %v4285, %v4770
  %v4772 = vpop.f32.mrb[0].mxu0
  %4773 = vmatprep.mubr.f32.mxu0 0.0
  %4774 = vmatmul.mubr.f32.gmra.mrb[0].mxu0 %v4424
  %v4775 = vpop.f32.mrb[0].mxu0
  %v4776 = vadd.f32 %v4285, %v4775
  %v4777 = vpop.f32.mrb[0].mxu0
  %4778 = vmatprep.mubr.f32.mxu0 0.0
  %4779 = vmatmul.mubr.f32.gmra.mrb[0].mxu0 %v4427
  %v4780 = vpop.f32.mrb[0].mxu0
  %v4781 = vadd.f32 %v4285, %v4780
  %v4782 = vpop.f32.mrb[0].mxu0
  %4783 = vmatprep.mubr.f32.mxu0 0.0
  %4784 = vmatmul.mubr.f32.gmra.mrb[0].mxu0 %v4430
  %v4785 = vpop.f32.mrb[0].mxu0
  %v4786 = vadd.f32 %v4285, %v4785
  %v4787 = vpop.f32.mrb[0].mxu0
  %4788 = vmatprep.mubr.f32.mxu0 0.0
  %4789 = vmatmul.mubr.f32.gmra.mrb[0].mxu0 %v4433
  %v4790 = vpop.f32.mrb[0].mxu0
  %v4791 = vadd.f32 %v4285, %v4790
  %v4792 = vpop.f32.mrb[0].mxu0
  %4793 = vmatprep.mubr.f32.mxu0 0.0
  %4794 = vmatmul.mubr.f32.gmra.mrb[0].mxu0 %v4436
  %v4795 = vpop.f32.mrb[0].mxu0
  %v4796 = vadd.f32 %v4285, %v4795
  %v4797 = vpop.f32.mrb[0].mxu0
  %4798 = vmatprep.mubr.f32.mxu0 0.0
  %4799 = vmatmul.mubr.f32.gmra.mrb[0].mxu0 %v4439
  %v4800 = vpop.f32.mrb[0].mxu0
  %v4801 = vadd.f32 %v4285, %v4800
  %v4802 = vpop.f32.mrb[0].mxu0
  %4803 = vmatprep.mubr.f32.mxu0 0.0
  %4804 = vmatmul.mubr.f32.gmra.mrb[0].mxu0 %v4442
  %v4805 = vpop.f32.mrb[0].mxu0
  %v4806 = vadd.f32 %v4285, %v4805
  %v4807 = vpop.f32.mrb[0].mxu0
  %4808 = vmatprep.mubr.f32.mxu0 0.0
  %4809 = vmatmul.mubr.f32.gmra.mrb[0].mxu0 %v4445
  %v4810 = vpop.f32.mrb[0].mxu0
  %v4811 = vadd.f32 %v4285, %v4810
  %v4812 = vpop.f32.mrb[0].mxu0
  %4813 = vmatprep.mubr.f32.mxu0 0.0
  %4814 = vmatmul.mubr.f32.gmra.mrb[0].mxu0 %v4448
  %v4815 = vpop.f32.mrb[0].mxu0
  %v4816 = vadd.f32 %v4285, %v4815
  %v4817 = vpop.f32.mrb[0].mxu0
  %4818 = vmatprep.mubr.f32.mxu0 0.0
  %4819 = vmatmul.mubr.f32.gmra.mrb[0].mxu0 %v4451
  %v4820 = vpop.f32.mrb[0].mxu0
  %v4821 = vadd.f32 %v4285, %v4820
  %v4822 = vpop.f32.mrb[0].mxu0
  %4823 = vmatprep.mubr.f32.mxu0 0.0
  %4824 = vmatmul.mubr.f32.gmra.mrb[0].mxu0 %v4454
  %v4825 = vpop.f32.mrb[0].mxu0
  %v4826 = vadd.f32 %v4285, %v4825
  %v4827 = vpop.f32.mrb[0].mxu0
  %4828 = vmatprep.mubr.f32.mxu0 0.0
  %4829 = vmatmul.mubr.f32.gmra.mrb[0].mxu0 %v4457
  %v4830 = vpop.f32.mrb[0].mxu0
  %v4831 = vadd.f32 %v4285, %v4830
  %v4832 = vpop.f32.mrb[0].mxu0
  %4833 = vmatprep.mubr.f32.mxu0 0.0
  %4834 = vmatmul.mubr.f32.gmra.mrb[0].mxu0 %v4460
  %v4835 = vpop.f32.mrb[0].mxu0
  %v4836 = vadd.f32 %v4285, %v4835
  %v4837 = vpop.f32.mrb[0].mxu0
  %4838 = vmatprep.mubr.f32.mxu0 0.0
  %4839 = vmatmul.mubr.f32.gmra.mrb[0].mxu0 %v4463
  %v4840 = vpop.f32.mrb[0].mxu0
  %v4841 = vadd.f32 %v4285, %v4840
  %v4842 = vpop.f32.mrb[0].mxu0
  %4843 = vmatprep.mubr.f32.mxu0 0.0
  %4844 = vmatmul.mubr.f32.gmra.mrb[0].mxu0 %v4466
  %v4845 = vpop.f32.mrb[0].mxu0
  %v4846 = vadd.f32 %v4285, %v4845
  %v4847 = vpop.f32.mrb[0].mxu0
  %4848 = vmatprep.mubr.f32.mxu0 0.0
  %4849 = vmatmul.mubr.f32.gmra.mrb[0].mxu0 %v4469
  %v4850 = vpop.f32.mrb[0].mxu0
  %v4851 = vadd.f32 %v4285, %v4850
  %v4852 = vpop.f32.mrb[0].mxu0
  %4853 = vmatprep.mubr.f32.mxu0 0.0
  %4854 = vmatmul.mubr.f32.gmra.mrb[0].mxu0 %v4472
  %v4855 = vpop.f32.mrb[0].mxu0
  %v4856 = vadd.f32 %v4285, %v4855
  %v4857 = vpop.f32.mrb[0].mxu0
  %4858 = vmatprep.mubr.f32.mxu0 0.0
  %4859 = vmatmul.mubr.f32.gmra.mrb[0].mxu0 %v4475
  %v4860 = vpop.f32.mrb[0].mxu0
  %v4861 = vadd.f32 %v4285, %v4860
  %v4862 = vpop.f32.mrb[0].mxu0
  %4863 = vmatprep.mubr.f32.mxu0 0.0
  %4864 = vmatmul.mubr.f32.gmra.mrb[0].mxu0 %v4478
  %v4865 = vpop.f32.mrb[0].mxu0
  %v4866 = vadd.f32 %v4285, %v4865
  %v4867 = vpop.f32.mrb[0].mxu0
  %4868 = vdwg.mxu0
  %v4869 = vmax.f32 %v4551, 0.0
  %v4870 = vmax.f32 %v4556, 0.0
  %v4871 = vmax.f32 %v4561, 0.0
  %v4872 = vmax.f32 %v4566, 0.0
  %v4873 = vmax.f32 %v4571, 0.0
  %v4874 = vmax.f32 %v4576, 0.0
  %v4875 = vmax.f32 %v4581, 0.0
  %v4876 = vmax.f32 %v4586, 0.0
  %v4877 = vmax.f32 %v4591, 0.0
  %v4878 = vmax.f32 %v4596, 0.0
  %v4879 = vmax.f32 %v4601, 0.0
  %v4880 = vmax.f32 %v4606, 0.0
  %v4881 = vmax.f32 %v4611, 0.0
  %v4882 = vmax.f32 %v4616, 0.0
  %v4883 = vmax.f32 %v4621, 0.0
  %v4884 = vmax.f32 %v4626, 0.0
  %v4885 = vmax.f32 %v4631, 0.0
  %v4886 = vmax.f32 %v4636, 0.0
  %v4887 = vmax.f32 %v4641, 0.0
  %v4888 = vmax.f32 %v4646, 0.0
  %v4889 = vmax.f32 %v4651, 0.0
  %v4890 = vmax.f32 %v4656, 0.0
  %v4891 = vmax.f32 %v4661, 0.0
  %v4892 = vmax.f32 %v4666, 0.0
  %v4893 = vmax.f32 %v4671, 0.0
  %v4894 = vmax.f32 %v4676, 0.0
  %v4895 = vmax.f32 %v4681, 0.0
  %v4896 = vmax.f32 %v4686, 0.0
  %v4897 = vmax.f32 %v4691, 0.0
  %v4898 = vmax.f32 %v4696, 0.0
  %v4899 = vmax.f32 %v4701, 0.0
  %v4900 = vmax.f32 %v4706, 0.0
  %v4901 = vmax.f32 %v4711, 0.0
  %v4902 = vmax.f32 %v4716, 0.0
  %v4903 = vmax.f32 %v4721, 0.0
  %v4904 = vmax.f32 %v4726, 0.0
  %v4905 = vmax.f32 %v4731, 0.0
  %v4906 = vmax.f32 %v4736, 0.0
  %v4907 = vmax.f32 %v4741, 0.0
  %v4908 = vmax.f32 %v4746, 0.0
  %v4909 = vmax.f32 %v4751, 0.0
  %v4910 = vmax.f32 %v4756, 0.0
  %v4911 = vmax.f32 %v4761, 0.0
  %v4912 = vmax.f32 %v4766, 0.0
  %v4913 = vmax.f32 %v4771, 0.0
  %v4914 = vmax.f32 %v4776, 0.0
  %v4915 = vmax.f32 %v4781, 0.0
  %v4916 = vmax.f32 %v4786, 0.0
  %v4917 = vmax.f32 %v4791, 0.0
  %v4918 = vmax.f32 %v4796, 0.0
  %v4919 = vmax.f32 %v4801, 0.0
  %v4920 = vmax.f32 %v4806, 0.0
  %v4921 = vmax.f32 %v4811, 0.0
  %v4922 = vmax.f32 %v4816, 0.0
  %v4923 = vmax.f32 %v4821, 0.0
  %v4924 = vmax.f32 %v4826, 0.0
  %v4925 = vmax.f32 %v4831, 0.0
  %v4926 = vmax.f32 %v4836, 0.0
  %v4927 = vmax.f32 %v4841, 0.0
  %v4928 = vmax.f32 %v4846, 0.0
  %v4929 = vmax.f32 %v4851, 0.0
  %v4930 = vmax.f32 %v4856, 0.0
  %v4931 = vmax.f32 %v4861, 0.0
  %v4932 = vmax.f32 %v4866, 0.0
  %vm4933 = vcmask 130048
  %v4934 = vsel %vm4933, %v4869, -inf
  %v4935 = vsel %vm4933, %v4871, -inf
  %v4936 = vmax.f32 %v4934, %v4935
  %v4937 = vsel %vm4933, %v4870, -inf
  %v4938 = vsel %vm4933, %v4872, -inf
  %v4939 = vmax.f32 %v4937, %v4938
  %v4940 = vsel %vm4933, %v4873, -inf
  %v4941 = vsel %vm4933, %v4875, -inf
  %v4942 = vmax.f32 %v4940, %v4941
  %v4943 = vsel %vm4933, %v4874, -inf
  %v4944 = vsel %vm4933, %v4876, -inf
  %v4945 = vmax.f32 %v4943, %v4944
  %v4946 = vsel %vm4933, %v4877, -inf
  %v4947 = vsel %vm4933, %v4879, -inf
  %v4948 = vmax.f32 %v4946, %v4947
  %v4949 = vsel %vm4933, %v4878, -inf
  %v4950 = vsel %vm4933, %v4880, -inf
  %v4951 = vmax.f32 %v4949, %v4950
  %v4952 = vsel %vm4933, %v4881, -inf
  %v4953 = vsel %vm4933, %v4883, -inf
  %v4954 = vmax.f32 %v4952, %v4953
  %v4955 = vsel %vm4933, %v4882, -inf
  %v4956 = vsel %vm4933, %v4884, -inf
  %v4957 = vmax.f32 %v4955, %v4956
  %v4958 = vsel %vm4933, %v4885, -inf
  %v4959 = vsel %vm4933, %v4887, -inf
  %v4960 = vmax.f32 %v4958, %v4959
  %v4961 = vsel %vm4933, %v4886, -inf
  %v4962 = vsel %vm4933, %v4888, -inf
  %v4963 = vmax.f32 %v4961, %v4962
  %v4964 = vsel %vm4933, %v4889, -inf
  %v4965 = vsel %vm4933, %v4891, -inf
  %v4966 = vmax.f32 %v4964, %v4965
  %v4967 = vsel %vm4933, %v4890, -inf
  %v4968 = vsel %vm4933, %v4892, -inf
  %v4969 = vmax.f32 %v4967, %v4968
  %v4970 = vsel %vm4933, %v4893, -inf
  %v4971 = vsel %vm4933, %v4895, -inf
  %v4972 = vmax.f32 %v4970, %v4971
  %v4973 = vsel %vm4933, %v4894, -inf
  %v4974 = vsel %vm4933, %v4896, -inf
  %v4975 = vmax.f32 %v4973, %v4974
  %v4976 = vsel %vm4933, %v4897, -inf
  %v4977 = vsel %vm4933, %v4899, -inf
  %v4978 = vmax.f32 %v4976, %v4977
  %v4979 = vsel %vm4933, %v4898, -inf
  %v4980 = vsel %vm4933, %v4900, -inf
  %v4981 = vmax.f32 %v4979, %v4980
  %v4982 = vsel %vm4933, %v4901, -inf
  %v4983 = vsel %vm4933, %v4903, -inf
  %v4984 = vmax.f32 %v4982, %v4983
  %v4985 = vsel %vm4933, %v4902, -inf
  %v4986 = vsel %vm4933, %v4904, -inf
  %v4987 = vmax.f32 %v4985, %v4986
  %v4988 = vsel %vm4933, %v4905, -inf
  %v4989 = vsel %vm4933, %v4907, -inf
  %v4990 = vmax.f32 %v4988, %v4989
  %v4991 = vsel %vm4933, %v4906, -inf
  %v4992 = vsel %vm4933, %v4908, -inf
  %v4993 = vmax.f32 %v4991, %v4992
  %v4994 = vsel %vm4933, %v4909, -inf
  %v4995 = vsel %vm4933, %v4911, -inf
  %v4996 = vmax.f32 %v4994, %v4995
  %v4997 = vsel %vm4933, %v4910, -inf
  %v4998 = vsel %vm4933, %v4912, -inf
  %v4999 = vmax.f32 %v4997, %v4998
  %v5000 = vsel %vm4933, %v4913, -inf
  %v5001 = vsel %vm4933, %v4915, -inf
  %v5002 = vmax.f32 %v5000, %v5001
  %v5003 = vsel %vm4933, %v4914, -inf
  %v5004 = vsel %vm4933, %v4916, -inf
  %v5005 = vmax.f32 %v5003, %v5004
  %v5006 = vsel %vm4933, %v4917, -inf
  %v5007 = vsel %vm4933, %v4919, -inf
  %v5008 = vmax.f32 %v5006, %v5007
  %v5009 = vsel %vm4933, %v4918, -inf
  %v5010 = vsel %vm4933, %v4920, -inf
  %v5011 = vmax.f32 %v5009, %v5010
  %v5012 = vsel %vm4933, %v4921, -inf
  %v5013 = vsel %vm4933, %v4923, -inf
  %v5014 = vmax.f32 %v5012, %v5013
  %v5015 = vsel %vm4933, %v4922, -inf
  %v5016 = vsel %vm4933, %v4924, -inf
  %v5017 = vmax.f32 %v5015, %v5016
  %v5018 = vsel %vm4933, %v4925, -inf
  %v5019 = vsel %vm4933, %v4927, -inf
  %v5020 = vmax.f32 %v5018, %v5019
  %v5021 = vsel %vm4933, %v4926, -inf
  %v5022 = vsel %vm4933, %v4928, -inf
  %v5023 = vmax.f32 %v5021, %v5022
  %v5024 = vsel %vm4933, %v4929, -inf
  %v5025 = vsel %vm4933, %v4931, -inf
  %v5026 = vmax.f32 %v5024, %v5025
  %v5027 = vsel %vm4933, %v4930, -inf
  %v5028 = vsel %vm4933, %v4932, -inf
  %v5029 = vmax.f32 %v5027, %v5028
  %v5062 = vrot.slane %v4936, 7
  %v5063 = vrot.slane %v4939, 7
  %v5064 = vsel %vm163, %v5062, %v5063
  %v5065 = vrot.slane %v4942, 7
  %v5066 = vrot.slane %v4945, 7
  %v5067 = vsel %vm163, %v5065, %v5066
  %v5068 = vrot.slane %v4948, 7
  %v5069 = vrot.slane %v4951, 7
  %v5070 = vsel %vm163, %v5068, %v5069
  %v5071 = vrot.slane %v4954, 7
  %v5072 = vrot.slane %v4957, 7
  %v5073 = vsel %vm163, %v5071, %v5072
  %v5074 = vrot.slane %v4960, 7
  %v5075 = vrot.slane %v4963, 7
  %v5076 = vsel %vm163, %v5074, %v5075
  %v5077 = vrot.slane %v4966, 7
  %v5078 = vrot.slane %v4969, 7
  %v5079 = vsel %vm163, %v5077, %v5078
  %v5080 = vrot.slane %v4972, 7
  %v5081 = vrot.slane %v4975, 7
  %v5082 = vsel %vm163, %v5080, %v5081
  %v5083 = vrot.slane %v4978, 7
  %v5084 = vrot.slane %v4981, 7
  %v5085 = vsel %vm163, %v5083, %v5084
  %v5086 = vrot.slane %v4984, 7
  %v5087 = vrot.slane %v4987, 7
  %v5088 = vsel %vm163, %v5086, %v5087
  %v5089 = vrot.slane %v4990, 7
  %v5090 = vrot.slane %v4993, 7
  %v5091 = vsel %vm163, %v5089, %v5090
  %v5092 = vrot.slane %v4996, 7
  %v5093 = vrot.slane %v4999, 7
  %v5094 = vsel %vm163, %v5092, %v5093
  %v5095 = vrot.slane %v5002, 7
  %v5096 = vrot.slane %v5005, 7
  %v5097 = vsel %vm163, %v5095, %v5096
  %v5098 = vrot.slane %v5008, 7
  %v5099 = vrot.slane %v5011, 7
  %v5100 = vsel %vm163, %v5098, %v5099
  %v5101 = vrot.slane %v5014, 7
  %v5102 = vrot.slane %v5017, 7
  %v5103 = vsel %vm163, %v5101, %v5102
  %v5104 = vrot.slane %v5020, 7
  %v5105 = vrot.slane %v5023, 7
  %v5106 = vsel %vm163, %v5104, %v5105
  %v5107 = vrot.slane %v5026, 7
  %v5108 = vrot.slane %v5029, 7
  %v5109 = vsel %vm163, %v5107, %v5108
  %v5154 = vsel %vm163, 0.0, %v5062
  %v5155 = vsel %vm163, 0.0, %v5065
  %v5156 = vsel %vm163, 0.0, %v5068
  %v5157 = vsel %vm163, 0.0, %v5071
  %v5158 = vsel %vm163, 0.0, %v5074
  %v5159 = vsel %vm163, 0.0, %v5077
  %v5160 = vsel %vm163, 0.0, %v5080
  %v5161 = vsel %vm163, 0.0, %v5083
  %v5162 = vsel %vm163, 0.0, %v5086
  %v5163 = vsel %vm163, 0.0, %v5089
  %v5164 = vsel %vm163, 0.0, %v5092
  %v5165 = vsel %vm163, 0.0, %v5095
  %v5166 = vsel %vm163, 0.0, %v5098
  %v5167 = vsel %vm163, 0.0, %v5101
  %v5168 = vsel %vm163, 0.0, %v5104
  %v5169 = vsel %vm163, 0.0, %v5107
  %v5170 = vsel %vm163, %v5063, 0.0
  %v5171 = vsel %vm163, %v5066, 0.0
  %v5172 = vsel %vm163, %v5069, 0.0
  %v5173 = vsel %vm163, %v5072, 0.0
  %v5174 = vsel %vm163, %v5075, 0.0
  %v5175 = vsel %vm163, %v5078, 0.0
  %v5176 = vsel %vm163, %v5081, 0.0
  %v5177 = vsel %vm163, %v5084, 0.0
  %v5178 = vsel %vm163, %v5087, 0.0
  %v5179 = vsel %vm163, %v5090, 0.0
  %v5180 = vsel %vm163, %v5093, 0.0
  %v5181 = vsel %vm163, %v5096, 0.0
  %v5182 = vsel %vm163, %v5099, 0.0
  %v5183 = vsel %vm163, %v5102, 0.0
  %v5184 = vsel %vm163, %v5105, 0.0
  %v5185 = vsel %vm163, %v5108, 0.0
  %v5210 = vrot.slane %v5154, 1
  %v5211 = vrot.slane %v5064, 1
  %v5212 = vsel %vm480, %v5210, %v5211
  %v5213 = vrot.slane %v5170, 1
  %v5214 = vsel %vm480, %v5211, %v5213
  %v5215 = vrot.slane %v5155, 1
  %v5216 = vrot.slane %v5067, 1
  %v5217 = vsel %vm480, %v5215, %v5216
  %v5218 = vrot.slane %v5171, 1
  %v5219 = vsel %vm480, %v5216, %v5218
  %v5220 = vrot.slane %v5156, 1
  %v5221 = vrot.slane %v5070, 1
  %v5222 = vsel %vm480, %v5220, %v5221
  %v5223 = vrot.slane %v5172, 1
  %v5224 = vsel %vm480, %v5221, %v5223
  %v5225 = vrot.slane %v5157, 1
  %v5226 = vrot.slane %v5073, 1
  %v5227 = vsel %vm480, %v5225, %v5226
  %v5228 = vrot.slane %v5173, 1
  %v5229 = vsel %vm480, %v5226, %v5228
  %v5230 = vrot.slane %v5158, 1
  %v5231 = vrot.slane %v5076, 1
  %v5232 = vsel %vm480, %v5230, %v5231
  %v5233 = vrot.slane %v5174, 1
  %v5234 = vsel %vm480, %v5231, %v5233
  %v5235 = vrot.slane %v5159, 1
  %v5236 = vrot.slane %v5079, 1
  %v5237 = vsel %vm480, %v5235, %v5236
  %v5238 = vrot.slane %v5175, 1
  %v5239 = vsel %vm480, %v5236, %v5238
  %v5240 = vrot.slane %v5162, 1
  %v5241 = vrot.slane %v5088, 1
  %v5242 = vsel %vm480, %v5240, %v5241
  %v5243 = vrot.slane %v5178, 1
  %v5244 = vsel %vm480, %v5241, %v5243
  %v5245 = vrot.slane %v5163, 1
  %v5246 = vrot.slane %v5091, 1
  %v5247 = vsel %vm480, %v5245, %v5246
  %v5248 = vrot.slane %v5179, 1
  %v5249 = vsel %vm480, %v5246, %v5248
  %v5250 = vrot.slane %v5164, 1
  %v5251 = vrot.slane %v5094, 1
  %v5252 = vsel %vm480, %v5250, %v5251
  %v5253 = vrot.slane %v5180, 1
  %v5254 = vsel %vm480, %v5251, %v5253
  %v5255 = vrot.slane %v5165, 1
  %v5256 = vrot.slane %v5097, 1
  %v5257 = vsel %vm480, %v5255, %v5256
  %v5258 = vrot.slane %v5181, 1
  %v5259 = vsel %vm480, %v5256, %v5258
  %v5260 = vrot.slane %v5166, 1
  %v5261 = vrot.slane %v5100, 1
  %v5262 = vsel %vm480, %v5260, %v5261
  %v5263 = vrot.slane %v5182, 1
  %v5264 = vsel %vm480, %v5261, %v5263
  %v5265 = vrot.slane %v5167, 1
  %v5266 = vrot.slane %v5103, 1
  %v5267 = vsel %vm480, %v5265, %v5266
  %v5268 = vrot.slane %v5183, 1
  %v5269 = vsel %vm480, %v5266, %v5268
  %5270 = vrot.lane.b32.xlu0 %v483, 16
  %v5271 = vpop.permute.xlu0 %5270
  %5272 = vrot.lane.b32.xlu0 %v485, 16
  %v5273 = vpop.permute.xlu0 %5272
  %5274 = vrot.lane.b32.xlu0 %v5212, 16
  %v5275 = vpop.permute.xlu0 %5274
  %5276 = vrot.lane.b32.xlu0 %v5214, 16
  %v5277 = vpop.permute.xlu0 %5276
  %5278 = vrot.lane.b32.xlu0 %v5217, 16
  %v5279 = vpop.permute.xlu0 %5278
  %5280 = vrot.lane.b32.xlu0 %v5219, 16
  %v5281 = vpop.permute.xlu0 %5280
  %5282 = vrot.lane.b32.xlu0 %v5222, 16
  %v5283 = vpop.permute.xlu0 %5282
  %5284 = vrot.lane.b32.xlu0 %v5224, 16
  %v5285 = vpop.permute.xlu0 %5284
  %5286 = vrot.lane.b32.xlu0 %v5227, 16
  %v5287 = vpop.permute.xlu0 %5286
  %5288 = vrot.lane.b32.xlu0 %v5229, 16
  %v5289 = vpop.permute.xlu0 %5288
  %5290 = vrot.lane.b32.xlu0 %v5232, 16
  %v5291 = vpop.permute.xlu0 %5290
  %5292 = vrot.lane.b32.xlu0 %v5234, 16
  %v5293 = vpop.permute.xlu0 %5292
  %5294 = vrot.lane.b32.xlu0 %v5237, 16
  %v5295 = vpop.permute.xlu0 %5294
  %5296 = vrot.lane.b32.xlu0 %v5239, 16
  %v5297 = vpop.permute.xlu0 %5296
  %5298 = vrot.lane.b32.xlu0 %v5242, 16
  %v5299 = vpop.permute.xlu0 %5298
  %5300 = vrot.lane.b32.xlu0 %v5244, 16
  %v5301 = vpop.permute.xlu0 %5300
  %5302 = vrot.lane.b32.xlu0 %v5247, 16
  %v5303 = vpop.permute.xlu0 %5302
  %5304 = vrot.lane.b32.xlu0 %v5249, 16
  %v5305 = vpop.permute.xlu0 %5304
  %5306 = vrot.lane.b32.xlu0 %v5252, 16
  %v5307 = vpop.permute.xlu0 %5306
  %5308 = vrot.lane.b32.xlu0 %v5254, 16
  %v5309 = vpop.permute.xlu0 %5308
  %5310 = vrot.lane.b32.xlu0 %v5257, 16
  %v5311 = vpop.permute.xlu0 %5310
  %5312 = vrot.lane.b32.xlu0 %v5259, 16
  %v5313 = vpop.permute.xlu0 %5312
  %5314 = vrot.lane.b32.xlu0 %v5262, 16
  %v5315 = vpop.permute.xlu0 %5314
  %5316 = vrot.lane.b32.xlu0 %v5264, 16
  %v5317 = vpop.permute.xlu0 %5316
  %5318 = vrot.lane.b32.xlu0 %v5267, 16
  %v5319 = vpop.permute.xlu0 %5318
  %5320 = vrot.lane.b32.xlu0 %v5269, 16
  %v5321 = vpop.permute.xlu0 %5320
  %v5348 = vrot.slane %v5154, 2
  %v5349 = vrot.slane %v5064, 2
  %v5350 = vsel %vm800, %v5348, %v5349
  %v5351 = vrot.slane %v5170, 2
  %v5352 = vsel %vm800, %v5349, %v5351
  %v5353 = vrot.slane %v5155, 2
  %v5354 = vrot.slane %v5067, 2
  %v5355 = vsel %vm800, %v5353, %v5354
  %v5356 = vrot.slane %v5171, 2
  %v5357 = vsel %vm800, %v5354, %v5356
  %v5358 = vrot.slane %v5156, 2
  %v5359 = vrot.slane %v5070, 2
  %v5360 = vsel %vm800, %v5358, %v5359
  %v5361 = vrot.slane %v5172, 2
  %v5362 = vsel %vm800, %v5359, %v5361
  %v5363 = vrot.slane %v5157, 2
  %v5364 = vrot.slane %v5073, 2
  %v5365 = vsel %vm800, %v5363, %v5364
  %v5366 = vrot.slane %v5173, 2
  %v5367 = vsel %vm800, %v5364, %v5366
  %v5368 = vrot.slane %v5158, 2
  %v5369 = vrot.slane %v5076, 2
  %v5370 = vsel %vm800, %v5368, %v5369
  %v5371 = vrot.slane %v5174, 2
  %v5372 = vsel %vm800, %v5369, %v5371
  %v5373 = vrot.slane %v5159, 2
  %v5374 = vrot.slane %v5079, 2
  %v5375 = vsel %vm800, %v5373, %v5374
  %v5376 = vrot.slane %v5175, 2
  %v5377 = vsel %vm800, %v5374, %v5376
  %v5378 = vrot.slane %v5162, 2
  %v5379 = vrot.slane %v5088, 2
  %v5380 = vsel %vm800, %v5378, %v5379
  %v5381 = vrot.slane %v5178, 2
  %v5382 = vsel %vm800, %v5379, %v5381
  %v5383 = vrot.slane %v5163, 2
  %v5384 = vrot.slane %v5091, 2
  %v5385 = vsel %vm800, %v5383, %v5384
  %v5386 = vrot.slane %v5179, 2
  %v5387 = vsel %vm800, %v5384, %v5386
  %v5388 = vrot.slane %v5164, 2
  %v5389 = vrot.slane %v5094, 2
  %v5390 = vsel %vm800, %v5388, %v5389
  %v5391 = vrot.slane %v5180, 2
  %v5392 = vsel %vm800, %v5389, %v5391
  %v5393 = vrot.slane %v5165, 2
  %v5394 = vrot.slane %v5097, 2
  %v5395 = vsel %vm800, %v5393, %v5394
  %v5396 = vrot.slane %v5181, 2
  %v5397 = vsel %vm800, %v5394, %v5396
  %v5398 = vrot.slane %v5166, 2
  %v5399 = vrot.slane %v5100, 2
  %v5400 = vsel %vm800, %v5398, %v5399
  %v5401 = vrot.slane %v5182, 2
  %v5402 = vsel %vm800, %v5399, %v5401
  %v5403 = vrot.slane %v5167, 2
  %v5404 = vrot.slane %v5103, 2
  %v5405 = vsel %vm800, %v5403, %v5404
  %v5406 = vrot.slane %v5183, 2
  %v5407 = vsel %vm800, %v5404, %v5406
  %5408 = vrot.lane.b32.xlu0 %v803, 32
  %v5409 = vpop.permute.xlu0 %5408
  %5410 = vrot.lane.b32.xlu0 %v805, 32
  %v5411 = vpop.permute.xlu0 %5410
  %5412 = vrot.lane.b32.xlu0 %v5350, 32
  %v5413 = vpop.permute.xlu0 %5412
  %5414 = vrot.lane.b32.xlu0 %v5352, 32
  %v5415 = vpop.permute.xlu0 %5414
  %5416 = vrot.lane.b32.xlu0 %v5355, 32
  %v5417 = vpop.permute.xlu0 %5416
  %5418 = vrot.lane.b32.xlu0 %v5357, 32
  %v5419 = vpop.permute.xlu0 %5418
  %5420 = vrot.lane.b32.xlu0 %v5360, 32
  %v5421 = vpop.permute.xlu0 %5420
  %5422 = vrot.lane.b32.xlu0 %v5362, 32
  %v5423 = vpop.permute.xlu0 %5422
  %5424 = vrot.lane.b32.xlu0 %v5365, 32
  %v5425 = vpop.permute.xlu0 %5424
  %5426 = vrot.lane.b32.xlu0 %v5367, 32
  %v5427 = vpop.permute.xlu0 %5426
  %5428 = vrot.lane.b32.xlu0 %v5370, 32
  %v5429 = vpop.permute.xlu0 %5428
  %5430 = vrot.lane.b32.xlu0 %v5372, 32
  %v5431 = vpop.permute.xlu0 %5430
  %5432 = vrot.lane.b32.xlu0 %v5375, 32
  %v5433 = vpop.permute.xlu0 %5432
  %5434 = vrot.lane.b32.xlu0 %v5377, 32
  %v5435 = vpop.permute.xlu0 %5434
  %5436 = vrot.lane.b32.xlu0 %v5380, 32
  %v5437 = vpop.permute.xlu0 %5436
  %5438 = vrot.lane.b32.xlu0 %v5382, 32
  %v5439 = vpop.permute.xlu0 %5438
  %5440 = vrot.lane.b32.xlu0 %v5385, 32
  %v5441 = vpop.permute.xlu0 %5440
  %5442 = vrot.lane.b32.xlu0 %v5387, 32
  %v5443 = vpop.permute.xlu0 %5442
  %5444 = vrot.lane.b32.xlu0 %v5390, 32
  %v5445 = vpop.permute.xlu0 %5444
  %5446 = vrot.lane.b32.xlu0 %v5392, 32
  %v5447 = vpop.permute.xlu0 %5446
  %5448 = vrot.lane.b32.xlu0 %v5395, 32
  %v5449 = vpop.permute.xlu0 %5448
  %5450 = vrot.lane.b32.xlu0 %v5397, 32
  %v5451 = vpop.permute.xlu0 %5450
  %5452 = vrot.lane.b32.xlu0 %v5400, 32
  %v5453 = vpop.permute.xlu0 %5452
  %5454 = vrot.lane.b32.xlu0 %v5402, 32
  %v5455 = vpop.permute.xlu0 %5454
  %5456 = vrot.lane.b32.xlu0 %v5405, 32
  %v5457 = vpop.permute.xlu0 %5456
  %5458 = vrot.lane.b32.xlu0 %v5407, 32
  %v5459 = vpop.permute.xlu0 %5458
  %5488 = vrot.lane.b32.xlu0 %v356, 48
  %v5489 = vpop.permute.xlu0 %5488
  %5490 = vrot.lane.b32.xlu0 %v165, 48
  %v5491 = vpop.permute.xlu0 %5490
  %5492 = vrot.lane.b32.xlu0 %v5154, 48
  %v5493 = vpop.permute.xlu0 %5492
  %5494 = vrot.lane.b32.xlu0 %v5064, 48
  %v5495 = vpop.permute.xlu0 %5494
  %5496 = vrot.lane.b32.xlu0 %v5155, 48
  %v5497 = vpop.permute.xlu0 %5496
  %5498 = vrot.lane.b32.xlu0 %v5067, 48
  %v5499 = vpop.permute.xlu0 %5498
  %5500 = vrot.lane.b32.xlu0 %v5156, 48
  %v5501 = vpop.permute.xlu0 %5500
  %5502 = vrot.lane.b32.xlu0 %v5070, 48
  %v5503 = vpop.permute.xlu0 %5502
  %5504 = vrot.lane.b32.xlu0 %v5157, 48
  %v5505 = vpop.permute.xlu0 %5504
  %5506 = vrot.lane.b32.xlu0 %v5073, 48
  %v5507 = vpop.permute.xlu0 %5506
  %5508 = vrot.lane.b32.xlu0 %v5158, 48
  %v5509 = vpop.permute.xlu0 %5508
  %5510 = vrot.lane.b32.xlu0 %v5076, 48
  %v5511 = vpop.permute.xlu0 %5510
  %5512 = vrot.lane.b32.xlu0 %v5159, 48
  %v5513 = vpop.permute.xlu0 %5512
  %5514 = vrot.lane.b32.xlu0 %v5079, 48
  %v5515 = vpop.permute.xlu0 %5514
  %5516 = vrot.lane.b32.xlu0 %v5160, 48
  %v5517 = vpop.permute.xlu0 %5516
  %5518 = vrot.lane.b32.xlu0 %v5082, 48
  %v5519 = vpop.permute.xlu0 %5518
  %5520 = vrot.lane.b32.xlu0 %v5162, 48
  %v5521 = vpop.permute.xlu0 %5520
  %5522 = vrot.lane.b32.xlu0 %v5088, 48
  %v5523 = vpop.permute.xlu0 %5522
  %5524 = vrot.lane.b32.xlu0 %v5163, 48
  %v5525 = vpop.permute.xlu0 %5524
  %5526 = vrot.lane.b32.xlu0 %v5091, 48
  %v5527 = vpop.permute.xlu0 %5526
  %5528 = vrot.lane.b32.xlu0 %v5164, 48
  %v5529 = vpop.permute.xlu0 %5528
  %5530 = vrot.lane.b32.xlu0 %v5094, 48
  %v5531 = vpop.permute.xlu0 %5530
  %5532 = vrot.lane.b32.xlu0 %v5165, 48
  %v5533 = vpop.permute.xlu0 %5532
  %5534 = vrot.lane.b32.xlu0 %v5097, 48
  %v5535 = vpop.permute.xlu0 %5534
  %5536 = vrot.lane.b32.xlu0 %v5166, 48
  %v5537 = vpop.permute.xlu0 %5536
  %5538 = vrot.lane.b32.xlu0 %v5100, 48
  %v5539 = vpop.permute.xlu0 %5538
  %5540 = vrot.lane.b32.xlu0 %v5167, 48
  %v5541 = vpop.permute.xlu0 %5540
  %5542 = vrot.lane.b32.xlu0 %v5103, 48
  %v5543 = vpop.permute.xlu0 %5542
  %5544 = vrot.lane.b32.xlu0 %v5168, 48
  %v5545 = vpop.permute.xlu0 %5544
  %5546 = vrot.lane.b32.xlu0 %v5106, 48
  %v5547 = vpop.permute.xlu0 %5546
  %v5580 = vrot.slane %v5160, 1
  %v5581 = vrot.slane %v5082, 1
  %v5582 = vsel %vm480, %v5580, %v5581
  %v5583 = vrot.slane %v5176, 1
  %v5584 = vsel %vm480, %v5581, %v5583
  %v5585 = vrot.slane %v5168, 1
  %v5586 = vrot.slane %v5106, 1
  %v5587 = vsel %vm480, %v5585, %v5586
  %v5588 = vrot.slane %v5184, 1
  %v5589 = vsel %vm480, %v5586, %v5588
  %5590 = vrot.lane.b32.xlu0 %v483, 64
  %v5591 = vpop.permute.xlu0 %5590
  %5592 = vrot.lane.b32.xlu0 %v485, 64
  %v5593 = vpop.permute.xlu0 %5592
  %5594 = vrot.lane.b32.xlu0 %v5212, 64
  %v5595 = vpop.permute.xlu0 %5594
  %5596 = vrot.lane.b32.xlu0 %v5214, 64
  %v5597 = vpop.permute.xlu0 %5596
  %5598 = vrot.lane.b32.xlu0 %v5217, 64
  %v5599 = vpop.permute.xlu0 %5598
  %5600 = vrot.lane.b32.xlu0 %v5219, 64
  %v5601 = vpop.permute.xlu0 %5600
  %5602 = vrot.lane.b32.xlu0 %v5222, 64
  %v5603 = vpop.permute.xlu0 %5602
  %5604 = vrot.lane.b32.xlu0 %v5224, 64
  %v5605 = vpop.permute.xlu0 %5604
  %5606 = vrot.lane.b32.xlu0 %v5227, 64
  %v5607 = vpop.permute.xlu0 %5606
  %5608 = vrot.lane.b32.xlu0 %v5229, 64
  %v5609 = vpop.permute.xlu0 %5608
  %5610 = vrot.lane.b32.xlu0 %v5232, 64
  %v5611 = vpop.permute.xlu0 %5610
  %5612 = vrot.lane.b32.xlu0 %v5234, 64
  %v5613 = vpop.permute.xlu0 %5612
  %5614 = vrot.lane.b32.xlu0 %v5237, 64
  %v5615 = vpop.permute.xlu0 %5614
  %5616 = vrot.lane.b32.xlu0 %v5239, 64
  %v5617 = vpop.permute.xlu0 %5616
  %5618 = vrot.lane.b32.xlu0 %v5582, 64
  %v5619 = vpop.permute.xlu0 %5618
  %5620 = vrot.lane.b32.xlu0 %v5584, 64
  %v5621 = vpop.permute.xlu0 %5620
  %5622 = vrot.lane.b32.xlu0 %v5242, 64
  %v5623 = vpop.permute.xlu0 %5622
  %5624 = vrot.lane.b32.xlu0 %v5244, 64
  %v5625 = vpop.permute.xlu0 %5624
  %5626 = vrot.lane.b32.xlu0 %v5247, 64
  %v5627 = vpop.permute.xlu0 %5626
  %5628 = vrot.lane.b32.xlu0 %v5249, 64
  %v5629 = vpop.permute.xlu0 %5628
  %5630 = vrot.lane.b32.xlu0 %v5252, 64
  %v5631 = vpop.permute.xlu0 %5630
  %5632 = vrot.lane.b32.xlu0 %v5254, 64
  %v5633 = vpop.permute.xlu0 %5632
  %5634 = vrot.lane.b32.xlu0 %v5257, 64
  %v5635 = vpop.permute.xlu0 %5634
  %5636 = vrot.lane.b32.xlu0 %v5259, 64
  %v5637 = vpop.permute.xlu0 %5636
  %5638 = vrot.lane.b32.xlu0 %v5262, 64
  %v5639 = vpop.permute.xlu0 %5638
  %5640 = vrot.lane.b32.xlu0 %v5264, 64
  %v5641 = vpop.permute.xlu0 %5640
  %5642 = vrot.lane.b32.xlu0 %v5267, 64
  %v5643 = vpop.permute.xlu0 %5642
  %5644 = vrot.lane.b32.xlu0 %v5269, 64
  %v5645 = vpop.permute.xlu0 %5644
  %5646 = vrot.lane.b32.xlu0 %v5587, 64
  %v5647 = vpop.permute.xlu0 %5646
  %5648 = vrot.lane.b32.xlu0 %v5589, 64
  %v5649 = vpop.permute.xlu0 %5648
  %v5680 = vrot.slane %v5160, 2
  %v5681 = vrot.slane %v5082, 2
  %v5682 = vsel %vm800, %v5680, %v5681
  %v5683 = vrot.slane %v5176, 2
  %v5684 = vsel %vm800, %v5681, %v5683
  %v5685 = vrot.slane %v5168, 2
  %v5686 = vrot.slane %v5106, 2
  %v5687 = vsel %vm800, %v5685, %v5686
  %v5688 = vrot.slane %v5184, 2
  %v5689 = vsel %vm800, %v5686, %v5688
  %5690 = vrot.lane.b32.xlu0 %v803, 80
  %v5691 = vpop.permute.xlu0 %5690
  %5692 = vrot.lane.b32.xlu0 %v805, 80
  %v5693 = vpop.permute.xlu0 %5692
  %5694 = vrot.lane.b32.xlu0 %v5350, 80
  %v5695 = vpop.permute.xlu0 %5694
  %5696 = vrot.lane.b32.xlu0 %v5352, 80
  %v5697 = vpop.permute.xlu0 %5696
  %5698 = vrot.lane.b32.xlu0 %v5355, 80
  %v5699 = vpop.permute.xlu0 %5698
  %5700 = vrot.lane.b32.xlu0 %v5357, 80
  %v5701 = vpop.permute.xlu0 %5700
  %5702 = vrot.lane.b32.xlu0 %v5360, 80
  %v5703 = vpop.permute.xlu0 %5702
  %5704 = vrot.lane.b32.xlu0 %v5362, 80
  %v5705 = vpop.permute.xlu0 %5704
  %5706 = vrot.lane.b32.xlu0 %v5365, 80
  %v5707 = vpop.permute.xlu0 %5706
  %5708 = vrot.lane.b32.xlu0 %v5367, 80
  %v5709 = vpop.permute.xlu0 %5708
  %5710 = vrot.lane.b32.xlu0 %v5370, 80
  %v5711 = vpop.permute.xlu0 %5710
  %5712 = vrot.lane.b32.xlu0 %v5372, 80
  %v5713 = vpop.permute.xlu0 %5712
  %5714 = vrot.lane.b32.xlu0 %v5375, 80
  %v5715 = vpop.permute.xlu0 %5714
  %5716 = vrot.lane.b32.xlu0 %v5377, 80
  %v5717 = vpop.permute.xlu0 %5716
  %5718 = vrot.lane.b32.xlu0 %v5682, 80
  %v5719 = vpop.permute.xlu0 %5718
  %5720 = vrot.lane.b32.xlu0 %v5684, 80
  %v5721 = vpop.permute.xlu0 %5720
  %5722 = vrot.lane.b32.xlu0 %v5380, 80
  %v5723 = vpop.permute.xlu0 %5722
  %5724 = vrot.lane.b32.xlu0 %v5382, 80
  %v5725 = vpop.permute.xlu0 %5724
  %5726 = vrot.lane.b32.xlu0 %v5385, 80
  %v5727 = vpop.permute.xlu0 %5726
  %5728 = vrot.lane.b32.xlu0 %v5387, 80
  %v5729 = vpop.permute.xlu0 %5728
  %5730 = vrot.lane.b32.xlu0 %v5390, 80
  %v5731 = vpop.permute.xlu0 %5730
  %5732 = vrot.lane.b32.xlu0 %v5392, 80
  %v5733 = vpop.permute.xlu0 %5732
  %5734 = vrot.lane.b32.xlu0 %v5395, 80
  %v5735 = vpop.permute.xlu0 %5734
  %5736 = vrot.lane.b32.xlu0 %v5397, 80
  %v5737 = vpop.permute.xlu0 %5736
  %5738 = vrot.lane.b32.xlu0 %v5400, 80
  %v5739 = vpop.permute.xlu0 %5738
  %5740 = vrot.lane.b32.xlu0 %v5402, 80
  %v5741 = vpop.permute.xlu0 %5740
  %5742 = vrot.lane.b32.xlu0 %v5405, 80
  %v5743 = vpop.permute.xlu0 %5742
  %5744 = vrot.lane.b32.xlu0 %v5407, 80
  %v5745 = vpop.permute.xlu0 %5744
  %5746 = vrot.lane.b32.xlu0 %v5687, 80
  %v5747 = vpop.permute.xlu0 %5746
  %5748 = vrot.lane.b32.xlu0 %v5689, 80
  %v5749 = vpop.permute.xlu0 %5748
  %5782 = vrot.lane.b32.xlu0 %v5154, 96
  %v5783 = vpop.permute.xlu0 %5782
  %5784 = vrot.lane.b32.xlu0 %v5064, 96
  %v5785 = vpop.permute.xlu0 %5784
  %5786 = vrot.lane.b32.xlu0 %v5155, 96
  %v5787 = vpop.permute.xlu0 %5786
  %5788 = vrot.lane.b32.xlu0 %v5067, 96
  %v5789 = vpop.permute.xlu0 %5788
  %5790 = vrot.lane.b32.xlu0 %v5156, 96
  %v5791 = vpop.permute.xlu0 %5790
  %5792 = vrot.lane.b32.xlu0 %v5070, 96
  %v5793 = vpop.permute.xlu0 %5792
  %5794 = vrot.lane.b32.xlu0 %v5157, 96
  %v5795 = vpop.permute.xlu0 %5794
  %5796 = vrot.lane.b32.xlu0 %v5073, 96
  %v5797 = vpop.permute.xlu0 %5796
  %5798 = vrot.lane.b32.xlu0 %v5158, 96
  %v5799 = vpop.permute.xlu0 %5798
  %5800 = vrot.lane.b32.xlu0 %v5076, 96
  %v5801 = vpop.permute.xlu0 %5800
  %5802 = vrot.lane.b32.xlu0 %v5159, 96
  %v5803 = vpop.permute.xlu0 %5802
  %5804 = vrot.lane.b32.xlu0 %v5079, 96
  %v5805 = vpop.permute.xlu0 %5804
  %5806 = vrot.lane.b32.xlu0 %v5160, 96
  %v5807 = vpop.permute.xlu0 %5806
  %5808 = vrot.lane.b32.xlu0 %v5082, 96
  %v5809 = vpop.permute.xlu0 %5808
  %5810 = vrot.lane.b32.xlu0 %v5161, 96
  %v5811 = vpop.permute.xlu0 %5810
  %5812 = vrot.lane.b32.xlu0 %v5085, 96
  %v5813 = vpop.permute.xlu0 %5812
  %5814 = vrot.lane.b32.xlu0 %v5162, 96
  %v5815 = vpop.permute.xlu0 %5814
  %5816 = vrot.lane.b32.xlu0 %v5088, 96
  %v5817 = vpop.permute.xlu0 %5816
  %5818 = vrot.lane.b32.xlu0 %v5163, 96
  %v5819 = vpop.permute.xlu0 %5818
  %5820 = vrot.lane.b32.xlu0 %v5091, 96
  %v5821 = vpop.permute.xlu0 %5820
  %5822 = vrot.lane.b32.xlu0 %v5164, 96
  %v5823 = vpop.permute.xlu0 %5822
  %5824 = vrot.lane.b32.xlu0 %v5094, 96
  %v5825 = vpop.permute.xlu0 %5824
  %5826 = vrot.lane.b32.xlu0 %v5165, 96
  %v5827 = vpop.permute.xlu0 %5826
  %5828 = vrot.lane.b32.xlu0 %v5097, 96
  %v5829 = vpop.permute.xlu0 %5828
  %5830 = vrot.lane.b32.xlu0 %v5166, 96
  %v5831 = vpop.permute.xlu0 %5830
  %5832 = vrot.lane.b32.xlu0 %v5100, 96
  %v5833 = vpop.permute.xlu0 %5832
  %5834 = vrot.lane.b32.xlu0 %v5167, 96
  %v5835 = vpop.permute.xlu0 %5834
  %5836 = vrot.lane.b32.xlu0 %v5103, 96
  %v5837 = vpop.permute.xlu0 %5836
  %5838 = vrot.lane.b32.xlu0 %v5168, 96
  %v5839 = vpop.permute.xlu0 %5838
  %5840 = vrot.lane.b32.xlu0 %v5106, 96
  %v5841 = vpop.permute.xlu0 %5840
  %5842 = vrot.lane.b32.xlu0 %v5169, 96
  %v5843 = vpop.permute.xlu0 %5842
  %5844 = vrot.lane.b32.xlu0 %v5109, 96
  %v5845 = vpop.permute.xlu0 %5844
  %v5880 = vrot.slane %v5161, 1
  %v5881 = vrot.slane %v5085, 1
  %v5882 = vsel %vm480, %v5880, %v5881
  %v5883 = vrot.slane %v5177, 1
  %v5884 = vsel %vm480, %v5881, %v5883
  %v5885 = vrot.slane %v5169, 1
  %v5886 = vrot.slane %v5109, 1
  %v5887 = vsel %vm480, %v5885, %v5886
  %v5888 = vrot.slane %v5185, 1
  %v5889 = vsel %vm480, %v5886, %v5888
  %5890 = vrot.lane.b32.xlu0 %v5212, 112
  %v5891 = vpop.permute.xlu0 %5890
  %5892 = vrot.lane.b32.xlu0 %v5214, 112
  %v5893 = vpop.permute.xlu0 %5892
  %5894 = vrot.lane.b32.xlu0 %v5217, 112
  %v5895 = vpop.permute.xlu0 %5894
  %5896 = vrot.lane.b32.xlu0 %v5219, 112
  %v5897 = vpop.permute.xlu0 %5896
  %5898 = vrot.lane.b32.xlu0 %v5222, 112
  %v5899 = vpop.permute.xlu0 %5898
  %5900 = vrot.lane.b32.xlu0 %v5224, 112
  %v5901 = vpop.permute.xlu0 %5900
  %5902 = vrot.lane.b32.xlu0 %v5227, 112
  %v5903 = vpop.permute.xlu0 %5902
  %5904 = vrot.lane.b32.xlu0 %v5229, 112
  %v5905 = vpop.permute.xlu0 %5904
  %5906 = vrot.lane.b32.xlu0 %v5232, 112
  %v5907 = vpop.permute.xlu0 %5906
  %5908 = vrot.lane.b32.xlu0 %v5234, 112
  %v5909 = vpop.permute.xlu0 %5908
  %5910 = vrot.lane.b32.xlu0 %v5237, 112
  %v5911 = vpop.permute.xlu0 %5910
  %5912 = vrot.lane.b32.xlu0 %v5239, 112
  %v5913 = vpop.permute.xlu0 %5912
  %5914 = vrot.lane.b32.xlu0 %v5582, 112
  %v5915 = vpop.permute.xlu0 %5914
  %5916 = vrot.lane.b32.xlu0 %v5584, 112
  %v5917 = vpop.permute.xlu0 %5916
  %5918 = vrot.lane.b32.xlu0 %v5882, 112
  %v5919 = vpop.permute.xlu0 %5918
  %5920 = vrot.lane.b32.xlu0 %v5884, 112
  %v5921 = vpop.permute.xlu0 %5920
  %5922 = vrot.lane.b32.xlu0 %v5242, 112
  %v5923 = vpop.permute.xlu0 %5922
  %5924 = vrot.lane.b32.xlu0 %v5244, 112
  %v5925 = vpop.permute.xlu0 %5924
  %5926 = vrot.lane.b32.xlu0 %v5247, 112
  %v5927 = vpop.permute.xlu0 %5926
  %5928 = vrot.lane.b32.xlu0 %v5249, 112
  %v5929 = vpop.permute.xlu0 %5928
  %5930 = vrot.lane.b32.xlu0 %v5252, 112
  %v5931 = vpop.permute.xlu0 %5930
  %5932 = vrot.lane.b32.xlu0 %v5254, 112
  %v5933 = vpop.permute.xlu0 %5932
  %5934 = vrot.lane.b32.xlu0 %v5257, 112
  %v5935 = vpop.permute.xlu0 %5934
  %5936 = vrot.lane.b32.xlu0 %v5259, 112
  %v5937 = vpop.permute.xlu0 %5936
  %5938 = vrot.lane.b32.xlu0 %v5262, 112
  %v5939 = vpop.permute.xlu0 %5938
  %5940 = vrot.lane.b32.xlu0 %v5264, 112
  %v5941 = vpop.permute.xlu0 %5940
  %5942 = vrot.lane.b32.xlu0 %v5267, 112
  %v5943 = vpop.permute.xlu0 %5942
  %5944 = vrot.lane.b32.xlu0 %v5269, 112
  %v5945 = vpop.permute.xlu0 %5944
  %5946 = vrot.lane.b32.xlu0 %v5587, 112
  %v5947 = vpop.permute.xlu0 %5946
  %5948 = vrot.lane.b32.xlu0 %v5589, 112
  %v5949 = vpop.permute.xlu0 %5948
  %5950 = vrot.lane.b32.xlu0 %v5887, 112
  %v5951 = vpop.permute.xlu0 %5950
  %5952 = vrot.lane.b32.xlu0 %v5889, 112
  %v5953 = vpop.permute.xlu0 %5952
  %v5986 = vrot.slane %v5161, 2
  %v5987 = vrot.slane %v5085, 2
  %v5988 = vsel %vm800, %v5986, %v5987
  %v5989 = vrot.slane %v5177, 2
  %v5990 = vsel %vm800, %v5987, %v5989
  %v5991 = vrot.slane %v5169, 2
  %v5992 = vrot.slane %v5109, 2
  %v5993 = vsel %vm800, %v5991, %v5992
  %v5994 = vrot.slane %v5185, 2
  %v5995 = vsel %vm800, %v5992, %v5994
  %6028 = vrot.lane.b32.xlu0 %v5155, 16
  %v6029 = vpop.permute.xlu0 %6028
  %6030 = vrot.lane.b32.xlu0 %v5067, 16
  %v6031 = vpop.permute.xlu0 %6030
  %6032 = vrot.lane.b32.xlu0 %v5156, 16
  %v6033 = vpop.permute.xlu0 %6032
  %6034 = vrot.lane.b32.xlu0 %v5070, 16
  %v6035 = vpop.permute.xlu0 %6034
  %6036 = vrot.lane.b32.xlu0 %v5157, 16
  %v6037 = vpop.permute.xlu0 %6036
  %6038 = vrot.lane.b32.xlu0 %v5073, 16
  %v6039 = vpop.permute.xlu0 %6038
  %6040 = vrot.lane.b32.xlu0 %v5158, 16
  %v6041 = vpop.permute.xlu0 %6040
  %6042 = vrot.lane.b32.xlu0 %v5076, 16
  %v6043 = vpop.permute.xlu0 %6042
  %6044 = vrot.lane.b32.xlu0 %v5159, 16
  %v6045 = vpop.permute.xlu0 %6044
  %6046 = vrot.lane.b32.xlu0 %v5079, 16
  %v6047 = vpop.permute.xlu0 %6046
  %6048 = vrot.lane.b32.xlu0 %v5160, 16
  %v6049 = vpop.permute.xlu0 %6048
  %6050 = vrot.lane.b32.xlu0 %v5082, 16
  %v6051 = vpop.permute.xlu0 %6050
  %6052 = vrot.lane.b32.xlu0 %v5161, 16
  %v6053 = vpop.permute.xlu0 %6052
  %6054 = vrot.lane.b32.xlu0 %v5085, 16
  %v6055 = vpop.permute.xlu0 %6054
  %6056 = vrot.lane.b32.xlu0 %v356, 16
  %v6057 = vpop.permute.xlu0 %6056
  %6058 = vrot.lane.b32.xlu0 %v165, 16
  %v6059 = vpop.permute.xlu0 %6058
  %6060 = vrot.lane.b32.xlu0 %v5163, 16
  %v6061 = vpop.permute.xlu0 %6060
  %6062 = vrot.lane.b32.xlu0 %v5091, 16
  %v6063 = vpop.permute.xlu0 %6062
  %6064 = vrot.lane.b32.xlu0 %v5164, 16
  %v6065 = vpop.permute.xlu0 %6064
  %6066 = vrot.lane.b32.xlu0 %v5094, 16
  %v6067 = vpop.permute.xlu0 %6066
  %6068 = vrot.lane.b32.xlu0 %v5165, 16
  %v6069 = vpop.permute.xlu0 %6068
  %6070 = vrot.lane.b32.xlu0 %v5097, 16
  %v6071 = vpop.permute.xlu0 %6070
  %6072 = vrot.lane.b32.xlu0 %v5166, 16
  %v6073 = vpop.permute.xlu0 %6072
  %6074 = vrot.lane.b32.xlu0 %v5100, 16
  %v6075 = vpop.permute.xlu0 %6074
  %6076 = vrot.lane.b32.xlu0 %v5167, 16
  %v6077 = vpop.permute.xlu0 %6076
  %6078 = vrot.lane.b32.xlu0 %v5103, 16
  %v6079 = vpop.permute.xlu0 %6078
  %6080 = vrot.lane.b32.xlu0 %v5168, 16
  %v6081 = vpop.permute.xlu0 %6080
  %6082 = vrot.lane.b32.xlu0 %v5106, 16
  %v6083 = vpop.permute.xlu0 %6082
  %6084 = vrot.lane.b32.xlu0 %v5169, 16
  %v6085 = vpop.permute.xlu0 %6084
  %6086 = vrot.lane.b32.xlu0 %v5109, 16
  %v6087 = vpop.permute.xlu0 %6086
  %6118 = vrot.lane.b32.xlu0 %v5217, 32
  %v6119 = vpop.permute.xlu0 %6118
  %6120 = vrot.lane.b32.xlu0 %v5219, 32
  %v6121 = vpop.permute.xlu0 %6120
  %6122 = vrot.lane.b32.xlu0 %v5222, 32
  %v6123 = vpop.permute.xlu0 %6122
  %6124 = vrot.lane.b32.xlu0 %v5224, 32
  %v6125 = vpop.permute.xlu0 %6124
  %6126 = vrot.lane.b32.xlu0 %v5227, 32
  %v6127 = vpop.permute.xlu0 %6126
  %6128 = vrot.lane.b32.xlu0 %v5229, 32
  %v6129 = vpop.permute.xlu0 %6128
  %6130 = vrot.lane.b32.xlu0 %v5232, 32
  %v6131 = vpop.permute.xlu0 %6130
  %6132 = vrot.lane.b32.xlu0 %v5234, 32
  %v6133 = vpop.permute.xlu0 %6132
  %6134 = vrot.lane.b32.xlu0 %v5237, 32
  %v6135 = vpop.permute.xlu0 %6134
  %6136 = vrot.lane.b32.xlu0 %v5239, 32
  %v6137 = vpop.permute.xlu0 %6136
  %6138 = vrot.lane.b32.xlu0 %v5582, 32
  %v6139 = vpop.permute.xlu0 %6138
  %6140 = vrot.lane.b32.xlu0 %v5584, 32
  %v6141 = vpop.permute.xlu0 %6140
  %6142 = vrot.lane.b32.xlu0 %v5882, 32
  %v6143 = vpop.permute.xlu0 %6142
  %6144 = vrot.lane.b32.xlu0 %v5884, 32
  %v6145 = vpop.permute.xlu0 %6144
  %6146 = vrot.lane.b32.xlu0 %v483, 32
  %v6147 = vpop.permute.xlu0 %6146
  %6148 = vrot.lane.b32.xlu0 %v485, 32
  %v6149 = vpop.permute.xlu0 %6148
  %6150 = vrot.lane.b32.xlu0 %v5247, 32
  %v6151 = vpop.permute.xlu0 %6150
  %6152 = vrot.lane.b32.xlu0 %v5249, 32
  %v6153 = vpop.permute.xlu0 %6152
  %6154 = vrot.lane.b32.xlu0 %v5252, 32
  %v6155 = vpop.permute.xlu0 %6154
  %6156 = vrot.lane.b32.xlu0 %v5254, 32
  %v6157 = vpop.permute.xlu0 %6156
  %6158 = vrot.lane.b32.xlu0 %v5257, 32
  %v6159 = vpop.permute.xlu0 %6158
  %6160 = vrot.lane.b32.xlu0 %v5259, 32
  %v6161 = vpop.permute.xlu0 %6160
  %6162 = vrot.lane.b32.xlu0 %v5262, 32
  %v6163 = vpop.permute.xlu0 %6162
  %6164 = vrot.lane.b32.xlu0 %v5264, 32
  %v6165 = vpop.permute.xlu0 %6164
  %6166 = vrot.lane.b32.xlu0 %v5267, 32
  %v6167 = vpop.permute.xlu0 %6166
  %6168 = vrot.lane.b32.xlu0 %v5269, 32
  %v6169 = vpop.permute.xlu0 %6168
  %6170 = vrot.lane.b32.xlu0 %v5587, 32
  %v6171 = vpop.permute.xlu0 %6170
  %6172 = vrot.lane.b32.xlu0 %v5589, 32
  %v6173 = vpop.permute.xlu0 %6172
  %6174 = vrot.lane.b32.xlu0 %v5887, 32
  %v6175 = vpop.permute.xlu0 %6174
  %6176 = vrot.lane.b32.xlu0 %v5889, 32
  %v6177 = vpop.permute.xlu0 %6176
  %6208 = vrot.lane.b32.xlu0 %v5355, 48
  %v6209 = vpop.permute.xlu0 %6208
  %6210 = vrot.lane.b32.xlu0 %v5357, 48
  %v6211 = vpop.permute.xlu0 %6210
  %6212 = vrot.lane.b32.xlu0 %v5360, 48
  %v6213 = vpop.permute.xlu0 %6212
  %6214 = vrot.lane.b32.xlu0 %v5362, 48
  %v6215 = vpop.permute.xlu0 %6214
  %6216 = vrot.lane.b32.xlu0 %v5365, 48
  %v6217 = vpop.permute.xlu0 %6216
  %6218 = vrot.lane.b32.xlu0 %v5367, 48
  %v6219 = vpop.permute.xlu0 %6218
  %6220 = vrot.lane.b32.xlu0 %v5370, 48
  %v6221 = vpop.permute.xlu0 %6220
  %6222 = vrot.lane.b32.xlu0 %v5372, 48
  %v6223 = vpop.permute.xlu0 %6222
  %6224 = vrot.lane.b32.xlu0 %v5375, 48
  %v6225 = vpop.permute.xlu0 %6224
  %6226 = vrot.lane.b32.xlu0 %v5377, 48
  %v6227 = vpop.permute.xlu0 %6226
  %6228 = vrot.lane.b32.xlu0 %v5682, 48
  %v6229 = vpop.permute.xlu0 %6228
  %6230 = vrot.lane.b32.xlu0 %v5684, 48
  %v6231 = vpop.permute.xlu0 %6230
  %6232 = vrot.lane.b32.xlu0 %v5988, 48
  %v6233 = vpop.permute.xlu0 %6232
  %6234 = vrot.lane.b32.xlu0 %v5990, 48
  %v6235 = vpop.permute.xlu0 %6234
  %6236 = vrot.lane.b32.xlu0 %v803, 48
  %v6237 = vpop.permute.xlu0 %6236
  %6238 = vrot.lane.b32.xlu0 %v805, 48
  %v6239 = vpop.permute.xlu0 %6238
  %6240 = vrot.lane.b32.xlu0 %v5385, 48
  %v6241 = vpop.permute.xlu0 %6240
  %6242 = vrot.lane.b32.xlu0 %v5387, 48
  %v6243 = vpop.permute.xlu0 %6242
  %6244 = vrot.lane.b32.xlu0 %v5390, 48
  %v6245 = vpop.permute.xlu0 %6244
  %6246 = vrot.lane.b32.xlu0 %v5392, 48
  %v6247 = vpop.permute.xlu0 %6246
  %6248 = vrot.lane.b32.xlu0 %v5395, 48
  %v6249 = vpop.permute.xlu0 %6248
  %6250 = vrot.lane.b32.xlu0 %v5397, 48
  %v6251 = vpop.permute.xlu0 %6250
  %6252 = vrot.lane.b32.xlu0 %v5400, 48
  %v6253 = vpop.permute.xlu0 %6252
  %6254 = vrot.lane.b32.xlu0 %v5402, 48
  %v6255 = vpop.permute.xlu0 %6254
  %6256 = vrot.lane.b32.xlu0 %v5405, 48
  %v6257 = vpop.permute.xlu0 %6256
  %6258 = vrot.lane.b32.xlu0 %v5407, 48
  %v6259 = vpop.permute.xlu0 %6258
  %6260 = vrot.lane.b32.xlu0 %v5687, 48
  %v6261 = vpop.permute.xlu0 %6260
  %6262 = vrot.lane.b32.xlu0 %v5689, 48
  %v6263 = vpop.permute.xlu0 %6262
  %6264 = vrot.lane.b32.xlu0 %v5993, 48
  %v6265 = vpop.permute.xlu0 %6264
  %6266 = vrot.lane.b32.xlu0 %v5995, 48
  %v6267 = vpop.permute.xlu0 %6266
  %6298 = vrot.lane.b32.xlu0 %v5156, 64
  %v6299 = vpop.permute.xlu0 %6298
  %6300 = vrot.lane.b32.xlu0 %v5070, 64
  %v6301 = vpop.permute.xlu0 %6300
  %6302 = vrot.lane.b32.xlu0 %v5157, 64
  %v6303 = vpop.permute.xlu0 %6302
  %6304 = vrot.lane.b32.xlu0 %v5073, 64
  %v6305 = vpop.permute.xlu0 %6304
  %6306 = vrot.lane.b32.xlu0 %v5158, 64
  %v6307 = vpop.permute.xlu0 %6306
  %6308 = vrot.lane.b32.xlu0 %v5076, 64
  %v6309 = vpop.permute.xlu0 %6308
  %6310 = vrot.lane.b32.xlu0 %v5159, 64
  %v6311 = vpop.permute.xlu0 %6310
  %6312 = vrot.lane.b32.xlu0 %v5079, 64
  %v6313 = vpop.permute.xlu0 %6312
  %6314 = vrot.lane.b32.xlu0 %v5160, 64
  %v6315 = vpop.permute.xlu0 %6314
  %6316 = vrot.lane.b32.xlu0 %v5082, 64
  %v6317 = vpop.permute.xlu0 %6316
  %6318 = vrot.lane.b32.xlu0 %v5161, 64
  %v6319 = vpop.permute.xlu0 %6318
  %6320 = vrot.lane.b32.xlu0 %v5085, 64
  %v6321 = vpop.permute.xlu0 %6320
  %6322 = vrot.lane.b32.xlu0 %v356, 64
  %v6323 = vpop.permute.xlu0 %6322
  %6324 = vrot.lane.b32.xlu0 %v165, 64
  %v6325 = vpop.permute.xlu0 %6324
  %6326 = vrot.lane.b32.xlu0 %v5164, 64
  %v6327 = vpop.permute.xlu0 %6326
  %6328 = vrot.lane.b32.xlu0 %v5094, 64
  %v6329 = vpop.permute.xlu0 %6328
  %6330 = vrot.lane.b32.xlu0 %v5165, 64
  %v6331 = vpop.permute.xlu0 %6330
  %6332 = vrot.lane.b32.xlu0 %v5097, 64
  %v6333 = vpop.permute.xlu0 %6332
  %6334 = vrot.lane.b32.xlu0 %v5166, 64
  %v6335 = vpop.permute.xlu0 %6334
  %6336 = vrot.lane.b32.xlu0 %v5100, 64
  %v6337 = vpop.permute.xlu0 %6336
  %6338 = vrot.lane.b32.xlu0 %v5167, 64
  %v6339 = vpop.permute.xlu0 %6338
  %6340 = vrot.lane.b32.xlu0 %v5103, 64
  %v6341 = vpop.permute.xlu0 %6340
  %6342 = vrot.lane.b32.xlu0 %v5168, 64
  %v6343 = vpop.permute.xlu0 %6342
  %6344 = vrot.lane.b32.xlu0 %v5106, 64
  %v6345 = vpop.permute.xlu0 %6344
  %6346 = vrot.lane.b32.xlu0 %v5169, 64
  %v6347 = vpop.permute.xlu0 %6346
  %6348 = vrot.lane.b32.xlu0 %v5109, 64
  %v6349 = vpop.permute.xlu0 %6348
  %6376 = vrot.lane.b32.xlu0 %v5222, 80
  %v6377 = vpop.permute.xlu0 %6376
  %6378 = vrot.lane.b32.xlu0 %v5224, 80
  %v6379 = vpop.permute.xlu0 %6378
  %6380 = vrot.lane.b32.xlu0 %v5227, 80
  %v6381 = vpop.permute.xlu0 %6380
  %6382 = vrot.lane.b32.xlu0 %v5229, 80
  %v6383 = vpop.permute.xlu0 %6382
  %6384 = vrot.lane.b32.xlu0 %v5232, 80
  %v6385 = vpop.permute.xlu0 %6384
  %6386 = vrot.lane.b32.xlu0 %v5234, 80
  %v6387 = vpop.permute.xlu0 %6386
  %6388 = vrot.lane.b32.xlu0 %v5237, 80
  %v6389 = vpop.permute.xlu0 %6388
  %6390 = vrot.lane.b32.xlu0 %v5239, 80
  %v6391 = vpop.permute.xlu0 %6390
  %6392 = vrot.lane.b32.xlu0 %v5582, 80
  %v6393 = vpop.permute.xlu0 %6392
  %6394 = vrot.lane.b32.xlu0 %v5584, 80
  %v6395 = vpop.permute.xlu0 %6394
  %6396 = vrot.lane.b32.xlu0 %v5882, 80
  %v6397 = vpop.permute.xlu0 %6396
  %6398 = vrot.lane.b32.xlu0 %v5884, 80
  %v6399 = vpop.permute.xlu0 %6398
  %6400 = vrot.lane.b32.xlu0 %v483, 80
  %v6401 = vpop.permute.xlu0 %6400
  %6402 = vrot.lane.b32.xlu0 %v485, 80
  %v6403 = vpop.permute.xlu0 %6402
  %6404 = vrot.lane.b32.xlu0 %v5252, 80
  %v6405 = vpop.permute.xlu0 %6404
  %6406 = vrot.lane.b32.xlu0 %v5254, 80
  %v6407 = vpop.permute.xlu0 %6406
  %6408 = vrot.lane.b32.xlu0 %v5257, 80
  %v6409 = vpop.permute.xlu0 %6408
  %6410 = vrot.lane.b32.xlu0 %v5259, 80
  %v6411 = vpop.permute.xlu0 %6410
  %6412 = vrot.lane.b32.xlu0 %v5262, 80
  %v6413 = vpop.permute.xlu0 %6412
  %6414 = vrot.lane.b32.xlu0 %v5264, 80
  %v6415 = vpop.permute.xlu0 %6414
  %6416 = vrot.lane.b32.xlu0 %v5267, 80
  %v6417 = vpop.permute.xlu0 %6416
  %6418 = vrot.lane.b32.xlu0 %v5269, 80
  %v6419 = vpop.permute.xlu0 %6418
  %6420 = vrot.lane.b32.xlu0 %v5587, 80
  %v6421 = vpop.permute.xlu0 %6420
  %6422 = vrot.lane.b32.xlu0 %v5589, 80
  %v6423 = vpop.permute.xlu0 %6422
  %6424 = vrot.lane.b32.xlu0 %v5887, 80
  %v6425 = vpop.permute.xlu0 %6424
  %6426 = vrot.lane.b32.xlu0 %v5889, 80
  %v6427 = vpop.permute.xlu0 %6426
  %6454 = vrot.lane.b32.xlu0 %v5360, 96
  %v6455 = vpop.permute.xlu0 %6454
  %6456 = vrot.lane.b32.xlu0 %v5362, 96
  %v6457 = vpop.permute.xlu0 %6456
  %6458 = vrot.lane.b32.xlu0 %v5365, 96
  %v6459 = vpop.permute.xlu0 %6458
  %6460 = vrot.lane.b32.xlu0 %v5367, 96
  %v6461 = vpop.permute.xlu0 %6460
  %6462 = vrot.lane.b32.xlu0 %v5370, 96
  %v6463 = vpop.permute.xlu0 %6462
  %6464 = vrot.lane.b32.xlu0 %v5372, 96
  %v6465 = vpop.permute.xlu0 %6464
  %6466 = vrot.lane.b32.xlu0 %v5375, 96
  %v6467 = vpop.permute.xlu0 %6466
  %6468 = vrot.lane.b32.xlu0 %v5377, 96
  %v6469 = vpop.permute.xlu0 %6468
  %6470 = vrot.lane.b32.xlu0 %v5682, 96
  %v6471 = vpop.permute.xlu0 %6470
  %6472 = vrot.lane.b32.xlu0 %v5684, 96
  %v6473 = vpop.permute.xlu0 %6472
  %6474 = vrot.lane.b32.xlu0 %v5988, 96
  %v6475 = vpop.permute.xlu0 %6474
  %6476 = vrot.lane.b32.xlu0 %v5990, 96
  %v6477 = vpop.permute.xlu0 %6476
  %6478 = vrot.lane.b32.xlu0 %v803, 96
  %v6479 = vpop.permute.xlu0 %6478
  %6480 = vrot.lane.b32.xlu0 %v805, 96
  %v6481 = vpop.permute.xlu0 %6480
  %6482 = vrot.lane.b32.xlu0 %v5390, 96
  %v6483 = vpop.permute.xlu0 %6482
  %6484 = vrot.lane.b32.xlu0 %v5392, 96
  %v6485 = vpop.permute.xlu0 %6484
  %6486 = vrot.lane.b32.xlu0 %v5395, 96
  %v6487 = vpop.permute.xlu0 %6486
  %6488 = vrot.lane.b32.xlu0 %v5397, 96
  %v6489 = vpop.permute.xlu0 %6488
  %6490 = vrot.lane.b32.xlu0 %v5400, 96
  %v6491 = vpop.permute.xlu0 %6490
  %6492 = vrot.lane.b32.xlu0 %v5402, 96
  %v6493 = vpop.permute.xlu0 %6492
  %6494 = vrot.lane.b32.xlu0 %v5405, 96
  %v6495 = vpop.permute.xlu0 %6494
  %6496 = vrot.lane.b32.xlu0 %v5407, 96
  %v6497 = vpop.permute.xlu0 %6496
  %6498 = vrot.lane.b32.xlu0 %v5687, 96
  %v6499 = vpop.permute.xlu0 %6498
  %6500 = vrot.lane.b32.xlu0 %v5689, 96
  %v6501 = vpop.permute.xlu0 %6500
  %6502 = vrot.lane.b32.xlu0 %v5993, 96
  %v6503 = vpop.permute.xlu0 %6502
  %6504 = vrot.lane.b32.xlu0 %v5995, 96
  %v6505 = vpop.permute.xlu0 %6504
  %v6532 = vsel %vm4933, %v356, %v5271
  %v6533 = vsel %vm4933, %v165, %v5273
  %v6534 = vsel %vm4933, %v5154, %v5275
  %v6535 = vsel %vm4933, %v5064, %v5277
  %v6536 = vsel %vm4933, %v5155, %v5279
  %v6537 = vsel %vm4933, %v5067, %v5281
  %v6538 = vsel %vm4933, %v5156, %v5283
  %v6539 = vsel %vm4933, %v5070, %v5285
  %v6540 = vsel %vm4933, %v5157, %v5287
  %v6541 = vsel %vm4933, %v5073, %v5289
  %v6542 = vsel %vm4933, %v5158, %v5291
  %v6543 = vsel %vm4933, %v5076, %v5293
  %v6544 = vsel %vm4933, %v5159, %v5295
  %v6545 = vsel %vm4933, %v5079, %v5297
  %v6546 = vsel %vm4933, %v5162, %v5299
  %v6547 = vsel %vm4933, %v5088, %v5301
  %v6548 = vsel %vm4933, %v5163, %v5303
  %v6549 = vsel %vm4933, %v5091, %v5305
  %v6550 = vsel %vm4933, %v5164, %v5307
  %v6551 = vsel %vm4933, %v5094, %v5309
  %v6552 = vsel %vm4933, %v5165, %v5311
  %v6553 = vsel %vm4933, %v5097, %v5313
  %v6554 = vsel %vm4933, %v5166, %v5315
  %v6555 = vsel %vm4933, %v5100, %v5317
  %v6556 = vsel %vm4933, %v5167, %v5319
  %v6557 = vsel %vm4933, %v5103, %v5321
  %vm6558 = vcmask 261120
  %v6559 = vsel %vm6558, %v6532, %v5409
  %v6560 = vsel %vm6558, %v6533, %v5411
  %v6561 = vsel %vm6558, %v6534, %v5413
  %v6562 = vsel %vm6558, %v6535, %v5415
  %v6563 = vsel %vm6558, %v6536, %v5417
  %v6564 = vsel %vm6558, %v6537, %v5419
  %v6565 = vsel %vm6558, %v6538, %v5421
  %v6566 = vsel %vm6558, %v6539, %v5423
  %v6567 = vsel %vm6558, %v6540, %v5425
  %v6568 = vsel %vm6558, %v6541, %v5427
  %v6569 = vsel %vm6558, %v6542, %v5429
  %v6570 = vsel %vm6558, %v6543, %v5431
  %v6571 = vsel %vm6558, %v6544, %v5433
  %v6572 = vsel %vm6558, %v6545, %v5435
  %v6573 = vsel %vm6558, %v6546, %v5437
  %v6574 = vsel %vm6558, %v6547, %v5439
  %v6575 = vsel %vm6558, %v6548, %v5441
  %v6576 = vsel %vm6558, %v6549, %v5443
  %v6577 = vsel %vm6558, %v6550, %v5445
  %v6578 = vsel %vm6558, %v6551, %v5447
  %v6579 = vsel %vm6558, %v6552, %v5449
  %v6580 = vsel %vm6558, %v6553, %v5451
  %v6581 = vsel %vm6558, %v6554, %v5453
  %v6582 = vsel %vm6558, %v6555, %v5455
  %v6583 = vsel %vm6558, %v6556, %v5457
  %v6584 = vsel %vm6558, %v6557, %v5459
  %vm6585 = vcmask 392192
  %v6586 = vsel %vm6585, %v6559, %v5489
  %v6587 = vsel %vm6585, %v6560, %v5491
  %v6588 = vsel %vm6585, %v6559, %v5493
  %v6589 = vsel %vm6585, %v6560, %v5495
  %v6590 = vsel %vm6585, %v6561, %v5497
  %v6591 = vsel %vm6585, %v6562, %v5499
  %v6592 = vsel %vm6585, %v6563, %v5501
  %v6593 = vsel %vm6585, %v6564, %v5503
  %v6594 = vsel %vm6585, %v6565, %v5505
  %v6595 = vsel %vm6585, %v6566, %v5507
  %v6596 = vsel %vm6585, %v6567, %v5509
  %v6597 = vsel %vm6585, %v6568, %v5511
  %v6598 = vsel %vm6585, %v6569, %v5513
  %v6599 = vsel %vm6585, %v6570, %v5515
  %v6600 = vsel %vm6585, %v6571, %v5517
  %v6601 = vsel %vm6585, %v6572, %v5519
  %v6602 = vsel %vm6585, %v6559, %v5521
  %v6603 = vsel %vm6585, %v6560, %v5523
  %v6604 = vsel %vm6585, %v6573, %v5525
  %v6605 = vsel %vm6585, %v6574, %v5527
  %v6606 = vsel %vm6585, %v6575, %v5529
  %v6607 = vsel %vm6585, %v6576, %v5531
  %v6608 = vsel %vm6585, %v6577, %v5533
  %v6609 = vsel %vm6585, %v6578, %v5535
  %v6610 = vsel %vm6585, %v6579, %v5537
  %v6611 = vsel %vm6585, %v6580, %v5539
  %v6612 = vsel %vm6585, %v6581, %v5541
  %v6613 = vsel %vm6585, %v6582, %v5543
  %v6614 = vsel %vm6585, %v6583, %v5545
  %v6615 = vsel %vm6585, %v6584, %v5547
  %vm6616 = vcmask 523264
  %v6617 = vsel %vm6616, %v6586, %v5591
  %v6618 = vsel %vm6616, %v6587, %v5593
  %v6619 = vsel %vm6616, %v6588, %v5595
  %v6620 = vsel %vm6616, %v6589, %v5597
  %v6621 = vsel %vm6616, %v6590, %v5599
  %v6622 = vsel %vm6616, %v6591, %v5601
  %v6623 = vsel %vm6616, %v6592, %v5603
  %v6624 = vsel %vm6616, %v6593, %v5605
  %v6625 = vsel %vm6616, %v6594, %v5607
  %v6626 = vsel %vm6616, %v6595, %v5609
  %v6627 = vsel %vm6616, %v6596, %v5611
  %v6628 = vsel %vm6616, %v6597, %v5613
  %v6629 = vsel %vm6616, %v6598, %v5615
  %v6630 = vsel %vm6616, %v6599, %v5617
  %v6631 = vsel %vm6616, %v6600, %v5619
  %v6632 = vsel %vm6616, %v6601, %v5621
  %v6633 = vsel %vm6616, %v6602, %v5623
  %v6634 = vsel %vm6616, %v6603, %v5625
  %v6635 = vsel %vm6616, %v6604, %v5627
  %v6636 = vsel %vm6616, %v6605, %v5629
  %v6637 = vsel %vm6616, %v6606, %v5631
  %v6638 = vsel %vm6616, %v6607, %v5633
  %v6639 = vsel %vm6616, %v6608, %v5635
  %v6640 = vsel %vm6616, %v6609, %v5637
  %v6641 = vsel %vm6616, %v6610, %v5639
  %v6642 = vsel %vm6616, %v6611, %v5641
  %v6643 = vsel %vm6616, %v6612, %v5643
  %v6644 = vsel %vm6616, %v6613, %v5645
  %v6645 = vsel %vm6616, %v6614, %v5647
  %v6646 = vsel %vm6616, %v6615, %v5649
  %vm6647 = vcmask 654336
  %v6648 = vsel %vm6647, %v6617, %v5691
  %v6649 = vsel %vm6647, %v6618, %v5693
  %v6650 = vsel %vm6647, %v6619, %v5695
  %v6651 = vsel %vm6647, %v6620, %v5697
  %v6652 = vsel %vm6647, %v6621, %v5699
  %v6653 = vsel %vm6647, %v6622, %v5701
  %v6654 = vsel %vm6647, %v6623, %v5703
  %v6655 = vsel %vm6647, %v6624, %v5705
  %v6656 = vsel %vm6647, %v6625, %v5707
  %v6657 = vsel %vm6647, %v6626, %v5709
  %v6658 = vsel %vm6647, %v6627, %v5711
  %v6659 = vsel %vm6647, %v6628, %v5713
  %v6660 = vsel %vm6647, %v6629, %v5715
  %v6661 = vsel %vm6647, %v6630, %v5717
  %v6662 = vsel %vm6647, %v6631, %v5719
  %v6663 = vsel %vm6647, %v6632, %v5721
  %v6664 = vsel %vm6647, %v6633, %v5723
  %v6665 = vsel %vm6647, %v6634, %v5725
  %v6666 = vsel %vm6647, %v6635, %v5727
  %v6667 = vsel %vm6647, %v6636, %v5729
  %v6668 = vsel %vm6647, %v6637, %v5731
  %v6669 = vsel %vm6647, %v6638, %v5733
  %v6670 = vsel %vm6647, %v6639, %v5735
  %v6671 = vsel %vm6647, %v6640, %v5737
  %v6672 = vsel %vm6647, %v6641, %v5739
  %v6673 = vsel %vm6647, %v6642, %v5741
  %v6674 = vsel %vm6647, %v6643, %v5743
  %v6675 = vsel %vm6647, %v6644, %v5745
  %v6676 = vsel %vm6647, %v6645, %v5747
  %v6677 = vsel %vm6647, %v6646, %v5749
  %vm6678 = vcmask 785408
  %v6679 = vsel %vm6678, %v6648, %v5783
  %v6680 = vsel %vm6678, %v6649, %v5785
  %v6681 = vsel %vm6678, %v6650, %v5787
  %v6682 = vsel %vm6678, %v6651, %v5789
  %v6683 = vsel %vm6678, %v6652, %v5791
  %v6684 = vsel %vm6678, %v6653, %v5793
  %v6685 = vsel %vm6678, %v6654, %v5795
  %v6686 = vsel %vm6678, %v6655, %v5797
  %v6687 = vsel %vm6678, %v6656, %v5799
  %v6688 = vsel %vm6678, %v6657, %v5801
  %v6689 = vsel %vm6678, %v6658, %v5803
  %v6690 = vsel %vm6678, %v6659, %v5805
  %v6691 = vsel %vm6678, %v6660, %v5807
  %v6692 = vsel %vm6678, %v6661, %v5809
  %v6693 = vsel %vm6678, %v6662, %v5811
  %v6694 = vsel %vm6678, %v6663, %v5813
  %v6695 = vsel %vm6678, %v6648, %v5815
  %v6696 = vsel %vm6678, %v6649, %v5817
  %v6697 = vsel %vm6678, %v6664, %v5819
  %v6698 = vsel %vm6678, %v6665, %v5821
  %v6699 = vsel %vm6678, %v6666, %v5823
  %v6700 = vsel %vm6678, %v6667, %v5825
  %v6701 = vsel %vm6678, %v6668, %v5827
  %v6702 = vsel %vm6678, %v6669, %v5829
  %v6703 = vsel %vm6678, %v6670, %v5831
  %v6704 = vsel %vm6678, %v6671, %v5833
  %v6705 = vsel %vm6678, %v6672, %v5835
  %v6706 = vsel %vm6678, %v6673, %v5837
  %v6707 = vsel %vm6678, %v6674, %v5839
  %v6708 = vsel %vm6678, %v6675, %v5841
  %v6709 = vsel %vm6678, %v6676, %v5843
  %v6710 = vsel %vm6678, %v6677, %v5845
  %vm6711 = vcmask 916480
  %v6712 = vsel %vm6711, %v6679, %v5891
  %v6713 = vsel %vm6711, %v6680, %v5893
  %v6714 = vsel %vm6711, %v6681, %v5895
  %v6715 = vsel %vm6711, %v6682, %v5897
  %v6716 = vsel %vm6711, %v6683, %v5899
  %v6717 = vsel %vm6711, %v6684, %v5901
  %v6718 = vsel %vm6711, %v6685, %v5903
  %v6719 = vsel %vm6711, %v6686, %v5905
  %v6720 = vsel %vm6711, %v6687, %v5907
  %v6721 = vsel %vm6711, %v6688, %v5909
  %v6722 = vsel %vm6711, %v6689, %v5911
  %v6723 = vsel %vm6711, %v6690, %v5913
  %v6724 = vsel %vm6711, %v6691, %v5915
  %v6725 = vsel %vm6711, %v6692, %v5917
  %v6726 = vsel %vm6711, %v6693, %v5919
  %v6727 = vsel %vm6711, %v6694, %v5921
  %v6728 = vsel %vm6711, %v6695, %v5923
  %v6729 = vsel %vm6711, %v6696, %v5925
  %v6730 = vsel %vm6711, %v6697, %v5927
  %v6731 = vsel %vm6711, %v6698, %v5929
  %v6732 = vsel %vm6711, %v6699, %v5931
  %v6733 = vsel %vm6711, %v6700, %v5933
  %v6734 = vsel %vm6711, %v6701, %v5935
  %v6735 = vsel %vm6711, %v6702, %v5937
  %v6736 = vsel %vm6711, %v6703, %v5939
  %v6737 = vsel %vm6711, %v6704, %v5941
  %v6738 = vsel %vm6711, %v6705, %v5943
  %v6739 = vsel %vm6711, %v6706, %v5945
  %v6740 = vsel %vm6711, %v6707, %v5947
  %v6741 = vsel %vm6711, %v6708, %v5949
  %v6742 = vsel %vm6711, %v6709, %v5951
  %v6743 = vsel %vm6711, %v6710, %v5953
  %v6744 = vsel %vm4933, %v5350, %v6029
  %v6745 = vsel %vm4933, %v5352, %v6031
  %v6746 = vsel %vm4933, %v5355, %v6033
  %v6747 = vsel %vm4933, %v5357, %v6035
  %v6748 = vsel %vm4933, %v5360, %v6037
  %v6749 = vsel %vm4933, %v5362, %v6039
  %v6750 = vsel %vm4933, %v5365, %v6041
  %v6751 = vsel %vm4933, %v5367, %v6043
  %v6752 = vsel %vm4933, %v5370, %v6045
  %v6753 = vsel %vm4933, %v5372, %v6047
  %v6754 = vsel %vm4933, %v5375, %v6049
  %v6755 = vsel %vm4933, %v5377, %v6051
  %v6756 = vsel %vm4933, %v5682, %v6053
  %v6757 = vsel %vm4933, %v5684, %v6055
  %v6758 = vsel %vm4933, %v5988, %v6057
  %v6759 = vsel %vm4933, %v5990, %v6059
  %v6760 = vsel %vm4933, %v5380, %v6061
  %v6761 = vsel %vm4933, %v5382, %v6063
  %v6762 = vsel %vm4933, %v5385, %v6065
  %v6763 = vsel %vm4933, %v5387, %v6067
  %v6764 = vsel %vm4933, %v5390, %v6069
  %v6765 = vsel %vm4933, %v5392, %v6071
  %v6766 = vsel %vm4933, %v5395, %v6073
  %v6767 = vsel %vm4933, %v5397, %v6075
  %v6768 = vsel %vm4933, %v5400, %v6077
  %v6769 = vsel %vm4933, %v5402, %v6079
  %v6770 = vsel %vm4933, %v5405, %v6081
  %v6771 = vsel %vm4933, %v5407, %v6083
  %v6772 = vsel %vm4933, %v5687, %v6085
  %v6773 = vsel %vm4933, %v5689, %v6087
  %v6774 = vsel %vm4933, %v5993, %v6057
  %v6775 = vsel %vm4933, %v5995, %v6059
  %v6776 = vsel %vm6558, %v6744, %v6119
  %v6777 = vsel %vm6558, %v6745, %v6121
  %v6778 = vsel %vm6558, %v6746, %v6123
  %v6779 = vsel %vm6558, %v6747, %v6125
  %v6780 = vsel %vm6558, %v6748, %v6127
  %v6781 = vsel %vm6558, %v6749, %v6129
  %v6782 = vsel %vm6558, %v6750, %v6131
  %v6783 = vsel %vm6558, %v6751, %v6133
  %v6784 = vsel %vm6558, %v6752, %v6135
  %v6785 = vsel %vm6558, %v6753, %v6137
  %v6786 = vsel %vm6558, %v6754, %v6139
  %v6787 = vsel %vm6558, %v6755, %v6141
  %v6788 = vsel %vm6558, %v6756, %v6143
  %v6789 = vsel %vm6558, %v6757, %v6145
  %v6790 = vsel %vm6558, %v6758, %v6147
  %v6791 = vsel %vm6558, %v6759, %v6149
  %v6792 = vsel %vm6558, %v6760, %v6151
  %v6793 = vsel %vm6558, %v6761, %v6153
  %v6794 = vsel %vm6558, %v6762, %v6155
  %v6795 = vsel %vm6558, %v6763, %v6157
  %v6796 = vsel %vm6558, %v6764, %v6159
  %v6797 = vsel %vm6558, %v6765, %v6161
  %v6798 = vsel %vm6558, %v6766, %v6163
  %v6799 = vsel %vm6558, %v6767, %v6165
  %v6800 = vsel %vm6558, %v6768, %v6167
  %v6801 = vsel %vm6558, %v6769, %v6169
  %v6802 = vsel %vm6558, %v6770, %v6171
  %v6803 = vsel %vm6558, %v6771, %v6173
  %v6804 = vsel %vm6558, %v6772, %v6175
  %v6805 = vsel %vm6558, %v6773, %v6177
  %v6806 = vsel %vm6558, %v6774, %v6147
  %v6807 = vsel %vm6558, %v6775, %v6149
  %v6808 = vsel %vm6585, %v6776, %v6209
  %v6809 = vsel %vm6585, %v6777, %v6211
  %v6810 = vsel %vm6585, %v6778, %v6213
  %v6811 = vsel %vm6585, %v6779, %v6215
  %v6812 = vsel %vm6585, %v6780, %v6217
  %v6813 = vsel %vm6585, %v6781, %v6219
  %v6814 = vsel %vm6585, %v6782, %v6221
  %v6815 = vsel %vm6585, %v6783, %v6223
  %v6816 = vsel %vm6585, %v6784, %v6225
  %v6817 = vsel %vm6585, %v6785, %v6227
  %v6818 = vsel %vm6585, %v6786, %v6229
  %v6819 = vsel %vm6585, %v6787, %v6231
  %v6820 = vsel %vm6585, %v6788, %v6233
  %v6821 = vsel %vm6585, %v6789, %v6235
  %v6822 = vsel %vm6585, %v6790, %v6237
  %v6823 = vsel %vm6585, %v6791, %v6239
  %v6824 = vsel %vm6585, %v6792, %v6241
  %v6825 = vsel %vm6585, %v6793, %v6243
  %v6826 = vsel %vm6585, %v6794, %v6245
  %v6827 = vsel %vm6585, %v6795, %v6247
  %v6828 = vsel %vm6585, %v6796, %v6249
  %v6829 = vsel %vm6585, %v6797, %v6251
  %v6830 = vsel %vm6585, %v6798, %v6253
  %v6831 = vsel %vm6585, %v6799, %v6255
  %v6832 = vsel %vm6585, %v6800, %v6257
  %v6833 = vsel %vm6585, %v6801, %v6259
  %v6834 = vsel %vm6585, %v6802, %v6261
  %v6835 = vsel %vm6585, %v6803, %v6263
  %v6836 = vsel %vm6585, %v6804, %v6265
  %v6837 = vsel %vm6585, %v6805, %v6267
  %v6838 = vsel %vm6585, %v6806, %v6237
  %v6839 = vsel %vm6585, %v6807, %v6239
  %v6840 = vsel %vm6616, %v6808, %v6299
  %v6841 = vsel %vm6616, %v6809, %v6301
  %v6842 = vsel %vm6616, %v6810, %v6303
  %v6843 = vsel %vm6616, %v6811, %v6305
  %v6844 = vsel %vm6616, %v6812, %v6307
  %v6845 = vsel %vm6616, %v6813, %v6309
  %v6846 = vsel %vm6616, %v6814, %v6311
  %v6847 = vsel %vm6616, %v6815, %v6313
  %v6848 = vsel %vm6616, %v6816, %v6315
  %v6849 = vsel %vm6616, %v6817, %v6317
  %v6850 = vsel %vm6616, %v6818, %v6319
  %v6851 = vsel %vm6616, %v6819, %v6321
  %v6852 = vsel %vm6616, %v6820, %v6323
  %v6853 = vsel %vm6616, %v6821, %v6325
  %v6854 = vsel %vm6616, %v6822, %v6323
  %v6855 = vsel %vm6616, %v6823, %v6325
  %v6856 = vsel %vm6616, %v6824, %v6327
  %v6857 = vsel %vm6616, %v6825, %v6329
  %v6858 = vsel %vm6616, %v6826, %v6331
  %v6859 = vsel %vm6616, %v6827, %v6333
  %v6860 = vsel %vm6616, %v6828, %v6335
  %v6861 = vsel %vm6616, %v6829, %v6337
  %v6862 = vsel %vm6616, %v6830, %v6339
  %v6863 = vsel %vm6616, %v6831, %v6341
  %v6864 = vsel %vm6616, %v6832, %v6343
  %v6865 = vsel %vm6616, %v6833, %v6345
  %v6866 = vsel %vm6616, %v6834, %v6347
  %v6867 = vsel %vm6616, %v6835, %v6349
  %v6868 = vsel %vm6616, %v6836, %v6323
  %v6869 = vsel %vm6616, %v6837, %v6325
  %v6870 = vsel %vm6616, %v6838, %v6323
  %v6871 = vsel %vm6616, %v6839, %v6325
  %v6872 = vsel %vm6647, %v6840, %v6377
  %v6873 = vsel %vm6647, %v6841, %v6379
  %v6874 = vsel %vm6647, %v6842, %v6381
  %v6875 = vsel %vm6647, %v6843, %v6383
  %v6876 = vsel %vm6647, %v6844, %v6385
  %v6877 = vsel %vm6647, %v6845, %v6387
  %v6878 = vsel %vm6647, %v6846, %v6389
  %v6879 = vsel %vm6647, %v6847, %v6391
  %v6880 = vsel %vm6647, %v6848, %v6393
  %v6881 = vsel %vm6647, %v6849, %v6395
  %v6882 = vsel %vm6647, %v6850, %v6397
  %v6883 = vsel %vm6647, %v6851, %v6399
  %v6884 = vsel %vm6647, %v6852, %v6401
  %v6885 = vsel %vm6647, %v6853, %v6403
  %v6886 = vsel %vm6647, %v6854, %v6401
  %v6887 = vsel %vm6647, %v6855, %v6403
  %v6888 = vsel %vm6647, %v6856, %v6405
  %v6889 = vsel %vm6647, %v6857, %v6407
  %v6890 = vsel %vm6647, %v6858, %v6409
  %v6891 = vsel %vm6647, %v6859, %v6411
  %v6892 = vsel %vm6647, %v6860, %v6413
  %v6893 = vsel %vm6647, %v6861, %v6415
  %v6894 = vsel %vm6647, %v6862, %v6417
  %v6895 = vsel %vm6647, %v6863, %v6419
  %v6896 = vsel %vm6647, %v6864, %v6421
  %v6897 = vsel %vm6647, %v6865, %v6423
  %v6898 = vsel %vm6647, %v6866, %v6425
  %v6899 = vsel %vm6647, %v6867, %v6427
  %v6900 = vsel %vm6647, %v6868, %v6401
  %v6901 = vsel %vm6647, %v6869, %v6403
  %v6902 = vsel %vm6647, %v6870, %v6401
  %v6903 = vsel %vm6647, %v6871, %v6403
  %v6904 = vsel %vm6678, %v6872, %v6455
  %v6905 = vsel %vm6678, %v6873, %v6457
  %v6906 = vsel %vm6678, %v6874, %v6459
  %v6907 = vsel %vm6678, %v6875, %v6461
  %v6908 = vsel %vm6678, %v6876, %v6463
  %v6909 = vsel %vm6678, %v6877, %v6465
  %v6910 = vsel %vm6678, %v6878, %v6467
  %v6911 = vsel %vm6678, %v6879, %v6469
  %v6912 = vsel %vm6678, %v6880, %v6471
  %v6913 = vsel %vm6678, %v6881, %v6473
  %v6914 = vsel %vm6678, %v6882, %v6475
  %v6915 = vsel %vm6678, %v6883, %v6477
  %v6916 = vsel %vm6678, %v6884, %v6479
  %v6917 = vsel %vm6678, %v6885, %v6481
  %v6918 = vsel %vm6678, %v6886, %v6479
  %v6919 = vsel %vm6678, %v6887, %v6481
  %v6920 = vsel %vm6678, %v6888, %v6483
  %v6921 = vsel %vm6678, %v6889, %v6485
  %v6922 = vsel %vm6678, %v6890, %v6487
  %v6923 = vsel %vm6678, %v6891, %v6489
  %v6924 = vsel %vm6678, %v6892, %v6491
  %v6925 = vsel %vm6678, %v6893, %v6493
  %v6926 = vsel %vm6678, %v6894, %v6495
  %v6927 = vsel %vm6678, %v6895, %v6497
  %v6928 = vsel %vm6678, %v6896, %v6499
  %v6929 = vsel %vm6678, %v6897, %v6501
  %v6930 = vsel %vm6678, %v6898, %v6503
  %v6931 = vsel %vm6678, %v6899, %v6505
  %v6932 = vsel %vm6678, %v6900, %v6479
  %v6933 = vsel %vm6678, %v6901, %v6481
  %v6934 = vsel %vm6678, %v6902, %v6479
  %v6935 = vsel %vm6678, %v6903, %v6481
  %v6936 = vld [vmem:[%s3] sm:$0xff]
  %v6937 = vld [vmem:[%s3 + $0x8] sm:$0xff]
  %v6938 = vld [vmem:[%s3 + $0x10] sm:$0xff]
  %v6939 = vld [vmem:[%s3 + $0x18] sm:$0xff]
  %v6940 = vld [vmem:[%s3 + $0x20] sm:$0xff]
  %v6941 = vld [vmem:[%s3 + $0x28] sm:$0xff]
  %v6942 = vld [vmem:[%s3 + $0x30] sm:$0xff]
  %v6943 = vld [vmem:[%s3 + $0x38] sm:$0xff]
  %v6944 = vld [vmem:[%s3 + $0x40] sm:$0xff]
  %v6945 = vld [vmem:[%s3 + $0x48] sm:$0xff]
  %v6946 = vld [vmem:[%s3 + $0x50] sm:$0xff]
  %v6947 = vld [vmem:[%s3 + $0x58] sm:$0xff]
  %v6948 = vld [vmem:[%s3 + $0x60] sm:$0xff]
  %v6949 = vld [vmem:[%s3 + $0x68] sm:$0xff]
  %v6950 = vld [vmem:[%s3 + $0x70] sm:$0xff]
  %v6951 = vld [vmem:[%s3 + $0x78] sm:$0xff]
  %v6952 = vld [vmem:[%s3 + $0x80] sm:$0xff]
  %v6953 = vld [vmem:[%s3 + $0x88] sm:$0xff]
  %v6954 = vld [vmem:[%s3 + $0x90] sm:$0xff]
  %v6955 = vld [vmem:[%s3 + $0x98] sm:$0xff]
  %v6956 = vld [vmem:[%s3 + $0xa0] sm:$0xff]
  %v6957 = vld [vmem:[%s3 + $0xa8] sm:$0xff]
  %v6958 = vld [vmem:[%s3 + $0xb0] sm:$0xff]
  %v6959 = vld [vmem:[%s3 + $0xb8] sm:$0xff]
  %v6960 = vld [vmem:[%s3 + $0xc0] sm:$0xff]
  %v6961 = vld [vmem:[%s3 + $0xc8] sm:$0xff]
  %v6962 = vld [vmem:[%s3 + $0xd0] sm:$0xff]
  %v6963 = vld [vmem:[%s3 + $0xd8] sm:$0xff]
  %v6964 = vld [vmem:[%s3 + $0xe0] sm:$0xff]
  %v6965 = vld [vmem:[%s3 + $0xe8] sm:$0xff]
  %v6966 = vld [vmem:[%s4] sm:$0x1]
  %v6968 = vlaneseq
  %v6969 = vshrl.u32 %v6968, 7
  %v6970 = vsub.s32 0, %v6969
  %v6971 = vrot.slane %v6966, %v6970
  %v6974 = vsel %vm6711, %v6904, 0
  %v6977 = vsel %vm6711, %v6905, 0
  %v6980 = vsel %vm6711, %v6906, 0
  %v6983 = vsel %vm6711, %v6907, 0
  %v6986 = vsel %vm6711, %v6908, 0
  %v6989 = vsel %vm6711, %v6909, 0
  %v6992 = vsel %vm6711, %v6910, 0
  %v6995 = vsel %vm6711, %v6911, 0
  %v6998 = vsel %vm6711, %v6912, 0
  %v7001 = vsel %vm6711, %v6913, 0
  %v7004 = vsel %vm6711, %v6914, 0
  %v7007 = vsel %vm6711, %v6915, 0
  %v7010 = vsel %vm6711, %v6916, 0
  %v7013 = vsel %vm6711, %v6917, 0
  %v7016 = vsel %vm6711, %v6918, 0
  %v7019 = vsel %vm6711, %v6919, 0
  %v7022 = vsel %vm6711, %v6920, 0
  %v7025 = vsel %vm6711, %v6921, 0
  %v7028 = vsel %vm6711, %v6922, 0
  %v7031 = vsel %vm6711, %v6923, 0
  %v7034 = vsel %vm6711, %v6924, 0
  %v7037 = vsel %vm6711, %v6925, 0
  %v7040 = vsel %vm6711, %v6926, 0
  %v7043 = vsel %vm6711, %v6927, 0
  %v7046 = vsel %vm6711, %v6928, 0
  %v7049 = vsel %vm6711, %v6929, 0
  %v7052 = vsel %vm6711, %v6930, 0
  %v7055 = vsel %vm6711, %v6931, 0
  %v7058 = vsel %vm6711, %v6932, 0
  %v7061 = vsel %vm6711, %v6933, 0
  %v7064 = vsel %vm6711, %v6934, 0
  %v7067 = vsel %vm6711, %v6935, 0
  %7069 = vmatprep.subr.mxu0 0.0
  %7070 = vmatpush1.msra.mxu0 %v6936
  %7071 = vmatprep.subr.mxu0 0.0
  %7072 = vmatpush1.msra.mxu0 %v6937
  %7073 = vmatprep.subr.mxu0 0.0
  %7074 = vmatpush1.msra.mxu0 %v6938
  %7075 = vmatprep.subr.mxu0 0.0
  %7076 = vmatpush1.msra.mxu0 %v6939
  %7077 = vmatprep.subr.mxu0 0.0
  %7078 = vmatpush1.msra.mxu0 %v6940
  %7079 = vmatprep.subr.mxu0 0.0
  %7080 = vmatpush1.msra.mxu0 %v6941
  %7081 = vmatprep.subr.mxu0 0.0
  %7082 = vmatpush1.msra.mxu0 %v6942
  %7083 = vmatprep.subr.mxu0 0.0
  %7084 = vmatpush1.msra.mxu0 %v6943
  %7085 = vmatprep.subr.mxu0 0.0
  %7086 = vmatpush1.msra.mxu0 %v6944
  %7087 = vmatprep.subr.mxu0 0.0
  %7088 = vmatpush1.msra.mxu0 %v6945
  %7089 = vmatprep.subr.mxu0 0.0
  %7090 = vmatpush1.msra.mxu0 %v6946
  %7091 = vmatprep.subr.mxu0 0.0
  %7092 = vmatpush1.msra.mxu0 %v6947
  %7093 = vmatprep.subr.mxu0 0.0
  %7094 = vmatpush1.msra.mxu0 %v6948
  %7095 = vmatprep.subr.mxu0 0.0
  %7096 = vmatpush1.msra.mxu0 %v6949
  %7097 = vmatprep.subr.mxu0 0.0
  %7098 = vmatpush1.msra.mxu0 %v6950
  %7099 = vmatprep.subr.mxu0 0.0
  %7100 = vmatpush1.msra.mxu0 %v6951
  %7101 = vmatprep.subr.mxu0 0.0
  %7102 = vmatpush1.msra.mxu0 %v6952
  %7103 = vmatprep.subr.mxu0 0.0
  %7104 = vmatpush1.msra.mxu0 %v6953
  %7105 = vmatprep.subr.mxu0 0.0
  %7106 = vmatpush1.msra.mxu0 %v6954
  %7107 = vmatprep.subr.mxu0 0.0
  %7108 = vmatpush1.msra.mxu0 %v6955
  %7109 = vmatprep.subr.mxu0 0.0
  %7110 = vmatpush1.msra.mxu0 %v6956
  %7111 = vmatprep.subr.mxu0 0.0
  %7112 = vmatpush1.msra.mxu0 %v6957
  %7113 = vmatprep.subr.mxu0 0.0
  %7114 = vmatpush1.msra.mxu0 %v6958
  %7115 = vmatprep.subr.mxu0 0.0
  %7116 = vmatpush1.msra.mxu0 %v6959
  %7117 = vmatprep.subr.mxu0 0.0
  %7118 = vmatpush1.msra.mxu0 %v6960
  %7119 = vmatprep.subr.mxu0 0.0
  %7120 = vmatpush1.msra.mxu0 %v6961
  %7121 = vmatprep.subr.mxu0 0.0
  %7122 = vmatpush1.msra.mxu0 %v6962
  %7123 = vmatprep.subr.mxu0 0.0
  %7124 = vmatpush1.msra.mxu0 %v6963
  %7125 = vmatprep.subr.mxu0 0.0
  %7126 = vmatpush1.msra.mxu0 %v6964
  %7127 = vmatprep.subr.mxu0 0.0
  %7128 = vmatpush1.msra.mxu0 %v6965
  %7129 = vmatprep.subr.mxu0 0.0
  %7130 = vmatpush1.msra.mxu0 0.0
  %7131 = vmatprep.subr.mxu0 0.0
  %7132 = vmatpush1.msra.mxu0 0.0
  %7133 = vmatprep.mubr.f32.mxu0 %v6974
  %7134 = vmatmul.mubr.f32.gmra.mrb[0].mxu0 %v6712
  %v7135 = vpop.f32.mrb[0].mxu0
  %v7136 = vadd.f32 %v6971, %v7135
  %v7137 = vpop.f32.mrb[0].mxu0
  %7138 = vmatprep.mubr.f32.mxu0 %v6977
  %7139 = vmatmul.mubr.f32.gmra.mrb[0].mxu0 %v6713
  %v7140 = vpop.f32.mrb[0].mxu0
  %v7141 = vadd.f32 %v6971, %v7140
  %v7142 = vpop.f32.mrb[0].mxu0
  %7143 = vmatprep.mubr.f32.mxu0 %v6980
  %7144 = vmatmul.mubr.f32.gmra.mrb[0].mxu0 %v6714
  %v7145 = vpop.f32.mrb[0].mxu0
  %v7146 = vadd.f32 %v6971, %v7145
  %v7147 = vpop.f32.mrb[0].mxu0
  %7148 = vmatprep.mubr.f32.mxu0 %v6983
  %7149 = vmatmul.mubr.f32.gmra.mrb[0].mxu0 %v6715
  %v7150 = vpop.f32.mrb[0].mxu0
  %v7151 = vadd.f32 %v6971, %v7150
  %v7152 = vpop.f32.mrb[0].mxu0
  %7153 = vmatprep.mubr.f32.mxu0 %v6986
  %7154 = vmatmul.mubr.f32.gmra.mrb[0].mxu0 %v6716
  %v7155 = vpop.f32.mrb[0].mxu0
  %v7156 = vadd.f32 %v6971, %v7155
  %v7157 = vpop.f32.mrb[0].mxu0
  %7158 = vmatprep.mubr.f32.mxu0 %v6989
  %7159 = vmatmul.mubr.f32.gmra.mrb[0].mxu0 %v6717
  %v7160 = vpop.f32.mrb[0].mxu0
  %v7161 = vadd.f32 %v6971, %v7160
  %v7162 = vpop.f32.mrb[0].mxu0
  %7163 = vmatprep.mubr.f32.mxu0 %v6992
  %7164 = vmatmul.mubr.f32.gmra.mrb[0].mxu0 %v6718
  %v7165 = vpop.f32.mrb[0].mxu0
  %v7166 = vadd.f32 %v6971, %v7165
  %v7167 = vpop.f32.mrb[0].mxu0
  %7168 = vmatprep.mubr.f32.mxu0 %v6995
  %7169 = vmatmul.mubr.f32.gmra.mrb[0].mxu0 %v6719
  %v7170 = vpop.f32.mrb[0].mxu0
  %v7171 = vadd.f32 %v6971, %v7170
  %v7172 = vpop.f32.mrb[0].mxu0
  %7173 = vmatprep.mubr.f32.mxu0 %v6998
  %7174 = vmatmul.mubr.f32.gmra.mrb[0].mxu0 %v6720
  %v7175 = vpop.f32.mrb[0].mxu0
  %v7176 = vadd.f32 %v6971, %v7175
  %v7177 = vpop.f32.mrb[0].mxu0
  %7178 = vmatprep.mubr.f32.mxu0 %v7001
  %7179 = vmatmul.mubr.f32.gmra.mrb[0].mxu0 %v6721
  %v7180 = vpop.f32.mrb[0].mxu0
  %v7181 = vadd.f32 %v6971, %v7180
  %v7182 = vpop.f32.mrb[0].mxu0
  %7183 = vmatprep.mubr.f32.mxu0 %v7004
  %7184 = vmatmul.mubr.f32.gmra.mrb[0].mxu0 %v6722
  %v7185 = vpop.f32.mrb[0].mxu0
  %v7186 = vadd.f32 %v6971, %v7185
  %v7187 = vpop.f32.mrb[0].mxu0
  %7188 = vmatprep.mubr.f32.mxu0 %v7007
  %7189 = vmatmul.mubr.f32.gmra.mrb[0].mxu0 %v6723
  %v7190 = vpop.f32.mrb[0].mxu0
  %v7191 = vadd.f32 %v6971, %v7190
  %v7192 = vpop.f32.mrb[0].mxu0
  %7193 = vmatprep.mubr.f32.mxu0 %v7010
  %7194 = vmatmul.mubr.f32.gmra.mrb[0].mxu0 %v6724
  %v7195 = vpop.f32.mrb[0].mxu0
  %v7196 = vadd.f32 %v6971, %v7195
  %v7197 = vpop.f32.mrb[0].mxu0
  %7198 = vmatprep.mubr.f32.mxu0 %v7013
  %7199 = vmatmul.mubr.f32.gmra.mrb[0].mxu0 %v6725
  %v7200 = vpop.f32.mrb[0].mxu0
  %v7201 = vadd.f32 %v6971, %v7200
  %v7202 = vpop.f32.mrb[0].mxu0
  %7203 = vmatprep.mubr.f32.mxu0 %v7016
  %7204 = vmatmul.mubr.f32.gmra.mrb[0].mxu0 %v6726
  %v7205 = vpop.f32.mrb[0].mxu0
  %v7206 = vadd.f32 %v6971, %v7205
  %v7207 = vpop.f32.mrb[0].mxu0
  %7208 = vmatprep.mubr.f32.mxu0 %v7019
  %7209 = vmatmul.mubr.f32.gmra.mrb[0].mxu0 %v6727
  %v7210 = vpop.f32.mrb[0].mxu0
  %v7211 = vadd.f32 %v6971, %v7210
  %v7212 = vpop.f32.mrb[0].mxu0
  %7213 = vmatprep.mubr.f32.mxu0 %v7022
  %7214 = vmatmul.mubr.f32.gmra.mrb[0].mxu0 %v6728
  %v7215 = vpop.f32.mrb[0].mxu0
  %v7216 = vadd.f32 %v6971, %v7215
  %v7217 = vpop.f32.mrb[0].mxu0
  %7218 = vmatprep.mubr.f32.mxu0 %v7025
  %7219 = vmatmul.mubr.f32.gmra.mrb[0].mxu0 %v6729
  %v7220 = vpop.f32.mrb[0].mxu0
  %v7221 = vadd.f32 %v6971, %v7220
  %v7222 = vpop.f32.mrb[0].mxu0
  %7223 = vmatprep.mubr.f32.mxu0 %v7028
  %7224 = vmatmul.mubr.f32.gmra.mrb[0].mxu0 %v6730
  %v7225 = vpop.f32.mrb[0].mxu0
  %v7226 = vadd.f32 %v6971, %v7225
  %v7227 = vpop.f32.mrb[0].mxu0
  %7228 = vmatprep.mubr.f32.mxu0 %v7031
  %7229 = vmatmul.mubr.f32.gmra.mrb[0].mxu0 %v6731
  %v7230 = vpop.f32.mrb[0].mxu0
  %v7231 = vadd.f32 %v6971, %v7230
  %v7232 = vpop.f32.mrb[0].mxu0
  %7233 = vmatprep.mubr.f32.mxu0 %v7034
  %7234 = vmatmul.mubr.f32.gmra.mrb[0].mxu0 %v6732
  %v7235 = vpop.f32.mrb[0].mxu0
  %v7236 = vadd.f32 %v6971, %v7235
  %v7237 = vpop.f32.mrb[0].mxu0
  %7238 = vmatprep.mubr.f32.mxu0 %v7037
  %7239 = vmatmul.mubr.f32.gmra.mrb[0].mxu0 %v6733
  %v7240 = vpop.f32.mrb[0].mxu0
  %v7241 = vadd.f32 %v6971, %v7240
  %v7242 = vpop.f32.mrb[0].mxu0
  %7243 = vmatprep.mubr.f32.mxu0 %v7040
  %7244 = vmatmul.mubr.f32.gmra.mrb[0].mxu0 %v6734
  %v7245 = vpop.f32.mrb[0].mxu0
  %v7246 = vadd.f32 %v6971, %v7245
  %v7247 = vpop.f32.mrb[0].mxu0
  %7248 = vmatprep.mubr.f32.mxu0 %v7043
  %7249 = vmatmul.mubr.f32.gmra.mrb[0].mxu0 %v6735
  %v7250 = vpop.f32.mrb[0].mxu0
  %v7251 = vadd.f32 %v6971, %v7250
  %v7252 = vpop.f32.mrb[0].mxu0
  %7253 = vmatprep.mubr.f32.mxu0 %v7046
  %7254 = vmatmul.mubr.f32.gmra.mrb[0].mxu0 %v6736
  %v7255 = vpop.f32.mrb[0].mxu0
  %v7256 = vadd.f32 %v6971, %v7255
  %v7257 = vpop.f32.mrb[0].mxu0
  %7258 = vmatprep.mubr.f32.mxu0 %v7049
  %7259 = vmatmul.mubr.f32.gmra.mrb[0].mxu0 %v6737
  %v7260 = vpop.f32.mrb[0].mxu0
  %v7261 = vadd.f32 %v6971, %v7260
  %v7262 = vpop.f32.mrb[0].mxu0
  %7263 = vmatprep.mubr.f32.mxu0 %v7052
  %7264 = vmatmul.mubr.f32.gmra.mrb[0].mxu0 %v6738
  %v7265 = vpop.f32.mrb[0].mxu0
  %v7266 = vadd.f32 %v6971, %v7265
  %v7267 = vpop.f32.mrb[0].mxu0
  %7268 = vmatprep.mubr.f32.mxu0 %v7055
  %7269 = vmatmul.mubr.f32.gmra.mrb[0].mxu0 %v6739
  %v7270 = vpop.f32.mrb[0].mxu0
  %v7271 = vadd.f32 %v6971, %v7270
  %v7272 = vpop.f32.mrb[0].mxu0
  %7273 = vmatprep.mubr.f32.mxu0 %v7058
  %7274 = vmatmul.mubr.f32.gmra.mrb[0].mxu0 %v6740
  %v7275 = vpop.f32.mrb[0].mxu0
  %v7276 = vadd.f32 %v6971, %v7275
  %v7277 = vpop.f32.mrb[0].mxu0
  %7278 = vmatprep.mubr.f32.mxu0 %v7061
  %7279 = vmatmul.mubr.f32.gmra.mrb[0].mxu0 %v6741
  %v7280 = vpop.f32.mrb[0].mxu0
  %v7281 = vadd.f32 %v6971, %v7280
  %v7282 = vpop.f32.mrb[0].mxu0
  %7283 = vmatprep.mubr.f32.mxu0 %v7064
  %7284 = vmatmul.mubr.f32.gmra.mrb[0].mxu0 %v6742
  %v7285 = vpop.f32.mrb[0].mxu0
  %v7286 = vadd.f32 %v6971, %v7285
  %v7287 = vpop.f32.mrb[0].mxu0
  %7288 = vmatprep.mubr.f32.mxu0 %v7067
  %7289 = vmatmul.mubr.f32.gmra.mrb[0].mxu0 %v6743
  %v7290 = vpop.f32.mrb[0].mxu0
  %v7291 = vadd.f32 %v6971, %v7290
  %v7292 = vpop.f32.mrb[0].mxu0
  %7293 = vdwg.mxu0
  %v7294 = vmax.f32 %v7136, 0.0
  %v7295 = vmax.f32 %v7141, 0.0
  %v7296 = vmax.f32 %v7146, 0.0
  %v7297 = vmax.f32 %v7151, 0.0
  %v7298 = vmax.f32 %v7156, 0.0
  %v7299 = vmax.f32 %v7161, 0.0
  %v7300 = vmax.f32 %v7166, 0.0
  %v7301 = vmax.f32 %v7171, 0.0
  %v7302 = vmax.f32 %v7176, 0.0
  %v7303 = vmax.f32 %v7181, 0.0
  %v7304 = vmax.f32 %v7186, 0.0
  %v7305 = vmax.f32 %v7191, 0.0
  %v7306 = vmax.f32 %v7196, 0.0
  %v7307 = vmax.f32 %v7201, 0.0
  %v7308 = vmax.f32 %v7206, 0.0
  %v7309 = vmax.f32 %v7211, 0.0
  %v7310 = vmax.f32 %v7216, 0.0
  %v7311 = vmax.f32 %v7221, 0.0
  %v7312 = vmax.f32 %v7226, 0.0
  %v7313 = vmax.f32 %v7231, 0.0
  %v7314 = vmax.f32 %v7236, 0.0
  %v7315 = vmax.f32 %v7241, 0.0
  %v7316 = vmax.f32 %v7246, 0.0
  %v7317 = vmax.f32 %v7251, 0.0
  %v7318 = vmax.f32 %v7256, 0.0
  %v7319 = vmax.f32 %v7261, 0.0
  %v7320 = vmax.f32 %v7266, 0.0
  %v7321 = vmax.f32 %v7271, 0.0
  %v7322 = vmax.f32 %v7276, 0.0
  %v7323 = vmax.f32 %v7281, 0.0
  %v7324 = vmax.f32 %v7286, 0.0
  %v7325 = vmax.f32 %v7291, 0.0
  %v7326 = vsel %vm6558, %v7294, -inf
  %v7327 = vsel %vm6558, %v7296, -inf
  %v7328 = vmax.f32 %v7326, %v7327
  %v7329 = vsel %vm6558, %v7295, -inf
  %v7330 = vsel %vm6558, %v7297, -inf
  %v7331 = vmax.f32 %v7329, %v7330
  %v7332 = vsel %vm6558, %v7298, -inf
  %v7333 = vsel %vm6558, %v7300, -inf
  %v7334 = vmax.f32 %v7332, %v7333
  %v7335 = vsel %vm6558, %v7299, -inf
  %v7336 = vsel %vm6558, %v7301, -inf
  %v7337 = vmax.f32 %v7335, %v7336
  %v7338 = vsel %vm6558, %v7302, -inf
  %v7339 = vsel %vm6558, %v7304, -inf
  %v7340 = vmax.f32 %v7338, %v7339
  %v7341 = vsel %vm6558, %v7303, -inf
  %v7342 = vsel %vm6558, %v7305, -inf
  %v7343 = vmax.f32 %v7341, %v7342
  %v7344 = vsel %vm6558, %v7306, -inf
  %v7345 = vsel %vm6558, %v7308, -inf
  %v7346 = vmax.f32 %v7344, %v7345
  %v7347 = vsel %vm6558, %v7307, -inf
  %v7348 = vsel %vm6558, %v7309, -inf
  %v7349 = vmax.f32 %v7347, %v7348
  %v7350 = vsel %vm6558, %v7310, -inf
  %v7351 = vsel %vm6558, %v7312, -inf
  %v7352 = vmax.f32 %v7350, %v7351
  %v7353 = vsel %vm6558, %v7311, -inf
  %v7354 = vsel %vm6558, %v7313, -inf
  %v7355 = vmax.f32 %v7353, %v7354
  %v7356 = vsel %vm6558, %v7314, -inf
  %v7357 = vsel %vm6558, %v7316, -inf
  %v7358 = vmax.f32 %v7356, %v7357
  %v7359 = vsel %vm6558, %v7315, -inf
  %v7360 = vsel %vm6558, %v7317, -inf
  %v7361 = vmax.f32 %v7359, %v7360
  %v7362 = vsel %vm6558, %v7318, -inf
  %v7363 = vsel %vm6558, %v7320, -inf
  %v7364 = vmax.f32 %v7362, %v7363
  %v7365 = vsel %vm6558, %v7319, -inf
  %v7366 = vsel %vm6558, %v7321, -inf
  %v7367 = vmax.f32 %v7365, %v7366
  %v7368 = vsel %vm6558, %v7322, -inf
  %v7369 = vsel %vm6558, %v7324, -inf
  %v7370 = vmax.f32 %v7368, %v7369
  %v7371 = vsel %vm6558, %v7323, -inf
  %v7372 = vsel %vm6558, %v7325, -inf
  %v7373 = vmax.f32 %v7371, %v7372
  %v7374 = vadd.f32 %v7328, 0.0
  %v7375 = vadd.f32 %v7331, 0.0
  %v7376 = vadd.f32 %v7334, 0.0
  %v7377 = vadd.f32 %v7337, 0.0
  %v7378 = vadd.f32 %v7340, 0.0
  %v7379 = vadd.f32 %v7343, 0.0
  %v7380 = vadd.f32 %v7346, 0.0
  %v7381 = vadd.f32 %v7349, 0.0
  %v7382 = vadd.f32 %v7352, 0.0
  %v7383 = vadd.f32 %v7355, 0.0
  %v7384 = vadd.f32 %v7358, 0.0
  %v7385 = vadd.f32 %v7361, 0.0
  %v7386 = vadd.f32 %v7364, 0.0
  %v7387 = vadd.f32 %v7367, 0.0
  %v7388 = vadd.f32 %v7370, 0.0
  %v7389 = vadd.f32 %v7373, 0.0
  %v7406 = vcombine.high %v7374, %v7374
  %v7407 = vcombine.high %v7375, %v7375
  %v7408 = vcombine.high %v7376, %v7376
  %v7409 = vcombine.high %v7377, %v7377
  %v7410 = vcombine.high %v7378, %v7378
  %v7411 = vcombine.high %v7379, %v7379
  %v7412 = vcombine.high %v7380, %v7380
  %v7413 = vcombine.high %v7381, %v7381
  %v7414 = vcombine.high %v7382, %v7382
  %v7415 = vcombine.high %v7383, %v7383
  %v7416 = vcombine.high %v7384, %v7384
  %v7417 = vcombine.high %v7385, %v7385
  %v7418 = vcombine.high %v7386, %v7386
  %v7419 = vcombine.high %v7387, %v7387
  %v7420 = vcombine.high %v7388, %v7388
  %v7421 = vcombine.high %v7389, %v7389
  %vm7438 = vcmask 257024
  %v7439 = vsel %vm7438, %v7374, 0.0
  %v7440 = vrot.slane %v7439, 4
  %v7441 = vadd.f32 %v7439, %v7440
  %v7442 = vrot.slane %v7441, 2
  %v7443 = vadd.f32 %v7441, %v7442
  %v7444 = vrot.slane %v7443, 1
  %v7445 = vadd.f32 %v7443, %v7444
  %v7446 = vsel %vm7438, %v7406, 0.0
  %v7447 = vrot.slane %v7446, 4
  %v7448 = vadd.f32 %v7446, %v7447
  %v7449 = vrot.slane %v7448, 2
  %v7450 = vadd.f32 %v7448, %v7449
  %v7451 = vrot.slane %v7450, 1
  %v7452 = vadd.f32 %v7450, %v7451
  %v7453 = vsel %vm7438, %v7375, 0.0
  %v7454 = vrot.slane %v7453, 4
  %v7455 = vadd.f32 %v7453, %v7454
  %v7456 = vrot.slane %v7455, 2
  %v7457 = vadd.f32 %v7455, %v7456
  %v7458 = vrot.slane %v7457, 1
  %v7459 = vadd.f32 %v7457, %v7458
  %v7460 = vsel %vm7438, %v7407, 0.0
  %v7461 = vrot.slane %v7460, 4
  %v7462 = vadd.f32 %v7460, %v7461
  %v7463 = vrot.slane %v7462, 2
  %v7464 = vadd.f32 %v7462, %v7463
  %v7465 = vrot.slane %v7464, 1
  %v7466 = vadd.f32 %v7464, %v7465
  %v7467 = vsel %vm7438, %v7376, 0.0
  %v7468 = vrot.slane %v7467, 4
  %v7469 = vadd.f32 %v7467, %v7468
  %v7470 = vrot.slane %v7469, 2
  %v7471 = vadd.f32 %v7469, %v7470
  %v7472 = vrot.slane %v7471, 1
  %v7473 = vadd.f32 %v7471, %v7472
  %v7474 = vsel %vm7438, %v7408, 0.0
  %v7475 = vrot.slane %v7474, 4
  %v7476 = vadd.f32 %v7474, %v7475
  %v7477 = vrot.slane %v7476, 2
  %v7478 = vadd.f32 %v7476, %v7477
  %v7479 = vrot.slane %v7478, 1
  %v7480 = vadd.f32 %v7478, %v7479
  %v7481 = vsel %vm7438, %v7377, 0.0
  %v7482 = vrot.slane %v7481, 4
  %v7483 = vadd.f32 %v7481, %v7482
  %v7484 = vrot.slane %v7483, 2
  %v7485 = vadd.f32 %v7483, %v7484
  %v7486 = vrot.slane %v7485, 1
  %v7487 = vadd.f32 %v7485, %v7486
  %v7488 = vsel %vm7438, %v7409, 0.0
  %v7489 = vrot.slane %v7488, 4
  %v7490 = vadd.f32 %v7488, %v7489
  %v7491 = vrot.slane %v7490, 2
  %v7492 = vadd.f32 %v7490, %v7491
  %v7493 = vrot.slane %v7492, 1
  %v7494 = vadd.f32 %v7492, %v7493
  %v7495 = vsel %vm7438, %v7378, 0.0
  %v7496 = vrot.slane %v7495, 4
  %v7497 = vadd.f32 %v7495, %v7496
  %v7498 = vrot.slane %v7497, 2
  %v7499 = vadd.f32 %v7497, %v7498
  %v7500 = vrot.slane %v7499, 1
  %v7501 = vadd.f32 %v7499, %v7500
  %v7502 = vsel %vm7438, %v7410, 0.0
  %v7503 = vrot.slane %v7502, 4
  %v7504 = vadd.f32 %v7502, %v7503
  %v7505 = vrot.slane %v7504, 2
  %v7506 = vadd.f32 %v7504, %v7505
  %v7507 = vrot.slane %v7506, 1
  %v7508 = vadd.f32 %v7506, %v7507
  %v7509 = vsel %vm7438, %v7379, 0.0
  %v7510 = vrot.slane %v7509, 4
  %v7511 = vadd.f32 %v7509, %v7510
  %v7512 = vrot.slane %v7511, 2
  %v7513 = vadd.f32 %v7511, %v7512
  %v7514 = vrot.slane %v7513, 1
  %v7515 = vadd.f32 %v7513, %v7514
  %v7516 = vsel %vm7438, %v7411, 0.0
  %v7517 = vrot.slane %v7516, 4
  %v7518 = vadd.f32 %v7516, %v7517
  %v7519 = vrot.slane %v7518, 2
  %v7520 = vadd.f32 %v7518, %v7519
  %v7521 = vrot.slane %v7520, 1
  %v7522 = vadd.f32 %v7520, %v7521
  %v7523 = vsel %vm7438, %v7380, 0.0
  %v7524 = vrot.slane %v7523, 4
  %v7525 = vadd.f32 %v7523, %v7524
  %v7526 = vrot.slane %v7525, 2
  %v7527 = vadd.f32 %v7525, %v7526
  %v7528 = vrot.slane %v7527, 1
  %v7529 = vadd.f32 %v7527, %v7528
  %v7530 = vsel %vm7438, %v7412, 0.0
  %v7531 = vrot.slane %v7530, 4
  %v7532 = vadd.f32 %v7530, %v7531
  %v7533 = vrot.slane %v7532, 2
  %v7534 = vadd.f32 %v7532, %v7533
  %v7535 = vrot.slane %v7534, 1
  %v7536 = vadd.f32 %v7534, %v7535
  %v7537 = vsel %vm7438, %v7381, 0.0
  %v7538 = vrot.slane %v7537, 4
  %v7539 = vadd.f32 %v7537, %v7538
  %v7540 = vrot.slane %v7539, 2
  %v7541 = vadd.f32 %v7539, %v7540
  %v7542 = vrot.slane %v7541, 1
  %v7543 = vadd.f32 %v7541, %v7542
  %v7544 = vsel %vm7438, %v7413, 0.0
  %v7545 = vrot.slane %v7544, 4
  %v7546 = vadd.f32 %v7544, %v7545
  %v7547 = vrot.slane %v7546, 2
  %v7548 = vadd.f32 %v7546, %v7547
  %v7549 = vrot.slane %v7548, 1
  %v7550 = vadd.f32 %v7548, %v7549
  %v7551 = vsel %vm7438, %v7382, 0.0
  %v7552 = vrot.slane %v7551, 4
  %v7553 = vadd.f32 %v7551, %v7552
  %v7554 = vrot.slane %v7553, 2
  %v7555 = vadd.f32 %v7553, %v7554
  %v7556 = vrot.slane %v7555, 1
  %v7557 = vadd.f32 %v7555, %v7556
  %v7558 = vsel %vm7438, %v7414, 0.0
  %v7559 = vrot.slane %v7558, 4
  %v7560 = vadd.f32 %v7558, %v7559
  %v7561 = vrot.slane %v7560, 2
  %v7562 = vadd.f32 %v7560, %v7561
  %v7563 = vrot.slane %v7562, 1
  %v7564 = vadd.f32 %v7562, %v7563
  %v7565 = vsel %vm7438, %v7383, 0.0
  %v7566 = vrot.slane %v7565, 4
  %v7567 = vadd.f32 %v7565, %v7566
  %v7568 = vrot.slane %v7567, 2
  %v7569 = vadd.f32 %v7567, %v7568
  %v7570 = vrot.slane %v7569, 1
  %v7571 = vadd.f32 %v7569, %v7570
  %v7572 = vsel %vm7438, %v7415, 0.0
  %v7573 = vrot.slane %v7572, 4
  %v7574 = vadd.f32 %v7572, %v7573
  %v7575 = vrot.slane %v7574, 2
  %v7576 = vadd.f32 %v7574, %v7575
  %v7577 = vrot.slane %v7576, 1
  %v7578 = vadd.f32 %v7576, %v7577
  %v7579 = vsel %vm7438, %v7384, 0.0
  %v7580 = vrot.slane %v7579, 4
  %v7581 = vadd.f32 %v7579, %v7580
  %v7582 = vrot.slane %v7581, 2
  %v7583 = vadd.f32 %v7581, %v7582
  %v7584 = vrot.slane %v7583, 1
  %v7585 = vadd.f32 %v7583, %v7584
  %v7586 = vsel %vm7438, %v7416, 0.0
  %v7587 = vrot.slane %v7586, 4
  %v7588 = vadd.f32 %v7586, %v7587
  %v7589 = vrot.slane %v7588, 2
  %v7590 = vadd.f32 %v7588, %v7589
  %v7591 = vrot.slane %v7590, 1
  %v7592 = vadd.f32 %v7590, %v7591
  %v7593 = vsel %vm7438, %v7385, 0.0
  %v7594 = vrot.slane %v7593, 4
  %v7595 = vadd.f32 %v7593, %v7594
  %v7596 = vrot.slane %v7595, 2
  %v7597 = vadd.f32 %v7595, %v7596
  %v7598 = vrot.slane %v7597, 1
  %v7599 = vadd.f32 %v7597, %v7598
  %v7600 = vsel %vm7438, %v7417, 0.0
  %v7601 = vrot.slane %v7600, 4
  %v7602 = vadd.f32 %v7600, %v7601
  %v7603 = vrot.slane %v7602, 2
  %v7604 = vadd.f32 %v7602, %v7603
  %v7605 = vrot.slane %v7604, 1
  %v7606 = vadd.f32 %v7604, %v7605
  %v7607 = vsel %vm7438, %v7386, 0.0
  %v7608 = vrot.slane %v7607, 4
  %v7609 = vadd.f32 %v7607, %v7608
  %v7610 = vrot.slane %v7609, 2
  %v7611 = vadd.f32 %v7609, %v7610
  %v7612 = vrot.slane %v7611, 1
  %v7613 = vadd.f32 %v7611, %v7612
  %v7614 = vsel %vm7438, %v7418, 0.0
  %v7615 = vrot.slane %v7614, 4
  %v7616 = vadd.f32 %v7614, %v7615
  %v7617 = vrot.slane %v7616, 2
  %v7618 = vadd.f32 %v7616, %v7617
  %v7619 = vrot.slane %v7618, 1
  %v7620 = vadd.f32 %v7618, %v7619
  %v7621 = vsel %vm7438, %v7387, 0.0
  %v7622 = vrot.slane %v7621, 4
  %v7623 = vadd.f32 %v7621, %v7622
  %v7624 = vrot.slane %v7623, 2
  %v7625 = vadd.f32 %v7623, %v7624
  %v7626 = vrot.slane %v7625, 1
  %v7627 = vadd.f32 %v7625, %v7626
  %v7628 = vsel %vm7438, %v7419, 0.0
  %v7629 = vrot.slane %v7628, 4
  %v7630 = vadd.f32 %v7628, %v7629
  %v7631 = vrot.slane %v7630, 2
  %v7632 = vadd.f32 %v7630, %v7631
  %v7633 = vrot.slane %v7632, 1
  %v7634 = vadd.f32 %v7632, %v7633
  %v7635 = vsel %vm7438, %v7388, 0.0
  %v7636 = vrot.slane %v7635, 4
  %v7637 = vadd.f32 %v7635, %v7636
  %v7638 = vrot.slane %v7637, 2
  %v7639 = vadd.f32 %v7637, %v7638
  %v7640 = vrot.slane %v7639, 1
  %v7641 = vadd.f32 %v7639, %v7640
  %v7642 = vsel %vm7438, %v7420, 0.0
  %v7643 = vrot.slane %v7642, 4
  %v7644 = vadd.f32 %v7642, %v7643
  %v7645 = vrot.slane %v7644, 2
  %v7646 = vadd.f32 %v7644, %v7645
  %v7647 = vrot.slane %v7646, 1
  %v7648 = vadd.f32 %v7646, %v7647
  %v7649 = vsel %vm7438, %v7389, 0.0
  %v7650 = vrot.slane %v7649, 4
  %v7651 = vadd.f32 %v7649, %v7650
  %v7652 = vrot.slane %v7651, 2
  %v7653 = vadd.f32 %v7651, %v7652
  %v7654 = vrot.slane %v7653, 1
  %v7655 = vadd.f32 %v7653, %v7654
  %v7656 = vsel %vm7438, %v7421, 0.0
  %v7657 = vrot.slane %v7656, 4
  %v7658 = vadd.f32 %v7656, %v7657
  %v7659 = vrot.slane %v7658, 2
  %v7660 = vadd.f32 %v7658, %v7659
  %v7661 = vrot.slane %v7660, 1
  %v7662 = vadd.f32 %v7660, %v7661
  %v7663 = vrcp.pop 4.0
  %v7664 = vmul.f32 %v7445, %v7663
  %v7665 = vmul.f32 %v7452, %v7663
  %v7666 = vmul.f32 %v7459, %v7663
  %v7667 = vmul.f32 %v7466, %v7663
  %v7668 = vmul.f32 %v7473, %v7663
  %v7669 = vmul.f32 %v7480, %v7663
  %v7670 = vmul.f32 %v7487, %v7663
  %v7671 = vmul.f32 %v7494, %v7663
  %v7672 = vmul.f32 %v7501, %v7663
  %v7673 = vmul.f32 %v7508, %v7663
  %v7674 = vmul.f32 %v7515, %v7663
  %v7675 = vmul.f32 %v7522, %v7663
  %v7676 = vmul.f32 %v7529, %v7663
  %v7677 = vmul.f32 %v7536, %v7663
  %v7678 = vmul.f32 %v7543, %v7663
  %v7679 = vmul.f32 %v7550, %v7663
  %v7680 = vmul.f32 %v7557, %v7663
  %v7681 = vmul.f32 %v7564, %v7663
  %v7682 = vmul.f32 %v7571, %v7663
  %v7683 = vmul.f32 %v7578, %v7663
  %v7684 = vmul.f32 %v7585, %v7663
  %v7685 = vmul.f32 %v7592, %v7663
  %v7686 = vmul.f32 %v7599, %v7663
  %v7687 = vmul.f32 %v7606, %v7663
  %v7688 = vmul.f32 %v7613, %v7663
  %v7689 = vmul.f32 %v7620, %v7663
  %v7690 = vmul.f32 %v7627, %v7663
  %v7691 = vmul.f32 %v7634, %v7663
  %v7692 = vmul.f32 %v7641, %v7663
  %v7693 = vmul.f32 %v7648, %v7663
  %v7694 = vmul.f32 %v7655, %v7663
  %v7695 = vmul.f32 %v7662, %v7663
  %vm7698 = vcmask 1041409
  %v7699 = vsel %vm7698, %v7680, %v7664
  %v7703 = vsel %vm7698, %v7681, %v7665
  %7704 = vrot.lane.b32.xlu0 %v7703, 32
  %v7705 = vpop.permute.xlu0 %7704
  %v7709 = vsel %vm7698, %v7682, %v7666
  %7710 = vrot.lane.b32.xlu0 %v7709, 64
  %v7711 = vpop.permute.xlu0 %7710
  %v7715 = vsel %vm7698, %v7683, %v7667
  %7716 = vrot.lane.b32.xlu0 %v7715, 96
  %v7717 = vpop.permute.xlu0 %7716
  %v7721 = vsel %vm7698, %v7684, %v7668
  %v7725 = vsel %vm7698, %v7685, %v7669
  %7726 = vrot.lane.b32.xlu0 %v7725, 32
  %v7727 = vpop.permute.xlu0 %7726
  %v7731 = vsel %vm7698, %v7686, %v7670
  %7732 = vrot.lane.b32.xlu0 %v7731, 64
  %v7733 = vpop.permute.xlu0 %7732
  %v7737 = vsel %vm7698, %v7687, %v7671
  %7738 = vrot.lane.b32.xlu0 %v7737, 96
  %v7739 = vpop.permute.xlu0 %7738
  %v7743 = vsel %vm7698, %v7688, %v7672
  %v7747 = vsel %vm7698, %v7689, %v7673
  %7748 = vrot.lane.b32.xlu0 %v7747, 32
  %v7749 = vpop.permute.xlu0 %7748
  %v7753 = vsel %vm7698, %v7690, %v7674
  %7754 = vrot.lane.b32.xlu0 %v7753, 64
  %v7755 = vpop.permute.xlu0 %7754
  %v7759 = vsel %vm7698, %v7691, %v7675
  %7760 = vrot.lane.b32.xlu0 %v7759, 96
  %v7761 = vpop.permute.xlu0 %7760
  %v7765 = vsel %vm7698, %v7692, %v7676
  %v7769 = vsel %vm7698, %v7693, %v7677
  %7770 = vrot.lane.b32.xlu0 %v7769, 32
  %v7771 = vpop.permute.xlu0 %7770
  %v7775 = vsel %vm7698, %v7694, %v7678
  %7776 = vrot.lane.b32.xlu0 %v7775, 64
  %v7777 = vpop.permute.xlu0 %7776
  %v7781 = vsel %vm7698, %v7695, %v7679
  %7782 = vrot.lane.b32.xlu0 %v7781, 96
  %v7783 = vpop.permute.xlu0 %7782
  %v7785 = vsel %vm6558, %v7699, %v7705
  %v7786 = vsel %vm6616, %v7785, %v7711
  %v7787 = vsel %vm6678, %v7786, %v7717
  %v7788 = vsel %vm6558, %v7721, %v7727
  %v7789 = vsel %vm6616, %v7788, %v7733
  %v7790 = vsel %vm6678, %v7789, %v7739
  %v7791 = vsel %vm6558, %v7743, %v7749
  %v7792 = vsel %vm6616, %v7791, %v7755
  %v7793 = vsel %vm6678, %v7792, %v7761
  %v7794 = vsel %vm6558, %v7765, %v7771
  %v7795 = vsel %vm6616, %v7794, %v7777
  %v7796 = vsel %vm6678, %v7795, %v7783
  %v7797 = vld [vmem:[%s5] sm:$0xff]
  %v7798 = vld [vmem:[%s5 + $0x8] sm:$0xff]
  %v7799 = vld [vmem:[%s5 + $0x10] sm:$0xff]
  %v7800 = vld [vmem:[%s5 + $0x18] sm:$0xff]
  %v7801 = vld [vmem:[%s5 + $0x20] sm:$0xff]
  %v7802 = vld [vmem:[%s5 + $0x28] sm:$0xff]
  %v7803 = vld [vmem:[%s5 + $0x30] sm:$0xff]
  %v7804 = vld [vmem:[%s5 + $0x38] sm:$0xff]
  %v7805 = vld [vmem:[%s5 + $0x40] sm:$0xff]
  %v7806 = vld [vmem:[%s5 + $0x48] sm:$0xff]
  %v7807 = vld [vmem:[%s5 + $0x50] sm:$0xff]
  %v7808 = vld [vmem:[%s5 + $0x58] sm:$0xff]
  %v7809 = vld [vmem:[%s5 + $0x60] sm:$0xff]
  %v7810 = vld [vmem:[%s5 + $0x68] sm:$0xff]
  %v7811 = vld [vmem:[%s5 + $0x70] sm:$0xff]
  %v7812 = vld [vmem:[%s5 + $0x78] sm:$0xff]
  %v7813 = vld [vmem:[%s5 + $0x80] sm:$0xff]
  %v7814 = vld [vmem:[%s5 + $0x88] sm:$0xff]
  %v7815 = vld [vmem:[%s5 + $0x90] sm:$0xff]
  %v7816 = vld [vmem:[%s5 + $0x98] sm:$0xff]
  %v7817 = vld [vmem:[%s5 + $0xa0] sm:$0xff]
  %v7818 = vld [vmem:[%s5 + $0xa8] sm:$0xff]
  %v7819 = vld [vmem:[%s5 + $0xb0] sm:$0xff]
  %v7820 = vld [vmem:[%s5 + $0xb8] sm:$0xff]
  %v7821 = vld [vmem:[%s5 + $0xc0] sm:$0xff]
  %v7822 = vld [vmem:[%s5 + $0xc8] sm:$0xff]
  %v7823 = vld [vmem:[%s5 + $0xd0] sm:$0xff]
  %v7824 = vld [vmem:[%s5 + $0xd8] sm:$0xff]
  %v7825 = vld [vmem:[%s5 + $0xe0] sm:$0xff]
  %v7826 = vld [vmem:[%s5 + $0xe8] sm:$0xff]
  %v7827 = vld [vmem:[%s5 + $0xf0] sm:$0xff]
  %v7828 = vld [vmem:[%s5 + $0xf8] sm:$0xff]
  %v7829 = vld [vmem:[%s5 + $0x100] sm:$0xff]
  %v7830 = vld [vmem:[%s5 + $0x108] sm:$0xff]
  %v7831 = vld [vmem:[%s5 + $0x110] sm:$0xff]
  %v7832 = vld [vmem:[%s5 + $0x118] sm:$0xff]
  %v7833 = vld [vmem:[%s5 + $0x120] sm:$0xff]
  %v7834 = vld [vmem:[%s5 + $0x128] sm:$0xff]
  %v7835 = vld [vmem:[%s5 + $0x130] sm:$0xff]
  %v7836 = vld [vmem:[%s5 + $0x138] sm:$0xff]
  %v7837 = vld [vmem:[%s5 + $0x140] sm:$0xff]
  %v7838 = vld [vmem:[%s5 + $0x148] sm:$0xff]
  %v7839 = vld [vmem:[%s5 + $0x150] sm:$0xff]
  %v7840 = vld [vmem:[%s5 + $0x158] sm:$0xff]
  %v7841 = vld [vmem:[%s5 + $0x160] sm:$0xff]
  %v7842 = vld [vmem:[%s5 + $0x168] sm:$0xff]
  %v7843 = vld [vmem:[%s5 + $0x170] sm:$0xff]
  %v7844 = vld [vmem:[%s5 + $0x178] sm:$0xff]
  %v7845 = vld [vmem:[%s5 + $0x180] sm:$0xff]
  %v7846 = vld [vmem:[%s5 + $0x188] sm:$0xff]
  %v7847 = vld [vmem:[%s5 + $0x190] sm:$0xff]
  %v7848 = vld [vmem:[%s5 + $0x198] sm:$0xff]
  %v7849 = vld [vmem:[%s5 + $0x1a0] sm:$0xff]
  %v7850 = vld [vmem:[%s5 + $0x1a8] sm:$0xff]
  %v7851 = vld [vmem:[%s5 + $0x1b0] sm:$0xff]
  %v7852 = vld [vmem:[%s5 + $0x1b8] sm:$0xff]
  %v7853 = vld [vmem:[%s5 + $0x1c0] sm:$0xff]
  %v7854 = vld [vmem:[%s5 + $0x1c8] sm:$0xff]
  %v7855 = vld [vmem:[%s5 + $0x1d0] sm:$0xff]
  %v7856 = vld [vmem:[%s5 + $0x1d8] sm:$0xff]
  %v7857 = vld [vmem:[%s5 + $0x1e0] sm:$0xff]
  %v7858 = vld [vmem:[%s5 + $0x1e8] sm:$0xff]
  %v7859 = vld [vmem:[%s5 + $0x1f0] sm:$0xff]
  %v7860 = vld [vmem:[%s5 + $0x1f8] sm:$0xff]
  %v7861 = vld [vmem:[%s6] sm:$0x1]
  %v7863 = vlaneseq
  %v7864 = vshrl.u32 %v7863, 7
  %v7865 = vsub.s32 0, %v7864
  %v7866 = vrot.slane %v7861, %v7865
  %7868 = vmatprep.subr.mxu0 0.0
  %7869 = vmatpush1.msra.mxu0 %v7797
  %7870 = vmatprep.subr.mxu0 0.0
  %7871 = vmatpush1.msra.mxu0 %v7798
  %7872 = vmatprep.subr.mxu0 0.0
  %7873 = vmatpush1.msra.mxu0 %v7799
  %7874 = vmatprep.subr.mxu0 0.0
  %7875 = vmatpush1.msra.mxu0 %v7800
  %7876 = vmatprep.subr.mxu0 0.0
  %7877 = vmatpush1.msra.mxu0 %v7801
  %7878 = vmatprep.subr.mxu0 0.0
  %7879 = vmatpush1.msra.mxu0 %v7802
  %7880 = vmatprep.subr.mxu0 0.0
  %7881 = vmatpush1.msra.mxu0 %v7803
  %7882 = vmatprep.subr.mxu0 0.0
  %7883 = vmatpush1.msra.mxu0 %v7804
  %7884 = vmatprep.subr.mxu0 0.0
  %7885 = vmatpush1.msra.mxu0 %v7805
  %7886 = vmatprep.subr.mxu0 0.0
  %7887 = vmatpush1.msra.mxu0 %v7806
  %7888 = vmatprep.subr.mxu0 0.0
  %7889 = vmatpush1.msra.mxu0 %v7807
  %7890 = vmatprep.subr.mxu0 0.0
  %7891 = vmatpush1.msra.mxu0 %v7808
  %7892 = vmatprep.subr.mxu0 0.0
  %7893 = vmatpush1.msra.mxu0 %v7809
  %7894 = vmatprep.subr.mxu0 0.0
  %7895 = vmatpush1.msra.mxu0 %v7810
  %7896 = vmatprep.subr.mxu0 0.0
  %7897 = vmatpush1.msra.mxu0 %v7811
  %7898 = vmatprep.subr.mxu0 0.0
  %7899 = vmatpush1.msra.mxu0 %v7812
  %7900 = vmatprep.subr.mxu0 0.0
  %7901 = vmatpush1.msra.mxu0 %v7813
  %7902 = vmatprep.subr.mxu0 0.0
  %7903 = vmatpush1.msra.mxu0 %v7814
  %7904 = vmatprep.subr.mxu0 0.0
  %7905 = vmatpush1.msra.mxu0 %v7815
  %7906 = vmatprep.subr.mxu0 0.0
  %7907 = vmatpush1.msra.mxu0 %v7816
  %7908 = vmatprep.subr.mxu0 0.0
  %7909 = vmatpush1.msra.mxu0 %v7817
  %7910 = vmatprep.subr.mxu0 0.0
  %7911 = vmatpush1.msra.mxu0 %v7818
  %7912 = vmatprep.subr.mxu0 0.0
  %7913 = vmatpush1.msra.mxu0 %v7819
  %7914 = vmatprep.subr.mxu0 0.0
  %7915 = vmatpush1.msra.mxu0 %v7820
  %7916 = vmatprep.subr.mxu0 0.0
  %7917 = vmatpush1.msra.mxu0 %v7821
  %7918 = vmatprep.subr.mxu0 0.0
  %7919 = vmatpush1.msra.mxu0 %v7822
  %7920 = vmatprep.subr.mxu0 0.0
  %7921 = vmatpush1.msra.mxu0 %v7823
  %7922 = vmatprep.subr.mxu0 0.0
  %7923 = vmatpush1.msra.mxu0 %v7824
  %7924 = vmatprep.subr.mxu0 0.0
  %7925 = vmatpush1.msra.mxu0 %v7825
  %7926 = vmatprep.subr.mxu0 0.0
  %7927 = vmatpush1.msra.mxu0 %v7826
  %7928 = vmatprep.subr.mxu0 0.0
  %7929 = vmatpush1.msra.mxu0 %v7827
  %7930 = vmatprep.subr.mxu0 0.0
  %7931 = vmatpush1.msra.mxu0 %v7828
  %7932 = vmatprep.mubr.f32.mxu0 %v7790
  %7933 = vmatmul.mubr.f32.gmra.mrb[0].mxu0 %v7787
  %v7934 = vpop.f32.mrb[0].mxu0
  %v7935 = vadd.f32 %v7866, %v7934
  %v7936 = vpop.f32.mrb[0].mxu0
  %7937 = vdwg.mxu0
  %7938 = vmatprep.subr.mxu0 0.0
  %7939 = vmatpush1.msra.mxu0 %v7829
  %7940 = vmatprep.subr.mxu0 0.0
  %7941 = vmatpush1.msra.mxu0 %v7830
  %7942 = vmatprep.subr.mxu0 0.0
  %7943 = vmatpush1.msra.mxu0 %v7831
  %7944 = vmatprep.subr.mxu0 0.0
  %7945 = vmatpush1.msra.mxu0 %v7832
  %7946 = vmatprep.subr.mxu0 0.0
  %7947 = vmatpush1.msra.mxu0 %v7833
  %7948 = vmatprep.subr.mxu0 0.0
  %7949 = vmatpush1.msra.mxu0 %v7834
  %7950 = vmatprep.subr.mxu0 0.0
  %7951 = vmatpush1.msra.mxu0 %v7835
  %7952 = vmatprep.subr.mxu0 0.0
  %7953 = vmatpush1.msra.mxu0 %v7836
  %7954 = vmatprep.subr.mxu0 0.0
  %7955 = vmatpush1.msra.mxu0 %v7837
  %7956 = vmatprep.subr.mxu0 0.0
  %7957 = vmatpush1.msra.mxu0 %v7838
  %7958 = vmatprep.subr.mxu0 0.0
  %7959 = vmatpush1.msra.mxu0 %v7839
  %7960 = vmatprep.subr.mxu0 0.0
  %7961 = vmatpush1.msra.mxu0 %v7840
  %7962 = vmatprep.subr.mxu0 0.0
  %7963 = vmatpush1.msra.mxu0 %v7841
  %7964 = vmatprep.subr.mxu0 0.0
  %7965 = vmatpush1.msra.mxu0 %v7842
  %7966 = vmatprep.subr.mxu0 0.0
  %7967 = vmatpush1.msra.mxu0 %v7843
  %7968 = vmatprep.subr.mxu0 0.0
  %7969 = vmatpush1.msra.mxu0 %v7844
  %7970 = vmatprep.subr.mxu0 0.0
  %7971 = vmatpush1.msra.mxu0 %v7845
  %7972 = vmatprep.subr.mxu0 0.0
  %7973 = vmatpush1.msra.mxu0 %v7846
  %7974 = vmatprep.subr.mxu0 0.0
  %7975 = vmatpush1.msra.mxu0 %v7847
  %7976 = vmatprep.subr.mxu0 0.0
  %7977 = vmatpush1.msra.mxu0 %v7848
  %7978 = vmatprep.subr.mxu0 0.0
  %7979 = vmatpush1.msra.mxu0 %v7849
  %7980 = vmatprep.subr.mxu0 0.0
  %7981 = vmatpush1.msra.mxu0 %v7850
  %7982 = vmatprep.subr.mxu0 0.0
  %7983 = vmatpush1.msra.mxu0 %v7851
  %7984 = vmatprep.subr.mxu0 0.0
  %7985 = vmatpush1.msra.mxu0 %v7852
  %7986 = vmatprep.subr.mxu0 0.0
  %7987 = vmatpush1.msra.mxu0 %v7853
  %7988 = vmatprep.subr.mxu0 0.0
  %7989 = vmatpush1.msra.mxu0 %v7854
  %7990 = vmatprep.subr.mxu0 0.0
  %7991 = vmatpush1.msra.mxu0 %v7855
  %7992 = vmatprep.subr.mxu0 0.0
  %7993 = vmatpush1.msra.mxu0 %v7856
  %7994 = vmatprep.subr.mxu0 0.0
  %7995 = vmatpush1.msra.mxu0 %v7857
  %7996 = vmatprep.subr.mxu0 0.0
  %7997 = vmatpush1.msra.mxu0 %v7858
  %7998 = vmatprep.subr.mxu0 0.0
  %7999 = vmatpush1.msra.mxu0 %v7859
  %8000 = vmatprep.subr.mxu0 0.0
  %8001 = vmatpush1.msra.mxu0 %v7860
  %8002 = vmatprep.mubr.f32.mxu0 %v7796
  %8003 = vmatmul.mubr.f32.gmra.mrb[0].mxu0 %v7793
  %v8004 = vpop.f32.mrb[0].mxu0
  %v8005 = vadd.f32 %v7935, %v8004
  %v8006 = vpop.f32.mrb[0].mxu0
  %8007 = vdwg.mxu0
  %v8008 = vmax.f32 %v8005, 0.0
  %v8009 = vld [vmem:[%s7] sm:$0x1]
  %v8011 = vlaneseq
  %v8012 = vshrl.u32 %v8011, 7
  %v8013 = vsub.s32 0, %v8012
  %v8014 = vrot.slane %v8009, %v8013
  %v8016 = vmul.f32 %v8008, %v8014
  %vm8017 = vcmask 1041408
  %v8018 = vsel %vm8017, %v8016, 0.0
  %8019 = vadd.xlane.f32.xlu0 %v8018
  %v8020 = vpop.xlane.xlu0 %8019
  %v8021 = vld [vmem:[#allocation2] sm:$0x1]
  %v8023 = vlaneseq
  %v8024 = vshrl.u32 %v8023, 7
  %v8025 = vsub.s32 0, %v8024
  %v8026 = vrot.slane %v8021, %v8025
  %v8028 = vadd.f32 %v8020, %v8026
  %v8029 = vtanh.pop %v8028
  %v8030 = vmul.f32 %v8029, 10.0
  %vm8031 = vcmask 1024
  %8032 = vst.msk [vmem:[%s9] sm:$0x3] %vm8031, %v8030
  // Predicated region
  $region38: #{stock_cnn_forward.1} parent=0 // pred_check
    _
  $region39: #{stock_cnn_forward.1} parent=0 // pred_check_branch
    %8034 = sbr.rel (0) target = $region41
  $region40: #{stock_cnn_forward.1} parent=0 // pred_region
    _
  $region41: #{stock_cnn_forward.1} parent=0 // pred_fallthru
    _
  // Predicated region
  $region42: #{stock_cnn_forward.1} parent=0 // pred_check
    _
  $region43: #{stock_cnn_forward.1} parent=0 // pred_check_branch
    %8036 = sbr.rel (0) target = $region45
  $region44: #{stock_cnn_forward.1} parent=0 // pred_region
    _
  $region45: #{stock_cnn_forward.1} parent=0 // pred_fallthru
    _

</llo_original>
